<compile_context>
chip_gen: v7x
topology: tpu7x:2x2x1
jax: 0.10.0
libtpu: 0.0.40
codegen_flags: <defaults>
</compile_context>

<pallas_src>
import functools

import jax
import jax.numpy as jnp
from jax.experimental import pallas as pl
from jax.experimental.pallas import tpu as pltpu


# ------------------------------- fused kernel --------------------------------

def gnn_gumbel_kernel(x_ref, eu_ref, ea_ref, u_ref,
                      pw1x_ref, pw1n0_ref, pw1n1_ref, pb1_ref,
                      pw2c0_ref, pw2c1_ref, pb2_ref,
                      gw1x_ref, gw1n0_ref, gw1n1_ref,
                      gw1a0_ref, gw1a1_ref, gb1_ref,
                      gw2d0_ref, gw2d1_ref, gb2_ref,
                      p_ref, lsum_ref, *, P, G, n_out):
    x = x_ref[...]                       # (ifd, M) channels-last-on-sublane
    EU = eu_ref[...]                     # (M, M) user mixing (scale folded in)
    EA = ea_ref[...]                     # (M, M) AP mixing   (scale folded in)

    def mm(a, b):
        return jnp.dot(a, b, preferred_element_type=jnp.float32)

    def conv(chunks, ws, b):
        # cat(chunks, channel) convolved == sum_i ws[i] @ chunks[i]  (no concat)
        acc = mm(ws[0], chunks[0])
        for w, c in zip(ws[1:], chunks[1:]):
            acc = acc + mm(w, c)
        return acc + b                   # b: (Cout, 1), broadcast along lanes

    def softplus(v):                     # stable, only exp/log/abs/max
        return jnp.maximum(v, 0.0) + jnp.log(1.0 + jnp.exp(-jnp.abs(v)))

    node0 = node1 = None                 # combined node chunks, (2G, M) each
    a_out = l_raw = None
    for i in range(5):                   # both GNNs evaluated together
        # ---- process_edge: phi_i(cat(channel_gains, node)) ----
        if i == 0:                       # layer 0: node == x (columns folded)
            h = conv([x], [pw1x_ref[i]], pb1_ref[i])
        else:
            h = conv([x, node0, node1],
                     [pw1x_ref[i], pw1n0_ref[i], pw1n1_ref[i]], pb1_ref[i])
        h = jnp.maximum(h, 0.0)                           # (4P, M)
        c1m = mm(h[2 * P:4 * P, :], EU)                   # mix users
        h2 = conv([h[:2 * P, :], c1m],
                  [pw2c0_ref[i], pw2c1_ref[i]], pb2_ref[i])
        m0 = h2[:2 * P, :]
        m1 = mm(h2[2 * P:4 * P, :], EU)                   # msgs = [m0 | m1]

        # ---- process_node: gamma_i(cat(node, msgs @ ex_aps / (A-1))) ----
        ag0 = mm(m0, EA)
        ag1 = mm(m1, EA)
        if i == 0:
            hg = conv([x, ag0, ag1],
                      [gw1x_ref[i], gw1a0_ref[i], gw1a1_ref[i]], gb1_ref[i])
        else:
            hg = conv([node0, node1, ag0, ag1],
                      [gw1n0_ref[i], gw1n1_ref[i],
                       gw1a0_ref[i], gw1a1_ref[i]], gb1_ref[i])
        hg = jnp.maximum(hg, 0.0)                         # (4G, M)
        d1m = mm(hg[2 * G:4 * G, :], EU)
        r = conv([hg[:2 * G, :], d1m],
                 [gw2d0_ref[i], gw2d1_ref[i]], gb2_ref[i])
        if i < 4:                                         # gamma1..gamma4
            rr = jnp.maximum(r, 0.0)
            node0 = rr[:2 * G, :]
            node1 = mm(rr[2 * G:4 * G, :], EU)
        else:                                             # gamma5 (final)
            a_out = r[:n_out, :]                          # gnn_a output
            l_raw = r[n_out:2 * n_out, :]                 # gnn_l output

    l = softplus(l_raw + 4.0) + 0.0001
    # Uniform(a, a + l).rsample() == a + u * l  with u ~ U[0,1)
    p_ref[...] = a_out + u_ref[...] * l
    lsum_ref[...] = jnp.sum(l, axis=0, keepdims=True)     # (1, M) support part


# --------------------------------- wrapper ------------------------------------

def gnn_gumbel_forward(x_nchw, packed, hp, u):
    B = x_nchw.shape[0]
    U, A = hp['num_users'], hp['num_aps']
    ifd, n_out = hp['input_feature_dim'], hp['max_conns_ap']
    P, G = hp['phi_feature_dim'], hp['gamma_feature_dim']
    M = B * U * A

    # NCHW -> (C, M): channels on sublanes, B*U*A on the 128-lane axis.
    x_cm = jnp.transpose(x_nchw, (1, 0, 2, 3)).reshape(ifd, M)

    eye = lambda n: jnp.eye(n, dtype=jnp.float32)
    # NOTE: num_users == 1 or num_aps == 1 divides by zero, as in the reference.
    exu = (jnp.ones((U, U), jnp.float32) - eye(U)) / float(U - 1)
    exa = (jnp.ones((A, A), jnp.float32) - eye(A)) / float(A - 1)
    EU = jnp.kron(eye(B), jnp.kron(exu, eye(A)))          # (M, M)
    EA = jnp.kron(eye(B * U), exa)                        # (M, M)

    vmem = pl.BlockSpec(memory_space=pltpu.MemorySpace.VMEM)
    kern = functools.partial(gnn_gumbel_kernel, P=P, G=G, n_out=n_out)
    p_cm, lsum = pl.pallas_call(
        kern,
        out_shape=(jax.ShapeDtypeStruct((n_out, M), jnp.float32),
                   jax.ShapeDtypeStruct((1, M), jnp.float32)),
        in_specs=[vmem] * (4 + len(packed)),
        out_specs=(vmem, vmem),
    )(x_cm, EU, EA, u, *packed)

    p_nchw = jnp.transpose(p_cm.reshape(n_out, B, U, A), (1, 0, 2, 3))
    support = jnp.sum(lsum.reshape(B, U * A), axis=1) / float(n_out * U * A)
    return p_nchw, support


# ------------------------------ parameter init --------------------------------

def init_conv(key, c_in, c_out):
    # torch Conv2d default init convention; weight stored as (c_out, c_in)
    k1, k2 = jax.random.split(key)
    bound = 1.0 / (float(c_in) ** 0.5)
    w = jax.random.uniform(k1, (c_out, c_in), minval=-bound, maxval=bound,
                           dtype=jnp.float32)
    b = jax.random.uniform(k2, (c_out,), minval=-bound, maxval=bound,
                           dtype=jnp.float32)
    return w, b


def init_gnn_params(key, hp):
    P, G, ifd = hp['phi_feature_dim'], hp['gamma_feature_dim'], hp['input_feature_dim']
    phi_out, gamma_out = 2 * P, 2 * G
    if hp['reduced_msg_input']:
        phi_in, phi_in_init = gamma_out + ifd, 2 * ifd
    else:
        phi_in, phi_in_init = 2 * gamma_out + ifd, 3 * ifd
    gamma_in_init, gamma_in = ifd + phi_out, gamma_out + phi_out

    keys = jax.random.split(key, 20)
    phi, gamma = [], []
    for i, cin in enumerate([phi_in_init] + [phi_in] * 4):
        w1, b1 = init_conv(keys[2 * i], cin, phi_out)
        w2, b2 = init_conv(keys[2 * i + 1], phi_out, phi_out)
        phi.append((w1, b1, w2, b2))
    g_outs = [gamma_out] * 4 + [hp['max_conns_ap']]
    for i, (cin, cout) in enumerate(zip([gamma_in_init] + [gamma_in] * 4, g_outs)):
        w1, b1 = init_conv(keys[10 + 2 * i], cin, 2 * G)
        w2, b2 = init_conv(keys[10 + 2 * i + 1], 2 * G, cout)
        gamma.append((w1, b1, w2, b2))
    return {'phi': phi, 'gamma': gamma}


# ---------------------- combined (gnn_a || gnn_l) packing ----------------------

def _rg_rows(wa, wl, K):
    """Role-grouped row stack: per-GNN (2K, C) -> combined (4K, C)."""
    return jnp.concatenate([wa[:K], wl[:K], wa[K:2 * K], wl[K:2 * K]], axis=0)


def _rg_block(wa_cols, wl_cols, K):
    """Weight block consuming a combined chunk laid out [a_part | l_part]."""
    a_full = jnp.concatenate([wa_cols, jnp.zeros_like(wa_cols)], axis=1)
    l_full = jnp.concatenate([jnp.zeros_like(wl_cols), wl_cols], axis=1)
    return _rg_rows(a_full, l_full, K)


def pack_params(pa, plp, hp):
    """Pack both GNNs' conv weights into 16 role-grouped / block-diagonal
    (Cout, Cin) tensors stacked over the 5 layers."""
    assert hp['reduced_msg_input'], "only reduced_msg_input=True is packed"
    P, G = hp['phi_feature_dim'], hp['gamma_feature_dim']
    ifd, n_out = hp['input_feature_dim'], hp['max_conns_ap']

    PW1X, PW1N0, PW1N1, PB1 = [], [], [], []
    PW2C0, PW2C1, PB2 = [], [], []
    GW1X, GW1N0, GW1N1, GW1A0, GW1A1, GB1 = [], [], [], [], [], []
    GW2D0, GW2D1, GB2 = [], [], []

    z_pn = jnp.zeros((4 * P, 2 * G), jnp.float32)
    z_gx = jnp.zeros((4 * G, ifd), jnp.float32)
    z_gn = jnp.zeros((4 * G, 2 * G), jnp.float32)

    for i in range(5):
        w1a, b1a, w2a, b2a = pa['phi'][i]
        w1l, b1l, w2l, b2l = plp['phi'][i]
        if i == 0:  # phi1 input is cat(x, x): fold the two x column blocks
            PW1X.append(_rg_rows(w1a[:, :ifd] + w1a[:, ifd:2 * ifd],
                                 w1l[:, :ifd] + w1l[:, ifd:2 * ifd], P))
            PW1N0.append(z_pn); PW1N1.append(z_pn)
        else:       # phi input columns: [x | node_c0 | node_c1m]
            PW1X.append(_rg_rows(w1a[:, :ifd], w1l[:, :ifd], P))
            PW1N0.append(_rg_block(w1a[:, ifd:ifd + G], w1l[:, ifd:ifd + G], P))
            PW1N1.append(_rg_block(w1a[:, ifd + G:ifd + 2 * G],
                                   w1l[:, ifd + G:ifd + 2 * G], P))
        PB1.append(_rg_rows(b1a[:, None], b1l[:, None], P))
        PW2C0.append(_rg_block(w2a[:, :P], w2l[:, :P], P))
        PW2C1.append(_rg_block(w2a[:, P:2 * P], w2l[:, P:2 * P], P))
        PB2.append(_rg_rows(b2a[:, None], b2l[:, None], P))

        g1a, c1a, g2a, c2a = pa['gamma'][i]
        g1l, c1l, g2l, c2l = plp['gamma'][i]
        if i == 0:  # gamma1 input columns: [x | agg0 | agg1]
            GW1X.append(_rg_rows(g1a[:, :ifd], g1l[:, :ifd], G))
            GW1N0.append(z_gn); GW1N1.append(z_gn)
            GW1A0.append(_rg_block(g1a[:, ifd:ifd + P], g1l[:, ifd:ifd + P], G))
            GW1A1.append(_rg_block(g1a[:, ifd + P:ifd + 2 * P],
                                   g1l[:, ifd + P:ifd + 2 * P], G))
        else:       # gamma input columns: [node_c0 | node_c1m | agg0 | agg1]
            GW1X.append(z_gx)
            GW1N0.append(_rg_block(g1a[:, :G], g1l[:, :G], G))
            GW1N1.append(_rg_block(g1a[:, G:2 * G], g1l[:, G:2 * G], G))
            GW1A0.append(_rg_block(g1a[:, 2 * G:2 * G + P],
                                   g1l[:, 2 * G:2 * G + P], G))
            GW1A1.append(_rg_block(g1a[:, 2 * G + P:2 * G + 2 * P],
                                   g1l[:, 2 * G + P:2 * G + 2 * P], G))
        GB1.append(_rg_rows(c1a[:, None], c1l[:, None], G))

        if i < 4:
            GW2D0.append(_rg_block(g2a[:, :G], g2l[:, :G], G))
            GW2D1.append(_rg_block(g2a[:, G:2 * G], g2l[:, G:2 * G], G))
            GB2.append(_rg_rows(c2a[:, None], c2l[:, None], G))
        else:
            # final layer: rows [0:n_out]=gnn_a, [n_out:2n_out]=gnn_l, rest pad
            def fin(wa_cols, wl_cols):
                blk = jnp.concatenate([
                    jnp.concatenate([wa_cols, jnp.zeros_like(wa_cols)], axis=1),
                    jnp.concatenate([jnp.zeros_like(wl_cols), wl_cols], axis=1)],
                    axis=0)
                return jnp.pad(blk, ((0, 4 * G - blk.shape[0]), (0, 0)))
            GW2D0.append(fin(g2a[:, :G], g2l[:, :G]))
            GW2D1.append(fin(g2a[:, G:2 * G], g2l[:, G:2 * G]))
            bb = jnp.concatenate([c2a, c2l])[:, None]
            GB2.append(jnp.pad(bb, ((0, 4 * G - bb.shape[0]), (0, 0))))

    stack = lambda xs: jnp.stack(xs).astype(jnp.float32)
    return tuple(map(stack, (PW1X, PW1N0, PW1N1, PB1, PW2C0, PW2C1, PB2,
                             GW1X, GW1N0, GW1N1, GW1A0, GW1A1, GB1,
                             GW2D0, GW2D1, GB2)))


# ------------------------- pure-JAX reference (NCHW) ---------------------------

def gnn_reference(x, params, hp):
    """Direct jnp transcription of the PyTorch GNN forward."""
    U, A = hp['num_users'], hp['num_aps']
    P, G = hp['phi_feature_dim'], hp['gamma_feature_dim']
    exU = jnp.ones((U, U), jnp.float32) - jnp.eye(U, dtype=jnp.float32)
    exA = jnp.ones((A, A), jnp.float32) - jnp.eye(A, dtype=jnp.float32)

    def conv(w, b, h):
        return jnp.einsum('oc,bcua->boua', w, h) + b[None, :, None, None]

    def post(h, fd):
        c0 = h[:, :fd]
        c1 = jnp.einsum('uv,bcva->bcua', exU, h[:, fd:2 * fd]) / (U - 1)
        return jnp.concatenate([c0, c1], axis=1)

    def phi(h, pr):
        w1, b1, w2, b2 = pr
        r = post(jax.nn.relu(conv(w1, b1, h)), P)
        return post(conv(w2, b2, r), P)

    def gamma(h, pr, final):
        w1, b1, w2, b2 = pr
        r = post(jax.nn.relu(conv(w1, b1, h)), G)
        r = conv(w2, b2, r)
        if not final:
            r = post(jax.nn.relu(r), G)
        return r

    node = x
    for i in range(5):
        msgs = phi(jnp.concatenate([x, node], axis=1), params['phi'][i])
        agg = jnp.einsum('bcua,av->bcuv', msgs, exA) / (A - 1)
        node = gamma(jnp.concatenate([node, agg], axis=1), params['gamma'][i],
                     final=(i == 4))
    return node


# ------------------------------------ main -------------------------------------

if __name__ == "__main__":
    hp = dict(gamma_feature_dim=8, phi_feature_dim=8, num_users=8, num_aps=8,
              input_feature_dim=4, reduced_msg_input=True, max_conns_ap=4)
    key = jax.random.PRNGKey(0)
    k_in, k_a, k_l, k_u = jax.random.split(key, 4)

    B = 2
    U, A, n_out = hp['num_users'], hp['num_aps'], hp['max_conns_ap']
    M = B * U * A

    # gnn_input: [B, input_feature_dim, num_users, num_aps] (NCHW, like PyTorch)
    gnn_input = jax.random.normal(
        k_in, (B, hp['input_feature_dim'], U, A), dtype=jnp.float32)
    params_a = init_gnn_params(k_a, hp)
    params_l = init_gnn_params(k_l, hp)
    packed = pack_params(params_a, params_l, hp)
    u = jax.random.uniform(k_u, (n_out, M), dtype=jnp.float32)   # U[0,1) draw

    fwd = jax.jit(lambda x, pk, uu: gnn_gumbel_forward(x, pk, hp, uu))
    p, support = fwd(gnn_input, packed, u)
    jax.block_until_ready((p, support))

    # ---- correctness self-check against a pure-JAX reference ----
    a_ref = gnn_reference(gnn_input, params_a, hp)
    l_ref = jax.nn.softplus(gnn_reference(gnn_input, params_l, hp) + 4.0) + 0.0001
    u_nchw = jnp.transpose(u.reshape(n_out, B, U, A), (1, 0, 2, 3))
    p_ref = a_ref + u_nchw * l_ref
    sup_ref = jnp.mean(l_ref, axis=(1, 2, 3))

    assert p.shape == (B, n_out, U, A)
    assert support.shape == (B,)
    assert bool(jnp.all(jnp.isfinite(p))) and bool(jnp.all(jnp.isfinite(support)))
    scale = float(jnp.max(jnp.abs(p_ref))) + 1.0
    err_p = float(jnp.max(jnp.abs(p - p_ref)))
    err_s = float(jnp.max(jnp.abs(support - sup_ref)))
    assert err_p <= 0.1 * scale, f"p mismatch: max err {err_p} (scale {scale})"
    assert err_s <= 0.1 * scale, f"support mismatch: max err {err_s}"
    print("KERNEL_OK")
</pallas_src>

<mosaic_0001>
module attributes {stable_mosaic.version = 11 : i64} {
  func.func @gnn_gumbel_kernel(%arg0: memref<4x128xf32, #tpu.memory_space<vmem>>, %arg1: memref<128x128xf32, #tpu.memory_space<vmem>>, %arg2: memref<128x128xf32, #tpu.memory_space<vmem>>, %arg3: memref<4x128xf32, #tpu.memory_space<vmem>>, %arg4: memref<5x32x4xf32, #tpu.memory_space<vmem>>, %arg5: memref<5x32x16xf32, #tpu.memory_space<vmem>>, %arg6: memref<5x32x16xf32, #tpu.memory_space<vmem>>, %arg7: memref<5x32x1xf32, #tpu.memory_space<vmem>>, %arg8: memref<5x32x16xf32, #tpu.memory_space<vmem>>, %arg9: memref<5x32x16xf32, #tpu.memory_space<vmem>>, %arg10: memref<5x32x1xf32, #tpu.memory_space<vmem>>, %arg11: memref<5x32x4xf32, #tpu.memory_space<vmem>>, %arg12: memref<5x32x16xf32, #tpu.memory_space<vmem>>, %arg13: memref<5x32x16xf32, #tpu.memory_space<vmem>>, %arg14: memref<5x32x16xf32, #tpu.memory_space<vmem>>, %arg15: memref<5x32x16xf32, #tpu.memory_space<vmem>>, %arg16: memref<5x32x1xf32, #tpu.memory_space<vmem>>, %arg17: memref<5x32x16xf32, #tpu.memory_space<vmem>>, %arg18: memref<5x32x16xf32, #tpu.memory_space<vmem>>, %arg19: memref<5x32x1xf32, #tpu.memory_space<vmem>>, %arg20: memref<4x128xf32, #tpu.memory_space<vmem>>, %arg21: memref<1x128xf32, #tpu.memory_space<vmem>>) attributes {dimension_semantics = [], scalar_prefetch = 0 : i64, scratch_operands = 0 : i64, tpu.core_type = #tpu.core_type<tc>} {
    %c0 = arith.constant 0 : index
    %c0_0 = arith.constant 0 : index
    %0 = vector.load %arg0[%c0, %c0_0] : memref<4x128xf32, #tpu.memory_space<vmem>>, vector<4x128xf32>
    %c0_1 = arith.constant 0 : index
    %c0_2 = arith.constant 0 : index
    %1 = vector.load %arg1[%c0_1, %c0_2] : memref<128x128xf32, #tpu.memory_space<vmem>>, vector<128x128xf32>
    %c0_3 = arith.constant 0 : index
    %c0_4 = arith.constant 0 : index
    %2 = vector.load %arg2[%c0_3, %c0_4] : memref<128x128xf32, #tpu.memory_space<vmem>>, vector<128x128xf32>
    %c0_5 = arith.constant 0 : index
    %c0_6 = arith.constant 0 : index
    %c0_7 = arith.constant 0 : index
    %3 = vector.load %arg4[%c0_5, %c0_6, %c0_7] : memref<5x32x4xf32, #tpu.memory_space<vmem>>, vector<1x32x4xf32>
    %4 = vector.shape_cast %3 : vector<1x32x4xf32> to vector<32x4xf32>
    %c0_8 = arith.constant 0 : index
    %c0_9 = arith.constant 0 : index
    %c0_10 = arith.constant 0 : index
    %5 = vector.load %arg7[%c0_8, %c0_9, %c0_10] : memref<5x32x1xf32, #tpu.memory_space<vmem>>, vector<1x32x1xf32>
    %6 = vector.shape_cast %5 : vector<1x32x1xf32> to vector<32x1xf32>
    %cst = arith.constant dense<0.000000e+00> : vector<32x128xf32>
    %7 = tpu.matmul %4, %0, %cst {dimension_numbers = #tpu.dot_dimension_numbers<[1], [0], [0], [1], [0, 0, 1, 1], [], []>} : vector<32x4xf32>, vector<4x128xf32>, vector<32x128xf32> -> vector<32x128xf32>
    %8 = vector.broadcast %6 : vector<32x1xf32> to vector<32x128xf32>
    %9 = arith.addf %7, %8 : vector<32x128xf32>
    %cst_11 = arith.constant 0.000000e+00 : f32
    %10 = vector.broadcast %cst_11 : f32 to vector<32x128xf32>
    %11 = arith.maximumf %9, %10 : vector<32x128xf32>
    %12 = vector.extract_strided_slice %11 {offsets = [16, 0], sizes = [16, 128], strides = [1, 1]} : vector<32x128xf32> to vector<16x128xf32>
    %cst_12 = arith.constant dense<0.000000e+00> : vector<16x128xf32>
    %13 = tpu.matmul %12, %1, %cst_12 {dimension_numbers = #tpu.dot_dimension_numbers<[1], [0], [0], [1], [0, 0, 1, 1], [], []>} : vector<16x128xf32>, vector<128x128xf32>, vector<16x128xf32> -> vector<16x128xf32>
    %14 = vector.extract_strided_slice %11 {offsets = [0, 0], sizes = [16, 128], strides = [1, 1]} : vector<32x128xf32> to vector<16x128xf32>
    %c0_13 = arith.constant 0 : index
    %c0_14 = arith.constant 0 : index
    %c0_15 = arith.constant 0 : index
    %15 = vector.load %arg8[%c0_13, %c0_14, %c0_15] : memref<5x32x16xf32, #tpu.memory_space<vmem>>, vector<1x32x16xf32>
    %16 = vector.shape_cast %15 : vector<1x32x16xf32> to vector<32x16xf32>
    %c0_16 = arith.constant 0 : index
    %c0_17 = arith.constant 0 : index
    %c0_18 = arith.constant 0 : index
    %17 = vector.load %arg9[%c0_16, %c0_17, %c0_18] : memref<5x32x16xf32, #tpu.memory_space<vmem>>, vector<1x32x16xf32>
    %18 = vector.shape_cast %17 : vector<1x32x16xf32> to vector<32x16xf32>
    %c0_19 = arith.constant 0 : index
    %c0_20 = arith.constant 0 : index
    %c0_21 = arith.constant 0 : index
    %19 = vector.load %arg10[%c0_19, %c0_20, %c0_21] : memref<5x32x1xf32, #tpu.memory_space<vmem>>, vector<1x32x1xf32>
    %20 = vector.shape_cast %19 : vector<1x32x1xf32> to vector<32x1xf32>
    %cst_22 = arith.constant dense<0.000000e+00> : vector<32x128xf32>
    %21 = tpu.matmul %16, %14, %cst_22 {dimension_numbers = #tpu.dot_dimension_numbers<[1], [0], [0], [1], [0, 0, 1, 1], [], []>} : vector<32x16xf32>, vector<16x128xf32>, vector<32x128xf32> -> vector<32x128xf32>
    %cst_23 = arith.constant dense<0.000000e+00> : vector<32x128xf32>
    %22 = tpu.matmul %18, %13, %cst_23 {dimension_numbers = #tpu.dot_dimension_numbers<[1], [0], [0], [1], [0, 0, 1, 1], [], []>} : vector<32x16xf32>, vector<16x128xf32>, vector<32x128xf32> -> vector<32x128xf32>
    %23 = arith.addf %21, %22 : vector<32x128xf32>
    %24 = vector.broadcast %20 : vector<32x1xf32> to vector<32x128xf32>
    %25 = arith.addf %23, %24 : vector<32x128xf32>
    %26 = vector.extract_strided_slice %25 {offsets = [0, 0], sizes = [16, 128], strides = [1, 1]} : vector<32x128xf32> to vector<16x128xf32>
    %27 = vector.extract_strided_slice %25 {offsets = [16, 0], sizes = [16, 128], strides = [1, 1]} : vector<32x128xf32> to vector<16x128xf32>
    %cst_24 = arith.constant dense<0.000000e+00> : vector<16x128xf32>
    %28 = tpu.matmul %27, %1, %cst_24 {dimension_numbers = #tpu.dot_dimension_numbers<[1], [0], [0], [1], [0, 0, 1, 1], [], []>} : vector<16x128xf32>, vector<128x128xf32>, vector<16x128xf32> -> vector<16x128xf32>
    %cst_25 = arith.constant dense<0.000000e+00> : vector<16x128xf32>
    %29 = tpu.matmul %26, %2, %cst_25 {dimension_numbers = #tpu.dot_dimension_numbers<[1], [0], [0], [1], [0, 0, 1, 1], [], []>} : vector<16x128xf32>, vector<128x128xf32>, vector<16x128xf32> -> vector<16x128xf32>
    %cst_26 = arith.constant dense<0.000000e+00> : vector<16x128xf32>
    %30 = tpu.matmul %28, %2, %cst_26 {dimension_numbers = #tpu.dot_dimension_numbers<[1], [0], [0], [1], [0, 0, 1, 1], [], []>} : vector<16x128xf32>, vector<128x128xf32>, vector<16x128xf32> -> vector<16x128xf32>
    %c0_27 = arith.constant 0 : index
    %c0_28 = arith.constant 0 : index
    %c0_29 = arith.constant 0 : index
    %31 = vector.load %arg11[%c0_27, %c0_28, %c0_29] : memref<5x32x4xf32, #tpu.memory_space<vmem>>, vector<1x32x4xf32>
    %32 = vector.shape_cast %31 : vector<1x32x4xf32> to vector<32x4xf32>
    %c0_30 = arith.constant 0 : index
    %c0_31 = arith.constant 0 : index
    %c0_32 = arith.constant 0 : index
    %33 = vector.load %arg14[%c0_30, %c0_31, %c0_32] : memref<5x32x16xf32, #tpu.memory_space<vmem>>, vector<1x32x16xf32>
    %34 = vector.shape_cast %33 : vector<1x32x16xf32> to vector<32x16xf32>
    %c0_33 = arith.constant 0 : index
    %c0_34 = arith.constant 0 : index
    %c0_35 = arith.constant 0 : index
    %35 = vector.load %arg15[%c0_33, %c0_34, %c0_35] : memref<5x32x16xf32, #tpu.memory_space<vmem>>, vector<1x32x16xf32>
    %36 = vector.shape_cast %35 : vector<1x32x16xf32> to vector<32x16xf32>
    %c0_36 = arith.constant 0 : index
    %c0_37 = arith.constant 0 : index
    %c0_38 = arith.constant 0 : index
    %37 = vector.load %arg16[%c0_36, %c0_37, %c0_38] : memref<5x32x1xf32, #tpu.memory_space<vmem>>, vector<1x32x1xf32>
    %38 = vector.shape_cast %37 : vector<1x32x1xf32> to vector<32x1xf32>
    %cst_39 = arith.constant dense<0.000000e+00> : vector<32x128xf32>
    %39 = tpu.matmul %32, %0, %cst_39 {dimension_numbers = #tpu.dot_dimension_numbers<[1], [0], [0], [1], [0, 0, 1, 1], [], []>} : vector<32x4xf32>, vector<4x128xf32>, vector<32x128xf32> -> vector<32x128xf32>
    %cst_40 = arith.constant dense<0.000000e+00> : vector<32x128xf32>
    %40 = tpu.matmul %34, %29, %cst_40 {dimension_numbers = #tpu.dot_dimension_numbers<[1], [0], [0], [1], [0, 0, 1, 1], [], []>} : vector<32x16xf32>, vector<16x128xf32>, vector<32x128xf32> -> vector<32x128xf32>
    %41 = arith.addf %39, %40 : vector<32x128xf32>
    %cst_41 = arith.constant dense<0.000000e+00> : vector<32x128xf32>
    %42 = tpu.matmul %36, %30, %cst_41 {dimension_numbers = #tpu.dot_dimension_numbers<[1], [0], [0], [1], [0, 0, 1, 1], [], []>} : vector<32x16xf32>, vector<16x128xf32>, vector<32x128xf32> -> vector<32x128xf32>
    %43 = arith.addf %41, %42 : vector<32x128xf32>
    %44 = vector.broadcast %38 : vector<32x1xf32> to vector<32x128xf32>
    %45 = arith.addf %43, %44 : vector<32x128xf32>
    %cst_42 = arith.constant 0.000000e+00 : f32
    %46 = vector.broadcast %cst_42 : f32 to vector<32x128xf32>
    %47 = arith.maximumf %45, %46 : vector<32x128xf32>
    %48 = vector.extract_strided_slice %47 {offsets = [16, 0], sizes = [16, 128], strides = [1, 1]} : vector<32x128xf32> to vector<16x128xf32>
    %cst_43 = arith.constant dense<0.000000e+00> : vector<16x128xf32>
    %49 = tpu.matmul %48, %1, %cst_43 {dimension_numbers = #tpu.dot_dimension_numbers<[1], [0], [0], [1], [0, 0, 1, 1], [], []>} : vector<16x128xf32>, vector<128x128xf32>, vector<16x128xf32> -> vector<16x128xf32>
    %50 = vector.extract_strided_slice %47 {offsets = [0, 0], sizes = [16, 128], strides = [1, 1]} : vector<32x128xf32> to vector<16x128xf32>
    %c0_44 = arith.constant 0 : index
    %c0_45 = arith.constant 0 : index
    %c0_46 = arith.constant 0 : index
    %51 = vector.load %arg17[%c0_44, %c0_45, %c0_46] : memref<5x32x16xf32, #tpu.memory_space<vmem>>, vector<1x32x16xf32>
    %52 = vector.shape_cast %51 : vector<1x32x16xf32> to vector<32x16xf32>
    %c0_47 = arith.constant 0 : index
    %c0_48 = arith.constant 0 : index
    %c0_49 = arith.constant 0 : index
    %53 = vector.load %arg18[%c0_47, %c0_48, %c0_49] : memref<5x32x16xf32, #tpu.memory_space<vmem>>, vector<1x32x16xf32>
    %54 = vector.shape_cast %53 : vector<1x32x16xf32> to vector<32x16xf32>
    %c0_50 = arith.constant 0 : index
    %c0_51 = arith.constant 0 : index
    %c0_52 = arith.constant 0 : index
    %55 = vector.load %arg19[%c0_50, %c0_51, %c0_52] : memref<5x32x1xf32, #tpu.memory_space<vmem>>, vector<1x32x1xf32>
    %56 = vector.shape_cast %55 : vector<1x32x1xf32> to vector<32x1xf32>
    %cst_53 = arith.constant dense<0.000000e+00> : vector<32x128xf32>
    %57 = tpu.matmul %52, %50, %cst_53 {dimension_numbers = #tpu.dot_dimension_numbers<[1], [0], [0], [1], [0, 0, 1, 1], [], []>} : vector<32x16xf32>, vector<16x128xf32>, vector<32x128xf32> -> vector<32x128xf32>
    %cst_54 = arith.constant dense<0.000000e+00> : vector<32x128xf32>
    %58 = tpu.matmul %54, %49, %cst_54 {dimension_numbers = #tpu.dot_dimension_numbers<[1], [0], [0], [1], [0, 0, 1, 1], [], []>} : vector<32x16xf32>, vector<16x128xf32>, vector<32x128xf32> -> vector<32x128xf32>
    %59 = arith.addf %57, %58 : vector<32x128xf32>
    %60 = vector.broadcast %56 : vector<32x1xf32> to vector<32x128xf32>
    %61 = arith.addf %59, %60 : vector<32x128xf32>
    %cst_55 = arith.constant 0.000000e+00 : f32
    %62 = vector.broadcast %cst_55 : f32 to vector<32x128xf32>
    %63 = arith.maximumf %61, %62 : vector<32x128xf32>
    %64 = vector.extract_strided_slice %63 {offsets = [0, 0], sizes = [16, 128], strides = [1, 1]} : vector<32x128xf32> to vector<16x128xf32>
    %65 = vector.extract_strided_slice %63 {offsets = [16, 0], sizes = [16, 128], strides = [1, 1]} : vector<32x128xf32> to vector<16x128xf32>
    %cst_56 = arith.constant dense<0.000000e+00> : vector<16x128xf32>
    %66 = tpu.matmul %65, %1, %cst_56 {dimension_numbers = #tpu.dot_dimension_numbers<[1], [0], [0], [1], [0, 0, 1, 1], [], []>} : vector<16x128xf32>, vector<128x128xf32>, vector<16x128xf32> -> vector<16x128xf32>
    %c1 = arith.constant 1 : index
    %c0_57 = arith.constant 0 : index
    %c0_58 = arith.constant 0 : index
    %67 = vector.load %arg4[%c1, %c0_57, %c0_58] : memref<5x32x4xf32, #tpu.memory_space<vmem>>, vector<1x32x4xf32>
    %68 = vector.shape_cast %67 : vector<1x32x4xf32> to vector<32x4xf32>
    %c1_59 = arith.constant 1 : index
    %c0_60 = arith.constant 0 : index
    %c0_61 = arith.constant 0 : index
    %69 = vector.load %arg5[%c1_59, %c0_60, %c0_61] : memref<5x32x16xf32, #tpu.memory_space<vmem>>, vector<1x32x16xf32>
    %70 = vector.shape_cast %69 : vector<1x32x16xf32> to vector<32x16xf32>
    %c1_62 = arith.constant 1 : index
    %c0_63 = arith.constant 0 : index
    %c0_64 = arith.constant 0 : index
    %71 = vector.load %arg6[%c1_62, %c0_63, %c0_64] : memref<5x32x16xf32, #tpu.memory_space<vmem>>, vector<1x32x16xf32>
    %72 = vector.shape_cast %71 : vector<1x32x16xf32> to vector<32x16xf32>
    %c1_65 = arith.constant 1 : index
    %c0_66 = arith.constant 0 : index
    %c0_67 = arith.constant 0 : index
    %73 = vector.load %arg7[%c1_65, %c0_66, %c0_67] : memref<5x32x1xf32, #tpu.memory_space<vmem>>, vector<1x32x1xf32>
    %74 = vector.shape_cast %73 : vector<1x32x1xf32> to vector<32x1xf32>
    %cst_68 = arith.constant dense<0.000000e+00> : vector<32x128xf32>
    %75 = tpu.matmul %68, %0, %cst_68 {dimension_numbers = #tpu.dot_dimension_numbers<[1], [0], [0], [1], [0, 0, 1, 1], [], []>} : vector<32x4xf32>, vector<4x128xf32>, vector<32x128xf32> -> vector<32x128xf32>
    %cst_69 = arith.constant dense<0.000000e+00> : vector<32x128xf32>
    %76 = tpu.matmul %70, %64, %cst_69 {dimension_numbers = #tpu.dot_dimension_numbers<[1], [0], [0], [1], [0, 0, 1, 1], [], []>} : vector<32x16xf32>, vector<16x128xf32>, vector<32x128xf32> -> vector<32x128xf32>
    %77 = arith.addf %75, %76 : vector<32x128xf32>
    %cst_70 = arith.constant dense<0.000000e+00> : vector<32x128xf32>
    %78 = tpu.matmul %72, %66, %cst_70 {dimension_numbers = #tpu.dot_dimension_numbers<[1], [0], [0], [1], [0, 0, 1, 1], [], []>} : vector<32x16xf32>, vector<16x128xf32>, vector<32x128xf32> -> vector<32x128xf32>
    %79 = arith.addf %77, %78 : vector<32x128xf32>
    %80 = vector.broadcast %74 : vector<32x1xf32> to vector<32x128xf32>
    %81 = arith.addf %79, %80 : vector<32x128xf32>
    %cst_71 = arith.constant 0.000000e+00 : f32
    %82 = vector.broadcast %cst_71 : f32 to vector<32x128xf32>
    %83 = arith.maximumf %81, %82 : vector<32x128xf32>
    %84 = vector.extract_strided_slice %83 {offsets = [16, 0], sizes = [16, 128], strides = [1, 1]} : vector<32x128xf32> to vector<16x128xf32>
    %cst_72 = arith.constant dense<0.000000e+00> : vector<16x128xf32>
    %85 = tpu.matmul %84, %1, %cst_72 {dimension_numbers = #tpu.dot_dimension_numbers<[1], [0], [0], [1], [0, 0, 1, 1], [], []>} : vector<16x128xf32>, vector<128x128xf32>, vector<16x128xf32> -> vector<16x128xf32>
    %86 = vector.extract_strided_slice %83 {offsets = [0, 0], sizes = [16, 128], strides = [1, 1]} : vector<32x128xf32> to vector<16x128xf32>
    %c1_73 = arith.constant 1 : index
    %c0_74 = arith.constant 0 : index
    %c0_75 = arith.constant 0 : index
    %87 = vector.load %arg8[%c1_73, %c0_74, %c0_75] : memref<5x32x16xf32, #tpu.memory_space<vmem>>, vector<1x32x16xf32>
    %88 = vector.shape_cast %87 : vector<1x32x16xf32> to vector<32x16xf32>
    %c1_76 = arith.constant 1 : index
    %c0_77 = arith.constant 0 : index
    %c0_78 = arith.constant 0 : index
    %89 = vector.load %arg9[%c1_76, %c0_77, %c0_78] : memref<5x32x16xf32, #tpu.memory_space<vmem>>, vector<1x32x16xf32>
    %90 = vector.shape_cast %89 : vector<1x32x16xf32> to vector<32x16xf32>
    %c1_79 = arith.constant 1 : index
    %c0_80 = arith.constant 0 : index
    %c0_81 = arith.constant 0 : index
    %91 = vector.load %arg10[%c1_79, %c0_80, %c0_81] : memref<5x32x1xf32, #tpu.memory_space<vmem>>, vector<1x32x1xf32>
    %92 = vector.shape_cast %91 : vector<1x32x1xf32> to vector<32x1xf32>
    %cst_82 = arith.constant dense<0.000000e+00> : vector<32x128xf32>
    %93 = tpu.matmul %88, %86, %cst_82 {dimension_numbers = #tpu.dot_dimension_numbers<[1], [0], [0], [1], [0, 0, 1, 1], [], []>} : vector<32x16xf32>, vector<16x128xf32>, vector<32x128xf32> -> vector<32x128xf32>
    %cst_83 = arith.constant dense<0.000000e+00> : vector<32x128xf32>
    %94 = tpu.matmul %90, %85, %cst_83 {dimension_numbers = #tpu.dot_dimension_numbers<[1], [0], [0], [1], [0, 0, 1, 1], [], []>} : vector<32x16xf32>, vector<16x128xf32>, vector<32x128xf32> -> vector<32x128xf32>
    %95 = arith.addf %93, %94 : vector<32x128xf32>
    %96 = vector.broadcast %92 : vector<32x1xf32> to vector<32x128xf32>
    %97 = arith.addf %95, %96 : vector<32x128xf32>
    %98 = vector.extract_strided_slice %97 {offsets = [0, 0], sizes = [16, 128], strides = [1, 1]} : vector<32x128xf32> to vector<16x128xf32>
    %99 = vector.extract_strided_slice %97 {offsets = [16, 0], sizes = [16, 128], strides = [1, 1]} : vector<32x128xf32> to vector<16x128xf32>
    %cst_84 = arith.constant dense<0.000000e+00> : vector<16x128xf32>
    %100 = tpu.matmul %99, %1, %cst_84 {dimension_numbers = #tpu.dot_dimension_numbers<[1], [0], [0], [1], [0, 0, 1, 1], [], []>} : vector<16x128xf32>, vector<128x128xf32>, vector<16x128xf32> -> vector<16x128xf32>
    %cst_85 = arith.constant dense<0.000000e+00> : vector<16x128xf32>
    %101 = tpu.matmul %98, %2, %cst_85 {dimension_numbers = #tpu.dot_dimension_numbers<[1], [0], [0], [1], [0, 0, 1, 1], [], []>} : vector<16x128xf32>, vector<128x128xf32>, vector<16x128xf32> -> vector<16x128xf32>
    %cst_86 = arith.constant dense<0.000000e+00> : vector<16x128xf32>
    %102 = tpu.matmul %100, %2, %cst_86 {dimension_numbers = #tpu.dot_dimension_numbers<[1], [0], [0], [1], [0, 0, 1, 1], [], []>} : vector<16x128xf32>, vector<128x128xf32>, vector<16x128xf32> -> vector<16x128xf32>
    %c1_87 = arith.constant 1 : index
    %c0_88 = arith.constant 0 : index
    %c0_89 = arith.constant 0 : index
    %103 = vector.load %arg12[%c1_87, %c0_88, %c0_89] : memref<5x32x16xf32, #tpu.memory_space<vmem>>, vector<1x32x16xf32>
    %104 = vector.shape_cast %103 : vector<1x32x16xf32> to vector<32x16xf32>
    %c1_90 = arith.constant 1 : index
    %c0_91 = arith.constant 0 : index
    %c0_92 = arith.constant 0 : index
    %105 = vector.load %arg13[%c1_90, %c0_91, %c0_92] : memref<5x32x16xf32, #tpu.memory_space<vmem>>, vector<1x32x16xf32>
    %106 = vector.shape_cast %105 : vector<1x32x16xf32> to vector<32x16xf32>
    %c1_93 = arith.constant 1 : index
    %c0_94 = arith.constant 0 : index
    %c0_95 = arith.constant 0 : index
    %107 = vector.load %arg14[%c1_93, %c0_94, %c0_95] : memref<5x32x16xf32, #tpu.memory_space<vmem>>, vector<1x32x16xf32>
    %108 = vector.shape_cast %107 : vector<1x32x16xf32> to vector<32x16xf32>
    %c1_96 = arith.constant 1 : index
    %c0_97 = arith.constant 0 : index
    %c0_98 = arith.constant 0 : index
    %109 = vector.load %arg15[%c1_96, %c0_97, %c0_98] : memref<5x32x16xf32, #tpu.memory_space<vmem>>, vector<1x32x16xf32>
    %110 = vector.shape_cast %109 : vector<1x32x16xf32> to vector<32x16xf32>
    %c1_99 = arith.constant 1 : index
    %c0_100 = arith.constant 0 : index
    %c0_101 = arith.constant 0 : index
    %111 = vector.load %arg16[%c1_99, %c0_100, %c0_101] : memref<5x32x1xf32, #tpu.memory_space<vmem>>, vector<1x32x1xf32>
    %112 = vector.shape_cast %111 : vector<1x32x1xf32> to vector<32x1xf32>
    %cst_102 = arith.constant dense<0.000000e+00> : vector<32x128xf32>
    %113 = tpu.matmul %104, %64, %cst_102 {dimension_numbers = #tpu.dot_dimension_numbers<[1], [0], [0], [1], [0, 0, 1, 1], [], []>} : vector<32x16xf32>, vector<16x128xf32>, vector<32x128xf32> -> vector<32x128xf32>
    %cst_103 = arith.constant dense<0.000000e+00> : vector<32x128xf32>
    %114 = tpu.matmul %106, %66, %cst_103 {dimension_numbers = #tpu.dot_dimension_numbers<[1], [0], [0], [1], [0, 0, 1, 1], [], []>} : vector<32x16xf32>, vector<16x128xf32>, vector<32x128xf32> -> vector<32x128xf32>
    %115 = arith.addf %113, %114 : vector<32x128xf32>
    %cst_104 = arith.constant dense<0.000000e+00> : vector<32x128xf32>
    %116 = tpu.matmul %108, %101, %cst_104 {dimension_numbers = #tpu.dot_dimension_numbers<[1], [0], [0], [1], [0, 0, 1, 1], [], []>} : vector<32x16xf32>, vector<16x128xf32>, vector<32x128xf32> -> vector<32x128xf32>
    %117 = arith.addf %115, %116 : vector<32x128xf32>
    %cst_105 = arith.constant dense<0.000000e+00> : vector<32x128xf32>
    %118 = tpu.matmul %110, %102, %cst_105 {dimension_numbers = #tpu.dot_dimension_numbers<[1], [0], [0], [1], [0, 0, 1, 1], [], []>} : vector<32x16xf32>, vector<16x128xf32>, vector<32x128xf32> -> vector<32x128xf32>
    %119 = arith.addf %117, %118 : vector<32x128xf32>
    %120 = vector.broadcast %112 : vector<32x1xf32> to vector<32x128xf32>
    %121 = arith.addf %119, %120 : vector<32x128xf32>
    %cst_106 = arith.constant 0.000000e+00 : f32
    %122 = vector.broadcast %cst_106 : f32 to vector<32x128xf32>
    %123 = arith.maximumf %121, %122 : vector<32x128xf32>
    %124 = vector.extract_strided_slice %123 {offsets = [16, 0], sizes = [16, 128], strides = [1, 1]} : vector<32x128xf32> to vector<16x128xf32>
    %cst_107 = arith.constant dense<0.000000e+00> : vector<16x128xf32>
    %125 = tpu.matmul %124, %1, %cst_107 {dimension_numbers = #tpu.dot_dimension_numbers<[1], [0], [0], [1], [0, 0, 1, 1], [], []>} : vector<16x128xf32>, vector<128x128xf32>, vector<16x128xf32> -> vector<16x128xf32>
    %126 = vector.extract_strided_slice %123 {offsets = [0, 0], sizes = [16, 128], strides = [1, 1]} : vector<32x128xf32> to vector<16x128xf32>
    %c1_108 = arith.constant 1 : index
    %c0_109 = arith.constant 0 : index
    %c0_110 = arith.constant 0 : index
    %127 = vector.load %arg17[%c1_108, %c0_109, %c0_110] : memref<5x32x16xf32, #tpu.memory_space<vmem>>, vector<1x32x16xf32>
    %128 = vector.shape_cast %127 : vector<1x32x16xf32> to vector<32x16xf32>
    %c1_111 = arith.constant 1 : index
    %c0_112 = arith.constant 0 : index
    %c0_113 = arith.constant 0 : index
    %129 = vector.load %arg18[%c1_111, %c0_112, %c0_113] : memref<5x32x16xf32, #tpu.memory_space<vmem>>, vector<1x32x16xf32>
    %130 = vector.shape_cast %129 : vector<1x32x16xf32> to vector<32x16xf32>
    %c1_114 = arith.constant 1 : index
    %c0_115 = arith.constant 0 : index
    %c0_116 = arith.constant 0 : index
    %131 = vector.load %arg19[%c1_114, %c0_115, %c0_116] : memref<5x32x1xf32, #tpu.memory_space<vmem>>, vector<1x32x1xf32>
    %132 = vector.shape_cast %131 : vector<1x32x1xf32> to vector<32x1xf32>
    %cst_117 = arith.constant dense<0.000000e+00> : vector<32x128xf32>
    %133 = tpu.matmul %128, %126, %cst_117 {dimension_numbers = #tpu.dot_dimension_numbers<[1], [0], [0], [1], [0, 0, 1, 1], [], []>} : vector<32x16xf32>, vector<16x128xf32>, vector<32x128xf32> -> vector<32x128xf32>
    %cst_118 = arith.constant dense<0.000000e+00> : vector<32x128xf32>
    %134 = tpu.matmul %130, %125, %cst_118 {dimension_numbers = #tpu.dot_dimension_numbers<[1], [0], [0], [1], [0, 0, 1, 1], [], []>} : vector<32x16xf32>, vector<16x128xf32>, vector<32x128xf32> -> vector<32x128xf32>
    %135 = arith.addf %133, %134 : vector<32x128xf32>
    %136 = vector.broadcast %132 : vector<32x1xf32> to vector<32x128xf32>
    %137 = arith.addf %135, %136 : vector<32x128xf32>
    %cst_119 = arith.constant 0.000000e+00 : f32
    %138 = vector.broadcast %cst_119 : f32 to vector<32x128xf32>
    %139 = arith.maximumf %137, %138 : vector<32x128xf32>
    %140 = vector.extract_strided_slice %139 {offsets = [0, 0], sizes = [16, 128], strides = [1, 1]} : vector<32x128xf32> to vector<16x128xf32>
    %141 = vector.extract_strided_slice %139 {offsets = [16, 0], sizes = [16, 128], strides = [1, 1]} : vector<32x128xf32> to vector<16x128xf32>
    %cst_120 = arith.constant dense<0.000000e+00> : vector<16x128xf32>
    %142 = tpu.matmul %141, %1, %cst_120 {dimension_numbers = #tpu.dot_dimension_numbers<[1], [0], [0], [1], [0, 0, 1, 1], [], []>} : vector<16x128xf32>, vector<128x128xf32>, vector<16x128xf32> -> vector<16x128xf32>
    %c2 = arith.constant 2 : index
    %c0_121 = arith.constant 0 : index
    %c0_122 = arith.constant 0 : index
    %143 = vector.load %arg4[%c2, %c0_121, %c0_122] : memref<5x32x4xf32, #tpu.memory_space<vmem>>, vector<1x32x4xf32>
    %144 = vector.shape_cast %143 : vector<1x32x4xf32> to vector<32x4xf32>
    %c2_123 = arith.constant 2 : index
    %c0_124 = arith.constant 0 : index
    %c0_125 = arith.constant 0 : index
    %145 = vector.load %arg5[%c2_123, %c0_124, %c0_125] : memref<5x32x16xf32, #tpu.memory_space<vmem>>, vector<1x32x16xf32>
    %146 = vector.shape_cast %145 : vector<1x32x16xf32> to vector<32x16xf32>
    %c2_126 = arith.constant 2 : index
    %c0_127 = arith.constant 0 : index
    %c0_128 = arith.constant 0 : index
    %147 = vector.load %arg6[%c2_126, %c0_127, %c0_128] : memref<5x32x16xf32, #tpu.memory_space<vmem>>, vector<1x32x16xf32>
    %148 = vector.shape_cast %147 : vector<1x32x16xf32> to vector<32x16xf32>
    %c2_129 = arith.constant 2 : index
    %c0_130 = arith.constant 0 : index
    %c0_131 = arith.constant 0 : index
    %149 = vector.load %arg7[%c2_129, %c0_130, %c0_131] : memref<5x32x1xf32, #tpu.memory_space<vmem>>, vector<1x32x1xf32>
    %150 = vector.shape_cast %149 : vector<1x32x1xf32> to vector<32x1xf32>
    %cst_132 = arith.constant dense<0.000000e+00> : vector<32x128xf32>
    %151 = tpu.matmul %144, %0, %cst_132 {dimension_numbers = #tpu.dot_dimension_numbers<[1], [0], [0], [1], [0, 0, 1, 1], [], []>} : vector<32x4xf32>, vector<4x128xf32>, vector<32x128xf32> -> vector<32x128xf32>
    %cst_133 = arith.constant dense<0.000000e+00> : vector<32x128xf32>
    %152 = tpu.matmul %146, %140, %cst_133 {dimension_numbers = #tpu.dot_dimension_numbers<[1], [0], [0], [1], [0, 0, 1, 1], [], []>} : vector<32x16xf32>, vector<16x128xf32>, vector<32x128xf32> -> vector<32x128xf32>
    %153 = arith.addf %151, %152 : vector<32x128xf32>
    %cst_134 = arith.constant dense<0.000000e+00> : vector<32x128xf32>
    %154 = tpu.matmul %148, %142, %cst_134 {dimension_numbers = #tpu.dot_dimension_numbers<[1], [0], [0], [1], [0, 0, 1, 1], [], []>} : vector<32x16xf32>, vector<16x128xf32>, vector<32x128xf32> -> vector<32x128xf32>
    %155 = arith.addf %153, %154 : vector<32x128xf32>
    %156 = vector.broadcast %150 : vector<32x1xf32> to vector<32x128xf32>
    %157 = arith.addf %155, %156 : vector<32x128xf32>
    %cst_135 = arith.constant 0.000000e+00 : f32
    %158 = vector.broadcast %cst_135 : f32 to vector<32x128xf32>
    %159 = arith.maximumf %157, %158 : vector<32x128xf32>
    %160 = vector.extract_strided_slice %159 {offsets = [16, 0], sizes = [16, 128], strides = [1, 1]} : vector<32x128xf32> to vector<16x128xf32>
    %cst_136 = arith.constant dense<0.000000e+00> : vector<16x128xf32>
    %161 = tpu.matmul %160, %1, %cst_136 {dimension_numbers = #tpu.dot_dimension_numbers<[1], [0], [0], [1], [0, 0, 1, 1], [], []>} : vector<16x128xf32>, vector<128x128xf32>, vector<16x128xf32> -> vector<16x128xf32>
    %162 = vector.extract_strided_slice %159 {offsets = [0, 0], sizes = [16, 128], strides = [1, 1]} : vector<32x128xf32> to vector<16x128xf32>
    %c2_137 = arith.constant 2 : index
    %c0_138 = arith.constant 0 : index
    %c0_139 = arith.constant 0 : index
    %163 = vector.load %arg8[%c2_137, %c0_138, %c0_139] : memref<5x32x16xf32, #tpu.memory_space<vmem>>, vector<1x32x16xf32>
    %164 = vector.shape_cast %163 : vector<1x32x16xf32> to vector<32x16xf32>
    %c2_140 = arith.constant 2 : index
    %c0_141 = arith.constant 0 : index
    %c0_142 = arith.constant 0 : index
    %165 = vector.load %arg9[%c2_140, %c0_141, %c0_142] : memref<5x32x16xf32, #tpu.memory_space<vmem>>, vector<1x32x16xf32>
    %166 = vector.shape_cast %165 : vector<1x32x16xf32> to vector<32x16xf32>
    %c2_143 = arith.constant 2 : index
    %c0_144 = arith.constant 0 : index
    %c0_145 = arith.constant 0 : index
    %167 = vector.load %arg10[%c2_143, %c0_144, %c0_145] : memref<5x32x1xf32, #tpu.memory_space<vmem>>, vector<1x32x1xf32>
    %168 = vector.shape_cast %167 : vector<1x32x1xf32> to vector<32x1xf32>
    %cst_146 = arith.constant dense<0.000000e+00> : vector<32x128xf32>
    %169 = tpu.matmul %164, %162, %cst_146 {dimension_numbers = #tpu.dot_dimension_numbers<[1], [0], [0], [1], [0, 0, 1, 1], [], []>} : vector<32x16xf32>, vector<16x128xf32>, vector<32x128xf32> -> vector<32x128xf32>
    %cst_147 = arith.constant dense<0.000000e+00> : vector<32x128xf32>
    %170 = tpu.matmul %166, %161, %cst_147 {dimension_numbers = #tpu.dot_dimension_numbers<[1], [0], [0], [1], [0, 0, 1, 1], [], []>} : vector<32x16xf32>, vector<16x128xf32>, vector<32x128xf32> -> vector<32x128xf32>
    %171 = arith.addf %169, %170 : vector<32x128xf32>
    %172 = vector.broadcast %168 : vector<32x1xf32> to vector<32x128xf32>
    %173 = arith.addf %171, %172 : vector<32x128xf32>
    %174 = vector.extract_strided_slice %173 {offsets = [0, 0], sizes = [16, 128], strides = [1, 1]} : vector<32x128xf32> to vector<16x128xf32>
    %175 = vector.extract_strided_slice %173 {offsets = [16, 0], sizes = [16, 128], strides = [1, 1]} : vector<32x128xf32> to vector<16x128xf32>
    %cst_148 = arith.constant dense<0.000000e+00> : vector<16x128xf32>
    %176 = tpu.matmul %175, %1, %cst_148 {dimension_numbers = #tpu.dot_dimension_numbers<[1], [0], [0], [1], [0, 0, 1, 1], [], []>} : vector<16x128xf32>, vector<128x128xf32>, vector<16x128xf32> -> vector<16x128xf32>
    %cst_149 = arith.constant dense<0.000000e+00> : vector<16x128xf32>
    %177 = tpu.matmul %174, %2, %cst_149 {dimension_numbers = #tpu.dot_dimension_numbers<[1], [0], [0], [1], [0, 0, 1, 1], [], []>} : vector<16x128xf32>, vector<128x128xf32>, vector<16x128xf32> -> vector<16x128xf32>
    %cst_150 = arith.constant dense<0.000000e+00> : vector<16x128xf32>
    %178 = tpu.matmul %176, %2, %cst_150 {dimension_numbers = #tpu.dot_dimension_numbers<[1], [0], [0], [1], [0, 0, 1, 1], [], []>} : vector<16x128xf32>, vector<128x128xf32>, vector<16x128xf32> -> vector<16x128xf32>
    %c2_151 = arith.constant 2 : index
    %c0_152 = arith.constant 0 : index
    %c0_153 = arith.constant 0 : index
    %179 = vector.load %arg12[%c2_151, %c0_152, %c0_153] : memref<5x32x16xf32, #tpu.memory_space<vmem>>, vector<1x32x16xf32>
    %180 = vector.shape_cast %179 : vector<1x32x16xf32> to vector<32x16xf32>
    %c2_154 = arith.constant 2 : index
    %c0_155 = arith.constant 0 : index
    %c0_156 = arith.constant 0 : index
    %181 = vector.load %arg13[%c2_154, %c0_155, %c0_156] : memref<5x32x16xf32, #tpu.memory_space<vmem>>, vector<1x32x16xf32>
    %182 = vector.shape_cast %181 : vector<1x32x16xf32> to vector<32x16xf32>
    %c2_157 = arith.constant 2 : index
    %c0_158 = arith.constant 0 : index
    %c0_159 = arith.constant 0 : index
    %183 = vector.load %arg14[%c2_157, %c0_158, %c0_159] : memref<5x32x16xf32, #tpu.memory_space<vmem>>, vector<1x32x16xf32>
    %184 = vector.shape_cast %183 : vector<1x32x16xf32> to vector<32x16xf32>
    %c2_160 = arith.constant 2 : index
    %c0_161 = arith.constant 0 : index
    %c0_162 = arith.constant 0 : index
    %185 = vector.load %arg15[%c2_160, %c0_161, %c0_162] : memref<5x32x16xf32, #tpu.memory_space<vmem>>, vector<1x32x16xf32>
    %186 = vector.shape_cast %185 : vector<1x32x16xf32> to vector<32x16xf32>
    %c2_163 = arith.constant 2 : index
    %c0_164 = arith.constant 0 : index
    %c0_165 = arith.constant 0 : index
    %187 = vector.load %arg16[%c2_163, %c0_164, %c0_165] : memref<5x32x1xf32, #tpu.memory_space<vmem>>, vector<1x32x1xf32>
    %188 = vector.shape_cast %187 : vector<1x32x1xf32> to vector<32x1xf32>
    %cst_166 = arith.constant dense<0.000000e+00> : vector<32x128xf32>
    %189 = tpu.matmul %180, %140, %cst_166 {dimension_numbers = #tpu.dot_dimension_numbers<[1], [0], [0], [1], [0, 0, 1, 1], [], []>} : vector<32x16xf32>, vector<16x128xf32>, vector<32x128xf32> -> vector<32x128xf32>
    %cst_167 = arith.constant dense<0.000000e+00> : vector<32x128xf32>
    %190 = tpu.matmul %182, %142, %cst_167 {dimension_numbers = #tpu.dot_dimension_numbers<[1], [0], [0], [1], [0, 0, 1, 1], [], []>} : vector<32x16xf32>, vector<16x128xf32>, vector<32x128xf32> -> vector<32x128xf32>
    %191 = arith.addf %189, %190 : vector<32x128xf32>
    %cst_168 = arith.constant dense<0.000000e+00> : vector<32x128xf32>
    %192 = tpu.matmul %184, %177, %cst_168 {dimension_numbers = #tpu.dot_dimension_numbers<[1], [0], [0], [1], [0, 0, 1, 1], [], []>} : vector<32x16xf32>, vector<16x128xf32>, vector<32x128xf32> -> vector<32x128xf32>
    %193 = arith.addf %191, %192 : vector<32x128xf32>
    %cst_169 = arith.constant dense<0.000000e+00> : vector<32x128xf32>
    %194 = tpu.matmul %186, %178, %cst_169 {dimension_numbers = #tpu.dot_dimension_numbers<[1], [0], [0], [1], [0, 0, 1, 1], [], []>} : vector<32x16xf32>, vector<16x128xf32>, vector<32x128xf32> -> vector<32x128xf32>
    %195 = arith.addf %193, %194 : vector<32x128xf32>
    %196 = vector.broadcast %188 : vector<32x1xf32> to vector<32x128xf32>
    %197 = arith.addf %195, %196 : vector<32x128xf32>
    %cst_170 = arith.constant 0.000000e+00 : f32
    %198 = vector.broadcast %cst_170 : f32 to vector<32x128xf32>
    %199 = arith.maximumf %197, %198 : vector<32x128xf32>
    %200 = vector.extract_strided_slice %199 {offsets = [16, 0], sizes = [16, 128], strides = [1, 1]} : vector<32x128xf32> to vector<16x128xf32>
    %cst_171 = arith.constant dense<0.000000e+00> : vector<16x128xf32>
    %201 = tpu.matmul %200, %1, %cst_171 {dimension_numbers = #tpu.dot_dimension_numbers<[1], [0], [0], [1], [0, 0, 1, 1], [], []>} : vector<16x128xf32>, vector<128x128xf32>, vector<16x128xf32> -> vector<16x128xf32>
    %202 = vector.extract_strided_slice %199 {offsets = [0, 0], sizes = [16, 128], strides = [1, 1]} : vector<32x128xf32> to vector<16x128xf32>
    %c2_172 = arith.constant 2 : index
    %c0_173 = arith.constant 0 : index
    %c0_174 = arith.constant 0 : index
    %203 = vector.load %arg17[%c2_172, %c0_173, %c0_174] : memref<5x32x16xf32, #tpu.memory_space<vmem>>, vector<1x32x16xf32>
    %204 = vector.shape_cast %203 : vector<1x32x16xf32> to vector<32x16xf32>
    %c2_175 = arith.constant 2 : index
    %c0_176 = arith.constant 0 : index
    %c0_177 = arith.constant 0 : index
    %205 = vector.load %arg18[%c2_175, %c0_176, %c0_177] : memref<5x32x16xf32, #tpu.memory_space<vmem>>, vector<1x32x16xf32>
    %206 = vector.shape_cast %205 : vector<1x32x16xf32> to vector<32x16xf32>
    %c2_178 = arith.constant 2 : index
    %c0_179 = arith.constant 0 : index
    %c0_180 = arith.constant 0 : index
    %207 = vector.load %arg19[%c2_178, %c0_179, %c0_180] : memref<5x32x1xf32, #tpu.memory_space<vmem>>, vector<1x32x1xf32>
    %208 = vector.shape_cast %207 : vector<1x32x1xf32> to vector<32x1xf32>
    %cst_181 = arith.constant dense<0.000000e+00> : vector<32x128xf32>
    %209 = tpu.matmul %204, %202, %cst_181 {dimension_numbers = #tpu.dot_dimension_numbers<[1], [0], [0], [1], [0, 0, 1, 1], [], []>} : vector<32x16xf32>, vector<16x128xf32>, vector<32x128xf32> -> vector<32x128xf32>
    %cst_182 = arith.constant dense<0.000000e+00> : vector<32x128xf32>
    %210 = tpu.matmul %206, %201, %cst_182 {dimension_numbers = #tpu.dot_dimension_numbers<[1], [0], [0], [1], [0, 0, 1, 1], [], []>} : vector<32x16xf32>, vector<16x128xf32>, vector<32x128xf32> -> vector<32x128xf32>
    %211 = arith.addf %209, %210 : vector<32x128xf32>
    %212 = vector.broadcast %208 : vector<32x1xf32> to vector<32x128xf32>
    %213 = arith.addf %211, %212 : vector<32x128xf32>
    %cst_183 = arith.constant 0.000000e+00 : f32
    %214 = vector.broadcast %cst_183 : f32 to vector<32x128xf32>
    %215 = arith.maximumf %213, %214 : vector<32x128xf32>
    %216 = vector.extract_strided_slice %215 {offsets = [0, 0], sizes = [16, 128], strides = [1, 1]} : vector<32x128xf32> to vector<16x128xf32>
    %217 = vector.extract_strided_slice %215 {offsets = [16, 0], sizes = [16, 128], strides = [1, 1]} : vector<32x128xf32> to vector<16x128xf32>
    %cst_184 = arith.constant dense<0.000000e+00> : vector<16x128xf32>
    %218 = tpu.matmul %217, %1, %cst_184 {dimension_numbers = #tpu.dot_dimension_numbers<[1], [0], [0], [1], [0, 0, 1, 1], [], []>} : vector<16x128xf32>, vector<128x128xf32>, vector<16x128xf32> -> vector<16x128xf32>
    %c3 = arith.constant 3 : index
    %c0_185 = arith.constant 0 : index
    %c0_186 = arith.constant 0 : index
    %219 = vector.load %arg4[%c3, %c0_185, %c0_186] : memref<5x32x4xf32, #tpu.memory_space<vmem>>, vector<1x32x4xf32>
    %220 = vector.shape_cast %219 : vector<1x32x4xf32> to vector<32x4xf32>
    %c3_187 = arith.constant 3 : index
    %c0_188 = arith.constant 0 : index
    %c0_189 = arith.constant 0 : index
    %221 = vector.load %arg5[%c3_187, %c0_188, %c0_189] : memref<5x32x16xf32, #tpu.memory_space<vmem>>, vector<1x32x16xf32>
    %222 = vector.shape_cast %221 : vector<1x32x16xf32> to vector<32x16xf32>
    %c3_190 = arith.constant 3 : index
    %c0_191 = arith.constant 0 : index
    %c0_192 = arith.constant 0 : index
    %223 = vector.load %arg6[%c3_190, %c0_191, %c0_192] : memref<5x32x16xf32, #tpu.memory_space<vmem>>, vector<1x32x16xf32>
    %224 = vector.shape_cast %223 : vector<1x32x16xf32> to vector<32x16xf32>
    %c3_193 = arith.constant 3 : index
    %c0_194 = arith.constant 0 : index
    %c0_195 = arith.constant 0 : index
    %225 = vector.load %arg7[%c3_193, %c0_194, %c0_195] : memref<5x32x1xf32, #tpu.memory_space<vmem>>, vector<1x32x1xf32>
    %226 = vector.shape_cast %225 : vector<1x32x1xf32> to vector<32x1xf32>
    %cst_196 = arith.constant dense<0.000000e+00> : vector<32x128xf32>
    %227 = tpu.matmul %220, %0, %cst_196 {dimension_numbers = #tpu.dot_dimension_numbers<[1], [0], [0], [1], [0, 0, 1, 1], [], []>} : vector<32x4xf32>, vector<4x128xf32>, vector<32x128xf32> -> vector<32x128xf32>
    %cst_197 = arith.constant dense<0.000000e+00> : vector<32x128xf32>
    %228 = tpu.matmul %222, %216, %cst_197 {dimension_numbers = #tpu.dot_dimension_numbers<[1], [0], [0], [1], [0, 0, 1, 1], [], []>} : vector<32x16xf32>, vector<16x128xf32>, vector<32x128xf32> -> vector<32x128xf32>
    %229 = arith.addf %227, %228 : vector<32x128xf32>
    %cst_198 = arith.constant dense<0.000000e+00> : vector<32x128xf32>
    %230 = tpu.matmul %224, %218, %cst_198 {dimension_numbers = #tpu.dot_dimension_numbers<[1], [0], [0], [1], [0, 0, 1, 1], [], []>} : vector<32x16xf32>, vector<16x128xf32>, vector<32x128xf32> -> vector<32x128xf32>
    %231 = arith.addf %229, %230 : vector<32x128xf32>
    %232 = vector.broadcast %226 : vector<32x1xf32> to vector<32x128xf32>
    %233 = arith.addf %231, %232 : vector<32x128xf32>
    %cst_199 = arith.constant 0.000000e+00 : f32
    %234 = vector.broadcast %cst_199 : f32 to vector<32x128xf32>
    %235 = arith.maximumf %233, %234 : vector<32x128xf32>
    %236 = vector.extract_strided_slice %235 {offsets = [16, 0], sizes = [16, 128], strides = [1, 1]} : vector<32x128xf32> to vector<16x128xf32>
    %cst_200 = arith.constant dense<0.000000e+00> : vector<16x128xf32>
    %237 = tpu.matmul %236, %1, %cst_200 {dimension_numbers = #tpu.dot_dimension_numbers<[1], [0], [0], [1], [0, 0, 1, 1], [], []>} : vector<16x128xf32>, vector<128x128xf32>, vector<16x128xf32> -> vector<16x128xf32>
    %238 = vector.extract_strided_slice %235 {offsets = [0, 0], sizes = [16, 128], strides = [1, 1]} : vector<32x128xf32> to vector<16x128xf32>
    %c3_201 = arith.constant 3 : index
    %c0_202 = arith.constant 0 : index
    %c0_203 = arith.constant 0 : index
    %239 = vector.load %arg8[%c3_201, %c0_202, %c0_203] : memref<5x32x16xf32, #tpu.memory_space<vmem>>, vector<1x32x16xf32>
    %240 = vector.shape_cast %239 : vector<1x32x16xf32> to vector<32x16xf32>
    %c3_204 = arith.constant 3 : index
    %c0_205 = arith.constant 0 : index
    %c0_206 = arith.constant 0 : index
    %241 = vector.load %arg9[%c3_204, %c0_205, %c0_206] : memref<5x32x16xf32, #tpu.memory_space<vmem>>, vector<1x32x16xf32>
    %242 = vector.shape_cast %241 : vector<1x32x16xf32> to vector<32x16xf32>
    %c3_207 = arith.constant 3 : index
    %c0_208 = arith.constant 0 : index
    %c0_209 = arith.constant 0 : index
    %243 = vector.load %arg10[%c3_207, %c0_208, %c0_209] : memref<5x32x1xf32, #tpu.memory_space<vmem>>, vector<1x32x1xf32>
    %244 = vector.shape_cast %243 : vector<1x32x1xf32> to vector<32x1xf32>
    %cst_210 = arith.constant dense<0.000000e+00> : vector<32x128xf32>
    %245 = tpu.matmul %240, %238, %cst_210 {dimension_numbers = #tpu.dot_dimension_numbers<[1], [0], [0], [1], [0, 0, 1, 1], [], []>} : vector<32x16xf32>, vector<16x128xf32>, vector<32x128xf32> -> vector<32x128xf32>
    %cst_211 = arith.constant dense<0.000000e+00> : vector<32x128xf32>
    %246 = tpu.matmul %242, %237, %cst_211 {dimension_numbers = #tpu.dot_dimension_numbers<[1], [0], [0], [1], [0, 0, 1, 1], [], []>} : vector<32x16xf32>, vector<16x128xf32>, vector<32x128xf32> -> vector<32x128xf32>
    %247 = arith.addf %245, %246 : vector<32x128xf32>
    %248 = vector.broadcast %244 : vector<32x1xf32> to vector<32x128xf32>
    %249 = arith.addf %247, %248 : vector<32x128xf32>
    %250 = vector.extract_strided_slice %249 {offsets = [0, 0], sizes = [16, 128], strides = [1, 1]} : vector<32x128xf32> to vector<16x128xf32>
    %251 = vector.extract_strided_slice %249 {offsets = [16, 0], sizes = [16, 128], strides = [1, 1]} : vector<32x128xf32> to vector<16x128xf32>
    %cst_212 = arith.constant dense<0.000000e+00> : vector<16x128xf32>
    %252 = tpu.matmul %251, %1, %cst_212 {dimension_numbers = #tpu.dot_dimension_numbers<[1], [0], [0], [1], [0, 0, 1, 1], [], []>} : vector<16x128xf32>, vector<128x128xf32>, vector<16x128xf32> -> vector<16x128xf32>
    %cst_213 = arith.constant dense<0.000000e+00> : vector<16x128xf32>
    %253 = tpu.matmul %250, %2, %cst_213 {dimension_numbers = #tpu.dot_dimension_numbers<[1], [0], [0], [1], [0, 0, 1, 1], [], []>} : vector<16x128xf32>, vector<128x128xf32>, vector<16x128xf32> -> vector<16x128xf32>
    %cst_214 = arith.constant dense<0.000000e+00> : vector<16x128xf32>
    %254 = tpu.matmul %252, %2, %cst_214 {dimension_numbers = #tpu.dot_dimension_numbers<[1], [0], [0], [1], [0, 0, 1, 1], [], []>} : vector<16x128xf32>, vector<128x128xf32>, vector<16x128xf32> -> vector<16x128xf32>
    %c3_215 = arith.constant 3 : index
    %c0_216 = arith.constant 0 : index
    %c0_217 = arith.constant 0 : index
    %255 = vector.load %arg12[%c3_215, %c0_216, %c0_217] : memref<5x32x16xf32, #tpu.memory_space<vmem>>, vector<1x32x16xf32>
    %256 = vector.shape_cast %255 : vector<1x32x16xf32> to vector<32x16xf32>
    %c3_218 = arith.constant 3 : index
    %c0_219 = arith.constant 0 : index
    %c0_220 = arith.constant 0 : index
    %257 = vector.load %arg13[%c3_218, %c0_219, %c0_220] : memref<5x32x16xf32, #tpu.memory_space<vmem>>, vector<1x32x16xf32>
    %258 = vector.shape_cast %257 : vector<1x32x16xf32> to vector<32x16xf32>
    %c3_221 = arith.constant 3 : index
    %c0_222 = arith.constant 0 : index
    %c0_223 = arith.constant 0 : index
    %259 = vector.load %arg14[%c3_221, %c0_222, %c0_223] : memref<5x32x16xf32, #tpu.memory_space<vmem>>, vector<1x32x16xf32>
    %260 = vector.shape_cast %259 : vector<1x32x16xf32> to vector<32x16xf32>
    %c3_224 = arith.constant 3 : index
    %c0_225 = arith.constant 0 : index
    %c0_226 = arith.constant 0 : index
    %261 = vector.load %arg15[%c3_224, %c0_225, %c0_226] : memref<5x32x16xf32, #tpu.memory_space<vmem>>, vector<1x32x16xf32>
    %262 = vector.shape_cast %261 : vector<1x32x16xf32> to vector<32x16xf32>
    %c3_227 = arith.constant 3 : index
    %c0_228 = arith.constant 0 : index
    %c0_229 = arith.constant 0 : index
    %263 = vector.load %arg16[%c3_227, %c0_228, %c0_229] : memref<5x32x1xf32, #tpu.memory_space<vmem>>, vector<1x32x1xf32>
    %264 = vector.shape_cast %263 : vector<1x32x1xf32> to vector<32x1xf32>
    %cst_230 = arith.constant dense<0.000000e+00> : vector<32x128xf32>
    %265 = tpu.matmul %256, %216, %cst_230 {dimension_numbers = #tpu.dot_dimension_numbers<[1], [0], [0], [1], [0, 0, 1, 1], [], []>} : vector<32x16xf32>, vector<16x128xf32>, vector<32x128xf32> -> vector<32x128xf32>
    %cst_231 = arith.constant dense<0.000000e+00> : vector<32x128xf32>
    %266 = tpu.matmul %258, %218, %cst_231 {dimension_numbers = #tpu.dot_dimension_numbers<[1], [0], [0], [1], [0, 0, 1, 1], [], []>} : vector<32x16xf32>, vector<16x128xf32>, vector<32x128xf32> -> vector<32x128xf32>
    %267 = arith.addf %265, %266 : vector<32x128xf32>
    %cst_232 = arith.constant dense<0.000000e+00> : vector<32x128xf32>
    %268 = tpu.matmul %260, %253, %cst_232 {dimension_numbers = #tpu.dot_dimension_numbers<[1], [0], [0], [1], [0, 0, 1, 1], [], []>} : vector<32x16xf32>, vector<16x128xf32>, vector<32x128xf32> -> vector<32x128xf32>
    %269 = arith.addf %267, %268 : vector<32x128xf32>
    %cst_233 = arith.constant dense<0.000000e+00> : vector<32x128xf32>
    %270 = tpu.matmul %262, %254, %cst_233 {dimension_numbers = #tpu.dot_dimension_numbers<[1], [0], [0], [1], [0, 0, 1, 1], [], []>} : vector<32x16xf32>, vector<16x128xf32>, vector<32x128xf32> -> vector<32x128xf32>
    %271 = arith.addf %269, %270 : vector<32x128xf32>
    %272 = vector.broadcast %264 : vector<32x1xf32> to vector<32x128xf32>
    %273 = arith.addf %271, %272 : vector<32x128xf32>
    %cst_234 = arith.constant 0.000000e+00 : f32
    %274 = vector.broadcast %cst_234 : f32 to vector<32x128xf32>
    %275 = arith.maximumf %273, %274 : vector<32x128xf32>
    %276 = vector.extract_strided_slice %275 {offsets = [16, 0], sizes = [16, 128], strides = [1, 1]} : vector<32x128xf32> to vector<16x128xf32>
    %cst_235 = arith.constant dense<0.000000e+00> : vector<16x128xf32>
    %277 = tpu.matmul %276, %1, %cst_235 {dimension_numbers = #tpu.dot_dimension_numbers<[1], [0], [0], [1], [0, 0, 1, 1], [], []>} : vector<16x128xf32>, vector<128x128xf32>, vector<16x128xf32> -> vector<16x128xf32>
    %278 = vector.extract_strided_slice %275 {offsets = [0, 0], sizes = [16, 128], strides = [1, 1]} : vector<32x128xf32> to vector<16x128xf32>
    %c3_236 = arith.constant 3 : index
    %c0_237 = arith.constant 0 : index
    %c0_238 = arith.constant 0 : index
    %279 = vector.load %arg17[%c3_236, %c0_237, %c0_238] : memref<5x32x16xf32, #tpu.memory_space<vmem>>, vector<1x32x16xf32>
    %280 = vector.shape_cast %279 : vector<1x32x16xf32> to vector<32x16xf32>
    %c3_239 = arith.constant 3 : index
    %c0_240 = arith.constant 0 : index
    %c0_241 = arith.constant 0 : index
    %281 = vector.load %arg18[%c3_239, %c0_240, %c0_241] : memref<5x32x16xf32, #tpu.memory_space<vmem>>, vector<1x32x16xf32>
    %282 = vector.shape_cast %281 : vector<1x32x16xf32> to vector<32x16xf32>
    %c3_242 = arith.constant 3 : index
    %c0_243 = arith.constant 0 : index
    %c0_244 = arith.constant 0 : index
    %283 = vector.load %arg19[%c3_242, %c0_243, %c0_244] : memref<5x32x1xf32, #tpu.memory_space<vmem>>, vector<1x32x1xf32>
    %284 = vector.shape_cast %283 : vector<1x32x1xf32> to vector<32x1xf32>
    %cst_245 = arith.constant dense<0.000000e+00> : vector<32x128xf32>
    %285 = tpu.matmul %280, %278, %cst_245 {dimension_numbers = #tpu.dot_dimension_numbers<[1], [0], [0], [1], [0, 0, 1, 1], [], []>} : vector<32x16xf32>, vector<16x128xf32>, vector<32x128xf32> -> vector<32x128xf32>
    %cst_246 = arith.constant dense<0.000000e+00> : vector<32x128xf32>
    %286 = tpu.matmul %282, %277, %cst_246 {dimension_numbers = #tpu.dot_dimension_numbers<[1], [0], [0], [1], [0, 0, 1, 1], [], []>} : vector<32x16xf32>, vector<16x128xf32>, vector<32x128xf32> -> vector<32x128xf32>
    %287 = arith.addf %285, %286 : vector<32x128xf32>
    %288 = vector.broadcast %284 : vector<32x1xf32> to vector<32x128xf32>
    %289 = arith.addf %287, %288 : vector<32x128xf32>
    %cst_247 = arith.constant 0.000000e+00 : f32
    %290 = vector.broadcast %cst_247 : f32 to vector<32x128xf32>
    %291 = arith.maximumf %289, %290 : vector<32x128xf32>
    %292 = vector.extract_strided_slice %291 {offsets = [0, 0], sizes = [16, 128], strides = [1, 1]} : vector<32x128xf32> to vector<16x128xf32>
    %293 = vector.extract_strided_slice %291 {offsets = [16, 0], sizes = [16, 128], strides = [1, 1]} : vector<32x128xf32> to vector<16x128xf32>
    %cst_248 = arith.constant dense<0.000000e+00> : vector<16x128xf32>
    %294 = tpu.matmul %293, %1, %cst_248 {dimension_numbers = #tpu.dot_dimension_numbers<[1], [0], [0], [1], [0, 0, 1, 1], [], []>} : vector<16x128xf32>, vector<128x128xf32>, vector<16x128xf32> -> vector<16x128xf32>
    %c4 = arith.constant 4 : index
    %c0_249 = arith.constant 0 : index
    %c0_250 = arith.constant 0 : index
    %295 = vector.load %arg4[%c4, %c0_249, %c0_250] : memref<5x32x4xf32, #tpu.memory_space<vmem>>, vector<1x32x4xf32>
    %296 = vector.shape_cast %295 : vector<1x32x4xf32> to vector<32x4xf32>
    %c4_251 = arith.constant 4 : index
    %c0_252 = arith.constant 0 : index
    %c0_253 = arith.constant 0 : index
    %297 = vector.load %arg5[%c4_251, %c0_252, %c0_253] : memref<5x32x16xf32, #tpu.memory_space<vmem>>, vector<1x32x16xf32>
    %298 = vector.shape_cast %297 : vector<1x32x16xf32> to vector<32x16xf32>
    %c4_254 = arith.constant 4 : index
    %c0_255 = arith.constant 0 : index
    %c0_256 = arith.constant 0 : index
    %299 = vector.load %arg6[%c4_254, %c0_255, %c0_256] : memref<5x32x16xf32, #tpu.memory_space<vmem>>, vector<1x32x16xf32>
    %300 = vector.shape_cast %299 : vector<1x32x16xf32> to vector<32x16xf32>
    %c4_257 = arith.constant 4 : index
    %c0_258 = arith.constant 0 : index
    %c0_259 = arith.constant 0 : index
    %301 = vector.load %arg7[%c4_257, %c0_258, %c0_259] : memref<5x32x1xf32, #tpu.memory_space<vmem>>, vector<1x32x1xf32>
    %302 = vector.shape_cast %301 : vector<1x32x1xf32> to vector<32x1xf32>
    %cst_260 = arith.constant dense<0.000000e+00> : vector<32x128xf32>
    %303 = tpu.matmul %296, %0, %cst_260 {dimension_numbers = #tpu.dot_dimension_numbers<[1], [0], [0], [1], [0, 0, 1, 1], [], []>} : vector<32x4xf32>, vector<4x128xf32>, vector<32x128xf32> -> vector<32x128xf32>
    %cst_261 = arith.constant dense<0.000000e+00> : vector<32x128xf32>
    %304 = tpu.matmul %298, %292, %cst_261 {dimension_numbers = #tpu.dot_dimension_numbers<[1], [0], [0], [1], [0, 0, 1, 1], [], []>} : vector<32x16xf32>, vector<16x128xf32>, vector<32x128xf32> -> vector<32x128xf32>
    %305 = arith.addf %303, %304 : vector<32x128xf32>
    %cst_262 = arith.constant dense<0.000000e+00> : vector<32x128xf32>
    %306 = tpu.matmul %300, %294, %cst_262 {dimension_numbers = #tpu.dot_dimension_numbers<[1], [0], [0], [1], [0, 0, 1, 1], [], []>} : vector<32x16xf32>, vector<16x128xf32>, vector<32x128xf32> -> vector<32x128xf32>
    %307 = arith.addf %305, %306 : vector<32x128xf32>
    %308 = vector.broadcast %302 : vector<32x1xf32> to vector<32x128xf32>
    %309 = arith.addf %307, %308 : vector<32x128xf32>
    %cst_263 = arith.constant 0.000000e+00 : f32
    %310 = vector.broadcast %cst_263 : f32 to vector<32x128xf32>
    %311 = arith.maximumf %309, %310 : vector<32x128xf32>
    %312 = vector.extract_strided_slice %311 {offsets = [16, 0], sizes = [16, 128], strides = [1, 1]} : vector<32x128xf32> to vector<16x128xf32>
    %cst_264 = arith.constant dense<0.000000e+00> : vector<16x128xf32>
    %313 = tpu.matmul %312, %1, %cst_264 {dimension_numbers = #tpu.dot_dimension_numbers<[1], [0], [0], [1], [0, 0, 1, 1], [], []>} : vector<16x128xf32>, vector<128x128xf32>, vector<16x128xf32> -> vector<16x128xf32>
    %314 = vector.extract_strided_slice %311 {offsets = [0, 0], sizes = [16, 128], strides = [1, 1]} : vector<32x128xf32> to vector<16x128xf32>
    %c4_265 = arith.constant 4 : index
    %c0_266 = arith.constant 0 : index
    %c0_267 = arith.constant 0 : index
    %315 = vector.load %arg8[%c4_265, %c0_266, %c0_267] : memref<5x32x16xf32, #tpu.memory_space<vmem>>, vector<1x32x16xf32>
    %316 = vector.shape_cast %315 : vector<1x32x16xf32> to vector<32x16xf32>
    %c4_268 = arith.constant 4 : index
    %c0_269 = arith.constant 0 : index
    %c0_270 = arith.constant 0 : index
    %317 = vector.load %arg9[%c4_268, %c0_269, %c0_270] : memref<5x32x16xf32, #tpu.memory_space<vmem>>, vector<1x32x16xf32>
    %318 = vector.shape_cast %317 : vector<1x32x16xf32> to vector<32x16xf32>
    %c4_271 = arith.constant 4 : index
    %c0_272 = arith.constant 0 : index
    %c0_273 = arith.constant 0 : index
    %319 = vector.load %arg10[%c4_271, %c0_272, %c0_273] : memref<5x32x1xf32, #tpu.memory_space<vmem>>, vector<1x32x1xf32>
    %320 = vector.shape_cast %319 : vector<1x32x1xf32> to vector<32x1xf32>
    %cst_274 = arith.constant dense<0.000000e+00> : vector<32x128xf32>
    %321 = tpu.matmul %316, %314, %cst_274 {dimension_numbers = #tpu.dot_dimension_numbers<[1], [0], [0], [1], [0, 0, 1, 1], [], []>} : vector<32x16xf32>, vector<16x128xf32>, vector<32x128xf32> -> vector<32x128xf32>
    %cst_275 = arith.constant dense<0.000000e+00> : vector<32x128xf32>
    %322 = tpu.matmul %318, %313, %cst_275 {dimension_numbers = #tpu.dot_dimension_numbers<[1], [0], [0], [1], [0, 0, 1, 1], [], []>} : vector<32x16xf32>, vector<16x128xf32>, vector<32x128xf32> -> vector<32x128xf32>
    %323 = arith.addf %321, %322 : vector<32x128xf32>
    %324 = vector.broadcast %320 : vector<32x1xf32> to vector<32x128xf32>
    %325 = arith.addf %323, %324 : vector<32x128xf32>
    %326 = vector.extract_strided_slice %325 {offsets = [0, 0], sizes = [16, 128], strides = [1, 1]} : vector<32x128xf32> to vector<16x128xf32>
    %327 = vector.extract_strided_slice %325 {offsets = [16, 0], sizes = [16, 128], strides = [1, 1]} : vector<32x128xf32> to vector<16x128xf32>
    %cst_276 = arith.constant dense<0.000000e+00> : vector<16x128xf32>
    %328 = tpu.matmul %327, %1, %cst_276 {dimension_numbers = #tpu.dot_dimension_numbers<[1], [0], [0], [1], [0, 0, 1, 1], [], []>} : vector<16x128xf32>, vector<128x128xf32>, vector<16x128xf32> -> vector<16x128xf32>
    %cst_277 = arith.constant dense<0.000000e+00> : vector<16x128xf32>
    %329 = tpu.matmul %326, %2, %cst_277 {dimension_numbers = #tpu.dot_dimension_numbers<[1], [0], [0], [1], [0, 0, 1, 1], [], []>} : vector<16x128xf32>, vector<128x128xf32>, vector<16x128xf32> -> vector<16x128xf32>
    %cst_278 = arith.constant dense<0.000000e+00> : vector<16x128xf32>
    %330 = tpu.matmul %328, %2, %cst_278 {dimension_numbers = #tpu.dot_dimension_numbers<[1], [0], [0], [1], [0, 0, 1, 1], [], []>} : vector<16x128xf32>, vector<128x128xf32>, vector<16x128xf32> -> vector<16x128xf32>
    %c4_279 = arith.constant 4 : index
    %c0_280 = arith.constant 0 : index
    %c0_281 = arith.constant 0 : index
    %331 = vector.load %arg12[%c4_279, %c0_280, %c0_281] : memref<5x32x16xf32, #tpu.memory_space<vmem>>, vector<1x32x16xf32>
    %332 = vector.shape_cast %331 : vector<1x32x16xf32> to vector<32x16xf32>
    %c4_282 = arith.constant 4 : index
    %c0_283 = arith.constant 0 : index
    %c0_284 = arith.constant 0 : index
    %333 = vector.load %arg13[%c4_282, %c0_283, %c0_284] : memref<5x32x16xf32, #tpu.memory_space<vmem>>, vector<1x32x16xf32>
    %334 = vector.shape_cast %333 : vector<1x32x16xf32> to vector<32x16xf32>
    %c4_285 = arith.constant 4 : index
    %c0_286 = arith.constant 0 : index
    %c0_287 = arith.constant 0 : index
    %335 = vector.load %arg14[%c4_285, %c0_286, %c0_287] : memref<5x32x16xf32, #tpu.memory_space<vmem>>, vector<1x32x16xf32>
    %336 = vector.shape_cast %335 : vector<1x32x16xf32> to vector<32x16xf32>
    %c4_288 = arith.constant 4 : index
    %c0_289 = arith.constant 0 : index
    %c0_290 = arith.constant 0 : index
    %337 = vector.load %arg15[%c4_288, %c0_289, %c0_290] : memref<5x32x16xf32, #tpu.memory_space<vmem>>, vector<1x32x16xf32>
    %338 = vector.shape_cast %337 : vector<1x32x16xf32> to vector<32x16xf32>
    %c4_291 = arith.constant 4 : index
    %c0_292 = arith.constant 0 : index
    %c0_293 = arith.constant 0 : index
    %339 = vector.load %arg16[%c4_291, %c0_292, %c0_293] : memref<5x32x1xf32, #tpu.memory_space<vmem>>, vector<1x32x1xf32>
    %340 = vector.shape_cast %339 : vector<1x32x1xf32> to vector<32x1xf32>
    %cst_294 = arith.constant dense<0.000000e+00> : vector<32x128xf32>
    %341 = tpu.matmul %332, %292, %cst_294 {dimension_numbers = #tpu.dot_dimension_numbers<[1], [0], [0], [1], [0, 0, 1, 1], [], []>} : vector<32x16xf32>, vector<16x128xf32>, vector<32x128xf32> -> vector<32x128xf32>
    %cst_295 = arith.constant dense<0.000000e+00> : vector<32x128xf32>
    %342 = tpu.matmul %334, %294, %cst_295 {dimension_numbers = #tpu.dot_dimension_numbers<[1], [0], [0], [1], [0, 0, 1, 1], [], []>} : vector<32x16xf32>, vector<16x128xf32>, vector<32x128xf32> -> vector<32x128xf32>
    %343 = arith.addf %341, %342 : vector<32x128xf32>
    %cst_296 = arith.constant dense<0.000000e+00> : vector<32x128xf32>
    %344 = tpu.matmul %336, %329, %cst_296 {dimension_numbers = #tpu.dot_dimension_numbers<[1], [0], [0], [1], [0, 0, 1, 1], [], []>} : vector<32x16xf32>, vector<16x128xf32>, vector<32x128xf32> -> vector<32x128xf32>
    %345 = arith.addf %343, %344 : vector<32x128xf32>
    %cst_297 = arith.constant dense<0.000000e+00> : vector<32x128xf32>
    %346 = tpu.matmul %338, %330, %cst_297 {dimension_numbers = #tpu.dot_dimension_numbers<[1], [0], [0], [1], [0, 0, 1, 1], [], []>} : vector<32x16xf32>, vector<16x128xf32>, vector<32x128xf32> -> vector<32x128xf32>
    %347 = arith.addf %345, %346 : vector<32x128xf32>
    %348 = vector.broadcast %340 : vector<32x1xf32> to vector<32x128xf32>
    %349 = arith.addf %347, %348 : vector<32x128xf32>
    %cst_298 = arith.constant 0.000000e+00 : f32
    %350 = vector.broadcast %cst_298 : f32 to vector<32x128xf32>
    %351 = arith.maximumf %349, %350 : vector<32x128xf32>
    %352 = vector.extract_strided_slice %351 {offsets = [16, 0], sizes = [16, 128], strides = [1, 1]} : vector<32x128xf32> to vector<16x128xf32>
    %cst_299 = arith.constant dense<0.000000e+00> : vector<16x128xf32>
    %353 = tpu.matmul %352, %1, %cst_299 {dimension_numbers = #tpu.dot_dimension_numbers<[1], [0], [0], [1], [0, 0, 1, 1], [], []>} : vector<16x128xf32>, vector<128x128xf32>, vector<16x128xf32> -> vector<16x128xf32>
    %354 = vector.extract_strided_slice %351 {offsets = [0, 0], sizes = [16, 128], strides = [1, 1]} : vector<32x128xf32> to vector<16x128xf32>
    %c4_300 = arith.constant 4 : index
    %c0_301 = arith.constant 0 : index
    %c0_302 = arith.constant 0 : index
    %355 = vector.load %arg17[%c4_300, %c0_301, %c0_302] : memref<5x32x16xf32, #tpu.memory_space<vmem>>, vector<1x32x16xf32>
    %356 = vector.shape_cast %355 : vector<1x32x16xf32> to vector<32x16xf32>
    %c4_303 = arith.constant 4 : index
    %c0_304 = arith.constant 0 : index
    %c0_305 = arith.constant 0 : index
    %357 = vector.load %arg18[%c4_303, %c0_304, %c0_305] : memref<5x32x16xf32, #tpu.memory_space<vmem>>, vector<1x32x16xf32>
    %358 = vector.shape_cast %357 : vector<1x32x16xf32> to vector<32x16xf32>
    %c4_306 = arith.constant 4 : index
    %c0_307 = arith.constant 0 : index
    %c0_308 = arith.constant 0 : index
    %359 = vector.load %arg19[%c4_306, %c0_307, %c0_308] : memref<5x32x1xf32, #tpu.memory_space<vmem>>, vector<1x32x1xf32>
    %360 = vector.shape_cast %359 : vector<1x32x1xf32> to vector<32x1xf32>
    %cst_309 = arith.constant dense<0.000000e+00> : vector<32x128xf32>
    %361 = tpu.matmul %356, %354, %cst_309 {dimension_numbers = #tpu.dot_dimension_numbers<[1], [0], [0], [1], [0, 0, 1, 1], [], []>} : vector<32x16xf32>, vector<16x128xf32>, vector<32x128xf32> -> vector<32x128xf32>
    %cst_310 = arith.constant dense<0.000000e+00> : vector<32x128xf32>
    %362 = tpu.matmul %358, %353, %cst_310 {dimension_numbers = #tpu.dot_dimension_numbers<[1], [0], [0], [1], [0, 0, 1, 1], [], []>} : vector<32x16xf32>, vector<16x128xf32>, vector<32x128xf32> -> vector<32x128xf32>
    %363 = arith.addf %361, %362 : vector<32x128xf32>
    %364 = vector.broadcast %360 : vector<32x1xf32> to vector<32x128xf32>
    %365 = arith.addf %363, %364 : vector<32x128xf32>
    %366 = vector.extract_strided_slice %365 {offsets = [0, 0], sizes = [4, 128], strides = [1, 1]} : vector<32x128xf32> to vector<4x128xf32>
    %367 = vector.extract_strided_slice %365 {offsets = [4, 0], sizes = [4, 128], strides = [1, 1]} : vector<32x128xf32> to vector<4x128xf32>
    %cst_311 = arith.constant 4.000000e+00 : f32
    %368 = vector.broadcast %cst_311 : f32 to vector<4x128xf32>
    %369 = arith.addf %367, %368 : vector<4x128xf32>
    %cst_312 = arith.constant 0.000000e+00 : f32
    %370 = vector.broadcast %cst_312 : f32 to vector<4x128xf32>
    %371 = arith.maximumf %369, %370 : vector<4x128xf32>
    %372 = math.absf %369 : vector<4x128xf32>
    %cst_313 = arith.constant 0.000000e+00 : f32
    %373 = vector.broadcast %cst_313 : f32 to vector<4x128xf32>
    %374 = arith.subf %373, %372 : vector<4x128xf32>
    %375 = math.exp %374 : vector<4x128xf32>
    %cst_314 = arith.constant 1.000000e+00 : f32
    %376 = vector.broadcast %cst_314 : f32 to vector<4x128xf32>
    %377 = arith.addf %376, %375 : vector<4x128xf32>
    %378 = math.log %377 : vector<4x128xf32>
    %379 = arith.addf %371, %378 : vector<4x128xf32>
    %cst_315 = arith.constant 9.99999974E-5 : f32
    %380 = vector.broadcast %cst_315 : f32 to vector<4x128xf32>
    %381 = arith.addf %379, %380 : vector<4x128xf32>
    %c0_316 = arith.constant 0 : index
    %c0_317 = arith.constant 0 : index
    %382 = vector.load %arg3[%c0_316, %c0_317] : memref<4x128xf32, #tpu.memory_space<vmem>>, vector<4x128xf32>
    %383 = arith.mulf %382, %381 : vector<4x128xf32>
    %384 = arith.addf %366, %383 : vector<4x128xf32>
    %c0_318 = arith.constant 0 : index
    %c0_319 = arith.constant 0 : index
    %385 = vector.load %arg20[%c0_318, %c0_319] : memref<4x128xf32, #tpu.memory_space<vmem>>, vector<4x128xf32>
    tpu.vector_store %arg20[%c0_318, %c0_319], %384 {strides = array<i32>} : memref<4x128xf32, #tpu.memory_space<vmem>>, vector<4x128xf32>,
    %cst_320 = arith.constant dense<0.000000e+00> : vector<128xf32>
    %386 = vector.multi_reduction <add>, %381, %cst_320 [0] : vector<4x128xf32> to vector<128xf32>
    %387 = vector.shape_cast %386 : vector<128xf32> to vector<1x128xf32>
    %c0_321 = arith.constant 0 : index
    %c0_322 = arith.constant 0 : index
    %388 = vector.load %arg21[%c0_321, %c0_322] : memref<1x128xf32, #tpu.memory_space<vmem>>, vector<1x128xf32>
    tpu.vector_store %arg21[%c0_321, %c0_322], %387 {strides = array<i32>} : memref<1x128xf32, #tpu.memory_space<vmem>>, vector<1x128xf32>,
    return
  }
}

</mosaic_0001>

<llo_original>
// kernel: _lambda_.1
$region0: #{_lambda_.1}
  #allocation0 [shape = 'u32[]', space=smem, size = 0x4, offset = 0x4, fixed_abs, tag = 'smem constant byte address 0x4 - core index']
  #allocation1 [shape = 'u32[144,128]{1,0:T(1,128)}', space=vmem, size = 0x12000, scoped, tag = 'internal scratch']
  %s0 = inlined_call_operand.vmem [shape: f32[4,128], index: 0, kind: input, shape index: {}]
  %s1 = inlined_call_operand.vmem [shape: f32[128,128], index: 1, kind: input, shape index: {}]
  %s2 = inlined_call_operand.vmem [shape: f32[128,128], index: 2, kind: input, shape index: {}]
  %s3 = inlined_call_operand.vmem [shape: f32[4,128], index: 3, kind: input, shape index: {}]
  %s4 = inlined_call_operand.vmem [shape: f32[5,32,4], index: 4, kind: input, shape index: {}]
  %s5 = inlined_call_operand.vmem [shape: f32[5,32,16], index: 5, kind: input, shape index: {}]
  %s6 = inlined_call_operand.vmem [shape: f32[5,32,16], index: 6, kind: input, shape index: {}]
  %s7 = inlined_call_operand.vmem [shape: f32[5,32,1], index: 7, kind: input, shape index: {}]
  %s8 = inlined_call_operand.vmem [shape: f32[5,32,16], index: 8, kind: input, shape index: {}]
  %s9 = inlined_call_operand.vmem [shape: f32[5,32,16], index: 9, kind: input, shape index: {}]
  %s10 = inlined_call_operand.vmem [shape: f32[5,32,1], index: 10, kind: input, shape index: {}]
  %s11 = inlined_call_operand.vmem [shape: f32[5,32,4], index: 11, kind: input, shape index: {}]
  %s12 = inlined_call_operand.vmem [shape: f32[5,32,16], index: 12, kind: input, shape index: {}]
  %s13 = inlined_call_operand.vmem [shape: f32[5,32,16], index: 13, kind: input, shape index: {}]
  %s14 = inlined_call_operand.vmem [shape: f32[5,32,16], index: 14, kind: input, shape index: {}]
  %s15 = inlined_call_operand.vmem [shape: f32[5,32,16], index: 15, kind: input, shape index: {}]
  %s16 = inlined_call_operand.vmem [shape: f32[5,32,1], index: 16, kind: input, shape index: {}]
  %s17 = inlined_call_operand.vmem [shape: f32[5,32,16], index: 17, kind: input, shape index: {}]
  %s18 = inlined_call_operand.vmem [shape: f32[5,32,16], index: 18, kind: input, shape index: {}]
  %s19 = inlined_call_operand.vmem [shape: f32[5,32,1], index: 19, kind: input, shape index: {}]
  %s20 = inlined_call_operand.vmem [shape: f32[4,128], index: 20, kind: output, shape index: {0}]
  %s21 = inlined_call_operand.vmem [shape: f32[1,128], index: 21, kind: output, shape index: {1}]
  %22 = xla_tuple %s20, %s21
  %s23 = sld [smem:[#allocation0]]
  $region98: #{_lambda_.1} parent=0
    _
  %s25 = ssub.s32 1, %s23
  %s26 = scalar_select 0, %s25, %s23
  // Predicated region
  $region2: #{_lambda_.1} parent=0 // pred_check
    _
  $region3: #{_lambda_.1} parent=0 // pred_check_branch
    %28 = sbr.rel (0) target = $region5
  $region4: #{_lambda_.1} parent=0 // pred_region
    _
  $region5: #{_lambda_.1} parent=0 // pred_fallthru
    _
  // Predicated region
  $region6: #{_lambda_.1} parent=0 // pred_check
    _
  $region7: #{_lambda_.1} parent=0 // pred_check_branch
    %30 = sbr.rel (0) target = $region9
  $region8: #{_lambda_.1} parent=0 // pred_region
    _
  $region9: #{_lambda_.1} parent=0 // pred_fallthru
    _
  // Predicated region
  $region10: #{_lambda_.1} parent=0 // pred_check
    _
  $region11: #{_lambda_.1} parent=0 // pred_check_branch
    %32 = sbr.rel (0) target = $region13
  $region12: #{_lambda_.1} parent=0 // pred_region
    _
  $region13: #{_lambda_.1} parent=0 // pred_fallthru
    _
  // Predicated region
  $region14: #{_lambda_.1} parent=0 // pred_check
    _
  $region15: #{_lambda_.1} parent=0 // pred_check_branch
    %34 = sbr.rel (0) target = $region17
  $region16: #{_lambda_.1} parent=0 // pred_region
    _
  $region17: #{_lambda_.1} parent=0 // pred_fallthru
    _
  // Predicated region
  $region18: #{_lambda_.1} parent=0 // pred_check
    _
  $region19: #{_lambda_.1} parent=0 // pred_check_branch
    %36 = sbr.rel (0) target = $region21
  $region20: #{_lambda_.1} parent=0 // pred_region
    _
  $region21: #{_lambda_.1} parent=0 // pred_fallthru
    _
  // Predicated region
  $region22: #{_lambda_.1} parent=0 // pred_check
    _
  $region23: #{_lambda_.1} parent=0 // pred_check_branch
    %38 = sbr.rel (0) target = $region25
  $region24: #{_lambda_.1} parent=0 // pred_region
    _
  $region25: #{_lambda_.1} parent=0 // pred_fallthru
    _
  // Predicated region
  $region26: #{_lambda_.1} parent=0 // pred_check
    _
  $region27: #{_lambda_.1} parent=0 // pred_check_branch
    %40 = sbr.rel (0) target = $region29
  $region28: #{_lambda_.1} parent=0 // pred_region
    _
  $region29: #{_lambda_.1} parent=0 // pred_fallthru
    _
  // Predicated region
  $region30: #{_lambda_.1} parent=0 // pred_check
    _
  $region31: #{_lambda_.1} parent=0 // pred_check_branch
    %42 = sbr.rel (0) target = $region33
  $region32: #{_lambda_.1} parent=0 // pred_region
    _
  $region33: #{_lambda_.1} parent=0 // pred_fallthru
    _
  // Predicated region
  $region34: #{_lambda_.1} parent=0 // pred_check
    _
  $region35: #{_lambda_.1} parent=0 // pred_check_branch
    %44 = sbr.rel (0) target = $region37
  $region36: #{_lambda_.1} parent=0 // pred_region
    _
  $region37: #{_lambda_.1} parent=0 // pred_fallthru
    _
  // Predicated region
  $region38: #{_lambda_.1} parent=0 // pred_check
    _
  $region39: #{_lambda_.1} parent=0 // pred_check_branch
    %46 = sbr.rel (0) target = $region41
  $region40: #{_lambda_.1} parent=0 // pred_region
    _
  $region41: #{_lambda_.1} parent=0 // pred_fallthru
    _
  // Predicated region
  $region42: #{_lambda_.1} parent=0 // pred_check
    _
  $region43: #{_lambda_.1} parent=0 // pred_check_branch
    %48 = sbr.rel (0) target = $region45
  $region44: #{_lambda_.1} parent=0 // pred_region
    _
  $region45: #{_lambda_.1} parent=0 // pred_fallthru
    _
  // Predicated region
  $region46: #{_lambda_.1} parent=0 // pred_check
    _
  $region47: #{_lambda_.1} parent=0 // pred_check_branch
    %50 = sbr.rel (0) target = $region49
  $region48: #{_lambda_.1} parent=0 // pred_region
    _
  $region49: #{_lambda_.1} parent=0 // pred_fallthru
    _
  // Predicated region
  $region50: #{_lambda_.1} parent=0 // pred_check
    _
  $region51: #{_lambda_.1} parent=0 // pred_check_branch
    %52 = sbr.rel (0) target = $region53
  $region52: #{_lambda_.1} parent=0 // pred_region
    _
  $region53: #{_lambda_.1} parent=0 // pred_fallthru
    _
  // Predicated region
  $region54: #{_lambda_.1} parent=0 // pred_check
    _
  $region55: #{_lambda_.1} parent=0 // pred_check_branch
    %54 = sbr.rel (0) target = $region57
  $region56: #{_lambda_.1} parent=0 // pred_region
    _
  $region57: #{_lambda_.1} parent=0 // pred_fallthru
    _
  // Predicated region
  $region58: #{_lambda_.1} parent=0 // pred_check
    _
  $region59: #{_lambda_.1} parent=0 // pred_check_branch
    %56 = sbr.rel (0) target = $region61
  $region60: #{_lambda_.1} parent=0 // pred_region
    _
  $region61: #{_lambda_.1} parent=0 // pred_fallthru
    _
  // Predicated region
  $region62: #{_lambda_.1} parent=0 // pred_check
    _
  $region63: #{_lambda_.1} parent=0 // pred_check_branch
    %58 = sbr.rel (0) target = $region65
  $region64: #{_lambda_.1} parent=0 // pred_region
    _
  $region65: #{_lambda_.1} parent=0 // pred_fallthru
    _
  // Predicated region
  $region66: #{_lambda_.1} parent=0 // pred_check
    _
  $region67: #{_lambda_.1} parent=0 // pred_check_branch
    %60 = sbr.rel (0) target = $region69
  $region68: #{_lambda_.1} parent=0 // pred_region
    _
  $region69: #{_lambda_.1} parent=0 // pred_fallthru
    _
  // Predicated region
  $region70: #{_lambda_.1} parent=0 // pred_check
    _
  $region71: #{_lambda_.1} parent=0 // pred_check_branch
    %62 = sbr.rel (0) target = $region73
  $region72: #{_lambda_.1} parent=0 // pred_region
    _
  $region73: #{_lambda_.1} parent=0 // pred_fallthru
    _
  // Predicated region
  $region74: #{_lambda_.1} parent=0 // pred_check
    _
  $region75: #{_lambda_.1} parent=0 // pred_check_branch
    %64 = sbr.rel (0) target = $region77
  $region76: #{_lambda_.1} parent=0 // pred_region
    _
  $region77: #{_lambda_.1} parent=0 // pred_fallthru
    _
  // Predicated region
  $region78: #{_lambda_.1} parent=0 // pred_check
    _
  $region79: #{_lambda_.1} parent=0 // pred_check_branch
    %66 = sbr.rel (0) target = $region81
  $region80: #{_lambda_.1} parent=0 // pred_region
    _
  $region81: #{_lambda_.1} parent=0 // pred_fallthru
    _
  %v67 = vld [vmem:[%s0] sm:$0xf]
  %v68 = vld [vmem:[%s1] sm:$0xff]
  %v69 = vld [vmem:[%s1 + $0x8] sm:$0xff]
  %v70 = vld [vmem:[%s1 + $0x10] sm:$0xff]
  %v71 = vld [vmem:[%s1 + $0x18] sm:$0xff]
  %v72 = vld [vmem:[%s1 + $0x20] sm:$0xff]
  %v73 = vld [vmem:[%s1 + $0x28] sm:$0xff]
  %v74 = vld [vmem:[%s1 + $0x30] sm:$0xff]
  %v75 = vld [vmem:[%s1 + $0x38] sm:$0xff]
  %v76 = vld [vmem:[%s1 + $0x40] sm:$0xff]
  %v77 = vld [vmem:[%s1 + $0x48] sm:$0xff]
  %v78 = vld [vmem:[%s1 + $0x50] sm:$0xff]
  %v79 = vld [vmem:[%s1 + $0x58] sm:$0xff]
  %v80 = vld [vmem:[%s1 + $0x60] sm:$0xff]
  %v81 = vld [vmem:[%s1 + $0x68] sm:$0xff]
  %v82 = vld [vmem:[%s1 + $0x70] sm:$0xff]
  %v83 = vld [vmem:[%s1 + $0x78] sm:$0xff]
  %v84 = vld [vmem:[%s2] sm:$0xff]
  %v85 = vld [vmem:[%s2 + $0x8] sm:$0xff]
  %v86 = vld [vmem:[%s2 + $0x10] sm:$0xff]
  %v87 = vld [vmem:[%s2 + $0x18] sm:$0xff]
  %v88 = vld [vmem:[%s2 + $0x20] sm:$0xff]
  %v89 = vld [vmem:[%s2 + $0x28] sm:$0xff]
  %v90 = vld [vmem:[%s2 + $0x30] sm:$0xff]
  %v91 = vld [vmem:[%s2 + $0x38] sm:$0xff]
  %v92 = vld [vmem:[%s2 + $0x40] sm:$0xff]
  %v93 = vld [vmem:[%s2 + $0x48] sm:$0xff]
  %v94 = vld [vmem:[%s2 + $0x50] sm:$0xff]
  %v95 = vld [vmem:[%s2 + $0x58] sm:$0xff]
  %v96 = vld [vmem:[%s2 + $0x60] sm:$0xff]
  %v97 = vld [vmem:[%s2 + $0x68] sm:$0xff]
  %v98 = vld [vmem:[%s2 + $0x70] sm:$0xff]
  %v99 = vld [vmem:[%s2 + $0x78] sm:$0xff]
  %v100 = vld [vmem:[%s4] sm:$0xff]
  %v101 = vld [vmem:[%s4 + $0x8] sm:$0xff]
  %v102 = vld [vmem:[%s4 + $0x10] sm:$0xff]
  %v103 = vld [vmem:[%s4 + $0x18] sm:$0xff]
  %v104 = vld [vmem:[%s7] sm:$0xff]
  %v105 = vld [vmem:[%s7 + $0x8] sm:$0xff]
  %v106 = vld [vmem:[%s7 + $0x10] sm:$0xff]
  %v107 = vld [vmem:[%s7 + $0x18] sm:$0xff]
  %109 = vset.pattern.permute.xlu0 0
  %110 = vperm.xlu0 %109, %v104
  %v111 = vpop.permute.xlu0 %110
  %114 = vset.pattern.permute.xlu0 0
  %115 = vperm.xlu0 %114, %v105
  %v116 = vpop.permute.xlu0 %115
  %119 = vset.pattern.permute.xlu0 0
  %120 = vperm.xlu0 %119, %v106
  %v121 = vpop.permute.xlu0 %120
  %124 = vset.pattern.permute.xlu0 0
  %125 = vperm.xlu0 %124, %v107
  %v126 = vpop.permute.xlu0 %125
  %vm128 = vcmask 31744
  %v130 = vsel %vm128, %v100, 0
  %v133 = vsel %vm128, %v101, 0
  %v136 = vsel %vm128, %v102, 0
  %v139 = vsel %vm128, %v103, 0
  %vm141 = vcmask 1043456
  %v143 = vsel %vm141, %v67, 0
  %145 = vmatprep.subr.mxu0 0.0
  %146 = vmatpush1.msra.mxu0 %v143
  %147 = vmatprep.subr.mxu0 0.0
  %148 = vmatpush1.msra.mxu0 0.0
  %149 = vmatprep.subr.mxu0 0.0
  %150 = vmatpush1.msra.mxu0 0.0
  %151 = vmatprep.subr.mxu0 0.0
  %152 = vmatpush1.msra.mxu0 0.0
  %153 = vmatprep.subr.mxu0 0.0
  %154 = vmatpush1.msra.mxu0 0.0
  %155 = vmatprep.subr.mxu0 0.0
  %156 = vmatpush1.msra.mxu0 0.0
  %157 = vmatprep.subr.mxu0 0.0
  %158 = vmatpush1.msra.mxu0 0.0
  %159 = vmatprep.subr.mxu0 0.0
  %160 = vmatpush1.msra.mxu0 0.0
  %161 = vmatprep.subr.mxu0 0.0
  %162 = vmatpush1.msra.mxu0 0.0
  %163 = vmatprep.subr.mxu0 0.0
  %164 = vmatpush1.msra.mxu0 0.0
  %165 = vmatprep.subr.mxu0 0.0
  %166 = vmatpush1.msra.mxu0 0.0
  %167 = vmatprep.subr.mxu0 0.0
  %168 = vmatpush1.msra.mxu0 0.0
  %169 = vmatprep.subr.mxu0 0.0
  %170 = vmatpush1.msra.mxu0 0.0
  %171 = vmatprep.subr.mxu0 0.0
  %172 = vmatpush1.msra.mxu0 0.0
  %173 = vmatprep.subr.mxu0 0.0
  %174 = vmatpush1.msra.mxu0 0.0
  %175 = vmatprep.subr.mxu0 0.0
  %176 = vmatpush1.msra.mxu0 0.0
  %177 = vmatprep.subr.mxu0 0.0
  %178 = vmatpush1.msra.mxu0 0.0
  %179 = vmatprep.subr.mxu0 0.0
  %180 = vmatpush1.msra.mxu0 0.0
  %181 = vmatprep.subr.mxu0 0.0
  %182 = vmatpush1.msra.mxu0 0.0
  %183 = vmatprep.subr.mxu0 0.0
  %184 = vmatpush1.msra.mxu0 0.0
  %185 = vmatprep.subr.mxu0 0.0
  %186 = vmatpush1.msra.mxu0 0.0
  %187 = vmatprep.subr.mxu0 0.0
  %188 = vmatpush1.msra.mxu0 0.0
  %189 = vmatprep.subr.mxu0 0.0
  %190 = vmatpush1.msra.mxu0 0.0
  %191 = vmatprep.subr.mxu0 0.0
  %192 = vmatpush1.msra.mxu0 0.0
  %193 = vmatprep.subr.mxu0 0.0
  %194 = vmatpush1.msra.mxu0 0.0
  %195 = vmatprep.subr.mxu0 0.0
  %196 = vmatpush1.msra.mxu0 0.0
  %197 = vmatprep.subr.mxu0 0.0
  %198 = vmatpush1.msra.mxu0 0.0
  %199 = vmatprep.subr.mxu0 0.0
  %200 = vmatpush1.msra.mxu0 0.0
  %201 = vmatprep.subr.mxu0 0.0
  %202 = vmatpush1.msra.mxu0 0.0
  %203 = vmatprep.subr.mxu0 0.0
  %204 = vmatpush1.msra.mxu0 0.0
  %205 = vmatprep.subr.mxu0 0.0
  %206 = vmatpush1.msra.mxu0 0.0
  %207 = vmatprep.subr.mxu0 0.0
  %208 = vmatpush1.msra.mxu0 0.0
  %209 = vmatprep.mubr.f32.mxu0 0.0
  %210 = vmatmul.mubr.f32.gmra.mrb[0].mxu0 %v130
  %v211 = vpop.f32.mrb[0].mxu0
  %v212 = vadd.f32 %v111, %v211
  %v213 = vpop.f32.mrb[0].mxu0
  %214 = vmatprep.mubr.f32.mxu0 0.0
  %215 = vmatmul.mubr.f32.gmra.mrb[0].mxu0 %v133
  %v216 = vpop.f32.mrb[0].mxu0
  %v217 = vadd.f32 %v116, %v216
  %v218 = vpop.f32.mrb[0].mxu0
  %219 = vmatprep.mubr.f32.mxu0 0.0
  %220 = vmatmul.mubr.f32.gmra.mrb[0].mxu0 %v136
  %v221 = vpop.f32.mrb[0].mxu0
  %v222 = vadd.f32 %v121, %v221
  %v223 = vpop.f32.mrb[0].mxu0
  %224 = vmatprep.mubr.f32.mxu0 0.0
  %225 = vmatmul.mubr.f32.gmra.mrb[0].mxu0 %v139
  %v226 = vpop.f32.mrb[0].mxu0
  %v227 = vadd.f32 %v126, %v226
  %v228 = vpop.f32.mrb[0].mxu0
  %229 = vdwg.mxu0
  %v230 = vmax.f32 %v212, 0.0
  %v231 = vmax.f32 %v217, 0.0
  %v232 = vmax.f32 %v222, 0.0
  %v233 = vmax.f32 %v227, 0.0
  %234 = vmatprep.subr.mxu0 0.0
  %235 = vmatpush1.msra.mxu0 %v68
  %236 = vmatprep.subr.mxu0 0.0
  %237 = vmatpush1.msra.mxu0 %v69
  %238 = vmatprep.subr.mxu0 0.0
  %239 = vmatpush1.msra.mxu0 %v70
  %240 = vmatprep.subr.mxu0 0.0
  %241 = vmatpush1.msra.mxu0 %v71
  %242 = vmatprep.subr.mxu0 0.0
  %243 = vmatpush1.msra.mxu0 %v72
  %244 = vmatprep.subr.mxu0 0.0
  %245 = vmatpush1.msra.mxu0 %v73
  %246 = vmatprep.subr.mxu0 0.0
  %247 = vmatpush1.msra.mxu0 %v74
  %248 = vmatprep.subr.mxu0 0.0
  %249 = vmatpush1.msra.mxu0 %v75
  %250 = vmatprep.subr.mxu0 0.0
  %251 = vmatpush1.msra.mxu0 %v76
  %252 = vmatprep.subr.mxu0 0.0
  %253 = vmatpush1.msra.mxu0 %v77
  %254 = vmatprep.subr.mxu0 0.0
  %255 = vmatpush1.msra.mxu0 %v78
  %256 = vmatprep.subr.mxu0 0.0
  %257 = vmatpush1.msra.mxu0 %v79
  %258 = vmatprep.subr.mxu0 0.0
  %259 = vmatpush1.msra.mxu0 %v80
  %260 = vmatprep.subr.mxu0 0.0
  %261 = vmatpush1.msra.mxu0 %v81
  %262 = vmatprep.subr.mxu0 0.0
  %263 = vmatpush1.msra.mxu0 %v82
  %264 = vmatprep.subr.mxu0 0.0
  %265 = vmatpush1.msra.mxu0 %v83
  %266 = vmatprep.subr.mxu0 0.0
  %267 = vmatpush1.msra.mxu0 0.0
  %268 = vmatprep.subr.mxu0 0.0
  %269 = vmatpush1.msra.mxu0 0.0
  %270 = vmatprep.subr.mxu0 0.0
  %271 = vmatpush1.msra.mxu0 0.0
  %272 = vmatprep.subr.mxu0 0.0
  %273 = vmatpush1.msra.mxu0 0.0
  %274 = vmatprep.subr.mxu0 0.0
  %275 = vmatpush1.msra.mxu0 0.0
  %276 = vmatprep.subr.mxu0 0.0
  %277 = vmatpush1.msra.mxu0 0.0
  %278 = vmatprep.subr.mxu0 0.0
  %279 = vmatpush1.msra.mxu0 0.0
  %280 = vmatprep.subr.mxu0 0.0
  %281 = vmatpush1.msra.mxu0 0.0
  %282 = vmatprep.subr.mxu0 0.0
  %283 = vmatpush1.msra.mxu0 0.0
  %284 = vmatprep.subr.mxu0 0.0
  %285 = vmatpush1.msra.mxu0 0.0
  %286 = vmatprep.subr.mxu0 0.0
  %287 = vmatpush1.msra.mxu0 0.0
  %288 = vmatprep.subr.mxu0 0.0
  %289 = vmatpush1.msra.mxu0 0.0
  %290 = vmatprep.subr.mxu0 0.0
  %291 = vmatpush1.msra.mxu0 0.0
  %292 = vmatprep.subr.mxu0 0.0
  %293 = vmatpush1.msra.mxu0 0.0
  %294 = vmatprep.subr.mxu0 0.0
  %295 = vmatpush1.msra.mxu0 0.0
  %296 = vmatprep.subr.mxu0 0.0
  %297 = vmatpush1.msra.mxu0 0.0
  %298 = vmatprep.mubr.f32.mxu0 0.0
  %299 = vmatmul.mubr.f32.gmra.mrb[0].mxu0 %v232
  %v300 = vpop.f32.mrb[0].mxu0
  %v301 = vadd.f32 0.0, %v300
  %v302 = vpop.f32.mrb[0].mxu0
  %303 = vmatprep.mubr.f32.mxu0 0.0
  %304 = vmatmul.mubr.f32.gmra.mrb[0].mxu0 %v233
  %v305 = vpop.f32.mrb[0].mxu0
  %v306 = vadd.f32 0.0, %v305
  %v307 = vpop.f32.mrb[0].mxu0
  %308 = vdwg.mxu0
  %v309 = vld [vmem:[%s8] sm:$0xff]
  %v310 = vld [vmem:[%s8 + $0x8] sm:$0xff]
  %v311 = vld [vmem:[%s8 + $0x10] sm:$0xff]
  %v312 = vld [vmem:[%s8 + $0x18] sm:$0xff]
  %v313 = vld [vmem:[%s9] sm:$0xff]
  %v314 = vld [vmem:[%s9 + $0x8] sm:$0xff]
  %v315 = vld [vmem:[%s9 + $0x10] sm:$0xff]
  %v316 = vld [vmem:[%s9 + $0x18] sm:$0xff]
  %v317 = vld [vmem:[%s10] sm:$0xff]
  %v318 = vld [vmem:[%s10 + $0x8] sm:$0xff]
  %v319 = vld [vmem:[%s10 + $0x10] sm:$0xff]
  %v320 = vld [vmem:[%s10 + $0x18] sm:$0xff]
  %vm321 = vcmask 130048
  %v323 = vsel %vm321, %v313, 0
  %v326 = vsel %vm321, %v314, 0
  %v329 = vsel %vm321, %v315, 0
  %v332 = vsel %vm321, %v316, 0
  %334 = vmatprep.subr.mxu0 0.0
  %335 = vmatpush1.msra.mxu0 %v301
  %336 = vmatprep.subr.mxu0 0.0
  %337 = vmatpush1.msra.mxu0 %v306
  %338 = vmatprep.subr.mxu0 0.0
  %339 = vmatpush1.msra.mxu0 0.0
  %340 = vmatprep.subr.mxu0 0.0
  %341 = vmatpush1.msra.mxu0 0.0
  %342 = vmatprep.subr.mxu0 0.0
  %343 = vmatpush1.msra.mxu0 0.0
  %344 = vmatprep.subr.mxu0 0.0
  %345 = vmatpush1.msra.mxu0 0.0
  %346 = vmatprep.subr.mxu0 0.0
  %347 = vmatpush1.msra.mxu0 0.0
  %348 = vmatprep.subr.mxu0 0.0
  %349 = vmatpush1.msra.mxu0 0.0
  %350 = vmatprep.subr.mxu0 0.0
  %351 = vmatpush1.msra.mxu0 0.0
  %352 = vmatprep.subr.mxu0 0.0
  %353 = vmatpush1.msra.mxu0 0.0
  %354 = vmatprep.subr.mxu0 0.0
  %355 = vmatpush1.msra.mxu0 0.0
  %356 = vmatprep.subr.mxu0 0.0
  %357 = vmatpush1.msra.mxu0 0.0
  %358 = vmatprep.subr.mxu0 0.0
  %359 = vmatpush1.msra.mxu0 0.0
  %360 = vmatprep.subr.mxu0 0.0
  %361 = vmatpush1.msra.mxu0 0.0
  %362 = vmatprep.subr.mxu0 0.0
  %363 = vmatpush1.msra.mxu0 0.0
  %364 = vmatprep.subr.mxu0 0.0
  %365 = vmatpush1.msra.mxu0 0.0
  %366 = vmatprep.subr.mxu0 0.0
  %367 = vmatpush1.msra.mxu0 0.0
  %368 = vmatprep.subr.mxu0 0.0
  %369 = vmatpush1.msra.mxu0 0.0
  %370 = vmatprep.subr.mxu0 0.0
  %371 = vmatpush1.msra.mxu0 0.0
  %372 = vmatprep.subr.mxu0 0.0
  %373 = vmatpush1.msra.mxu0 0.0
  %374 = vmatprep.subr.mxu0 0.0
  %375 = vmatpush1.msra.mxu0 0.0
  %376 = vmatprep.subr.mxu0 0.0
  %377 = vmatpush1.msra.mxu0 0.0
  %378 = vmatprep.subr.mxu0 0.0
  %379 = vmatpush1.msra.mxu0 0.0
  %380 = vmatprep.subr.mxu0 0.0
  %381 = vmatpush1.msra.mxu0 0.0
  %382 = vmatprep.subr.mxu0 0.0
  %383 = vmatpush1.msra.mxu0 0.0
  %384 = vmatprep.subr.mxu0 0.0
  %385 = vmatpush1.msra.mxu0 0.0
  %386 = vmatprep.subr.mxu0 0.0
  %387 = vmatpush1.msra.mxu0 0.0
  %388 = vmatprep.subr.mxu0 0.0
  %389 = vmatpush1.msra.mxu0 0.0
  %390 = vmatprep.subr.mxu0 0.0
  %391 = vmatpush1.msra.mxu0 0.0
  %392 = vmatprep.subr.mxu0 0.0
  %393 = vmatpush1.msra.mxu0 0.0
  %394 = vmatprep.subr.mxu0 0.0
  %395 = vmatpush1.msra.mxu0 0.0
  %396 = vmatprep.subr.mxu0 0.0
  %397 = vmatpush1.msra.mxu0 0.0
  %398 = vmatprep.mubr.f32.mxu0 0.0
  %399 = vmatmul.mubr.f32.gmra.mrb[0].mxu0 %v323
  %v400 = vpop.f32.mrb[0].mxu0
  %v401 = vadd.f32 0.0, %v400
  %v402 = vpop.f32.mrb[0].mxu0
  %403 = vmatprep.mubr.f32.mxu0 0.0
  %404 = vmatmul.mubr.f32.gmra.mrb[0].mxu0 %v326
  %v405 = vpop.f32.mrb[0].mxu0
  %v406 = vadd.f32 0.0, %v405
  %v407 = vpop.f32.mrb[0].mxu0
  %408 = vmatprep.mubr.f32.mxu0 0.0
  %409 = vmatmul.mubr.f32.gmra.mrb[0].mxu0 %v329
  %v410 = vpop.f32.mrb[0].mxu0
  %v411 = vadd.f32 0.0, %v410
  %v412 = vpop.f32.mrb[0].mxu0
  %413 = vmatprep.mubr.f32.mxu0 0.0
  %414 = vmatmul.mubr.f32.gmra.mrb[0].mxu0 %v332
  %v415 = vpop.f32.mrb[0].mxu0
  %v416 = vadd.f32 0.0, %v415
  %v417 = vpop.f32.mrb[0].mxu0
  %418 = vdwg.mxu0
  %v420 = vsel %vm321, %v309, 0
  %v423 = vsel %vm321, %v310, 0
  %v426 = vsel %vm321, %v311, 0
  %v429 = vsel %vm321, %v312, 0
  %431 = vmatprep.subr.mxu0 0.0
  %432 = vmatpush1.msra.mxu0 %v230
  %433 = vmatprep.subr.mxu0 0.0
  %434 = vmatpush1.msra.mxu0 %v231
  %435 = vmatprep.subr.mxu0 0.0
  %436 = vmatpush1.msra.mxu0 0.0
  %437 = vmatprep.subr.mxu0 0.0
  %438 = vmatpush1.msra.mxu0 0.0
  %439 = vmatprep.subr.mxu0 0.0
  %440 = vmatpush1.msra.mxu0 0.0
  %441 = vmatprep.subr.mxu0 0.0
  %442 = vmatpush1.msra.mxu0 0.0
  %443 = vmatprep.subr.mxu0 0.0
  %444 = vmatpush1.msra.mxu0 0.0
  %445 = vmatprep.subr.mxu0 0.0
  %446 = vmatpush1.msra.mxu0 0.0
  %447 = vmatprep.subr.mxu0 0.0
  %448 = vmatpush1.msra.mxu0 0.0
  %449 = vmatprep.subr.mxu0 0.0
  %450 = vmatpush1.msra.mxu0 0.0
  %451 = vmatprep.subr.mxu0 0.0
  %452 = vmatpush1.msra.mxu0 0.0
  %453 = vmatprep.subr.mxu0 0.0
  %454 = vmatpush1.msra.mxu0 0.0
  %455 = vmatprep.subr.mxu0 0.0
  %456 = vmatpush1.msra.mxu0 0.0
  %457 = vmatprep.subr.mxu0 0.0
  %458 = vmatpush1.msra.mxu0 0.0
  %459 = vmatprep.subr.mxu0 0.0
  %460 = vmatpush1.msra.mxu0 0.0
  %461 = vmatprep.subr.mxu0 0.0
  %462 = vmatpush1.msra.mxu0 0.0
  %463 = vmatprep.subr.mxu0 0.0
  %464 = vmatpush1.msra.mxu0 0.0
  %465 = vmatprep.subr.mxu0 0.0
  %466 = vmatpush1.msra.mxu0 0.0
  %467 = vmatprep.subr.mxu0 0.0
  %468 = vmatpush1.msra.mxu0 0.0
  %469 = vmatprep.subr.mxu0 0.0
  %470 = vmatpush1.msra.mxu0 0.0
  %471 = vmatprep.subr.mxu0 0.0
  %472 = vmatpush1.msra.mxu0 0.0
  %473 = vmatprep.subr.mxu0 0.0
  %474 = vmatpush1.msra.mxu0 0.0
  %475 = vmatprep.subr.mxu0 0.0
  %476 = vmatpush1.msra.mxu0 0.0
  %477 = vmatprep.subr.mxu0 0.0
  %478 = vmatpush1.msra.mxu0 0.0
  %479 = vmatprep.subr.mxu0 0.0
  %480 = vmatpush1.msra.mxu0 0.0
  %481 = vmatprep.subr.mxu0 0.0
  %482 = vmatpush1.msra.mxu0 0.0
  %483 = vmatprep.subr.mxu0 0.0
  %484 = vmatpush1.msra.mxu0 0.0
  %485 = vmatprep.subr.mxu0 0.0
  %486 = vmatpush1.msra.mxu0 0.0
  %487 = vmatprep.subr.mxu0 0.0
  %488 = vmatpush1.msra.mxu0 0.0
  %489 = vmatprep.subr.mxu0 0.0
  %490 = vmatpush1.msra.mxu0 0.0
  %491 = vmatprep.subr.mxu0 0.0
  %492 = vmatpush1.msra.mxu0 0.0
  %493 = vmatprep.subr.mxu0 0.0
  %494 = vmatpush1.msra.mxu0 0.0
  %495 = vmatprep.mubr.f32.mxu0 0.0
  %496 = vmatmul.mubr.f32.gmra.mrb[0].mxu0 %v420
  %v497 = vpop.f32.mrb[0].mxu0
  %v498 = vadd.f32 %v401, %v497
  %v499 = vpop.f32.mrb[0].mxu0
  %500 = vmatprep.mubr.f32.mxu0 0.0
  %501 = vmatmul.mubr.f32.gmra.mrb[0].mxu0 %v423
  %v502 = vpop.f32.mrb[0].mxu0
  %v503 = vadd.f32 %v406, %v502
  %v504 = vpop.f32.mrb[0].mxu0
  %505 = vmatprep.mubr.f32.mxu0 0.0
  %506 = vmatmul.mubr.f32.gmra.mrb[0].mxu0 %v426
  %v507 = vpop.f32.mrb[0].mxu0
  %v508 = vadd.f32 %v411, %v507
  %v509 = vpop.f32.mrb[0].mxu0
  %510 = vmatprep.mubr.f32.mxu0 0.0
  %511 = vmatmul.mubr.f32.gmra.mrb[0].mxu0 %v429
  %v512 = vpop.f32.mrb[0].mxu0
  %v513 = vadd.f32 %v416, %v512
  %v514 = vpop.f32.mrb[0].mxu0
  %515 = vdwg.mxu0
  %517 = vset.pattern.permute.xlu0 0
  %518 = vperm.xlu0 %517, %v317
  %v519 = vpop.permute.xlu0 %518
  %522 = vset.pattern.permute.xlu0 0
  %523 = vperm.xlu0 %522, %v318
  %v524 = vpop.permute.xlu0 %523
  %527 = vset.pattern.permute.xlu0 0
  %528 = vperm.xlu0 %527, %v319
  %v529 = vpop.permute.xlu0 %528
  %532 = vset.pattern.permute.xlu0 0
  %533 = vperm.xlu0 %532, %v320
  %v534 = vpop.permute.xlu0 %533
  %v536 = vadd.f32 %v498, %v519
  %v537 = vadd.f32 %v503, %v524
  %v538 = vadd.f32 %v508, %v529
  %v539 = vadd.f32 %v513, %v534
  %540 = vmatprep.subr.mxu0 0.0
  %541 = vmatpush1.msra.mxu0 %v68
  %542 = vmatprep.subr.mxu0 0.0
  %543 = vmatpush1.msra.mxu0 %v69
  %544 = vmatprep.subr.mxu0 0.0
  %545 = vmatpush1.msra.mxu0 %v70
  %546 = vmatprep.subr.mxu0 0.0
  %547 = vmatpush1.msra.mxu0 %v71
  %548 = vmatprep.subr.mxu0 0.0
  %549 = vmatpush1.msra.mxu0 %v72
  %550 = vmatprep.subr.mxu0 0.0
  %551 = vmatpush1.msra.mxu0 %v73
  %552 = vmatprep.subr.mxu0 0.0
  %553 = vmatpush1.msra.mxu0 %v74
  %554 = vmatprep.subr.mxu0 0.0
  %555 = vmatpush1.msra.mxu0 %v75
  %556 = vmatprep.subr.mxu0 0.0
  %557 = vmatpush1.msra.mxu0 %v76
  %558 = vmatprep.subr.mxu0 0.0
  %559 = vmatpush1.msra.mxu0 %v77
  %560 = vmatprep.subr.mxu0 0.0
  %561 = vmatpush1.msra.mxu0 %v78
  %562 = vmatprep.subr.mxu0 0.0
  %563 = vmatpush1.msra.mxu0 %v79
  %564 = vmatprep.subr.mxu0 0.0
  %565 = vmatpush1.msra.mxu0 %v80
  %566 = vmatprep.subr.mxu0 0.0
  %567 = vmatpush1.msra.mxu0 %v81
  %568 = vmatprep.subr.mxu0 0.0
  %569 = vmatpush1.msra.mxu0 %v82
  %570 = vmatprep.subr.mxu0 0.0
  %571 = vmatpush1.msra.mxu0 %v83
  %572 = vmatprep.subr.mxu0 0.0
  %573 = vmatpush1.msra.mxu0 0.0
  %574 = vmatprep.subr.mxu0 0.0
  %575 = vmatpush1.msra.mxu0 0.0
  %576 = vmatprep.subr.mxu0 0.0
  %577 = vmatpush1.msra.mxu0 0.0
  %578 = vmatprep.subr.mxu0 0.0
  %579 = vmatpush1.msra.mxu0 0.0
  %580 = vmatprep.subr.mxu0 0.0
  %581 = vmatpush1.msra.mxu0 0.0
  %582 = vmatprep.subr.mxu0 0.0
  %583 = vmatpush1.msra.mxu0 0.0
  %584 = vmatprep.subr.mxu0 0.0
  %585 = vmatpush1.msra.mxu0 0.0
  %586 = vmatprep.subr.mxu0 0.0
  %587 = vmatpush1.msra.mxu0 0.0
  %588 = vmatprep.subr.mxu0 0.0
  %589 = vmatpush1.msra.mxu0 0.0
  %590 = vmatprep.subr.mxu0 0.0
  %591 = vmatpush1.msra.mxu0 0.0
  %592 = vmatprep.subr.mxu0 0.0
  %593 = vmatpush1.msra.mxu0 0.0
  %594 = vmatprep.subr.mxu0 0.0
  %595 = vmatpush1.msra.mxu0 0.0
  %596 = vmatprep.subr.mxu0 0.0
  %597 = vmatpush1.msra.mxu0 0.0
  %598 = vmatprep.subr.mxu0 0.0
  %599 = vmatpush1.msra.mxu0 0.0
  %600 = vmatprep.subr.mxu0 0.0
  %601 = vmatpush1.msra.mxu0 0.0
  %602 = vmatprep.subr.mxu0 0.0
  %603 = vmatpush1.msra.mxu0 0.0
  %604 = vmatprep.mubr.f32.mxu0 0.0
  %605 = vmatmul.mubr.f32.gmra.mrb[0].mxu0 %v538
  %v606 = vpop.f32.mrb[0].mxu0
  %v607 = vadd.f32 0.0, %v606
  %v608 = vpop.f32.mrb[0].mxu0
  %609 = vmatprep.mubr.f32.mxu0 0.0
  %610 = vmatmul.mubr.f32.gmra.mrb[0].mxu0 %v539
  %v611 = vpop.f32.mrb[0].mxu0
  %v612 = vadd.f32 0.0, %v611
  %v613 = vpop.f32.mrb[0].mxu0
  %614 = vdwg.mxu0
  %615 = vmatprep.subr.mxu0 0.0
  %616 = vmatpush1.msra.mxu0 %v84
  %617 = vmatprep.subr.mxu0 0.0
  %618 = vmatpush1.msra.mxu0 %v85
  %619 = vmatprep.subr.mxu0 0.0
  %620 = vmatpush1.msra.mxu0 %v86
  %621 = vmatprep.subr.mxu0 0.0
  %622 = vmatpush1.msra.mxu0 %v87
  %623 = vmatprep.subr.mxu0 0.0
  %624 = vmatpush1.msra.mxu0 %v88
  %625 = vmatprep.subr.mxu0 0.0
  %626 = vmatpush1.msra.mxu0 %v89
  %627 = vmatprep.subr.mxu0 0.0
  %628 = vmatpush1.msra.mxu0 %v90
  %629 = vmatprep.subr.mxu0 0.0
  %630 = vmatpush1.msra.mxu0 %v91
  %631 = vmatprep.subr.mxu0 0.0
  %632 = vmatpush1.msra.mxu0 %v92
  %633 = vmatprep.subr.mxu0 0.0
  %634 = vmatpush1.msra.mxu0 %v93
  %635 = vmatprep.subr.mxu0 0.0
  %636 = vmatpush1.msra.mxu0 %v94
  %637 = vmatprep.subr.mxu0 0.0
  %638 = vmatpush1.msra.mxu0 %v95
  %639 = vmatprep.subr.mxu0 0.0
  %640 = vmatpush1.msra.mxu0 %v96
  %641 = vmatprep.subr.mxu0 0.0
  %642 = vmatpush1.msra.mxu0 %v97
  %643 = vmatprep.subr.mxu0 0.0
  %644 = vmatpush1.msra.mxu0 %v98
  %645 = vmatprep.subr.mxu0 0.0
  %646 = vmatpush1.msra.mxu0 %v99
  %647 = vmatprep.subr.mxu0 0.0
  %648 = vmatpush1.msra.mxu0 0.0
  %649 = vmatprep.subr.mxu0 0.0
  %650 = vmatpush1.msra.mxu0 0.0
  %651 = vmatprep.subr.mxu0 0.0
  %652 = vmatpush1.msra.mxu0 0.0
  %653 = vmatprep.subr.mxu0 0.0
  %654 = vmatpush1.msra.mxu0 0.0
  %655 = vmatprep.subr.mxu0 0.0
  %656 = vmatpush1.msra.mxu0 0.0
  %657 = vmatprep.subr.mxu0 0.0
  %658 = vmatpush1.msra.mxu0 0.0
  %659 = vmatprep.subr.mxu0 0.0
  %660 = vmatpush1.msra.mxu0 0.0
  %661 = vmatprep.subr.mxu0 0.0
  %662 = vmatpush1.msra.mxu0 0.0
  %663 = vmatprep.subr.mxu0 0.0
  %664 = vmatpush1.msra.mxu0 0.0
  %665 = vmatprep.subr.mxu0 0.0
  %666 = vmatpush1.msra.mxu0 0.0
  %667 = vmatprep.subr.mxu0 0.0
  %668 = vmatpush1.msra.mxu0 0.0
  %669 = vmatprep.subr.mxu0 0.0
  %670 = vmatpush1.msra.mxu0 0.0
  %671 = vmatprep.subr.mxu0 0.0
  %672 = vmatpush1.msra.mxu0 0.0
  %673 = vmatprep.subr.mxu0 0.0
  %674 = vmatpush1.msra.mxu0 0.0
  %675 = vmatprep.subr.mxu0 0.0
  %676 = vmatpush1.msra.mxu0 0.0
  %677 = vmatprep.subr.mxu0 0.0
  %678 = vmatpush1.msra.mxu0 0.0
  %679 = vmatprep.mubr.f32.mxu0 0.0
  %680 = vmatmul.mubr.f32.gmra.mrb[0].mxu0 %v536
  %v681 = vpop.f32.mrb[0].mxu0
  %v682 = vadd.f32 0.0, %v681
  %v683 = vpop.f32.mrb[0].mxu0
  %684 = vmatprep.mubr.f32.mxu0 0.0
  %685 = vmatmul.mubr.f32.gmra.mrb[0].mxu0 %v537
  %v686 = vpop.f32.mrb[0].mxu0
  %v687 = vadd.f32 0.0, %v686
  %v688 = vpop.f32.mrb[0].mxu0
  %689 = vdwg.mxu0
  %690 = vmatprep.subr.mxu0 0.0
  %691 = vmatpush1.msra.mxu0 %v84
  %692 = vmatprep.subr.mxu0 0.0
  %693 = vmatpush1.msra.mxu0 %v85
  %694 = vmatprep.subr.mxu0 0.0
  %695 = vmatpush1.msra.mxu0 %v86
  %696 = vmatprep.subr.mxu0 0.0
  %697 = vmatpush1.msra.mxu0 %v87
  %698 = vmatprep.subr.mxu0 0.0
  %699 = vmatpush1.msra.mxu0 %v88
  %700 = vmatprep.subr.mxu0 0.0
  %701 = vmatpush1.msra.mxu0 %v89
  %702 = vmatprep.subr.mxu0 0.0
  %703 = vmatpush1.msra.mxu0 %v90
  %704 = vmatprep.subr.mxu0 0.0
  %705 = vmatpush1.msra.mxu0 %v91
  %706 = vmatprep.subr.mxu0 0.0
  %707 = vmatpush1.msra.mxu0 %v92
  %708 = vmatprep.subr.mxu0 0.0
  %709 = vmatpush1.msra.mxu0 %v93
  %710 = vmatprep.subr.mxu0 0.0
  %711 = vmatpush1.msra.mxu0 %v94
  %712 = vmatprep.subr.mxu0 0.0
  %713 = vmatpush1.msra.mxu0 %v95
  %714 = vmatprep.subr.mxu0 0.0
  %715 = vmatpush1.msra.mxu0 %v96
  %716 = vmatprep.subr.mxu0 0.0
  %717 = vmatpush1.msra.mxu0 %v97
  %718 = vmatprep.subr.mxu0 0.0
  %719 = vmatpush1.msra.mxu0 %v98
  %720 = vmatprep.subr.mxu0 0.0
  %721 = vmatpush1.msra.mxu0 %v99
  %722 = vmatprep.subr.mxu0 0.0
  %723 = vmatpush1.msra.mxu0 0.0
  %724 = vmatprep.subr.mxu0 0.0
  %725 = vmatpush1.msra.mxu0 0.0
  %726 = vmatprep.subr.mxu0 0.0
  %727 = vmatpush1.msra.mxu0 0.0
  %728 = vmatprep.subr.mxu0 0.0
  %729 = vmatpush1.msra.mxu0 0.0
  %730 = vmatprep.subr.mxu0 0.0
  %731 = vmatpush1.msra.mxu0 0.0
  %732 = vmatprep.subr.mxu0 0.0
  %733 = vmatpush1.msra.mxu0 0.0
  %734 = vmatprep.subr.mxu0 0.0
  %735 = vmatpush1.msra.mxu0 0.0
  %736 = vmatprep.subr.mxu0 0.0
  %737 = vmatpush1.msra.mxu0 0.0
  %738 = vmatprep.subr.mxu0 0.0
  %739 = vmatpush1.msra.mxu0 0.0
  %740 = vmatprep.subr.mxu0 0.0
  %741 = vmatpush1.msra.mxu0 0.0
  %742 = vmatprep.subr.mxu0 0.0
  %743 = vmatpush1.msra.mxu0 0.0
  %744 = vmatprep.subr.mxu0 0.0
  %745 = vmatpush1.msra.mxu0 0.0
  %746 = vmatprep.subr.mxu0 0.0
  %747 = vmatpush1.msra.mxu0 0.0
  %748 = vmatprep.subr.mxu0 0.0
  %749 = vmatpush1.msra.mxu0 0.0
  %750 = vmatprep.subr.mxu0 0.0
  %751 = vmatpush1.msra.mxu0 0.0
  %752 = vmatprep.subr.mxu0 0.0
  %753 = vmatpush1.msra.mxu0 0.0
  %754 = vmatprep.mubr.f32.mxu0 0.0
  %755 = vmatmul.mubr.f32.gmra.mrb[0].mxu0 %v607
  %v756 = vpop.f32.mrb[0].mxu0
  %v757 = vadd.f32 0.0, %v756
  %v758 = vpop.f32.mrb[0].mxu0
  %759 = vmatprep.mubr.f32.mxu0 0.0
  %760 = vmatmul.mubr.f32.gmra.mrb[0].mxu0 %v612
  %v761 = vpop.f32.mrb[0].mxu0
  %v762 = vadd.f32 0.0, %v761
  %v763 = vpop.f32.mrb[0].mxu0
  %764 = vdwg.mxu0
  %v765 = vld [vmem:[%s11] sm:$0xff]
  %v766 = vld [vmem:[%s11 + $0x8] sm:$0xff]
  %v767 = vld [vmem:[%s11 + $0x10] sm:$0xff]
  %v768 = vld [vmem:[%s11 + $0x18] sm:$0xff]
  %v769 = vld [vmem:[%s14] sm:$0xff]
  %v770 = vld [vmem:[%s14 + $0x8] sm:$0xff]
  %v771 = vld [vmem:[%s14 + $0x10] sm:$0xff]
  %v772 = vld [vmem:[%s14 + $0x18] sm:$0xff]
  %v773 = vld [vmem:[%s15] sm:$0xff]
  %v774 = vld [vmem:[%s15 + $0x8] sm:$0xff]
  %v775 = vld [vmem:[%s15 + $0x10] sm:$0xff]
  %v776 = vld [vmem:[%s15 + $0x18] sm:$0xff]
  %v777 = vld [vmem:[%s16] sm:$0xff]
  %v778 = vld [vmem:[%s16 + $0x8] sm:$0xff]
  %v779 = vld [vmem:[%s16 + $0x10] sm:$0xff]
  %v780 = vld [vmem:[%s16 + $0x18] sm:$0xff]
  %v782 = vsel %vm321, %v769, 0
  %v785 = vsel %vm321, %v770, 0
  %v788 = vsel %vm321, %v771, 0
  %v791 = vsel %vm321, %v772, 0
  %793 = vmatprep.subr.mxu0 0.0
  %794 = vmatpush1.msra.mxu0 %v682
  %795 = vmatprep.subr.mxu0 0.0
  %796 = vmatpush1.msra.mxu0 %v687
  %797 = vmatprep.subr.mxu0 0.0
  %798 = vmatpush1.msra.mxu0 0.0
  %799 = vmatprep.subr.mxu0 0.0
  %800 = vmatpush1.msra.mxu0 0.0
  %801 = vmatprep.subr.mxu0 0.0
  %802 = vmatpush1.msra.mxu0 0.0
  %803 = vmatprep.subr.mxu0 0.0
  %804 = vmatpush1.msra.mxu0 0.0
  %805 = vmatprep.subr.mxu0 0.0
  %806 = vmatpush1.msra.mxu0 0.0
  %807 = vmatprep.subr.mxu0 0.0
  %808 = vmatpush1.msra.mxu0 0.0
  %809 = vmatprep.subr.mxu0 0.0
  %810 = vmatpush1.msra.mxu0 0.0
  %811 = vmatprep.subr.mxu0 0.0
  %812 = vmatpush1.msra.mxu0 0.0
  %813 = vmatprep.subr.mxu0 0.0
  %814 = vmatpush1.msra.mxu0 0.0
  %815 = vmatprep.subr.mxu0 0.0
  %816 = vmatpush1.msra.mxu0 0.0
  %817 = vmatprep.subr.mxu0 0.0
  %818 = vmatpush1.msra.mxu0 0.0
  %819 = vmatprep.subr.mxu0 0.0
  %820 = vmatpush1.msra.mxu0 0.0
  %821 = vmatprep.subr.mxu0 0.0
  %822 = vmatpush1.msra.mxu0 0.0
  %823 = vmatprep.subr.mxu0 0.0
  %824 = vmatpush1.msra.mxu0 0.0
  %825 = vmatprep.subr.mxu0 0.0
  %826 = vmatpush1.msra.mxu0 0.0
  %827 = vmatprep.subr.mxu0 0.0
  %828 = vmatpush1.msra.mxu0 0.0
  %829 = vmatprep.subr.mxu0 0.0
  %830 = vmatpush1.msra.mxu0 0.0
  %831 = vmatprep.subr.mxu0 0.0
  %832 = vmatpush1.msra.mxu0 0.0
  %833 = vmatprep.subr.mxu0 0.0
  %834 = vmatpush1.msra.mxu0 0.0
  %835 = vmatprep.subr.mxu0 0.0
  %836 = vmatpush1.msra.mxu0 0.0
  %837 = vmatprep.subr.mxu0 0.0
  %838 = vmatpush1.msra.mxu0 0.0
  %839 = vmatprep.subr.mxu0 0.0
  %840 = vmatpush1.msra.mxu0 0.0
  %841 = vmatprep.subr.mxu0 0.0
  %842 = vmatpush1.msra.mxu0 0.0
  %843 = vmatprep.subr.mxu0 0.0
  %844 = vmatpush1.msra.mxu0 0.0
  %845 = vmatprep.subr.mxu0 0.0
  %846 = vmatpush1.msra.mxu0 0.0
  %847 = vmatprep.subr.mxu0 0.0
  %848 = vmatpush1.msra.mxu0 0.0
  %849 = vmatprep.subr.mxu0 0.0
  %850 = vmatpush1.msra.mxu0 0.0
  %851 = vmatprep.subr.mxu0 0.0
  %852 = vmatpush1.msra.mxu0 0.0
  %853 = vmatprep.subr.mxu0 0.0
  %854 = vmatpush1.msra.mxu0 0.0
  %855 = vmatprep.subr.mxu0 0.0
  %856 = vmatpush1.msra.mxu0 0.0
  %857 = vmatprep.mubr.f32.mxu0 0.0
  %858 = vmatmul.mubr.f32.gmra.mrb[0].mxu0 %v782
  %v859 = vpop.f32.mrb[0].mxu0
  %v860 = vadd.f32 0.0, %v859
  %v861 = vpop.f32.mrb[0].mxu0
  %862 = vmatprep.mubr.f32.mxu0 0.0
  %863 = vmatmul.mubr.f32.gmra.mrb[0].mxu0 %v785
  %v864 = vpop.f32.mrb[0].mxu0
  %v865 = vadd.f32 0.0, %v864
  %v866 = vpop.f32.mrb[0].mxu0
  %867 = vmatprep.mubr.f32.mxu0 0.0
  %868 = vmatmul.mubr.f32.gmra.mrb[0].mxu0 %v788
  %v869 = vpop.f32.mrb[0].mxu0
  %v870 = vadd.f32 0.0, %v869
  %v871 = vpop.f32.mrb[0].mxu0
  %872 = vmatprep.mubr.f32.mxu0 0.0
  %873 = vmatmul.mubr.f32.gmra.mrb[0].mxu0 %v791
  %v874 = vpop.f32.mrb[0].mxu0
  %v875 = vadd.f32 0.0, %v874
  %v876 = vpop.f32.mrb[0].mxu0
  %877 = vdwg.mxu0
  %v879 = vsel %vm128, %v765, 0
  %v882 = vsel %vm128, %v766, 0
  %v885 = vsel %vm128, %v767, 0
  %v888 = vsel %vm128, %v768, 0
  %890 = vmatprep.subr.mxu0 0.0
  %891 = vmatpush1.msra.mxu0 %v143
  %892 = vmatprep.subr.mxu0 0.0
  %893 = vmatpush1.msra.mxu0 0.0
  %894 = vmatprep.subr.mxu0 0.0
  %895 = vmatpush1.msra.mxu0 0.0
  %896 = vmatprep.subr.mxu0 0.0
  %897 = vmatpush1.msra.mxu0 0.0
  %898 = vmatprep.subr.mxu0 0.0
  %899 = vmatpush1.msra.mxu0 0.0
  %900 = vmatprep.subr.mxu0 0.0
  %901 = vmatpush1.msra.mxu0 0.0
  %902 = vmatprep.subr.mxu0 0.0
  %903 = vmatpush1.msra.mxu0 0.0
  %904 = vmatprep.subr.mxu0 0.0
  %905 = vmatpush1.msra.mxu0 0.0
  %906 = vmatprep.subr.mxu0 0.0
  %907 = vmatpush1.msra.mxu0 0.0
  %908 = vmatprep.subr.mxu0 0.0
  %909 = vmatpush1.msra.mxu0 0.0
  %910 = vmatprep.subr.mxu0 0.0
  %911 = vmatpush1.msra.mxu0 0.0
  %912 = vmatprep.subr.mxu0 0.0
  %913 = vmatpush1.msra.mxu0 0.0
  %914 = vmatprep.subr.mxu0 0.0
  %915 = vmatpush1.msra.mxu0 0.0
  %916 = vmatprep.subr.mxu0 0.0
  %917 = vmatpush1.msra.mxu0 0.0
  %918 = vmatprep.subr.mxu0 0.0
  %919 = vmatpush1.msra.mxu0 0.0
  %920 = vmatprep.subr.mxu0 0.0
  %921 = vmatpush1.msra.mxu0 0.0
  %922 = vmatprep.subr.mxu0 0.0
  %923 = vmatpush1.msra.mxu0 0.0
  %924 = vmatprep.subr.mxu0 0.0
  %925 = vmatpush1.msra.mxu0 0.0
  %926 = vmatprep.subr.mxu0 0.0
  %927 = vmatpush1.msra.mxu0 0.0
  %928 = vmatprep.subr.mxu0 0.0
  %929 = vmatpush1.msra.mxu0 0.0
  %930 = vmatprep.subr.mxu0 0.0
  %931 = vmatpush1.msra.mxu0 0.0
  %932 = vmatprep.subr.mxu0 0.0
  %933 = vmatpush1.msra.mxu0 0.0
  %934 = vmatprep.subr.mxu0 0.0
  %935 = vmatpush1.msra.mxu0 0.0
  %936 = vmatprep.subr.mxu0 0.0
  %937 = vmatpush1.msra.mxu0 0.0
  %938 = vmatprep.subr.mxu0 0.0
  %939 = vmatpush1.msra.mxu0 0.0
  %940 = vmatprep.subr.mxu0 0.0
  %941 = vmatpush1.msra.mxu0 0.0
  %942 = vmatprep.subr.mxu0 0.0
  %943 = vmatpush1.msra.mxu0 0.0
  %944 = vmatprep.subr.mxu0 0.0
  %945 = vmatpush1.msra.mxu0 0.0
  %946 = vmatprep.subr.mxu0 0.0
  %947 = vmatpush1.msra.mxu0 0.0
  %948 = vmatprep.subr.mxu0 0.0
  %949 = vmatpush1.msra.mxu0 0.0
  %950 = vmatprep.subr.mxu0 0.0
  %951 = vmatpush1.msra.mxu0 0.0
  %952 = vmatprep.subr.mxu0 0.0
  %953 = vmatpush1.msra.mxu0 0.0
  %954 = vmatprep.mubr.f32.mxu0 0.0
  %955 = vmatmul.mubr.f32.gmra.mrb[0].mxu0 %v879
  %v956 = vpop.f32.mrb[0].mxu0
  %v957 = vadd.f32 %v860, %v956
  %v958 = vpop.f32.mrb[0].mxu0
  %959 = vmatprep.mubr.f32.mxu0 0.0
  %960 = vmatmul.mubr.f32.gmra.mrb[0].mxu0 %v882
  %v961 = vpop.f32.mrb[0].mxu0
  %v962 = vadd.f32 %v865, %v961
  %v963 = vpop.f32.mrb[0].mxu0
  %964 = vmatprep.mubr.f32.mxu0 0.0
  %965 = vmatmul.mubr.f32.gmra.mrb[0].mxu0 %v885
  %v966 = vpop.f32.mrb[0].mxu0
  %v967 = vadd.f32 %v870, %v966
  %v968 = vpop.f32.mrb[0].mxu0
  %969 = vmatprep.mubr.f32.mxu0 0.0
  %970 = vmatmul.mubr.f32.gmra.mrb[0].mxu0 %v888
  %v971 = vpop.f32.mrb[0].mxu0
  %v972 = vadd.f32 %v875, %v971
  %v973 = vpop.f32.mrb[0].mxu0
  %974 = vdwg.mxu0
  %v976 = vsel %vm321, %v773, 0
  %v979 = vsel %vm321, %v774, 0
  %v982 = vsel %vm321, %v775, 0
  %v985 = vsel %vm321, %v776, 0
  %987 = vmatprep.subr.mxu0 0.0
  %988 = vmatpush1.msra.mxu0 %v757
  %989 = vmatprep.subr.mxu0 0.0
  %990 = vmatpush1.msra.mxu0 %v762
  %991 = vmatprep.subr.mxu0 0.0
  %992 = vmatpush1.msra.mxu0 0.0
  %993 = vmatprep.subr.mxu0 0.0
  %994 = vmatpush1.msra.mxu0 0.0
  %995 = vmatprep.subr.mxu0 0.0
  %996 = vmatpush1.msra.mxu0 0.0
  %997 = vmatprep.subr.mxu0 0.0
  %998 = vmatpush1.msra.mxu0 0.0
  %999 = vmatprep.subr.mxu0 0.0
  %1000 = vmatpush1.msra.mxu0 0.0
  %1001 = vmatprep.subr.mxu0 0.0
  %1002 = vmatpush1.msra.mxu0 0.0
  %1003 = vmatprep.subr.mxu0 0.0
  %1004 = vmatpush1.msra.mxu0 0.0
  %1005 = vmatprep.subr.mxu0 0.0
  %1006 = vmatpush1.msra.mxu0 0.0
  %1007 = vmatprep.subr.mxu0 0.0
  %1008 = vmatpush1.msra.mxu0 0.0
  %1009 = vmatprep.subr.mxu0 0.0
  %1010 = vmatpush1.msra.mxu0 0.0
  %1011 = vmatprep.subr.mxu0 0.0
  %1012 = vmatpush1.msra.mxu0 0.0
  %1013 = vmatprep.subr.mxu0 0.0
  %1014 = vmatpush1.msra.mxu0 0.0
  %1015 = vmatprep.subr.mxu0 0.0
  %1016 = vmatpush1.msra.mxu0 0.0
  %1017 = vmatprep.subr.mxu0 0.0
  %1018 = vmatpush1.msra.mxu0 0.0
  %1019 = vmatprep.subr.mxu0 0.0
  %1020 = vmatpush1.msra.mxu0 0.0
  %1021 = vmatprep.subr.mxu0 0.0
  %1022 = vmatpush1.msra.mxu0 0.0
  %1023 = vmatprep.subr.mxu0 0.0
  %1024 = vmatpush1.msra.mxu0 0.0
  %1025 = vmatprep.subr.mxu0 0.0
  %1026 = vmatpush1.msra.mxu0 0.0
  %1027 = vmatprep.subr.mxu0 0.0
  %1028 = vmatpush1.msra.mxu0 0.0
  %1029 = vmatprep.subr.mxu0 0.0
  %1030 = vmatpush1.msra.mxu0 0.0
  %1031 = vmatprep.subr.mxu0 0.0
  %1032 = vmatpush1.msra.mxu0 0.0
  %1033 = vmatprep.subr.mxu0 0.0
  %1034 = vmatpush1.msra.mxu0 0.0
  %1035 = vmatprep.subr.mxu0 0.0
  %1036 = vmatpush1.msra.mxu0 0.0
  %1037 = vmatprep.subr.mxu0 0.0
  %1038 = vmatpush1.msra.mxu0 0.0
  %1039 = vmatprep.subr.mxu0 0.0
  %1040 = vmatpush1.msra.mxu0 0.0
  %1041 = vmatprep.subr.mxu0 0.0
  %1042 = vmatpush1.msra.mxu0 0.0
  %1043 = vmatprep.subr.mxu0 0.0
  %1044 = vmatpush1.msra.mxu0 0.0
  %1045 = vmatprep.subr.mxu0 0.0
  %1046 = vmatpush1.msra.mxu0 0.0
  %1047 = vmatprep.subr.mxu0 0.0
  %1048 = vmatpush1.msra.mxu0 0.0
  %1049 = vmatprep.subr.mxu0 0.0
  %1050 = vmatpush1.msra.mxu0 0.0
  %1051 = vmatprep.mubr.f32.mxu0 0.0
  %1052 = vmatmul.mubr.f32.gmra.mrb[0].mxu0 %v976
  %v1053 = vpop.f32.mrb[0].mxu0
  %v1054 = vadd.f32 0.0, %v1053
  %v1055 = vpop.f32.mrb[0].mxu0
  %1056 = vmatprep.mubr.f32.mxu0 0.0
  %1057 = vmatmul.mubr.f32.gmra.mrb[0].mxu0 %v979
  %v1058 = vpop.f32.mrb[0].mxu0
  %v1059 = vadd.f32 0.0, %v1058
  %v1060 = vpop.f32.mrb[0].mxu0
  %1061 = vmatprep.mubr.f32.mxu0 0.0
  %1062 = vmatmul.mubr.f32.gmra.mrb[0].mxu0 %v982
  %v1063 = vpop.f32.mrb[0].mxu0
  %v1064 = vadd.f32 0.0, %v1063
  %v1065 = vpop.f32.mrb[0].mxu0
  %1066 = vmatprep.mubr.f32.mxu0 0.0
  %1067 = vmatmul.mubr.f32.gmra.mrb[0].mxu0 %v985
  %v1068 = vpop.f32.mrb[0].mxu0
  %v1069 = vadd.f32 0.0, %v1068
  %v1070 = vpop.f32.mrb[0].mxu0
  %1071 = vdwg.mxu0
  %v1072 = vadd.f32 %v957, %v1054
  %v1073 = vadd.f32 %v962, %v1059
  %v1074 = vadd.f32 %v967, %v1064
  %v1075 = vadd.f32 %v972, %v1069
  %1077 = vset.pattern.permute.xlu0 0
  %1078 = vperm.xlu0 %1077, %v777
  %v1079 = vpop.permute.xlu0 %1078
  %1082 = vset.pattern.permute.xlu0 0
  %1083 = vperm.xlu0 %1082, %v778
  %v1084 = vpop.permute.xlu0 %1083
  %1087 = vset.pattern.permute.xlu0 0
  %1088 = vperm.xlu0 %1087, %v779
  %v1089 = vpop.permute.xlu0 %1088
  %1092 = vset.pattern.permute.xlu0 0
  %1093 = vperm.xlu0 %1092, %v780
  %v1094 = vpop.permute.xlu0 %1093
  %v1096 = vadd.f32 %v1072, %v1079
  %v1097 = vadd.f32 %v1073, %v1084
  %v1098 = vadd.f32 %v1074, %v1089
  %v1099 = vadd.f32 %v1075, %v1094
  %v1100 = vmax.f32 %v1096, 0.0
  %v1101 = vmax.f32 %v1097, 0.0
  %v1102 = vmax.f32 %v1098, 0.0
  %v1103 = vmax.f32 %v1099, 0.0
  %1104 = vmatprep.subr.mxu0 0.0
  %1105 = vmatpush1.msra.mxu0 %v68
  %1106 = vmatprep.subr.mxu0 0.0
  %1107 = vmatpush1.msra.mxu0 %v69
  %1108 = vmatprep.subr.mxu0 0.0
  %1109 = vmatpush1.msra.mxu0 %v70
  %1110 = vmatprep.subr.mxu0 0.0
  %1111 = vmatpush1.msra.mxu0 %v71
  %1112 = vmatprep.subr.mxu0 0.0
  %1113 = vmatpush1.msra.mxu0 %v72
  %1114 = vmatprep.subr.mxu0 0.0
  %1115 = vmatpush1.msra.mxu0 %v73
  %1116 = vmatprep.subr.mxu0 0.0
  %1117 = vmatpush1.msra.mxu0 %v74
  %1118 = vmatprep.subr.mxu0 0.0
  %1119 = vmatpush1.msra.mxu0 %v75
  %1120 = vmatprep.subr.mxu0 0.0
  %1121 = vmatpush1.msra.mxu0 %v76
  %1122 = vmatprep.subr.mxu0 0.0
  %1123 = vmatpush1.msra.mxu0 %v77
  %1124 = vmatprep.subr.mxu0 0.0
  %1125 = vmatpush1.msra.mxu0 %v78
  %1126 = vmatprep.subr.mxu0 0.0
  %1127 = vmatpush1.msra.mxu0 %v79
  %1128 = vmatprep.subr.mxu0 0.0
  %1129 = vmatpush1.msra.mxu0 %v80
  %1130 = vmatprep.subr.mxu0 0.0
  %1131 = vmatpush1.msra.mxu0 %v81
  %1132 = vmatprep.subr.mxu0 0.0
  %1133 = vmatpush1.msra.mxu0 %v82
  %1134 = vmatprep.subr.mxu0 0.0
  %1135 = vmatpush1.msra.mxu0 %v83
  %1136 = vmatprep.subr.mxu0 0.0
  %1137 = vmatpush1.msra.mxu0 0.0
  %1138 = vmatprep.subr.mxu0 0.0
  %1139 = vmatpush1.msra.mxu0 0.0
  %1140 = vmatprep.subr.mxu0 0.0
  %1141 = vmatpush1.msra.mxu0 0.0
  %1142 = vmatprep.subr.mxu0 0.0
  %1143 = vmatpush1.msra.mxu0 0.0
  %1144 = vmatprep.subr.mxu0 0.0
  %1145 = vmatpush1.msra.mxu0 0.0
  %1146 = vmatprep.subr.mxu0 0.0
  %1147 = vmatpush1.msra.mxu0 0.0
  %1148 = vmatprep.subr.mxu0 0.0
  %1149 = vmatpush1.msra.mxu0 0.0
  %1150 = vmatprep.subr.mxu0 0.0
  %1151 = vmatpush1.msra.mxu0 0.0
  %1152 = vmatprep.subr.mxu0 0.0
  %1153 = vmatpush1.msra.mxu0 0.0
  %1154 = vmatprep.subr.mxu0 0.0
  %1155 = vmatpush1.msra.mxu0 0.0
  %1156 = vmatprep.subr.mxu0 0.0
  %1157 = vmatpush1.msra.mxu0 0.0
  %1158 = vmatprep.subr.mxu0 0.0
  %1159 = vmatpush1.msra.mxu0 0.0
  %1160 = vmatprep.subr.mxu0 0.0
  %1161 = vmatpush1.msra.mxu0 0.0
  %1162 = vmatprep.subr.mxu0 0.0
  %1163 = vmatpush1.msra.mxu0 0.0
  %1164 = vmatprep.subr.mxu0 0.0
  %1165 = vmatpush1.msra.mxu0 0.0
  %1166 = vmatprep.subr.mxu0 0.0
  %1167 = vmatpush1.msra.mxu0 0.0
  %1168 = vmatprep.mubr.f32.mxu0 0.0
  %1169 = vmatmul.mubr.f32.gmra.mrb[0].mxu0 %v1102
  %v1170 = vpop.f32.mrb[0].mxu0
  %v1171 = vadd.f32 0.0, %v1170
  %v1172 = vpop.f32.mrb[0].mxu0
  %1173 = vmatprep.mubr.f32.mxu0 0.0
  %1174 = vmatmul.mubr.f32.gmra.mrb[0].mxu0 %v1103
  %v1175 = vpop.f32.mrb[0].mxu0
  %v1176 = vadd.f32 0.0, %v1175
  %v1177 = vpop.f32.mrb[0].mxu0
  %1178 = vdwg.mxu0
  %v1179 = vld [vmem:[%s17] sm:$0xff]
  %v1180 = vld [vmem:[%s17 + $0x8] sm:$0xff]
  %v1181 = vld [vmem:[%s17 + $0x10] sm:$0xff]
  %v1182 = vld [vmem:[%s17 + $0x18] sm:$0xff]
  %v1183 = vld [vmem:[%s18] sm:$0xff]
  %v1184 = vld [vmem:[%s18 + $0x8] sm:$0xff]
  %v1185 = vld [vmem:[%s18 + $0x10] sm:$0xff]
  %v1186 = vld [vmem:[%s18 + $0x18] sm:$0xff]
  %v1187 = vld [vmem:[%s19] sm:$0xff]
  %v1188 = vld [vmem:[%s19 + $0x8] sm:$0xff]
  %v1189 = vld [vmem:[%s19 + $0x10] sm:$0xff]
  %v1190 = vld [vmem:[%s19 + $0x18] sm:$0xff]
  %v1192 = vsel %vm321, %v1183, 0
  %v1195 = vsel %vm321, %v1184, 0
  %v1198 = vsel %vm321, %v1185, 0
  %v1201 = vsel %vm321, %v1186, 0
  %1203 = vmatprep.subr.mxu0 0.0
  %1204 = vmatpush1.msra.mxu0 %v1171
  %1205 = vmatprep.subr.mxu0 0.0
  %1206 = vmatpush1.msra.mxu0 %v1176
  %1207 = vmatprep.subr.mxu0 0.0
  %1208 = vmatpush1.msra.mxu0 0.0
  %1209 = vmatprep.subr.mxu0 0.0
  %1210 = vmatpush1.msra.mxu0 0.0
  %1211 = vmatprep.subr.mxu0 0.0
  %1212 = vmatpush1.msra.mxu0 0.0
  %1213 = vmatprep.subr.mxu0 0.0
  %1214 = vmatpush1.msra.mxu0 0.0
  %1215 = vmatprep.subr.mxu0 0.0
  %1216 = vmatpush1.msra.mxu0 0.0
  %1217 = vmatprep.subr.mxu0 0.0
  %1218 = vmatpush1.msra.mxu0 0.0
  %1219 = vmatprep.subr.mxu0 0.0
  %1220 = vmatpush1.msra.mxu0 0.0
  %1221 = vmatprep.subr.mxu0 0.0
  %1222 = vmatpush1.msra.mxu0 0.0
  %1223 = vmatprep.subr.mxu0 0.0
  %1224 = vmatpush1.msra.mxu0 0.0
  %1225 = vmatprep.subr.mxu0 0.0
  %1226 = vmatpush1.msra.mxu0 0.0
  %1227 = vmatprep.subr.mxu0 0.0
  %1228 = vmatpush1.msra.mxu0 0.0
  %1229 = vmatprep.subr.mxu0 0.0
  %1230 = vmatpush1.msra.mxu0 0.0
  %1231 = vmatprep.subr.mxu0 0.0
  %1232 = vmatpush1.msra.mxu0 0.0
  %1233 = vmatprep.subr.mxu0 0.0
  %1234 = vmatpush1.msra.mxu0 0.0
  %1235 = vmatprep.subr.mxu0 0.0
  %1236 = vmatpush1.msra.mxu0 0.0
  %1237 = vmatprep.subr.mxu0 0.0
  %1238 = vmatpush1.msra.mxu0 0.0
  %1239 = vmatprep.subr.mxu0 0.0
  %1240 = vmatpush1.msra.mxu0 0.0
  %1241 = vmatprep.subr.mxu0 0.0
  %1242 = vmatpush1.msra.mxu0 0.0
  %1243 = vmatprep.subr.mxu0 0.0
  %1244 = vmatpush1.msra.mxu0 0.0
  %1245 = vmatprep.subr.mxu0 0.0
  %1246 = vmatpush1.msra.mxu0 0.0
  %1247 = vmatprep.subr.mxu0 0.0
  %1248 = vmatpush1.msra.mxu0 0.0
  %1249 = vmatprep.subr.mxu0 0.0
  %1250 = vmatpush1.msra.mxu0 0.0
  %1251 = vmatprep.subr.mxu0 0.0
  %1252 = vmatpush1.msra.mxu0 0.0
  %1253 = vmatprep.subr.mxu0 0.0
  %1254 = vmatpush1.msra.mxu0 0.0
  %1255 = vmatprep.subr.mxu0 0.0
  %1256 = vmatpush1.msra.mxu0 0.0
  %1257 = vmatprep.subr.mxu0 0.0
  %1258 = vmatpush1.msra.mxu0 0.0
  %1259 = vmatprep.subr.mxu0 0.0
  %1260 = vmatpush1.msra.mxu0 0.0
  %1261 = vmatprep.subr.mxu0 0.0
  %1262 = vmatpush1.msra.mxu0 0.0
  %1263 = vmatprep.subr.mxu0 0.0
  %1264 = vmatpush1.msra.mxu0 0.0
  %1265 = vmatprep.subr.mxu0 0.0
  %1266 = vmatpush1.msra.mxu0 0.0
  %1267 = vmatprep.mubr.f32.mxu0 0.0
  %1268 = vmatmul.mubr.f32.gmra.mrb[0].mxu0 %v1192
  %v1269 = vpop.f32.mrb[0].mxu0
  %v1270 = vadd.f32 0.0, %v1269
  %v1271 = vpop.f32.mrb[0].mxu0
  %1272 = vmatprep.mubr.f32.mxu0 0.0
  %1273 = vmatmul.mubr.f32.gmra.mrb[0].mxu0 %v1195
  %v1274 = vpop.f32.mrb[0].mxu0
  %v1275 = vadd.f32 0.0, %v1274
  %v1276 = vpop.f32.mrb[0].mxu0
  %1277 = vmatprep.mubr.f32.mxu0 0.0
  %1278 = vmatmul.mubr.f32.gmra.mrb[0].mxu0 %v1198
  %v1279 = vpop.f32.mrb[0].mxu0
  %v1280 = vadd.f32 0.0, %v1279
  %v1281 = vpop.f32.mrb[0].mxu0
  %1282 = vmatprep.mubr.f32.mxu0 0.0
  %1283 = vmatmul.mubr.f32.gmra.mrb[0].mxu0 %v1201
  %v1284 = vpop.f32.mrb[0].mxu0
  %v1285 = vadd.f32 0.0, %v1284
  %v1286 = vpop.f32.mrb[0].mxu0
  %1287 = vdwg.mxu0
  %v1289 = vsel %vm321, %v1179, 0
  %v1292 = vsel %vm321, %v1180, 0
  %v1295 = vsel %vm321, %v1181, 0
  %v1298 = vsel %vm321, %v1182, 0
  %1300 = vmatprep.subr.mxu0 0.0
  %1301 = vmatpush1.msra.mxu0 %v1100
  %1302 = vmatprep.subr.mxu0 0.0
  %1303 = vmatpush1.msra.mxu0 %v1101
  %1304 = vmatprep.subr.mxu0 0.0
  %1305 = vmatpush1.msra.mxu0 0.0
  %1306 = vmatprep.subr.mxu0 0.0
  %1307 = vmatpush1.msra.mxu0 0.0
  %1308 = vmatprep.subr.mxu0 0.0
  %1309 = vmatpush1.msra.mxu0 0.0
  %1310 = vmatprep.subr.mxu0 0.0
  %1311 = vmatpush1.msra.mxu0 0.0
  %1312 = vmatprep.subr.mxu0 0.0
  %1313 = vmatpush1.msra.mxu0 0.0
  %1314 = vmatprep.subr.mxu0 0.0
  %1315 = vmatpush1.msra.mxu0 0.0
  %1316 = vmatprep.subr.mxu0 0.0
  %1317 = vmatpush1.msra.mxu0 0.0
  %1318 = vmatprep.subr.mxu0 0.0
  %1319 = vmatpush1.msra.mxu0 0.0
  %1320 = vmatprep.subr.mxu0 0.0
  %1321 = vmatpush1.msra.mxu0 0.0
  %1322 = vmatprep.subr.mxu0 0.0
  %1323 = vmatpush1.msra.mxu0 0.0
  %1324 = vmatprep.subr.mxu0 0.0
  %1325 = vmatpush1.msra.mxu0 0.0
  %1326 = vmatprep.subr.mxu0 0.0
  %1327 = vmatpush1.msra.mxu0 0.0
  %1328 = vmatprep.subr.mxu0 0.0
  %1329 = vmatpush1.msra.mxu0 0.0
  %1330 = vmatprep.subr.mxu0 0.0
  %1331 = vmatpush1.msra.mxu0 0.0
  %1332 = vmatprep.subr.mxu0 0.0
  %1333 = vmatpush1.msra.mxu0 0.0
  %1334 = vmatprep.subr.mxu0 0.0
  %1335 = vmatpush1.msra.mxu0 0.0
  %1336 = vmatprep.subr.mxu0 0.0
  %1337 = vmatpush1.msra.mxu0 0.0
  %1338 = vmatprep.subr.mxu0 0.0
  %1339 = vmatpush1.msra.mxu0 0.0
  %1340 = vmatprep.subr.mxu0 0.0
  %1341 = vmatpush1.msra.mxu0 0.0
  %1342 = vmatprep.subr.mxu0 0.0
  %1343 = vmatpush1.msra.mxu0 0.0
  %1344 = vmatprep.subr.mxu0 0.0
  %1345 = vmatpush1.msra.mxu0 0.0
  %1346 = vmatprep.subr.mxu0 0.0
  %1347 = vmatpush1.msra.mxu0 0.0
  %1348 = vmatprep.subr.mxu0 0.0
  %1349 = vmatpush1.msra.mxu0 0.0
  %1350 = vmatprep.subr.mxu0 0.0
  %1351 = vmatpush1.msra.mxu0 0.0
  %1352 = vmatprep.subr.mxu0 0.0
  %1353 = vmatpush1.msra.mxu0 0.0
  %1354 = vmatprep.subr.mxu0 0.0
  %1355 = vmatpush1.msra.mxu0 0.0
  %1356 = vmatprep.subr.mxu0 0.0
  %1357 = vmatpush1.msra.mxu0 0.0
  %1358 = vmatprep.subr.mxu0 0.0
  %1359 = vmatpush1.msra.mxu0 0.0
  %1360 = vmatprep.subr.mxu0 0.0
  %1361 = vmatpush1.msra.mxu0 0.0
  %1362 = vmatprep.subr.mxu0 0.0
  %1363 = vmatpush1.msra.mxu0 0.0
  %1364 = vmatprep.mubr.f32.mxu0 0.0
  %1365 = vmatmul.mubr.f32.gmra.mrb[0].mxu0 %v1289
  %v1366 = vpop.f32.mrb[0].mxu0
  %v1367 = vadd.f32 %v1270, %v1366
  %v1368 = vpop.f32.mrb[0].mxu0
  %1369 = vmatprep.mubr.f32.mxu0 0.0
  %1370 = vmatmul.mubr.f32.gmra.mrb[0].mxu0 %v1292
  %v1371 = vpop.f32.mrb[0].mxu0
  %v1372 = vadd.f32 %v1275, %v1371
  %v1373 = vpop.f32.mrb[0].mxu0
  %1374 = vmatprep.mubr.f32.mxu0 0.0
  %1375 = vmatmul.mubr.f32.gmra.mrb[0].mxu0 %v1295
  %v1376 = vpop.f32.mrb[0].mxu0
  %v1377 = vadd.f32 %v1280, %v1376
  %v1378 = vpop.f32.mrb[0].mxu0
  %1379 = vmatprep.mubr.f32.mxu0 0.0
  %1380 = vmatmul.mubr.f32.gmra.mrb[0].mxu0 %v1298
  %v1381 = vpop.f32.mrb[0].mxu0
  %v1382 = vadd.f32 %v1285, %v1381
  %v1383 = vpop.f32.mrb[0].mxu0
  %1384 = vdwg.mxu0
  %1386 = vset.pattern.permute.xlu0 0
  %1387 = vperm.xlu0 %1386, %v1187
  %v1388 = vpop.permute.xlu0 %1387
  %1391 = vset.pattern.permute.xlu0 0
  %1392 = vperm.xlu0 %1391, %v1188
  %v1393 = vpop.permute.xlu0 %1392
  %1396 = vset.pattern.permute.xlu0 0
  %1397 = vperm.xlu0 %1396, %v1189
  %v1398 = vpop.permute.xlu0 %1397
  %1401 = vset.pattern.permute.xlu0 0
  %1402 = vperm.xlu0 %1401, %v1190
  %v1403 = vpop.permute.xlu0 %1402
  %v1405 = vadd.f32 %v1367, %v1388
  %v1406 = vadd.f32 %v1372, %v1393
  %v1407 = vadd.f32 %v1377, %v1398
  %v1408 = vadd.f32 %v1382, %v1403
  %v1409 = vmax.f32 %v1405, 0.0
  %v1410 = vmax.f32 %v1406, 0.0
  %v1411 = vmax.f32 %v1407, 0.0
  %v1412 = vmax.f32 %v1408, 0.0
  %1413 = vmatprep.subr.mxu0 0.0
  %1414 = vmatpush1.msra.mxu0 %v68
  %1415 = vmatprep.subr.mxu0 0.0
  %1416 = vmatpush1.msra.mxu0 %v69
  %1417 = vmatprep.subr.mxu0 0.0
  %1418 = vmatpush1.msra.mxu0 %v70
  %1419 = vmatprep.subr.mxu0 0.0
  %1420 = vmatpush1.msra.mxu0 %v71
  %1421 = vmatprep.subr.mxu0 0.0
  %1422 = vmatpush1.msra.mxu0 %v72
  %1423 = vmatprep.subr.mxu0 0.0
  %1424 = vmatpush1.msra.mxu0 %v73
  %1425 = vmatprep.subr.mxu0 0.0
  %1426 = vmatpush1.msra.mxu0 %v74
  %1427 = vmatprep.subr.mxu0 0.0
  %1428 = vmatpush1.msra.mxu0 %v75
  %1429 = vmatprep.subr.mxu0 0.0
  %1430 = vmatpush1.msra.mxu0 %v76
  %1431 = vmatprep.subr.mxu0 0.0
  %1432 = vmatpush1.msra.mxu0 %v77
  %1433 = vmatprep.subr.mxu0 0.0
  %1434 = vmatpush1.msra.mxu0 %v78
  %1435 = vmatprep.subr.mxu0 0.0
  %1436 = vmatpush1.msra.mxu0 %v79
  %1437 = vmatprep.subr.mxu0 0.0
  %1438 = vmatpush1.msra.mxu0 %v80
  %1439 = vmatprep.subr.mxu0 0.0
  %1440 = vmatpush1.msra.mxu0 %v81
  %1441 = vmatprep.subr.mxu0 0.0
  %1442 = vmatpush1.msra.mxu0 %v82
  %1443 = vmatprep.subr.mxu0 0.0
  %1444 = vmatpush1.msra.mxu0 %v83
  %1445 = vmatprep.subr.mxu0 0.0
  %1446 = vmatpush1.msra.mxu0 0.0
  %1447 = vmatprep.subr.mxu0 0.0
  %1448 = vmatpush1.msra.mxu0 0.0
  %1449 = vmatprep.subr.mxu0 0.0
  %1450 = vmatpush1.msra.mxu0 0.0
  %1451 = vmatprep.subr.mxu0 0.0
  %1452 = vmatpush1.msra.mxu0 0.0
  %1453 = vmatprep.subr.mxu0 0.0
  %1454 = vmatpush1.msra.mxu0 0.0
  %1455 = vmatprep.subr.mxu0 0.0
  %1456 = vmatpush1.msra.mxu0 0.0
  %1457 = vmatprep.subr.mxu0 0.0
  %1458 = vmatpush1.msra.mxu0 0.0
  %1459 = vmatprep.subr.mxu0 0.0
  %1460 = vmatpush1.msra.mxu0 0.0
  %1461 = vmatprep.subr.mxu0 0.0
  %1462 = vmatpush1.msra.mxu0 0.0
  %1463 = vmatprep.subr.mxu0 0.0
  %1464 = vmatpush1.msra.mxu0 0.0
  %1465 = vmatprep.subr.mxu0 0.0
  %1466 = vmatpush1.msra.mxu0 0.0
  %1467 = vmatprep.subr.mxu0 0.0
  %1468 = vmatpush1.msra.mxu0 0.0
  %1469 = vmatprep.subr.mxu0 0.0
  %1470 = vmatpush1.msra.mxu0 0.0
  %1471 = vmatprep.subr.mxu0 0.0
  %1472 = vmatpush1.msra.mxu0 0.0
  %1473 = vmatprep.subr.mxu0 0.0
  %1474 = vmatpush1.msra.mxu0 0.0
  %1475 = vmatprep.subr.mxu0 0.0
  %1476 = vmatpush1.msra.mxu0 0.0
  %1477 = vmatprep.mubr.f32.mxu0 0.0
  %1478 = vmatmul.mubr.f32.gmra.mrb[0].mxu0 %v1411
  %v1479 = vpop.f32.mrb[0].mxu0
  %v1480 = vadd.f32 0.0, %v1479
  %v1481 = vpop.f32.mrb[0].mxu0
  %1482 = vmatprep.mubr.f32.mxu0 0.0
  %1483 = vmatmul.mubr.f32.gmra.mrb[0].mxu0 %v1412
  %v1484 = vpop.f32.mrb[0].mxu0
  %v1485 = vadd.f32 0.0, %v1484
  %v1486 = vpop.f32.mrb[0].mxu0
  %1487 = vdwg.mxu0
  %s1488 = scalar_lea.vmem %s4, 32
  %v1489 = vld [vmem:[%s1488] sm:$0xff]
  %v1490 = vld [vmem:[%s1488 + $0x8] sm:$0xff]
  %v1491 = vld [vmem:[%s1488 + $0x10] sm:$0xff]
  %v1492 = vld [vmem:[%s1488 + $0x18] sm:$0xff]
  %s1493 = scalar_lea.vmem %s5, 32
  %v1494 = vld [vmem:[%s1493] sm:$0xff]
  %v1495 = vld [vmem:[%s1493 + $0x8] sm:$0xff]
  %v1496 = vld [vmem:[%s1493 + $0x10] sm:$0xff]
  %v1497 = vld [vmem:[%s1493 + $0x18] sm:$0xff]
  %s1498 = scalar_lea.vmem %s6, 32
  %v1499 = vld [vmem:[%s1498] sm:$0xff]
  %v1500 = vld [vmem:[%s1498 + $0x8] sm:$0xff]
  %v1501 = vld [vmem:[%s1498 + $0x10] sm:$0xff]
  %v1502 = vld [vmem:[%s1498 + $0x18] sm:$0xff]
  %s1503 = scalar_lea.vmem %s7, 32
  %v1504 = vld [vmem:[%s1503] sm:$0xff]
  %v1505 = vld [vmem:[%s1503 + $0x8] sm:$0xff]
  %v1506 = vld [vmem:[%s1503 + $0x10] sm:$0xff]
  %v1507 = vld [vmem:[%s1503 + $0x18] sm:$0xff]
  %v1509 = vsel %vm321, %v1494, 0
  %v1512 = vsel %vm321, %v1495, 0
  %v1515 = vsel %vm321, %v1496, 0
  %v1518 = vsel %vm321, %v1497, 0
  %1520 = vmatprep.subr.mxu0 0.0
  %1521 = vmatpush1.msra.mxu0 %v1409
  %1522 = vmatprep.subr.mxu0 0.0
  %1523 = vmatpush1.msra.mxu0 %v1410
  %1524 = vmatprep.subr.mxu0 0.0
  %1525 = vmatpush1.msra.mxu0 0.0
  %1526 = vmatprep.subr.mxu0 0.0
  %1527 = vmatpush1.msra.mxu0 0.0
  %1528 = vmatprep.subr.mxu0 0.0
  %1529 = vmatpush1.msra.mxu0 0.0
  %1530 = vmatprep.subr.mxu0 0.0
  %1531 = vmatpush1.msra.mxu0 0.0
  %1532 = vmatprep.subr.mxu0 0.0
  %1533 = vmatpush1.msra.mxu0 0.0
  %1534 = vmatprep.subr.mxu0 0.0
  %1535 = vmatpush1.msra.mxu0 0.0
  %1536 = vmatprep.subr.mxu0 0.0
  %1537 = vmatpush1.msra.mxu0 0.0
  %1538 = vmatprep.subr.mxu0 0.0
  %1539 = vmatpush1.msra.mxu0 0.0
  %1540 = vmatprep.subr.mxu0 0.0
  %1541 = vmatpush1.msra.mxu0 0.0
  %1542 = vmatprep.subr.mxu0 0.0
  %1543 = vmatpush1.msra.mxu0 0.0
  %1544 = vmatprep.subr.mxu0 0.0
  %1545 = vmatpush1.msra.mxu0 0.0
  %1546 = vmatprep.subr.mxu0 0.0
  %1547 = vmatpush1.msra.mxu0 0.0
  %1548 = vmatprep.subr.mxu0 0.0
  %1549 = vmatpush1.msra.mxu0 0.0
  %1550 = vmatprep.subr.mxu0 0.0
  %1551 = vmatpush1.msra.mxu0 0.0
  %1552 = vmatprep.subr.mxu0 0.0
  %1553 = vmatpush1.msra.mxu0 0.0
  %1554 = vmatprep.subr.mxu0 0.0
  %1555 = vmatpush1.msra.mxu0 0.0
  %1556 = vmatprep.subr.mxu0 0.0
  %1557 = vmatpush1.msra.mxu0 0.0
  %1558 = vmatprep.subr.mxu0 0.0
  %1559 = vmatpush1.msra.mxu0 0.0
  %1560 = vmatprep.subr.mxu0 0.0
  %1561 = vmatpush1.msra.mxu0 0.0
  %1562 = vmatprep.subr.mxu0 0.0
  %1563 = vmatpush1.msra.mxu0 0.0
  %1564 = vmatprep.subr.mxu0 0.0
  %1565 = vmatpush1.msra.mxu0 0.0
  %1566 = vmatprep.subr.mxu0 0.0
  %1567 = vmatpush1.msra.mxu0 0.0
  %1568 = vmatprep.subr.mxu0 0.0
  %1569 = vmatpush1.msra.mxu0 0.0
  %1570 = vmatprep.subr.mxu0 0.0
  %1571 = vmatpush1.msra.mxu0 0.0
  %1572 = vmatprep.subr.mxu0 0.0
  %1573 = vmatpush1.msra.mxu0 0.0
  %1574 = vmatprep.subr.mxu0 0.0
  %1575 = vmatpush1.msra.mxu0 0.0
  %1576 = vmatprep.subr.mxu0 0.0
  %1577 = vmatpush1.msra.mxu0 0.0
  %1578 = vmatprep.subr.mxu0 0.0
  %1579 = vmatpush1.msra.mxu0 0.0
  %1580 = vmatprep.subr.mxu0 0.0
  %1581 = vmatpush1.msra.mxu0 0.0
  %1582 = vmatprep.subr.mxu0 0.0
  %1583 = vmatpush1.msra.mxu0 0.0
  %1584 = vmatprep.mubr.f32.mxu0 0.0
  %1585 = vmatmul.mubr.f32.gmra.mrb[0].mxu0 %v1509
  %v1586 = vpop.f32.mrb[0].mxu0
  %v1587 = vadd.f32 0.0, %v1586
  %v1588 = vpop.f32.mrb[0].mxu0
  %1589 = vmatprep.mubr.f32.mxu0 0.0
  %1590 = vmatmul.mubr.f32.gmra.mrb[0].mxu0 %v1512
  %v1591 = vpop.f32.mrb[0].mxu0
  %v1592 = vadd.f32 0.0, %v1591
  %v1593 = vpop.f32.mrb[0].mxu0
  %1594 = vmatprep.mubr.f32.mxu0 0.0
  %1595 = vmatmul.mubr.f32.gmra.mrb[0].mxu0 %v1515
  %v1596 = vpop.f32.mrb[0].mxu0
  %v1597 = vadd.f32 0.0, %v1596
  %v1598 = vpop.f32.mrb[0].mxu0
  %1599 = vmatprep.mubr.f32.mxu0 0.0
  %1600 = vmatmul.mubr.f32.gmra.mrb[0].mxu0 %v1518
  %v1601 = vpop.f32.mrb[0].mxu0
  %v1602 = vadd.f32 0.0, %v1601
  %v1603 = vpop.f32.mrb[0].mxu0
  %1604 = vdwg.mxu0
  %v1606 = vsel %vm128, %v1489, 0
  %v1609 = vsel %vm128, %v1490, 0
  %v1612 = vsel %vm128, %v1491, 0
  %v1615 = vsel %vm128, %v1492, 0
  %1617 = vmatprep.subr.mxu0 0.0
  %1618 = vmatpush1.msra.mxu0 %v143
  %1619 = vmatprep.subr.mxu0 0.0
  %1620 = vmatpush1.msra.mxu0 0.0
  %1621 = vmatprep.subr.mxu0 0.0
  %1622 = vmatpush1.msra.mxu0 0.0
  %1623 = vmatprep.subr.mxu0 0.0
  %1624 = vmatpush1.msra.mxu0 0.0
  %1625 = vmatprep.subr.mxu0 0.0
  %1626 = vmatpush1.msra.mxu0 0.0
  %1627 = vmatprep.subr.mxu0 0.0
  %1628 = vmatpush1.msra.mxu0 0.0
  %1629 = vmatprep.subr.mxu0 0.0
  %1630 = vmatpush1.msra.mxu0 0.0
  %1631 = vmatprep.subr.mxu0 0.0
  %1632 = vmatpush1.msra.mxu0 0.0
  %1633 = vmatprep.subr.mxu0 0.0
  %1634 = vmatpush1.msra.mxu0 0.0
  %1635 = vmatprep.subr.mxu0 0.0
  %1636 = vmatpush1.msra.mxu0 0.0
  %1637 = vmatprep.subr.mxu0 0.0
  %1638 = vmatpush1.msra.mxu0 0.0
  %1639 = vmatprep.subr.mxu0 0.0
  %1640 = vmatpush1.msra.mxu0 0.0
  %1641 = vmatprep.subr.mxu0 0.0
  %1642 = vmatpush1.msra.mxu0 0.0
  %1643 = vmatprep.subr.mxu0 0.0
  %1644 = vmatpush1.msra.mxu0 0.0
  %1645 = vmatprep.subr.mxu0 0.0
  %1646 = vmatpush1.msra.mxu0 0.0
  %1647 = vmatprep.subr.mxu0 0.0
  %1648 = vmatpush1.msra.mxu0 0.0
  %1649 = vmatprep.subr.mxu0 0.0
  %1650 = vmatpush1.msra.mxu0 0.0
  %1651 = vmatprep.subr.mxu0 0.0
  %1652 = vmatpush1.msra.mxu0 0.0
  %1653 = vmatprep.subr.mxu0 0.0
  %1654 = vmatpush1.msra.mxu0 0.0
  %1655 = vmatprep.subr.mxu0 0.0
  %1656 = vmatpush1.msra.mxu0 0.0
  %1657 = vmatprep.subr.mxu0 0.0
  %1658 = vmatpush1.msra.mxu0 0.0
  %1659 = vmatprep.subr.mxu0 0.0
  %1660 = vmatpush1.msra.mxu0 0.0
  %1661 = vmatprep.subr.mxu0 0.0
  %1662 = vmatpush1.msra.mxu0 0.0
  %1663 = vmatprep.subr.mxu0 0.0
  %1664 = vmatpush1.msra.mxu0 0.0
  %1665 = vmatprep.subr.mxu0 0.0
  %1666 = vmatpush1.msra.mxu0 0.0
  %1667 = vmatprep.subr.mxu0 0.0
  %1668 = vmatpush1.msra.mxu0 0.0
  %1669 = vmatprep.subr.mxu0 0.0
  %1670 = vmatpush1.msra.mxu0 0.0
  %1671 = vmatprep.subr.mxu0 0.0
  %1672 = vmatpush1.msra.mxu0 0.0
  %1673 = vmatprep.subr.mxu0 0.0
  %1674 = vmatpush1.msra.mxu0 0.0
  %1675 = vmatprep.subr.mxu0 0.0
  %1676 = vmatpush1.msra.mxu0 0.0
  %1677 = vmatprep.subr.mxu0 0.0
  %1678 = vmatpush1.msra.mxu0 0.0
  %1679 = vmatprep.subr.mxu0 0.0
  %1680 = vmatpush1.msra.mxu0 0.0
  %1681 = vmatprep.mubr.f32.mxu0 0.0
  %1682 = vmatmul.mubr.f32.gmra.mrb[0].mxu0 %v1606
  %v1683 = vpop.f32.mrb[0].mxu0
  %v1684 = vadd.f32 %v1587, %v1683
  %v1685 = vpop.f32.mrb[0].mxu0
  %1686 = vmatprep.mubr.f32.mxu0 0.0
  %1687 = vmatmul.mubr.f32.gmra.mrb[0].mxu0 %v1609
  %v1688 = vpop.f32.mrb[0].mxu0
  %v1689 = vadd.f32 %v1592, %v1688
  %v1690 = vpop.f32.mrb[0].mxu0
  %1691 = vmatprep.mubr.f32.mxu0 0.0
  %1692 = vmatmul.mubr.f32.gmra.mrb[0].mxu0 %v1612
  %v1693 = vpop.f32.mrb[0].mxu0
  %v1694 = vadd.f32 %v1597, %v1693
  %v1695 = vpop.f32.mrb[0].mxu0
  %1696 = vmatprep.mubr.f32.mxu0 0.0
  %1697 = vmatmul.mubr.f32.gmra.mrb[0].mxu0 %v1615
  %v1698 = vpop.f32.mrb[0].mxu0
  %v1699 = vadd.f32 %v1602, %v1698
  %v1700 = vpop.f32.mrb[0].mxu0
  %1701 = vdwg.mxu0
  %v1703 = vsel %vm321, %v1499, 0
  %v1706 = vsel %vm321, %v1500, 0
  %v1709 = vsel %vm321, %v1501, 0
  %v1712 = vsel %vm321, %v1502, 0
  %1714 = vmatprep.subr.mxu0 0.0
  %1715 = vmatpush1.msra.mxu0 %v1480
  %1716 = vmatprep.subr.mxu0 0.0
  %1717 = vmatpush1.msra.mxu0 %v1485
  %1718 = vmatprep.subr.mxu0 0.0
  %1719 = vmatpush1.msra.mxu0 0.0
  %1720 = vmatprep.subr.mxu0 0.0
  %1721 = vmatpush1.msra.mxu0 0.0
  %1722 = vmatprep.subr.mxu0 0.0
  %1723 = vmatpush1.msra.mxu0 0.0
  %1724 = vmatprep.subr.mxu0 0.0
  %1725 = vmatpush1.msra.mxu0 0.0
  %1726 = vmatprep.subr.mxu0 0.0
  %1727 = vmatpush1.msra.mxu0 0.0
  %1728 = vmatprep.subr.mxu0 0.0
  %1729 = vmatpush1.msra.mxu0 0.0
  %1730 = vmatprep.subr.mxu0 0.0
  %1731 = vmatpush1.msra.mxu0 0.0
  %1732 = vmatprep.subr.mxu0 0.0
  %1733 = vmatpush1.msra.mxu0 0.0
  %1734 = vmatprep.subr.mxu0 0.0
  %1735 = vmatpush1.msra.mxu0 0.0
  %1736 = vmatprep.subr.mxu0 0.0
  %1737 = vmatpush1.msra.mxu0 0.0
  %1738 = vmatprep.subr.mxu0 0.0
  %1739 = vmatpush1.msra.mxu0 0.0
  %1740 = vmatprep.subr.mxu0 0.0
  %1741 = vmatpush1.msra.mxu0 0.0
  %1742 = vmatprep.subr.mxu0 0.0
  %1743 = vmatpush1.msra.mxu0 0.0
  %1744 = vmatprep.subr.mxu0 0.0
  %1745 = vmatpush1.msra.mxu0 0.0
  %1746 = vmatprep.subr.mxu0 0.0
  %1747 = vmatpush1.msra.mxu0 0.0
  %1748 = vmatprep.subr.mxu0 0.0
  %1749 = vmatpush1.msra.mxu0 0.0
  %1750 = vmatprep.subr.mxu0 0.0
  %1751 = vmatpush1.msra.mxu0 0.0
  %1752 = vmatprep.subr.mxu0 0.0
  %1753 = vmatpush1.msra.mxu0 0.0
  %1754 = vmatprep.subr.mxu0 0.0
  %1755 = vmatpush1.msra.mxu0 0.0
  %1756 = vmatprep.subr.mxu0 0.0
  %1757 = vmatpush1.msra.mxu0 0.0
  %1758 = vmatprep.subr.mxu0 0.0
  %1759 = vmatpush1.msra.mxu0 0.0
  %1760 = vmatprep.subr.mxu0 0.0
  %1761 = vmatpush1.msra.mxu0 0.0
  %1762 = vmatprep.subr.mxu0 0.0
  %1763 = vmatpush1.msra.mxu0 0.0
  %1764 = vmatprep.subr.mxu0 0.0
  %1765 = vmatpush1.msra.mxu0 0.0
  %1766 = vmatprep.subr.mxu0 0.0
  %1767 = vmatpush1.msra.mxu0 0.0
  %1768 = vmatprep.subr.mxu0 0.0
  %1769 = vmatpush1.msra.mxu0 0.0
  %1770 = vmatprep.subr.mxu0 0.0
  %1771 = vmatpush1.msra.mxu0 0.0
  %1772 = vmatprep.subr.mxu0 0.0
  %1773 = vmatpush1.msra.mxu0 0.0
  %1774 = vmatprep.subr.mxu0 0.0
  %1775 = vmatpush1.msra.mxu0 0.0
  %1776 = vmatprep.subr.mxu0 0.0
  %1777 = vmatpush1.msra.mxu0 0.0
  %1778 = vmatprep.mubr.f32.mxu0 0.0
  %1779 = vmatmul.mubr.f32.gmra.mrb[0].mxu0 %v1703
  %v1780 = vpop.f32.mrb[0].mxu0
  %v1781 = vadd.f32 0.0, %v1780
  %v1782 = vpop.f32.mrb[0].mxu0
  %1783 = vmatprep.mubr.f32.mxu0 0.0
  %1784 = vmatmul.mubr.f32.gmra.mrb[0].mxu0 %v1706
  %v1785 = vpop.f32.mrb[0].mxu0
  %v1786 = vadd.f32 0.0, %v1785
  %v1787 = vpop.f32.mrb[0].mxu0
  %1788 = vmatprep.mubr.f32.mxu0 0.0
  %1789 = vmatmul.mubr.f32.gmra.mrb[0].mxu0 %v1709
  %v1790 = vpop.f32.mrb[0].mxu0
  %v1791 = vadd.f32 0.0, %v1790
  %v1792 = vpop.f32.mrb[0].mxu0
  %1793 = vmatprep.mubr.f32.mxu0 0.0
  %1794 = vmatmul.mubr.f32.gmra.mrb[0].mxu0 %v1712
  %v1795 = vpop.f32.mrb[0].mxu0
  %v1796 = vadd.f32 0.0, %v1795
  %v1797 = vpop.f32.mrb[0].mxu0
  %1798 = vdwg.mxu0
  %v1799 = vadd.f32 %v1684, %v1781
  %v1800 = vadd.f32 %v1689, %v1786
  %v1801 = vadd.f32 %v1694, %v1791
  %v1802 = vadd.f32 %v1699, %v1796
  %1804 = vset.pattern.permute.xlu0 0
  %1805 = vperm.xlu0 %1804, %v1504
  %v1806 = vpop.permute.xlu0 %1805
  %1809 = vset.pattern.permute.xlu0 0
  %1810 = vperm.xlu0 %1809, %v1505
  %v1811 = vpop.permute.xlu0 %1810
  %1814 = vset.pattern.permute.xlu0 0
  %1815 = vperm.xlu0 %1814, %v1506
  %v1816 = vpop.permute.xlu0 %1815
  %1819 = vset.pattern.permute.xlu0 0
  %1820 = vperm.xlu0 %1819, %v1507
  %v1821 = vpop.permute.xlu0 %1820
  %v1823 = vadd.f32 %v1799, %v1806
  %v1824 = vadd.f32 %v1800, %v1811
  %v1825 = vadd.f32 %v1801, %v1816
  %v1826 = vadd.f32 %v1802, %v1821
  %v1827 = vmax.f32 %v1823, 0.0
  %v1828 = vmax.f32 %v1824, 0.0
  %v1829 = vmax.f32 %v1825, 0.0
  %v1830 = vmax.f32 %v1826, 0.0
  %1831 = vmatprep.subr.mxu0 0.0
  %1832 = vmatpush1.msra.mxu0 %v68
  %1833 = vmatprep.subr.mxu0 0.0
  %1834 = vmatpush1.msra.mxu0 %v69
  %1835 = vmatprep.subr.mxu0 0.0
  %1836 = vmatpush1.msra.mxu0 %v70
  %1837 = vmatprep.subr.mxu0 0.0
  %1838 = vmatpush1.msra.mxu0 %v71
  %1839 = vmatprep.subr.mxu0 0.0
  %1840 = vmatpush1.msra.mxu0 %v72
  %1841 = vmatprep.subr.mxu0 0.0
  %1842 = vmatpush1.msra.mxu0 %v73
  %1843 = vmatprep.subr.mxu0 0.0
  %1844 = vmatpush1.msra.mxu0 %v74
  %1845 = vmatprep.subr.mxu0 0.0
  %1846 = vmatpush1.msra.mxu0 %v75
  %1847 = vmatprep.subr.mxu0 0.0
  %1848 = vmatpush1.msra.mxu0 %v76
  %1849 = vmatprep.subr.mxu0 0.0
  %1850 = vmatpush1.msra.mxu0 %v77
  %1851 = vmatprep.subr.mxu0 0.0
  %1852 = vmatpush1.msra.mxu0 %v78
  %1853 = vmatprep.subr.mxu0 0.0
  %1854 = vmatpush1.msra.mxu0 %v79
  %1855 = vmatprep.subr.mxu0 0.0
  %1856 = vmatpush1.msra.mxu0 %v80
  %1857 = vmatprep.subr.mxu0 0.0
  %1858 = vmatpush1.msra.mxu0 %v81
  %1859 = vmatprep.subr.mxu0 0.0
  %1860 = vmatpush1.msra.mxu0 %v82
  %1861 = vmatprep.subr.mxu0 0.0
  %1862 = vmatpush1.msra.mxu0 %v83
  %1863 = vmatprep.subr.mxu0 0.0
  %1864 = vmatpush1.msra.mxu0 0.0
  %1865 = vmatprep.subr.mxu0 0.0
  %1866 = vmatpush1.msra.mxu0 0.0
  %1867 = vmatprep.subr.mxu0 0.0
  %1868 = vmatpush1.msra.mxu0 0.0
  %1869 = vmatprep.subr.mxu0 0.0
  %1870 = vmatpush1.msra.mxu0 0.0
  %1871 = vmatprep.subr.mxu0 0.0
  %1872 = vmatpush1.msra.mxu0 0.0
  %1873 = vmatprep.subr.mxu0 0.0
  %1874 = vmatpush1.msra.mxu0 0.0
  %1875 = vmatprep.subr.mxu0 0.0
  %1876 = vmatpush1.msra.mxu0 0.0
  %1877 = vmatprep.subr.mxu0 0.0
  %1878 = vmatpush1.msra.mxu0 0.0
  %1879 = vmatprep.subr.mxu0 0.0
  %1880 = vmatpush1.msra.mxu0 0.0
  %1881 = vmatprep.subr.mxu0 0.0
  %1882 = vmatpush1.msra.mxu0 0.0
  %1883 = vmatprep.subr.mxu0 0.0
  %1884 = vmatpush1.msra.mxu0 0.0
  %1885 = vmatprep.subr.mxu0 0.0
  %1886 = vmatpush1.msra.mxu0 0.0
  %1887 = vmatprep.subr.mxu0 0.0
  %1888 = vmatpush1.msra.mxu0 0.0
  %1889 = vmatprep.subr.mxu0 0.0
  %1890 = vmatpush1.msra.mxu0 0.0
  %1891 = vmatprep.subr.mxu0 0.0
  %1892 = vmatpush1.msra.mxu0 0.0
  %1893 = vmatprep.subr.mxu0 0.0
  %1894 = vmatpush1.msra.mxu0 0.0
  %1895 = vmatprep.mubr.f32.mxu0 0.0
  %1896 = vmatmul.mubr.f32.gmra.mrb[0].mxu0 %v1829
  %v1897 = vpop.f32.mrb[0].mxu0
  %v1898 = vadd.f32 0.0, %v1897
  %v1899 = vpop.f32.mrb[0].mxu0
  %1900 = vmatprep.mubr.f32.mxu0 0.0
  %1901 = vmatmul.mubr.f32.gmra.mrb[0].mxu0 %v1830
  %v1902 = vpop.f32.mrb[0].mxu0
  %v1903 = vadd.f32 0.0, %v1902
  %v1904 = vpop.f32.mrb[0].mxu0
  %1905 = vdwg.mxu0
  %s1906 = scalar_lea.vmem %s8, 32
  %v1907 = vld [vmem:[%s1906] sm:$0xff]
  %v1908 = vld [vmem:[%s1906 + $0x8] sm:$0xff]
  %v1909 = vld [vmem:[%s1906 + $0x10] sm:$0xff]
  %v1910 = vld [vmem:[%s1906 + $0x18] sm:$0xff]
  %s1911 = scalar_lea.vmem %s9, 32
  %v1912 = vld [vmem:[%s1911] sm:$0xff]
  %v1913 = vld [vmem:[%s1911 + $0x8] sm:$0xff]
  %v1914 = vld [vmem:[%s1911 + $0x10] sm:$0xff]
  %v1915 = vld [vmem:[%s1911 + $0x18] sm:$0xff]
  %s1916 = scalar_lea.vmem %s10, 32
  %v1917 = vld [vmem:[%s1916] sm:$0xff]
  %v1918 = vld [vmem:[%s1916 + $0x8] sm:$0xff]
  %v1919 = vld [vmem:[%s1916 + $0x10] sm:$0xff]
  %v1920 = vld [vmem:[%s1916 + $0x18] sm:$0xff]
  %v1922 = vsel %vm321, %v1912, 0
  %v1925 = vsel %vm321, %v1913, 0
  %v1928 = vsel %vm321, %v1914, 0
  %v1931 = vsel %vm321, %v1915, 0
  %1933 = vmatprep.subr.mxu0 0.0
  %1934 = vmatpush1.msra.mxu0 %v1898
  %1935 = vmatprep.subr.mxu0 0.0
  %1936 = vmatpush1.msra.mxu0 %v1903
  %1937 = vmatprep.subr.mxu0 0.0
  %1938 = vmatpush1.msra.mxu0 0.0
  %1939 = vmatprep.subr.mxu0 0.0
  %1940 = vmatpush1.msra.mxu0 0.0
  %1941 = vmatprep.subr.mxu0 0.0
  %1942 = vmatpush1.msra.mxu0 0.0
  %1943 = vmatprep.subr.mxu0 0.0
  %1944 = vmatpush1.msra.mxu0 0.0
  %1945 = vmatprep.subr.mxu0 0.0
  %1946 = vmatpush1.msra.mxu0 0.0
  %1947 = vmatprep.subr.mxu0 0.0
  %1948 = vmatpush1.msra.mxu0 0.0
  %1949 = vmatprep.subr.mxu0 0.0
  %1950 = vmatpush1.msra.mxu0 0.0
  %1951 = vmatprep.subr.mxu0 0.0
  %1952 = vmatpush1.msra.mxu0 0.0
  %1953 = vmatprep.subr.mxu0 0.0
  %1954 = vmatpush1.msra.mxu0 0.0
  %1955 = vmatprep.subr.mxu0 0.0
  %1956 = vmatpush1.msra.mxu0 0.0
  %1957 = vmatprep.subr.mxu0 0.0
  %1958 = vmatpush1.msra.mxu0 0.0
  %1959 = vmatprep.subr.mxu0 0.0
  %1960 = vmatpush1.msra.mxu0 0.0
  %1961 = vmatprep.subr.mxu0 0.0
  %1962 = vmatpush1.msra.mxu0 0.0
  %1963 = vmatprep.subr.mxu0 0.0
  %1964 = vmatpush1.msra.mxu0 0.0
  %1965 = vmatprep.subr.mxu0 0.0
  %1966 = vmatpush1.msra.mxu0 0.0
  %1967 = vmatprep.subr.mxu0 0.0
  %1968 = vmatpush1.msra.mxu0 0.0
  %1969 = vmatprep.subr.mxu0 0.0
  %1970 = vmatpush1.msra.mxu0 0.0
  %1971 = vmatprep.subr.mxu0 0.0
  %1972 = vmatpush1.msra.mxu0 0.0
  %1973 = vmatprep.subr.mxu0 0.0
  %1974 = vmatpush1.msra.mxu0 0.0
  %1975 = vmatprep.subr.mxu0 0.0
  %1976 = vmatpush1.msra.mxu0 0.0
  %1977 = vmatprep.subr.mxu0 0.0
  %1978 = vmatpush1.msra.mxu0 0.0
  %1979 = vmatprep.subr.mxu0 0.0
  %1980 = vmatpush1.msra.mxu0 0.0
  %1981 = vmatprep.subr.mxu0 0.0
  %1982 = vmatpush1.msra.mxu0 0.0
  %1983 = vmatprep.subr.mxu0 0.0
  %1984 = vmatpush1.msra.mxu0 0.0
  %1985 = vmatprep.subr.mxu0 0.0
  %1986 = vmatpush1.msra.mxu0 0.0
  %1987 = vmatprep.subr.mxu0 0.0
  %1988 = vmatpush1.msra.mxu0 0.0
  %1989 = vmatprep.subr.mxu0 0.0
  %1990 = vmatpush1.msra.mxu0 0.0
  %1991 = vmatprep.subr.mxu0 0.0
  %1992 = vmatpush1.msra.mxu0 0.0
  %1993 = vmatprep.subr.mxu0 0.0
  %1994 = vmatpush1.msra.mxu0 0.0
  %1995 = vmatprep.subr.mxu0 0.0
  %1996 = vmatpush1.msra.mxu0 0.0
  %1997 = vmatprep.mubr.f32.mxu0 0.0
  %1998 = vmatmul.mubr.f32.gmra.mrb[0].mxu0 %v1922
  %v1999 = vpop.f32.mrb[0].mxu0
  %v2000 = vadd.f32 0.0, %v1999
  %v2001 = vpop.f32.mrb[0].mxu0
  %2002 = vmatprep.mubr.f32.mxu0 0.0
  %2003 = vmatmul.mubr.f32.gmra.mrb[0].mxu0 %v1925
  %v2004 = vpop.f32.mrb[0].mxu0
  %v2005 = vadd.f32 0.0, %v2004
  %v2006 = vpop.f32.mrb[0].mxu0
  %2007 = vmatprep.mubr.f32.mxu0 0.0
  %2008 = vmatmul.mubr.f32.gmra.mrb[0].mxu0 %v1928
  %v2009 = vpop.f32.mrb[0].mxu0
  %v2010 = vadd.f32 0.0, %v2009
  %v2011 = vpop.f32.mrb[0].mxu0
  %2012 = vmatprep.mubr.f32.mxu0 0.0
  %2013 = vmatmul.mubr.f32.gmra.mrb[0].mxu0 %v1931
  %v2014 = vpop.f32.mrb[0].mxu0
  %v2015 = vadd.f32 0.0, %v2014
  %v2016 = vpop.f32.mrb[0].mxu0
  %2017 = vdwg.mxu0
  %v2019 = vsel %vm321, %v1907, 0
  %v2022 = vsel %vm321, %v1908, 0
  %v2025 = vsel %vm321, %v1909, 0
  %v2028 = vsel %vm321, %v1910, 0
  %2030 = vmatprep.subr.mxu0 0.0
  %2031 = vmatpush1.msra.mxu0 %v1827
  %2032 = vmatprep.subr.mxu0 0.0
  %2033 = vmatpush1.msra.mxu0 %v1828
  %2034 = vmatprep.subr.mxu0 0.0
  %2035 = vmatpush1.msra.mxu0 0.0
  %2036 = vmatprep.subr.mxu0 0.0
  %2037 = vmatpush1.msra.mxu0 0.0
  %2038 = vmatprep.subr.mxu0 0.0
  %2039 = vmatpush1.msra.mxu0 0.0
  %2040 = vmatprep.subr.mxu0 0.0
  %2041 = vmatpush1.msra.mxu0 0.0
  %2042 = vmatprep.subr.mxu0 0.0
  %2043 = vmatpush1.msra.mxu0 0.0
  %2044 = vmatprep.subr.mxu0 0.0
  %2045 = vmatpush1.msra.mxu0 0.0
  %2046 = vmatprep.subr.mxu0 0.0
  %2047 = vmatpush1.msra.mxu0 0.0
  %2048 = vmatprep.subr.mxu0 0.0
  %2049 = vmatpush1.msra.mxu0 0.0
  %2050 = vmatprep.subr.mxu0 0.0
  %2051 = vmatpush1.msra.mxu0 0.0
  %2052 = vmatprep.subr.mxu0 0.0
  %2053 = vmatpush1.msra.mxu0 0.0
  %2054 = vmatprep.subr.mxu0 0.0
  %2055 = vmatpush1.msra.mxu0 0.0
  %2056 = vmatprep.subr.mxu0 0.0
  %2057 = vmatpush1.msra.mxu0 0.0
  %2058 = vmatprep.subr.mxu0 0.0
  %2059 = vmatpush1.msra.mxu0 0.0
  %2060 = vmatprep.subr.mxu0 0.0
  %2061 = vmatpush1.msra.mxu0 0.0
  %2062 = vmatprep.subr.mxu0 0.0
  %2063 = vmatpush1.msra.mxu0 0.0
  %2064 = vmatprep.subr.mxu0 0.0
  %2065 = vmatpush1.msra.mxu0 0.0
  %2066 = vmatprep.subr.mxu0 0.0
  %2067 = vmatpush1.msra.mxu0 0.0
  %2068 = vmatprep.subr.mxu0 0.0
  %2069 = vmatpush1.msra.mxu0 0.0
  %2070 = vmatprep.subr.mxu0 0.0
  %2071 = vmatpush1.msra.mxu0 0.0
  %2072 = vmatprep.subr.mxu0 0.0
  %2073 = vmatpush1.msra.mxu0 0.0
  %2074 = vmatprep.subr.mxu0 0.0
  %2075 = vmatpush1.msra.mxu0 0.0
  %2076 = vmatprep.subr.mxu0 0.0
  %2077 = vmatpush1.msra.mxu0 0.0
  %2078 = vmatprep.subr.mxu0 0.0
  %2079 = vmatpush1.msra.mxu0 0.0
  %2080 = vmatprep.subr.mxu0 0.0
  %2081 = vmatpush1.msra.mxu0 0.0
  %2082 = vmatprep.subr.mxu0 0.0
  %2083 = vmatpush1.msra.mxu0 0.0
  %2084 = vmatprep.subr.mxu0 0.0
  %2085 = vmatpush1.msra.mxu0 0.0
  %2086 = vmatprep.subr.mxu0 0.0
  %2087 = vmatpush1.msra.mxu0 0.0
  %2088 = vmatprep.subr.mxu0 0.0
  %2089 = vmatpush1.msra.mxu0 0.0
  %2090 = vmatprep.subr.mxu0 0.0
  %2091 = vmatpush1.msra.mxu0 0.0
  %2092 = vmatprep.subr.mxu0 0.0
  %2093 = vmatpush1.msra.mxu0 0.0
  %2094 = vmatprep.mubr.f32.mxu0 0.0
  %2095 = vmatmul.mubr.f32.gmra.mrb[0].mxu0 %v2019
  %v2096 = vpop.f32.mrb[0].mxu0
  %v2097 = vadd.f32 %v2000, %v2096
  %v2098 = vpop.f32.mrb[0].mxu0
  %2099 = vmatprep.mubr.f32.mxu0 0.0
  %2100 = vmatmul.mubr.f32.gmra.mrb[0].mxu0 %v2022
  %v2101 = vpop.f32.mrb[0].mxu0
  %v2102 = vadd.f32 %v2005, %v2101
  %v2103 = vpop.f32.mrb[0].mxu0
  %2104 = vmatprep.mubr.f32.mxu0 0.0
  %2105 = vmatmul.mubr.f32.gmra.mrb[0].mxu0 %v2025
  %v2106 = vpop.f32.mrb[0].mxu0
  %v2107 = vadd.f32 %v2010, %v2106
  %v2108 = vpop.f32.mrb[0].mxu0
  %2109 = vmatprep.mubr.f32.mxu0 0.0
  %2110 = vmatmul.mubr.f32.gmra.mrb[0].mxu0 %v2028
  %v2111 = vpop.f32.mrb[0].mxu0
  %v2112 = vadd.f32 %v2015, %v2111
  %v2113 = vpop.f32.mrb[0].mxu0
  %2114 = vdwg.mxu0
  %2116 = vset.pattern.permute.xlu0 0
  %2117 = vperm.xlu0 %2116, %v1917
  %v2118 = vpop.permute.xlu0 %2117
  %2121 = vset.pattern.permute.xlu0 0
  %2122 = vperm.xlu0 %2121, %v1918
  %v2123 = vpop.permute.xlu0 %2122
  %2126 = vset.pattern.permute.xlu0 0
  %2127 = vperm.xlu0 %2126, %v1919
  %v2128 = vpop.permute.xlu0 %2127
  %2131 = vset.pattern.permute.xlu0 0
  %2132 = vperm.xlu0 %2131, %v1920
  %v2133 = vpop.permute.xlu0 %2132
  %v2135 = vadd.f32 %v2097, %v2118
  %v2136 = vadd.f32 %v2102, %v2123
  %v2137 = vadd.f32 %v2107, %v2128
  %v2138 = vadd.f32 %v2112, %v2133
  %2139 = vmatprep.subr.mxu0 0.0
  %2140 = vmatpush1.msra.mxu0 %v68
  %2141 = vmatprep.subr.mxu0 0.0
  %2142 = vmatpush1.msra.mxu0 %v69
  %2143 = vmatprep.subr.mxu0 0.0
  %2144 = vmatpush1.msra.mxu0 %v70
  %2145 = vmatprep.subr.mxu0 0.0
  %2146 = vmatpush1.msra.mxu0 %v71
  %2147 = vmatprep.subr.mxu0 0.0
  %2148 = vmatpush1.msra.mxu0 %v72
  %2149 = vmatprep.subr.mxu0 0.0
  %2150 = vmatpush1.msra.mxu0 %v73
  %2151 = vmatprep.subr.mxu0 0.0
  %2152 = vmatpush1.msra.mxu0 %v74
  %2153 = vmatprep.subr.mxu0 0.0
  %2154 = vmatpush1.msra.mxu0 %v75
  %2155 = vmatprep.subr.mxu0 0.0
  %2156 = vmatpush1.msra.mxu0 %v76
  %2157 = vmatprep.subr.mxu0 0.0
  %2158 = vmatpush1.msra.mxu0 %v77
  %2159 = vmatprep.subr.mxu0 0.0
  %2160 = vmatpush1.msra.mxu0 %v78
  %2161 = vmatprep.subr.mxu0 0.0
  %2162 = vmatpush1.msra.mxu0 %v79
  %2163 = vmatprep.subr.mxu0 0.0
  %2164 = vmatpush1.msra.mxu0 %v80
  %2165 = vmatprep.subr.mxu0 0.0
  %2166 = vmatpush1.msra.mxu0 %v81
  %2167 = vmatprep.subr.mxu0 0.0
  %2168 = vmatpush1.msra.mxu0 %v82
  %2169 = vmatprep.subr.mxu0 0.0
  %2170 = vmatpush1.msra.mxu0 %v83
  %2171 = vmatprep.subr.mxu0 0.0
  %2172 = vmatpush1.msra.mxu0 0.0
  %2173 = vmatprep.subr.mxu0 0.0
  %2174 = vmatpush1.msra.mxu0 0.0
  %2175 = vmatprep.subr.mxu0 0.0
  %2176 = vmatpush1.msra.mxu0 0.0
  %2177 = vmatprep.subr.mxu0 0.0
  %2178 = vmatpush1.msra.mxu0 0.0
  %2179 = vmatprep.subr.mxu0 0.0
  %2180 = vmatpush1.msra.mxu0 0.0
  %2181 = vmatprep.subr.mxu0 0.0
  %2182 = vmatpush1.msra.mxu0 0.0
  %2183 = vmatprep.subr.mxu0 0.0
  %2184 = vmatpush1.msra.mxu0 0.0
  %2185 = vmatprep.subr.mxu0 0.0
  %2186 = vmatpush1.msra.mxu0 0.0
  %2187 = vmatprep.subr.mxu0 0.0
  %2188 = vmatpush1.msra.mxu0 0.0
  %2189 = vmatprep.subr.mxu0 0.0
  %2190 = vmatpush1.msra.mxu0 0.0
  %2191 = vmatprep.subr.mxu0 0.0
  %2192 = vmatpush1.msra.mxu0 0.0
  %2193 = vmatprep.subr.mxu0 0.0
  %2194 = vmatpush1.msra.mxu0 0.0
  %2195 = vmatprep.subr.mxu0 0.0
  %2196 = vmatpush1.msra.mxu0 0.0
  %2197 = vmatprep.subr.mxu0 0.0
  %2198 = vmatpush1.msra.mxu0 0.0
  %2199 = vmatprep.subr.mxu0 0.0
  %2200 = vmatpush1.msra.mxu0 0.0
  %2201 = vmatprep.subr.mxu0 0.0
  %2202 = vmatpush1.msra.mxu0 0.0
  %2203 = vmatprep.mubr.f32.mxu0 0.0
  %2204 = vmatmul.mubr.f32.gmra.mrb[0].mxu0 %v2137
  %v2205 = vpop.f32.mrb[0].mxu0
  %v2206 = vadd.f32 0.0, %v2205
  %v2207 = vpop.f32.mrb[0].mxu0
  %2208 = vmatprep.mubr.f32.mxu0 0.0
  %2209 = vmatmul.mubr.f32.gmra.mrb[0].mxu0 %v2138
  %v2210 = vpop.f32.mrb[0].mxu0
  %v2211 = vadd.f32 0.0, %v2210
  %v2212 = vpop.f32.mrb[0].mxu0
  %2213 = vdwg.mxu0
  %2214 = vmatprep.subr.mxu0 0.0
  %2215 = vmatpush1.msra.mxu0 %v84
  %2216 = vmatprep.subr.mxu0 0.0
  %2217 = vmatpush1.msra.mxu0 %v85
  %2218 = vmatprep.subr.mxu0 0.0
  %2219 = vmatpush1.msra.mxu0 %v86
  %2220 = vmatprep.subr.mxu0 0.0
  %2221 = vmatpush1.msra.mxu0 %v87
  %2222 = vmatprep.subr.mxu0 0.0
  %2223 = vmatpush1.msra.mxu0 %v88
  %2224 = vmatprep.subr.mxu0 0.0
  %2225 = vmatpush1.msra.mxu0 %v89
  %2226 = vmatprep.subr.mxu0 0.0
  %2227 = vmatpush1.msra.mxu0 %v90
  %2228 = vmatprep.subr.mxu0 0.0
  %2229 = vmatpush1.msra.mxu0 %v91
  %2230 = vmatprep.subr.mxu0 0.0
  %2231 = vmatpush1.msra.mxu0 %v92
  %2232 = vmatprep.subr.mxu0 0.0
  %2233 = vmatpush1.msra.mxu0 %v93
  %2234 = vmatprep.subr.mxu0 0.0
  %2235 = vmatpush1.msra.mxu0 %v94
  %2236 = vmatprep.subr.mxu0 0.0
  %2237 = vmatpush1.msra.mxu0 %v95
  %2238 = vmatprep.subr.mxu0 0.0
  %2239 = vmatpush1.msra.mxu0 %v96
  %2240 = vmatprep.subr.mxu0 0.0
  %2241 = vmatpush1.msra.mxu0 %v97
  %2242 = vmatprep.subr.mxu0 0.0
  %2243 = vmatpush1.msra.mxu0 %v98
  %2244 = vmatprep.subr.mxu0 0.0
  %2245 = vmatpush1.msra.mxu0 %v99
  %2246 = vmatprep.subr.mxu0 0.0
  %2247 = vmatpush1.msra.mxu0 0.0
  %2248 = vmatprep.subr.mxu0 0.0
  %2249 = vmatpush1.msra.mxu0 0.0
  %2250 = vmatprep.subr.mxu0 0.0
  %2251 = vmatpush1.msra.mxu0 0.0
  %2252 = vmatprep.subr.mxu0 0.0
  %2253 = vmatpush1.msra.mxu0 0.0
  %2254 = vmatprep.subr.mxu0 0.0
  %2255 = vmatpush1.msra.mxu0 0.0
  %2256 = vmatprep.subr.mxu0 0.0
  %2257 = vmatpush1.msra.mxu0 0.0
  %2258 = vmatprep.subr.mxu0 0.0
  %2259 = vmatpush1.msra.mxu0 0.0
  %2260 = vmatprep.subr.mxu0 0.0
  %2261 = vmatpush1.msra.mxu0 0.0
  %2262 = vmatprep.subr.mxu0 0.0
  %2263 = vmatpush1.msra.mxu0 0.0
  %2264 = vmatprep.subr.mxu0 0.0
  %2265 = vmatpush1.msra.mxu0 0.0
  %2266 = vmatprep.subr.mxu0 0.0
  %2267 = vmatpush1.msra.mxu0 0.0
  %2268 = vmatprep.subr.mxu0 0.0
  %2269 = vmatpush1.msra.mxu0 0.0
  %2270 = vmatprep.subr.mxu0 0.0
  %2271 = vmatpush1.msra.mxu0 0.0
  %2272 = vmatprep.subr.mxu0 0.0
  %2273 = vmatpush1.msra.mxu0 0.0
  %2274 = vmatprep.subr.mxu0 0.0
  %2275 = vmatpush1.msra.mxu0 0.0
  %2276 = vmatprep.subr.mxu0 0.0
  %2277 = vmatpush1.msra.mxu0 0.0
  %2278 = vmatprep.mubr.f32.mxu0 0.0
  %2279 = vmatmul.mubr.f32.gmra.mrb[0].mxu0 %v2135
  %v2280 = vpop.f32.mrb[0].mxu0
  %v2281 = vadd.f32 0.0, %v2280
  %v2282 = vpop.f32.mrb[0].mxu0
  %2283 = vmatprep.mubr.f32.mxu0 0.0
  %2284 = vmatmul.mubr.f32.gmra.mrb[0].mxu0 %v2136
  %v2285 = vpop.f32.mrb[0].mxu0
  %v2286 = vadd.f32 0.0, %v2285
  %v2287 = vpop.f32.mrb[0].mxu0
  %2288 = vdwg.mxu0
  %2289 = vmatprep.subr.mxu0 0.0
  %2290 = vmatpush1.msra.mxu0 %v84
  %2291 = vmatprep.subr.mxu0 0.0
  %2292 = vmatpush1.msra.mxu0 %v85
  %2293 = vmatprep.subr.mxu0 0.0
  %2294 = vmatpush1.msra.mxu0 %v86
  %2295 = vmatprep.subr.mxu0 0.0
  %2296 = vmatpush1.msra.mxu0 %v87
  %2297 = vmatprep.subr.mxu0 0.0
  %2298 = vmatpush1.msra.mxu0 %v88
  %2299 = vmatprep.subr.mxu0 0.0
  %2300 = vmatpush1.msra.mxu0 %v89
  %2301 = vmatprep.subr.mxu0 0.0
  %2302 = vmatpush1.msra.mxu0 %v90
  %2303 = vmatprep.subr.mxu0 0.0
  %2304 = vmatpush1.msra.mxu0 %v91
  %2305 = vmatprep.subr.mxu0 0.0
  %2306 = vmatpush1.msra.mxu0 %v92
  %2307 = vmatprep.subr.mxu0 0.0
  %2308 = vmatpush1.msra.mxu0 %v93
  %2309 = vmatprep.subr.mxu0 0.0
  %2310 = vmatpush1.msra.mxu0 %v94
  %2311 = vmatprep.subr.mxu0 0.0
  %2312 = vmatpush1.msra.mxu0 %v95
  %2313 = vmatprep.subr.mxu0 0.0
  %2314 = vmatpush1.msra.mxu0 %v96
  %2315 = vmatprep.subr.mxu0 0.0
  %2316 = vmatpush1.msra.mxu0 %v97
  %2317 = vmatprep.subr.mxu0 0.0
  %2318 = vmatpush1.msra.mxu0 %v98
  %2319 = vmatprep.subr.mxu0 0.0
  %2320 = vmatpush1.msra.mxu0 %v99
  %2321 = vmatprep.subr.mxu0 0.0
  %2322 = vmatpush1.msra.mxu0 0.0
  %2323 = vmatprep.subr.mxu0 0.0
  %2324 = vmatpush1.msra.mxu0 0.0
  %2325 = vmatprep.subr.mxu0 0.0
  %2326 = vmatpush1.msra.mxu0 0.0
  %2327 = vmatprep.subr.mxu0 0.0
  %2328 = vmatpush1.msra.mxu0 0.0
  %2329 = vmatprep.subr.mxu0 0.0
  %2330 = vmatpush1.msra.mxu0 0.0
  %2331 = vmatprep.subr.mxu0 0.0
  %2332 = vmatpush1.msra.mxu0 0.0
  %2333 = vmatprep.subr.mxu0 0.0
  %2334 = vmatpush1.msra.mxu0 0.0
  %2335 = vmatprep.subr.mxu0 0.0
  %2336 = vmatpush1.msra.mxu0 0.0
  %2337 = vmatprep.subr.mxu0 0.0
  %2338 = vmatpush1.msra.mxu0 0.0
  %2339 = vmatprep.subr.mxu0 0.0
  %2340 = vmatpush1.msra.mxu0 0.0
  %2341 = vmatprep.subr.mxu0 0.0
  %2342 = vmatpush1.msra.mxu0 0.0
  %2343 = vmatprep.subr.mxu0 0.0
  %2344 = vmatpush1.msra.mxu0 0.0
  %2345 = vmatprep.subr.mxu0 0.0
  %2346 = vmatpush1.msra.mxu0 0.0
  %2347 = vmatprep.subr.mxu0 0.0
  %2348 = vmatpush1.msra.mxu0 0.0
  %2349 = vmatprep.subr.mxu0 0.0
  %2350 = vmatpush1.msra.mxu0 0.0
  %2351 = vmatprep.subr.mxu0 0.0
  %2352 = vmatpush1.msra.mxu0 0.0
  %2353 = vmatprep.mubr.f32.mxu0 0.0
  %2354 = vmatmul.mubr.f32.gmra.mrb[0].mxu0 %v2206
  %v2355 = vpop.f32.mrb[0].mxu0
  %v2356 = vadd.f32 0.0, %v2355
  %v2357 = vpop.f32.mrb[0].mxu0
  %2358 = vmatprep.mubr.f32.mxu0 0.0
  %2359 = vmatmul.mubr.f32.gmra.mrb[0].mxu0 %v2211
  %v2360 = vpop.f32.mrb[0].mxu0
  %v2361 = vadd.f32 0.0, %v2360
  %v2362 = vpop.f32.mrb[0].mxu0
  %2363 = vdwg.mxu0
  %s2364 = scalar_lea.vmem %s12, 32
  %v2365 = vld [vmem:[%s2364] sm:$0xff]
  %v2366 = vld [vmem:[%s2364 + $0x8] sm:$0xff]
  %v2367 = vld [vmem:[%s2364 + $0x10] sm:$0xff]
  %v2368 = vld [vmem:[%s2364 + $0x18] sm:$0xff]
  %s2369 = scalar_lea.vmem %s13, 32
  %v2370 = vld [vmem:[%s2369] sm:$0xff]
  %v2371 = vld [vmem:[%s2369 + $0x8] sm:$0xff]
  %v2372 = vld [vmem:[%s2369 + $0x10] sm:$0xff]
  %v2373 = vld [vmem:[%s2369 + $0x18] sm:$0xff]
  %s2374 = scalar_lea.vmem %s14, 32
  %v2375 = vld [vmem:[%s2374] sm:$0xff]
  %v2376 = vld [vmem:[%s2374 + $0x8] sm:$0xff]
  %v2377 = vld [vmem:[%s2374 + $0x10] sm:$0xff]
  %v2378 = vld [vmem:[%s2374 + $0x18] sm:$0xff]
  %s2379 = scalar_lea.vmem %s15, 32
  %v2380 = vld [vmem:[%s2379] sm:$0xff]
  %v2381 = vld [vmem:[%s2379 + $0x8] sm:$0xff]
  %v2382 = vld [vmem:[%s2379 + $0x10] sm:$0xff]
  %v2383 = vld [vmem:[%s2379 + $0x18] sm:$0xff]
  %s2384 = scalar_lea.vmem %s16, 32
  %v2385 = vld [vmem:[%s2384] sm:$0xff]
  %v2386 = vld [vmem:[%s2384 + $0x8] sm:$0xff]
  %v2387 = vld [vmem:[%s2384 + $0x10] sm:$0xff]
  %v2388 = vld [vmem:[%s2384 + $0x18] sm:$0xff]
  %v2390 = vsel %vm321, %v2370, 0
  %v2393 = vsel %vm321, %v2371, 0
  %v2396 = vsel %vm321, %v2372, 0
  %v2399 = vsel %vm321, %v2373, 0
  %2401 = vmatprep.subr.mxu0 0.0
  %2402 = vmatpush1.msra.mxu0 %v1480
  %2403 = vmatprep.subr.mxu0 0.0
  %2404 = vmatpush1.msra.mxu0 %v1485
  %2405 = vmatprep.subr.mxu0 0.0
  %2406 = vmatpush1.msra.mxu0 0.0
  %2407 = vmatprep.subr.mxu0 0.0
  %2408 = vmatpush1.msra.mxu0 0.0
  %2409 = vmatprep.subr.mxu0 0.0
  %2410 = vmatpush1.msra.mxu0 0.0
  %2411 = vmatprep.subr.mxu0 0.0
  %2412 = vmatpush1.msra.mxu0 0.0
  %2413 = vmatprep.subr.mxu0 0.0
  %2414 = vmatpush1.msra.mxu0 0.0
  %2415 = vmatprep.subr.mxu0 0.0
  %2416 = vmatpush1.msra.mxu0 0.0
  %2417 = vmatprep.subr.mxu0 0.0
  %2418 = vmatpush1.msra.mxu0 0.0
  %2419 = vmatprep.subr.mxu0 0.0
  %2420 = vmatpush1.msra.mxu0 0.0
  %2421 = vmatprep.subr.mxu0 0.0
  %2422 = vmatpush1.msra.mxu0 0.0
  %2423 = vmatprep.subr.mxu0 0.0
  %2424 = vmatpush1.msra.mxu0 0.0
  %2425 = vmatprep.subr.mxu0 0.0
  %2426 = vmatpush1.msra.mxu0 0.0
  %2427 = vmatprep.subr.mxu0 0.0
  %2428 = vmatpush1.msra.mxu0 0.0
  %2429 = vmatprep.subr.mxu0 0.0
  %2430 = vmatpush1.msra.mxu0 0.0
  %2431 = vmatprep.subr.mxu0 0.0
  %2432 = vmatpush1.msra.mxu0 0.0
  %2433 = vmatprep.subr.mxu0 0.0
  %2434 = vmatpush1.msra.mxu0 0.0
  %2435 = vmatprep.subr.mxu0 0.0
  %2436 = vmatpush1.msra.mxu0 0.0
  %2437 = vmatprep.subr.mxu0 0.0
  %2438 = vmatpush1.msra.mxu0 0.0
  %2439 = vmatprep.subr.mxu0 0.0
  %2440 = vmatpush1.msra.mxu0 0.0
  %2441 = vmatprep.subr.mxu0 0.0
  %2442 = vmatpush1.msra.mxu0 0.0
  %2443 = vmatprep.subr.mxu0 0.0
  %2444 = vmatpush1.msra.mxu0 0.0
  %2445 = vmatprep.subr.mxu0 0.0
  %2446 = vmatpush1.msra.mxu0 0.0
  %2447 = vmatprep.subr.mxu0 0.0
  %2448 = vmatpush1.msra.mxu0 0.0
  %2449 = vmatprep.subr.mxu0 0.0
  %2450 = vmatpush1.msra.mxu0 0.0
  %2451 = vmatprep.subr.mxu0 0.0
  %2452 = vmatpush1.msra.mxu0 0.0
  %2453 = vmatprep.subr.mxu0 0.0
  %2454 = vmatpush1.msra.mxu0 0.0
  %2455 = vmatprep.subr.mxu0 0.0
  %2456 = vmatpush1.msra.mxu0 0.0
  %2457 = vmatprep.subr.mxu0 0.0
  %2458 = vmatpush1.msra.mxu0 0.0
  %2459 = vmatprep.subr.mxu0 0.0
  %2460 = vmatpush1.msra.mxu0 0.0
  %2461 = vmatprep.subr.mxu0 0.0
  %2462 = vmatpush1.msra.mxu0 0.0
  %2463 = vmatprep.subr.mxu0 0.0
  %2464 = vmatpush1.msra.mxu0 0.0
  %2465 = vmatprep.mubr.f32.mxu0 0.0
  %2466 = vmatmul.mubr.f32.gmra.mrb[0].mxu0 %v2390
  %v2467 = vpop.f32.mrb[0].mxu0
  %v2468 = vadd.f32 0.0, %v2467
  %v2469 = vpop.f32.mrb[0].mxu0
  %2470 = vmatprep.mubr.f32.mxu0 0.0
  %2471 = vmatmul.mubr.f32.gmra.mrb[0].mxu0 %v2393
  %v2472 = vpop.f32.mrb[0].mxu0
  %v2473 = vadd.f32 0.0, %v2472
  %v2474 = vpop.f32.mrb[0].mxu0
  %2475 = vmatprep.mubr.f32.mxu0 0.0
  %2476 = vmatmul.mubr.f32.gmra.mrb[0].mxu0 %v2396
  %v2477 = vpop.f32.mrb[0].mxu0
  %v2478 = vadd.f32 0.0, %v2477
  %v2479 = vpop.f32.mrb[0].mxu0
  %2480 = vmatprep.mubr.f32.mxu0 0.0
  %2481 = vmatmul.mubr.f32.gmra.mrb[0].mxu0 %v2399
  %v2482 = vpop.f32.mrb[0].mxu0
  %v2483 = vadd.f32 0.0, %v2482
  %v2484 = vpop.f32.mrb[0].mxu0
  %2485 = vdwg.mxu0
  %v2487 = vsel %vm321, %v2365, 0
  %v2490 = vsel %vm321, %v2366, 0
  %v2493 = vsel %vm321, %v2367, 0
  %v2496 = vsel %vm321, %v2368, 0
  %2498 = vmatprep.subr.mxu0 0.0
  %2499 = vmatpush1.msra.mxu0 %v1409
  %2500 = vmatprep.subr.mxu0 0.0
  %2501 = vmatpush1.msra.mxu0 %v1410
  %2502 = vmatprep.subr.mxu0 0.0
  %2503 = vmatpush1.msra.mxu0 0.0
  %2504 = vmatprep.subr.mxu0 0.0
  %2505 = vmatpush1.msra.mxu0 0.0
  %2506 = vmatprep.subr.mxu0 0.0
  %2507 = vmatpush1.msra.mxu0 0.0
  %2508 = vmatprep.subr.mxu0 0.0
  %2509 = vmatpush1.msra.mxu0 0.0
  %2510 = vmatprep.subr.mxu0 0.0
  %2511 = vmatpush1.msra.mxu0 0.0
  %2512 = vmatprep.subr.mxu0 0.0
  %2513 = vmatpush1.msra.mxu0 0.0
  %2514 = vmatprep.subr.mxu0 0.0
  %2515 = vmatpush1.msra.mxu0 0.0
  %2516 = vmatprep.subr.mxu0 0.0
  %2517 = vmatpush1.msra.mxu0 0.0
  %2518 = vmatprep.subr.mxu0 0.0
  %2519 = vmatpush1.msra.mxu0 0.0
  %2520 = vmatprep.subr.mxu0 0.0
  %2521 = vmatpush1.msra.mxu0 0.0
  %2522 = vmatprep.subr.mxu0 0.0
  %2523 = vmatpush1.msra.mxu0 0.0
  %2524 = vmatprep.subr.mxu0 0.0
  %2525 = vmatpush1.msra.mxu0 0.0
  %2526 = vmatprep.subr.mxu0 0.0
  %2527 = vmatpush1.msra.mxu0 0.0
  %2528 = vmatprep.subr.mxu0 0.0
  %2529 = vmatpush1.msra.mxu0 0.0
  %2530 = vmatprep.subr.mxu0 0.0
  %2531 = vmatpush1.msra.mxu0 0.0
  %2532 = vmatprep.subr.mxu0 0.0
  %2533 = vmatpush1.msra.mxu0 0.0
  %2534 = vmatprep.subr.mxu0 0.0
  %2535 = vmatpush1.msra.mxu0 0.0
  %2536 = vmatprep.subr.mxu0 0.0
  %2537 = vmatpush1.msra.mxu0 0.0
  %2538 = vmatprep.subr.mxu0 0.0
  %2539 = vmatpush1.msra.mxu0 0.0
  %2540 = vmatprep.subr.mxu0 0.0
  %2541 = vmatpush1.msra.mxu0 0.0
  %2542 = vmatprep.subr.mxu0 0.0
  %2543 = vmatpush1.msra.mxu0 0.0
  %2544 = vmatprep.subr.mxu0 0.0
  %2545 = vmatpush1.msra.mxu0 0.0
  %2546 = vmatprep.subr.mxu0 0.0
  %2547 = vmatpush1.msra.mxu0 0.0
  %2548 = vmatprep.subr.mxu0 0.0
  %2549 = vmatpush1.msra.mxu0 0.0
  %2550 = vmatprep.subr.mxu0 0.0
  %2551 = vmatpush1.msra.mxu0 0.0
  %2552 = vmatprep.subr.mxu0 0.0
  %2553 = vmatpush1.msra.mxu0 0.0
  %2554 = vmatprep.subr.mxu0 0.0
  %2555 = vmatpush1.msra.mxu0 0.0
  %2556 = vmatprep.subr.mxu0 0.0
  %2557 = vmatpush1.msra.mxu0 0.0
  %2558 = vmatprep.subr.mxu0 0.0
  %2559 = vmatpush1.msra.mxu0 0.0
  %2560 = vmatprep.subr.mxu0 0.0
  %2561 = vmatpush1.msra.mxu0 0.0
  %2562 = vmatprep.mubr.f32.mxu0 0.0
  %2563 = vmatmul.mubr.f32.gmra.mrb[0].mxu0 %v2487
  %v2564 = vpop.f32.mrb[0].mxu0
  %v2565 = vadd.f32 %v2468, %v2564
  %v2566 = vpop.f32.mrb[0].mxu0
  %2567 = vmatprep.mubr.f32.mxu0 0.0
  %2568 = vmatmul.mubr.f32.gmra.mrb[0].mxu0 %v2490
  %v2569 = vpop.f32.mrb[0].mxu0
  %v2570 = vadd.f32 %v2473, %v2569
  %v2571 = vpop.f32.mrb[0].mxu0
  %2572 = vmatprep.mubr.f32.mxu0 0.0
  %2573 = vmatmul.mubr.f32.gmra.mrb[0].mxu0 %v2493
  %v2574 = vpop.f32.mrb[0].mxu0
  %v2575 = vadd.f32 %v2478, %v2574
  %v2576 = vpop.f32.mrb[0].mxu0
  %2577 = vmatprep.mubr.f32.mxu0 0.0
  %2578 = vmatmul.mubr.f32.gmra.mrb[0].mxu0 %v2496
  %v2579 = vpop.f32.mrb[0].mxu0
  %v2580 = vadd.f32 %v2483, %v2579
  %v2581 = vpop.f32.mrb[0].mxu0
  %2582 = vdwg.mxu0
  %v2584 = vsel %vm321, %v2375, 0
  %v2587 = vsel %vm321, %v2376, 0
  %v2590 = vsel %vm321, %v2377, 0
  %v2593 = vsel %vm321, %v2378, 0
  %2595 = vmatprep.subr.mxu0 0.0
  %2596 = vmatpush1.msra.mxu0 %v2281
  %2597 = vmatprep.subr.mxu0 0.0
  %2598 = vmatpush1.msra.mxu0 %v2286
  %2599 = vmatprep.subr.mxu0 0.0
  %2600 = vmatpush1.msra.mxu0 0.0
  %2601 = vmatprep.subr.mxu0 0.0
  %2602 = vmatpush1.msra.mxu0 0.0
  %2603 = vmatprep.subr.mxu0 0.0
  %2604 = vmatpush1.msra.mxu0 0.0
  %2605 = vmatprep.subr.mxu0 0.0
  %2606 = vmatpush1.msra.mxu0 0.0
  %2607 = vmatprep.subr.mxu0 0.0
  %2608 = vmatpush1.msra.mxu0 0.0
  %2609 = vmatprep.subr.mxu0 0.0
  %2610 = vmatpush1.msra.mxu0 0.0
  %2611 = vmatprep.subr.mxu0 0.0
  %2612 = vmatpush1.msra.mxu0 0.0
  %2613 = vmatprep.subr.mxu0 0.0
  %2614 = vmatpush1.msra.mxu0 0.0
  %2615 = vmatprep.subr.mxu0 0.0
  %2616 = vmatpush1.msra.mxu0 0.0
  %2617 = vmatprep.subr.mxu0 0.0
  %2618 = vmatpush1.msra.mxu0 0.0
  %2619 = vmatprep.subr.mxu0 0.0
  %2620 = vmatpush1.msra.mxu0 0.0
  %2621 = vmatprep.subr.mxu0 0.0
  %2622 = vmatpush1.msra.mxu0 0.0
  %2623 = vmatprep.subr.mxu0 0.0
  %2624 = vmatpush1.msra.mxu0 0.0
  %2625 = vmatprep.subr.mxu0 0.0
  %2626 = vmatpush1.msra.mxu0 0.0
  %2627 = vmatprep.subr.mxu0 0.0
  %2628 = vmatpush1.msra.mxu0 0.0
  %2629 = vmatprep.subr.mxu0 0.0
  %2630 = vmatpush1.msra.mxu0 0.0
  %2631 = vmatprep.subr.mxu0 0.0
  %2632 = vmatpush1.msra.mxu0 0.0
  %2633 = vmatprep.subr.mxu0 0.0
  %2634 = vmatpush1.msra.mxu0 0.0
  %2635 = vmatprep.subr.mxu0 0.0
  %2636 = vmatpush1.msra.mxu0 0.0
  %2637 = vmatprep.subr.mxu0 0.0
  %2638 = vmatpush1.msra.mxu0 0.0
  %2639 = vmatprep.subr.mxu0 0.0
  %2640 = vmatpush1.msra.mxu0 0.0
  %2641 = vmatprep.subr.mxu0 0.0
  %2642 = vmatpush1.msra.mxu0 0.0
  %2643 = vmatprep.subr.mxu0 0.0
  %2644 = vmatpush1.msra.mxu0 0.0
  %2645 = vmatprep.subr.mxu0 0.0
  %2646 = vmatpush1.msra.mxu0 0.0
  %2647 = vmatprep.subr.mxu0 0.0
  %2648 = vmatpush1.msra.mxu0 0.0
  %2649 = vmatprep.subr.mxu0 0.0
  %2650 = vmatpush1.msra.mxu0 0.0
  %2651 = vmatprep.subr.mxu0 0.0
  %2652 = vmatpush1.msra.mxu0 0.0
  %2653 = vmatprep.subr.mxu0 0.0
  %2654 = vmatpush1.msra.mxu0 0.0
  %2655 = vmatprep.subr.mxu0 0.0
  %2656 = vmatpush1.msra.mxu0 0.0
  %2657 = vmatprep.subr.mxu0 0.0
  %2658 = vmatpush1.msra.mxu0 0.0
  %2659 = vmatprep.mubr.f32.mxu0 0.0
  %2660 = vmatmul.mubr.f32.gmra.mrb[0].mxu0 %v2584
  %v2661 = vpop.f32.mrb[0].mxu0
  %v2662 = vadd.f32 0.0, %v2661
  %v2663 = vpop.f32.mrb[0].mxu0
  %2664 = vmatprep.mubr.f32.mxu0 0.0
  %2665 = vmatmul.mubr.f32.gmra.mrb[0].mxu0 %v2587
  %v2666 = vpop.f32.mrb[0].mxu0
  %v2667 = vadd.f32 0.0, %v2666
  %v2668 = vpop.f32.mrb[0].mxu0
  %2669 = vmatprep.mubr.f32.mxu0 0.0
  %2670 = vmatmul.mubr.f32.gmra.mrb[0].mxu0 %v2590
  %v2671 = vpop.f32.mrb[0].mxu0
  %v2672 = vadd.f32 0.0, %v2671
  %v2673 = vpop.f32.mrb[0].mxu0
  %2674 = vmatprep.mubr.f32.mxu0 0.0
  %2675 = vmatmul.mubr.f32.gmra.mrb[0].mxu0 %v2593
  %v2676 = vpop.f32.mrb[0].mxu0
  %v2677 = vadd.f32 0.0, %v2676
  %v2678 = vpop.f32.mrb[0].mxu0
  %2679 = vdwg.mxu0
  %v2680 = vadd.f32 %v2565, %v2662
  %v2681 = vadd.f32 %v2570, %v2667
  %v2682 = vadd.f32 %v2575, %v2672
  %v2683 = vadd.f32 %v2580, %v2677
  %v2685 = vsel %vm321, %v2380, 0
  %v2688 = vsel %vm321, %v2381, 0
  %v2691 = vsel %vm321, %v2382, 0
  %v2694 = vsel %vm321, %v2383, 0
  %2696 = vmatprep.subr.mxu0 0.0
  %2697 = vmatpush1.msra.mxu0 %v2356
  %2698 = vmatprep.subr.mxu0 0.0
  %2699 = vmatpush1.msra.mxu0 %v2361
  %2700 = vmatprep.subr.mxu0 0.0
  %2701 = vmatpush1.msra.mxu0 0.0
  %2702 = vmatprep.subr.mxu0 0.0
  %2703 = vmatpush1.msra.mxu0 0.0
  %2704 = vmatprep.subr.mxu0 0.0
  %2705 = vmatpush1.msra.mxu0 0.0
  %2706 = vmatprep.subr.mxu0 0.0
  %2707 = vmatpush1.msra.mxu0 0.0
  %2708 = vmatprep.subr.mxu0 0.0
  %2709 = vmatpush1.msra.mxu0 0.0
  %2710 = vmatprep.subr.mxu0 0.0
  %2711 = vmatpush1.msra.mxu0 0.0
  %2712 = vmatprep.subr.mxu0 0.0
  %2713 = vmatpush1.msra.mxu0 0.0
  %2714 = vmatprep.subr.mxu0 0.0
  %2715 = vmatpush1.msra.mxu0 0.0
  %2716 = vmatprep.subr.mxu0 0.0
  %2717 = vmatpush1.msra.mxu0 0.0
  %2718 = vmatprep.subr.mxu0 0.0
  %2719 = vmatpush1.msra.mxu0 0.0
  %2720 = vmatprep.subr.mxu0 0.0
  %2721 = vmatpush1.msra.mxu0 0.0
  %2722 = vmatprep.subr.mxu0 0.0
  %2723 = vmatpush1.msra.mxu0 0.0
  %2724 = vmatprep.subr.mxu0 0.0
  %2725 = vmatpush1.msra.mxu0 0.0
  %2726 = vmatprep.subr.mxu0 0.0
  %2727 = vmatpush1.msra.mxu0 0.0
  %2728 = vmatprep.subr.mxu0 0.0
  %2729 = vmatpush1.msra.mxu0 0.0
  %2730 = vmatprep.subr.mxu0 0.0
  %2731 = vmatpush1.msra.mxu0 0.0
  %2732 = vmatprep.subr.mxu0 0.0
  %2733 = vmatpush1.msra.mxu0 0.0
  %2734 = vmatprep.subr.mxu0 0.0
  %2735 = vmatpush1.msra.mxu0 0.0
  %2736 = vmatprep.subr.mxu0 0.0
  %2737 = vmatpush1.msra.mxu0 0.0
  %2738 = vmatprep.subr.mxu0 0.0
  %2739 = vmatpush1.msra.mxu0 0.0
  %2740 = vmatprep.subr.mxu0 0.0
  %2741 = vmatpush1.msra.mxu0 0.0
  %2742 = vmatprep.subr.mxu0 0.0
  %2743 = vmatpush1.msra.mxu0 0.0
  %2744 = vmatprep.subr.mxu0 0.0
  %2745 = vmatpush1.msra.mxu0 0.0
  %2746 = vmatprep.subr.mxu0 0.0
  %2747 = vmatpush1.msra.mxu0 0.0
  %2748 = vmatprep.subr.mxu0 0.0
  %2749 = vmatpush1.msra.mxu0 0.0
  %2750 = vmatprep.subr.mxu0 0.0
  %2751 = vmatpush1.msra.mxu0 0.0
  %2752 = vmatprep.subr.mxu0 0.0
  %2753 = vmatpush1.msra.mxu0 0.0
  %2754 = vmatprep.subr.mxu0 0.0
  %2755 = vmatpush1.msra.mxu0 0.0
  %2756 = vmatprep.subr.mxu0 0.0
  %2757 = vmatpush1.msra.mxu0 0.0
  %2758 = vmatprep.subr.mxu0 0.0
  %2759 = vmatpush1.msra.mxu0 0.0
  %2760 = vmatprep.mubr.f32.mxu0 0.0
  %2761 = vmatmul.mubr.f32.gmra.mrb[0].mxu0 %v2685
  %v2762 = vpop.f32.mrb[0].mxu0
  %v2763 = vadd.f32 0.0, %v2762
  %v2764 = vpop.f32.mrb[0].mxu0
  %2765 = vmatprep.mubr.f32.mxu0 0.0
  %2766 = vmatmul.mubr.f32.gmra.mrb[0].mxu0 %v2688
  %v2767 = vpop.f32.mrb[0].mxu0
  %v2768 = vadd.f32 0.0, %v2767
  %v2769 = vpop.f32.mrb[0].mxu0
  %2770 = vmatprep.mubr.f32.mxu0 0.0
  %2771 = vmatmul.mubr.f32.gmra.mrb[0].mxu0 %v2691
  %v2772 = vpop.f32.mrb[0].mxu0
  %v2773 = vadd.f32 0.0, %v2772
  %v2774 = vpop.f32.mrb[0].mxu0
  %2775 = vmatprep.mubr.f32.mxu0 0.0
  %2776 = vmatmul.mubr.f32.gmra.mrb[0].mxu0 %v2694
  %v2777 = vpop.f32.mrb[0].mxu0
  %v2778 = vadd.f32 0.0, %v2777
  %v2779 = vpop.f32.mrb[0].mxu0
  %2780 = vdwg.mxu0
  %v2781 = vadd.f32 %v2680, %v2763
  %v2782 = vadd.f32 %v2681, %v2768
  %v2783 = vadd.f32 %v2682, %v2773
  %v2784 = vadd.f32 %v2683, %v2778
  %2786 = vset.pattern.permute.xlu0 0
  %2787 = vperm.xlu0 %2786, %v2385
  %v2788 = vpop.permute.xlu0 %2787
  %2791 = vset.pattern.permute.xlu0 0
  %2792 = vperm.xlu0 %2791, %v2386
  %v2793 = vpop.permute.xlu0 %2792
  %2796 = vset.pattern.permute.xlu0 0
  %2797 = vperm.xlu0 %2796, %v2387
  %v2798 = vpop.permute.xlu0 %2797
  %2801 = vset.pattern.permute.xlu0 0
  %2802 = vperm.xlu0 %2801, %v2388
  %v2803 = vpop.permute.xlu0 %2802
  %v2805 = vadd.f32 %v2781, %v2788
  %v2806 = vadd.f32 %v2782, %v2793
  %v2807 = vadd.f32 %v2783, %v2798
  %v2808 = vadd.f32 %v2784, %v2803
  %v2809 = vmax.f32 %v2805, 0.0
  %v2810 = vmax.f32 %v2806, 0.0
  %v2811 = vmax.f32 %v2807, 0.0
  %v2812 = vmax.f32 %v2808, 0.0
  %2813 = vmatprep.subr.mxu0 0.0
  %2814 = vmatpush1.msra.mxu0 %v68
  %2815 = vmatprep.subr.mxu0 0.0
  %2816 = vmatpush1.msra.mxu0 %v69
  %2817 = vmatprep.subr.mxu0 0.0
  %2818 = vmatpush1.msra.mxu0 %v70
  %2819 = vmatprep.subr.mxu0 0.0
  %2820 = vmatpush1.msra.mxu0 %v71
  %2821 = vmatprep.subr.mxu0 0.0
  %2822 = vmatpush1.msra.mxu0 %v72
  %2823 = vmatprep.subr.mxu0 0.0
  %2824 = vmatpush1.msra.mxu0 %v73
  %2825 = vmatprep.subr.mxu0 0.0
  %2826 = vmatpush1.msra.mxu0 %v74
  %2827 = vmatprep.subr.mxu0 0.0
  %2828 = vmatpush1.msra.mxu0 %v75
  %2829 = vmatprep.subr.mxu0 0.0
  %2830 = vmatpush1.msra.mxu0 %v76
  %2831 = vmatprep.subr.mxu0 0.0
  %2832 = vmatpush1.msra.mxu0 %v77
  %2833 = vmatprep.subr.mxu0 0.0
  %2834 = vmatpush1.msra.mxu0 %v78
  %2835 = vmatprep.subr.mxu0 0.0
  %2836 = vmatpush1.msra.mxu0 %v79
  %2837 = vmatprep.subr.mxu0 0.0
  %2838 = vmatpush1.msra.mxu0 %v80
  %2839 = vmatprep.subr.mxu0 0.0
  %2840 = vmatpush1.msra.mxu0 %v81
  %2841 = vmatprep.subr.mxu0 0.0
  %2842 = vmatpush1.msra.mxu0 %v82
  %2843 = vmatprep.subr.mxu0 0.0
  %2844 = vmatpush1.msra.mxu0 %v83
  %2845 = vmatprep.subr.mxu0 0.0
  %2846 = vmatpush1.msra.mxu0 0.0
  %2847 = vmatprep.subr.mxu0 0.0
  %2848 = vmatpush1.msra.mxu0 0.0
  %2849 = vmatprep.subr.mxu0 0.0
  %2850 = vmatpush1.msra.mxu0 0.0
  %2851 = vmatprep.subr.mxu0 0.0
  %2852 = vmatpush1.msra.mxu0 0.0
  %2853 = vmatprep.subr.mxu0 0.0
  %2854 = vmatpush1.msra.mxu0 0.0
  %2855 = vmatprep.subr.mxu0 0.0
  %2856 = vmatpush1.msra.mxu0 0.0
  %2857 = vmatprep.subr.mxu0 0.0
  %2858 = vmatpush1.msra.mxu0 0.0
  %2859 = vmatprep.subr.mxu0 0.0
  %2860 = vmatpush1.msra.mxu0 0.0
  %2861 = vmatprep.subr.mxu0 0.0
  %2862 = vmatpush1.msra.mxu0 0.0
  %2863 = vmatprep.subr.mxu0 0.0
  %2864 = vmatpush1.msra.mxu0 0.0
  %2865 = vmatprep.subr.mxu0 0.0
  %2866 = vmatpush1.msra.mxu0 0.0
  %2867 = vmatprep.subr.mxu0 0.0
  %2868 = vmatpush1.msra.mxu0 0.0
  %2869 = vmatprep.subr.mxu0 0.0
  %2870 = vmatpush1.msra.mxu0 0.0
  %2871 = vmatprep.subr.mxu0 0.0
  %2872 = vmatpush1.msra.mxu0 0.0
  %2873 = vmatprep.subr.mxu0 0.0
  %2874 = vmatpush1.msra.mxu0 0.0
  %2875 = vmatprep.subr.mxu0 0.0
  %2876 = vmatpush1.msra.mxu0 0.0
  %2877 = vmatprep.mubr.f32.mxu0 0.0
  %2878 = vmatmul.mubr.f32.gmra.mrb[0].mxu0 %v2811
  %v2879 = vpop.f32.mrb[0].mxu0
  %v2880 = vadd.f32 0.0, %v2879
  %v2881 = vpop.f32.mrb[0].mxu0
  %2882 = vmatprep.mubr.f32.mxu0 0.0
  %2883 = vmatmul.mubr.f32.gmra.mrb[0].mxu0 %v2812
  %v2884 = vpop.f32.mrb[0].mxu0
  %v2885 = vadd.f32 0.0, %v2884
  %v2886 = vpop.f32.mrb[0].mxu0
  %2887 = vdwg.mxu0
  %s2888 = scalar_lea.vmem %s17, 32
  %v2889 = vld [vmem:[%s2888] sm:$0xff]
  %v2890 = vld [vmem:[%s2888 + $0x8] sm:$0xff]
  %v2891 = vld [vmem:[%s2888 + $0x10] sm:$0xff]
  %v2892 = vld [vmem:[%s2888 + $0x18] sm:$0xff]
  %s2893 = scalar_lea.vmem %s18, 32
  %v2894 = vld [vmem:[%s2893] sm:$0xff]
  %v2895 = vld [vmem:[%s2893 + $0x8] sm:$0xff]
  %v2896 = vld [vmem:[%s2893 + $0x10] sm:$0xff]
  %v2897 = vld [vmem:[%s2893 + $0x18] sm:$0xff]
  %s2898 = scalar_lea.vmem %s19, 32
  %v2899 = vld [vmem:[%s2898] sm:$0xff]
  %v2900 = vld [vmem:[%s2898 + $0x8] sm:$0xff]
  %v2901 = vld [vmem:[%s2898 + $0x10] sm:$0xff]
  %v2902 = vld [vmem:[%s2898 + $0x18] sm:$0xff]
  %v2904 = vsel %vm321, %v2894, 0
  %v2907 = vsel %vm321, %v2895, 0
  %v2910 = vsel %vm321, %v2896, 0
  %v2913 = vsel %vm321, %v2897, 0
  %2915 = vmatprep.subr.mxu0 0.0
  %2916 = vmatpush1.msra.mxu0 %v2880
  %2917 = vmatprep.subr.mxu0 0.0
  %2918 = vmatpush1.msra.mxu0 %v2885
  %2919 = vmatprep.subr.mxu0 0.0
  %2920 = vmatpush1.msra.mxu0 0.0
  %2921 = vmatprep.subr.mxu0 0.0
  %2922 = vmatpush1.msra.mxu0 0.0
  %2923 = vmatprep.subr.mxu0 0.0
  %2924 = vmatpush1.msra.mxu0 0.0
  %2925 = vmatprep.subr.mxu0 0.0
  %2926 = vmatpush1.msra.mxu0 0.0
  %2927 = vmatprep.subr.mxu0 0.0
  %2928 = vmatpush1.msra.mxu0 0.0
  %2929 = vmatprep.subr.mxu0 0.0
  %2930 = vmatpush1.msra.mxu0 0.0
  %2931 = vmatprep.subr.mxu0 0.0
  %2932 = vmatpush1.msra.mxu0 0.0
  %2933 = vmatprep.subr.mxu0 0.0
  %2934 = vmatpush1.msra.mxu0 0.0
  %2935 = vmatprep.subr.mxu0 0.0
  %2936 = vmatpush1.msra.mxu0 0.0
  %2937 = vmatprep.subr.mxu0 0.0
  %2938 = vmatpush1.msra.mxu0 0.0
  %2939 = vmatprep.subr.mxu0 0.0
  %2940 = vmatpush1.msra.mxu0 0.0
  %2941 = vmatprep.subr.mxu0 0.0
  %2942 = vmatpush1.msra.mxu0 0.0
  %2943 = vmatprep.subr.mxu0 0.0
  %2944 = vmatpush1.msra.mxu0 0.0
  %2945 = vmatprep.subr.mxu0 0.0
  %2946 = vmatpush1.msra.mxu0 0.0
  %2947 = vmatprep.subr.mxu0 0.0
  %2948 = vmatpush1.msra.mxu0 0.0
  %2949 = vmatprep.subr.mxu0 0.0
  %2950 = vmatpush1.msra.mxu0 0.0
  %2951 = vmatprep.subr.mxu0 0.0
  %2952 = vmatpush1.msra.mxu0 0.0
  %2953 = vmatprep.subr.mxu0 0.0
  %2954 = vmatpush1.msra.mxu0 0.0
  %2955 = vmatprep.subr.mxu0 0.0
  %2956 = vmatpush1.msra.mxu0 0.0
  %2957 = vmatprep.subr.mxu0 0.0
  %2958 = vmatpush1.msra.mxu0 0.0
  %2959 = vmatprep.subr.mxu0 0.0
  %2960 = vmatpush1.msra.mxu0 0.0
  %2961 = vmatprep.subr.mxu0 0.0
  %2962 = vmatpush1.msra.mxu0 0.0
  %2963 = vmatprep.subr.mxu0 0.0
  %2964 = vmatpush1.msra.mxu0 0.0
  %2965 = vmatprep.subr.mxu0 0.0
  %2966 = vmatpush1.msra.mxu0 0.0
  %2967 = vmatprep.subr.mxu0 0.0
  %2968 = vmatpush1.msra.mxu0 0.0
  %2969 = vmatprep.subr.mxu0 0.0
  %2970 = vmatpush1.msra.mxu0 0.0
  %2971 = vmatprep.subr.mxu0 0.0
  %2972 = vmatpush1.msra.mxu0 0.0
  %2973 = vmatprep.subr.mxu0 0.0
  %2974 = vmatpush1.msra.mxu0 0.0
  %2975 = vmatprep.subr.mxu0 0.0
  %2976 = vmatpush1.msra.mxu0 0.0
  %2977 = vmatprep.subr.mxu0 0.0
  %2978 = vmatpush1.msra.mxu0 0.0
  %2979 = vmatprep.mubr.f32.mxu0 0.0
  %2980 = vmatmul.mubr.f32.gmra.mrb[0].mxu0 %v2904
  %v2981 = vpop.f32.mrb[0].mxu0
  %v2982 = vadd.f32 0.0, %v2981
  %v2983 = vpop.f32.mrb[0].mxu0
  %2984 = vmatprep.mubr.f32.mxu0 0.0
  %2985 = vmatmul.mubr.f32.gmra.mrb[0].mxu0 %v2907
  %v2986 = vpop.f32.mrb[0].mxu0
  %v2987 = vadd.f32 0.0, %v2986
  %v2988 = vpop.f32.mrb[0].mxu0
  %2989 = vmatprep.mubr.f32.mxu0 0.0
  %2990 = vmatmul.mubr.f32.gmra.mrb[0].mxu0 %v2910
  %v2991 = vpop.f32.mrb[0].mxu0
  %v2992 = vadd.f32 0.0, %v2991
  %v2993 = vpop.f32.mrb[0].mxu0
  %2994 = vmatprep.mubr.f32.mxu0 0.0
  %2995 = vmatmul.mubr.f32.gmra.mrb[0].mxu0 %v2913
  %v2996 = vpop.f32.mrb[0].mxu0
  %v2997 = vadd.f32 0.0, %v2996
  %v2998 = vpop.f32.mrb[0].mxu0
  %2999 = vdwg.mxu0
  %v3001 = vsel %vm321, %v2889, 0
  %v3004 = vsel %vm321, %v2890, 0
  %v3007 = vsel %vm321, %v2891, 0
  %v3010 = vsel %vm321, %v2892, 0
  %3012 = vmatprep.subr.mxu0 0.0
  %3013 = vmatpush1.msra.mxu0 %v2809
  %3014 = vmatprep.subr.mxu0 0.0
  %3015 = vmatpush1.msra.mxu0 %v2810
  %3016 = vmatprep.subr.mxu0 0.0
  %3017 = vmatpush1.msra.mxu0 0.0
  %3018 = vmatprep.subr.mxu0 0.0
  %3019 = vmatpush1.msra.mxu0 0.0
  %3020 = vmatprep.subr.mxu0 0.0
  %3021 = vmatpush1.msra.mxu0 0.0
  %3022 = vmatprep.subr.mxu0 0.0
  %3023 = vmatpush1.msra.mxu0 0.0
  %3024 = vmatprep.subr.mxu0 0.0
  %3025 = vmatpush1.msra.mxu0 0.0
  %3026 = vmatprep.subr.mxu0 0.0
  %3027 = vmatpush1.msra.mxu0 0.0
  %3028 = vmatprep.subr.mxu0 0.0
  %3029 = vmatpush1.msra.mxu0 0.0
  %3030 = vmatprep.subr.mxu0 0.0
  %3031 = vmatpush1.msra.mxu0 0.0
  %3032 = vmatprep.subr.mxu0 0.0
  %3033 = vmatpush1.msra.mxu0 0.0
  %3034 = vmatprep.subr.mxu0 0.0
  %3035 = vmatpush1.msra.mxu0 0.0
  %3036 = vmatprep.subr.mxu0 0.0
  %3037 = vmatpush1.msra.mxu0 0.0
  %3038 = vmatprep.subr.mxu0 0.0
  %3039 = vmatpush1.msra.mxu0 0.0
  %3040 = vmatprep.subr.mxu0 0.0
  %3041 = vmatpush1.msra.mxu0 0.0
  %3042 = vmatprep.subr.mxu0 0.0
  %3043 = vmatpush1.msra.mxu0 0.0
  %3044 = vmatprep.subr.mxu0 0.0
  %3045 = vmatpush1.msra.mxu0 0.0
  %3046 = vmatprep.subr.mxu0 0.0
  %3047 = vmatpush1.msra.mxu0 0.0
  %3048 = vmatprep.subr.mxu0 0.0
  %3049 = vmatpush1.msra.mxu0 0.0
  %3050 = vmatprep.subr.mxu0 0.0
  %3051 = vmatpush1.msra.mxu0 0.0
  %3052 = vmatprep.subr.mxu0 0.0
  %3053 = vmatpush1.msra.mxu0 0.0
  %3054 = vmatprep.subr.mxu0 0.0
  %3055 = vmatpush1.msra.mxu0 0.0
  %3056 = vmatprep.subr.mxu0 0.0
  %3057 = vmatpush1.msra.mxu0 0.0
  %3058 = vmatprep.subr.mxu0 0.0
  %3059 = vmatpush1.msra.mxu0 0.0
  %3060 = vmatprep.subr.mxu0 0.0
  %3061 = vmatpush1.msra.mxu0 0.0
  %3062 = vmatprep.subr.mxu0 0.0
  %3063 = vmatpush1.msra.mxu0 0.0
  %3064 = vmatprep.subr.mxu0 0.0
  %3065 = vmatpush1.msra.mxu0 0.0
  %3066 = vmatprep.subr.mxu0 0.0
  %3067 = vmatpush1.msra.mxu0 0.0
  %3068 = vmatprep.subr.mxu0 0.0
  %3069 = vmatpush1.msra.mxu0 0.0
  %3070 = vmatprep.subr.mxu0 0.0
  %3071 = vmatpush1.msra.mxu0 0.0
  %3072 = vmatprep.subr.mxu0 0.0
  %3073 = vmatpush1.msra.mxu0 0.0
  %3074 = vmatprep.subr.mxu0 0.0
  %3075 = vmatpush1.msra.mxu0 0.0
  %3076 = vmatprep.mubr.f32.mxu0 0.0
  %3077 = vmatmul.mubr.f32.gmra.mrb[0].mxu0 %v3001
  %v3078 = vpop.f32.mrb[0].mxu0
  %v3079 = vadd.f32 %v2982, %v3078
  %v3080 = vpop.f32.mrb[0].mxu0
  %3081 = vmatprep.mubr.f32.mxu0 0.0
  %3082 = vmatmul.mubr.f32.gmra.mrb[0].mxu0 %v3004
  %v3083 = vpop.f32.mrb[0].mxu0
  %v3084 = vadd.f32 %v2987, %v3083
  %v3085 = vpop.f32.mrb[0].mxu0
  %3086 = vmatprep.mubr.f32.mxu0 0.0
  %3087 = vmatmul.mubr.f32.gmra.mrb[0].mxu0 %v3007
  %v3088 = vpop.f32.mrb[0].mxu0
  %v3089 = vadd.f32 %v2992, %v3088
  %v3090 = vpop.f32.mrb[0].mxu0
  %3091 = vmatprep.mubr.f32.mxu0 0.0
  %3092 = vmatmul.mubr.f32.gmra.mrb[0].mxu0 %v3010
  %v3093 = vpop.f32.mrb[0].mxu0
  %v3094 = vadd.f32 %v2997, %v3093
  %v3095 = vpop.f32.mrb[0].mxu0
  %3096 = vdwg.mxu0
  %3098 = vset.pattern.permute.xlu0 0
  %3099 = vperm.xlu0 %3098, %v2899
  %v3100 = vpop.permute.xlu0 %3099
  %3103 = vset.pattern.permute.xlu0 0
  %3104 = vperm.xlu0 %3103, %v2900
  %v3105 = vpop.permute.xlu0 %3104
  %3108 = vset.pattern.permute.xlu0 0
  %3109 = vperm.xlu0 %3108, %v2901
  %v3110 = vpop.permute.xlu0 %3109
  %3113 = vset.pattern.permute.xlu0 0
  %3114 = vperm.xlu0 %3113, %v2902
  %v3115 = vpop.permute.xlu0 %3114
  %v3117 = vadd.f32 %v3079, %v3100
  %v3118 = vadd.f32 %v3084, %v3105
  %v3119 = vadd.f32 %v3089, %v3110
  %v3120 = vadd.f32 %v3094, %v3115
  %v3121 = vmax.f32 %v3117, 0.0
  %v3122 = vmax.f32 %v3118, 0.0
  %v3123 = vmax.f32 %v3119, 0.0
  %v3124 = vmax.f32 %v3120, 0.0
  %3125 = vmatprep.subr.mxu0 0.0
  %3126 = vmatpush1.msra.mxu0 %v68
  %3127 = vmatprep.subr.mxu0 0.0
  %3128 = vmatpush1.msra.mxu0 %v69
  %3129 = vmatprep.subr.mxu0 0.0
  %3130 = vmatpush1.msra.mxu0 %v70
  %3131 = vmatprep.subr.mxu0 0.0
  %3132 = vmatpush1.msra.mxu0 %v71
  %3133 = vmatprep.subr.mxu0 0.0
  %3134 = vmatpush1.msra.mxu0 %v72
  %3135 = vmatprep.subr.mxu0 0.0
  %3136 = vmatpush1.msra.mxu0 %v73
  %3137 = vmatprep.subr.mxu0 0.0
  %3138 = vmatpush1.msra.mxu0 %v74
  %3139 = vmatprep.subr.mxu0 0.0
  %3140 = vmatpush1.msra.mxu0 %v75
  %3141 = vmatprep.subr.mxu0 0.0
  %3142 = vmatpush1.msra.mxu0 %v76
  %3143 = vmatprep.subr.mxu0 0.0
  %3144 = vmatpush1.msra.mxu0 %v77
  %3145 = vmatprep.subr.mxu0 0.0
  %3146 = vmatpush1.msra.mxu0 %v78
  %3147 = vmatprep.subr.mxu0 0.0
  %3148 = vmatpush1.msra.mxu0 %v79
  %3149 = vmatprep.subr.mxu0 0.0
  %3150 = vmatpush1.msra.mxu0 %v80
  %3151 = vmatprep.subr.mxu0 0.0
  %3152 = vmatpush1.msra.mxu0 %v81
  %3153 = vmatprep.subr.mxu0 0.0
  %3154 = vmatpush1.msra.mxu0 %v82
  %3155 = vmatprep.subr.mxu0 0.0
  %3156 = vmatpush1.msra.mxu0 %v83
  %3157 = vmatprep.subr.mxu0 0.0
  %3158 = vmatpush1.msra.mxu0 0.0
  %3159 = vmatprep.subr.mxu0 0.0
  %3160 = vmatpush1.msra.mxu0 0.0
  %3161 = vmatprep.subr.mxu0 0.0
  %3162 = vmatpush1.msra.mxu0 0.0
  %3163 = vmatprep.subr.mxu0 0.0
  %3164 = vmatpush1.msra.mxu0 0.0
  %3165 = vmatprep.subr.mxu0 0.0
  %3166 = vmatpush1.msra.mxu0 0.0
  %3167 = vmatprep.subr.mxu0 0.0
  %3168 = vmatpush1.msra.mxu0 0.0
  %3169 = vmatprep.subr.mxu0 0.0
  %3170 = vmatpush1.msra.mxu0 0.0
  %3171 = vmatprep.subr.mxu0 0.0
  %3172 = vmatpush1.msra.mxu0 0.0
  %3173 = vmatprep.subr.mxu0 0.0
  %3174 = vmatpush1.msra.mxu0 0.0
  %3175 = vmatprep.subr.mxu0 0.0
  %3176 = vmatpush1.msra.mxu0 0.0
  %3177 = vmatprep.subr.mxu0 0.0
  %3178 = vmatpush1.msra.mxu0 0.0
  %3179 = vmatprep.subr.mxu0 0.0
  %3180 = vmatpush1.msra.mxu0 0.0
  %3181 = vmatprep.subr.mxu0 0.0
  %3182 = vmatpush1.msra.mxu0 0.0
  %3183 = vmatprep.subr.mxu0 0.0
  %3184 = vmatpush1.msra.mxu0 0.0
  %3185 = vmatprep.subr.mxu0 0.0
  %3186 = vmatpush1.msra.mxu0 0.0
  %3187 = vmatprep.subr.mxu0 0.0
  %3188 = vmatpush1.msra.mxu0 0.0
  %3189 = vmatprep.mubr.f32.mxu0 0.0
  %3190 = vmatmul.mubr.f32.gmra.mrb[0].mxu0 %v3123
  %v3191 = vpop.f32.mrb[0].mxu0
  %v3192 = vadd.f32 0.0, %v3191
  %v3193 = vpop.f32.mrb[0].mxu0
  %3194 = vmatprep.mubr.f32.mxu0 0.0
  %3195 = vmatmul.mubr.f32.gmra.mrb[0].mxu0 %v3124
  %v3196 = vpop.f32.mrb[0].mxu0
  %v3197 = vadd.f32 0.0, %v3196
  %v3198 = vpop.f32.mrb[0].mxu0
  %3199 = vdwg.mxu0
  %s3200 = scalar_lea.vmem %s4, 64
  %v3201 = vld [vmem:[%s3200] sm:$0xff]
  %v3202 = vld [vmem:[%s3200 + $0x8] sm:$0xff]
  %v3203 = vld [vmem:[%s3200 + $0x10] sm:$0xff]
  %v3204 = vld [vmem:[%s3200 + $0x18] sm:$0xff]
  %s3205 = scalar_lea.vmem %s5, 64
  %v3206 = vld [vmem:[%s3205] sm:$0xff]
  %v3207 = vld [vmem:[%s3205 + $0x8] sm:$0xff]
  %v3208 = vld [vmem:[%s3205 + $0x10] sm:$0xff]
  %v3209 = vld [vmem:[%s3205 + $0x18] sm:$0xff]
  %s3210 = scalar_lea.vmem %s6, 64
  %v3211 = vld [vmem:[%s3210] sm:$0xff]
  %v3212 = vld [vmem:[%s3210 + $0x8] sm:$0xff]
  %v3213 = vld [vmem:[%s3210 + $0x10] sm:$0xff]
  %v3214 = vld [vmem:[%s3210 + $0x18] sm:$0xff]
  %s3215 = scalar_lea.vmem %s7, 64
  %v3216 = vld [vmem:[%s3215] sm:$0xff]
  %v3217 = vld [vmem:[%s3215 + $0x8] sm:$0xff]
  %v3218 = vld [vmem:[%s3215 + $0x10] sm:$0xff]
  %v3219 = vld [vmem:[%s3215 + $0x18] sm:$0xff]
  %v3221 = vsel %vm321, %v3206, 0
  %v3224 = vsel %vm321, %v3207, 0
  %v3227 = vsel %vm321, %v3208, 0
  %v3230 = vsel %vm321, %v3209, 0
  %3232 = vmatprep.subr.mxu0 0.0
  %3233 = vmatpush1.msra.mxu0 %v3121
  %3234 = vmatprep.subr.mxu0 0.0
  %3235 = vmatpush1.msra.mxu0 %v3122
  %3236 = vmatprep.subr.mxu0 0.0
  %3237 = vmatpush1.msra.mxu0 0.0
  %3238 = vmatprep.subr.mxu0 0.0
  %3239 = vmatpush1.msra.mxu0 0.0
  %3240 = vmatprep.subr.mxu0 0.0
  %3241 = vmatpush1.msra.mxu0 0.0
  %3242 = vmatprep.subr.mxu0 0.0
  %3243 = vmatpush1.msra.mxu0 0.0
  %3244 = vmatprep.subr.mxu0 0.0
  %3245 = vmatpush1.msra.mxu0 0.0
  %3246 = vmatprep.subr.mxu0 0.0
  %3247 = vmatpush1.msra.mxu0 0.0
  %3248 = vmatprep.subr.mxu0 0.0
  %3249 = vmatpush1.msra.mxu0 0.0
  %3250 = vmatprep.subr.mxu0 0.0
  %3251 = vmatpush1.msra.mxu0 0.0
  %3252 = vmatprep.subr.mxu0 0.0
  %3253 = vmatpush1.msra.mxu0 0.0
  %3254 = vmatprep.subr.mxu0 0.0
  %3255 = vmatpush1.msra.mxu0 0.0
  %3256 = vmatprep.subr.mxu0 0.0
  %3257 = vmatpush1.msra.mxu0 0.0
  %3258 = vmatprep.subr.mxu0 0.0
  %3259 = vmatpush1.msra.mxu0 0.0
  %3260 = vmatprep.subr.mxu0 0.0
  %3261 = vmatpush1.msra.mxu0 0.0
  %3262 = vmatprep.subr.mxu0 0.0
  %3263 = vmatpush1.msra.mxu0 0.0
  %3264 = vmatprep.subr.mxu0 0.0
  %3265 = vmatpush1.msra.mxu0 0.0
  %3266 = vmatprep.subr.mxu0 0.0
  %3267 = vmatpush1.msra.mxu0 0.0
  %3268 = vmatprep.subr.mxu0 0.0
  %3269 = vmatpush1.msra.mxu0 0.0
  %3270 = vmatprep.subr.mxu0 0.0
  %3271 = vmatpush1.msra.mxu0 0.0
  %3272 = vmatprep.subr.mxu0 0.0
  %3273 = vmatpush1.msra.mxu0 0.0
  %3274 = vmatprep.subr.mxu0 0.0
  %3275 = vmatpush1.msra.mxu0 0.0
  %3276 = vmatprep.subr.mxu0 0.0
  %3277 = vmatpush1.msra.mxu0 0.0
  %3278 = vmatprep.subr.mxu0 0.0
  %3279 = vmatpush1.msra.mxu0 0.0
  %3280 = vmatprep.subr.mxu0 0.0
  %3281 = vmatpush1.msra.mxu0 0.0
  %3282 = vmatprep.subr.mxu0 0.0
  %3283 = vmatpush1.msra.mxu0 0.0
  %3284 = vmatprep.subr.mxu0 0.0
  %3285 = vmatpush1.msra.mxu0 0.0
  %3286 = vmatprep.subr.mxu0 0.0
  %3287 = vmatpush1.msra.mxu0 0.0
  %3288 = vmatprep.subr.mxu0 0.0
  %3289 = vmatpush1.msra.mxu0 0.0
  %3290 = vmatprep.subr.mxu0 0.0
  %3291 = vmatpush1.msra.mxu0 0.0
  %3292 = vmatprep.subr.mxu0 0.0
  %3293 = vmatpush1.msra.mxu0 0.0
  %3294 = vmatprep.subr.mxu0 0.0
  %3295 = vmatpush1.msra.mxu0 0.0
  %3296 = vmatprep.mubr.f32.mxu0 0.0
  %3297 = vmatmul.mubr.f32.gmra.mrb[0].mxu0 %v3221
  %v3298 = vpop.f32.mrb[0].mxu0
  %v3299 = vadd.f32 0.0, %v3298
  %v3300 = vpop.f32.mrb[0].mxu0
  %3301 = vmatprep.mubr.f32.mxu0 0.0
  %3302 = vmatmul.mubr.f32.gmra.mrb[0].mxu0 %v3224
  %v3303 = vpop.f32.mrb[0].mxu0
  %v3304 = vadd.f32 0.0, %v3303
  %v3305 = vpop.f32.mrb[0].mxu0
  %3306 = vmatprep.mubr.f32.mxu0 0.0
  %3307 = vmatmul.mubr.f32.gmra.mrb[0].mxu0 %v3227
  %v3308 = vpop.f32.mrb[0].mxu0
  %v3309 = vadd.f32 0.0, %v3308
  %v3310 = vpop.f32.mrb[0].mxu0
  %3311 = vmatprep.mubr.f32.mxu0 0.0
  %3312 = vmatmul.mubr.f32.gmra.mrb[0].mxu0 %v3230
  %v3313 = vpop.f32.mrb[0].mxu0
  %v3314 = vadd.f32 0.0, %v3313
  %v3315 = vpop.f32.mrb[0].mxu0
  %3316 = vdwg.mxu0
  %v3318 = vsel %vm128, %v3201, 0
  %v3321 = vsel %vm128, %v3202, 0
  %v3324 = vsel %vm128, %v3203, 0
  %v3327 = vsel %vm128, %v3204, 0
  %3329 = vmatprep.subr.mxu0 0.0
  %3330 = vmatpush1.msra.mxu0 %v143
  %3331 = vmatprep.subr.mxu0 0.0
  %3332 = vmatpush1.msra.mxu0 0.0
  %3333 = vmatprep.subr.mxu0 0.0
  %3334 = vmatpush1.msra.mxu0 0.0
  %3335 = vmatprep.subr.mxu0 0.0
  %3336 = vmatpush1.msra.mxu0 0.0
  %3337 = vmatprep.subr.mxu0 0.0
  %3338 = vmatpush1.msra.mxu0 0.0
  %3339 = vmatprep.subr.mxu0 0.0
  %3340 = vmatpush1.msra.mxu0 0.0
  %3341 = vmatprep.subr.mxu0 0.0
  %3342 = vmatpush1.msra.mxu0 0.0
  %3343 = vmatprep.subr.mxu0 0.0
  %3344 = vmatpush1.msra.mxu0 0.0
  %3345 = vmatprep.subr.mxu0 0.0
  %3346 = vmatpush1.msra.mxu0 0.0
  %3347 = vmatprep.subr.mxu0 0.0
  %3348 = vmatpush1.msra.mxu0 0.0
  %3349 = vmatprep.subr.mxu0 0.0
  %3350 = vmatpush1.msra.mxu0 0.0
  %3351 = vmatprep.subr.mxu0 0.0
  %3352 = vmatpush1.msra.mxu0 0.0
  %3353 = vmatprep.subr.mxu0 0.0
  %3354 = vmatpush1.msra.mxu0 0.0
  %3355 = vmatprep.subr.mxu0 0.0
  %3356 = vmatpush1.msra.mxu0 0.0
  %3357 = vmatprep.subr.mxu0 0.0
  %3358 = vmatpush1.msra.mxu0 0.0
  %3359 = vmatprep.subr.mxu0 0.0
  %3360 = vmatpush1.msra.mxu0 0.0
  %3361 = vmatprep.subr.mxu0 0.0
  %3362 = vmatpush1.msra.mxu0 0.0
  %3363 = vmatprep.subr.mxu0 0.0
  %3364 = vmatpush1.msra.mxu0 0.0
  %3365 = vmatprep.subr.mxu0 0.0
  %3366 = vmatpush1.msra.mxu0 0.0
  %3367 = vmatprep.subr.mxu0 0.0
  %3368 = vmatpush1.msra.mxu0 0.0
  %3369 = vmatprep.subr.mxu0 0.0
  %3370 = vmatpush1.msra.mxu0 0.0
  %3371 = vmatprep.subr.mxu0 0.0
  %3372 = vmatpush1.msra.mxu0 0.0
  %3373 = vmatprep.subr.mxu0 0.0
  %3374 = vmatpush1.msra.mxu0 0.0
  %3375 = vmatprep.subr.mxu0 0.0
  %3376 = vmatpush1.msra.mxu0 0.0
  %3377 = vmatprep.subr.mxu0 0.0
  %3378 = vmatpush1.msra.mxu0 0.0
  %3379 = vmatprep.subr.mxu0 0.0
  %3380 = vmatpush1.msra.mxu0 0.0
  %3381 = vmatprep.subr.mxu0 0.0
  %3382 = vmatpush1.msra.mxu0 0.0
  %3383 = vmatprep.subr.mxu0 0.0
  %3384 = vmatpush1.msra.mxu0 0.0
  %3385 = vmatprep.subr.mxu0 0.0
  %3386 = vmatpush1.msra.mxu0 0.0
  %3387 = vmatprep.subr.mxu0 0.0
  %3388 = vmatpush1.msra.mxu0 0.0
  %3389 = vmatprep.subr.mxu0 0.0
  %3390 = vmatpush1.msra.mxu0 0.0
  %3391 = vmatprep.subr.mxu0 0.0
  %3392 = vmatpush1.msra.mxu0 0.0
  %3393 = vmatprep.mubr.f32.mxu0 0.0
  %3394 = vmatmul.mubr.f32.gmra.mrb[0].mxu0 %v3318
  %v3395 = vpop.f32.mrb[0].mxu0
  %v3396 = vadd.f32 %v3299, %v3395
  %v3397 = vpop.f32.mrb[0].mxu0
  %3398 = vmatprep.mubr.f32.mxu0 0.0
  %3399 = vmatmul.mubr.f32.gmra.mrb[0].mxu0 %v3321
  %v3400 = vpop.f32.mrb[0].mxu0
  %v3401 = vadd.f32 %v3304, %v3400
  %v3402 = vpop.f32.mrb[0].mxu0
  %3403 = vmatprep.mubr.f32.mxu0 0.0
  %3404 = vmatmul.mubr.f32.gmra.mrb[0].mxu0 %v3324
  %v3405 = vpop.f32.mrb[0].mxu0
  %v3406 = vadd.f32 %v3309, %v3405
  %v3407 = vpop.f32.mrb[0].mxu0
  %3408 = vmatprep.mubr.f32.mxu0 0.0
  %3409 = vmatmul.mubr.f32.gmra.mrb[0].mxu0 %v3327
  %v3410 = vpop.f32.mrb[0].mxu0
  %v3411 = vadd.f32 %v3314, %v3410
  %v3412 = vpop.f32.mrb[0].mxu0
  %3413 = vdwg.mxu0
  %v3415 = vsel %vm321, %v3211, 0
  %v3418 = vsel %vm321, %v3212, 0
  %v3421 = vsel %vm321, %v3213, 0
  %v3424 = vsel %vm321, %v3214, 0
  %3426 = vmatprep.subr.mxu0 0.0
  %3427 = vmatpush1.msra.mxu0 %v3192
  %3428 = vmatprep.subr.mxu0 0.0
  %3429 = vmatpush1.msra.mxu0 %v3197
  %3430 = vmatprep.subr.mxu0 0.0
  %3431 = vmatpush1.msra.mxu0 0.0
  %3432 = vmatprep.subr.mxu0 0.0
  %3433 = vmatpush1.msra.mxu0 0.0
  %3434 = vmatprep.subr.mxu0 0.0
  %3435 = vmatpush1.msra.mxu0 0.0
  %3436 = vmatprep.subr.mxu0 0.0
  %3437 = vmatpush1.msra.mxu0 0.0
  %3438 = vmatprep.subr.mxu0 0.0
  %3439 = vmatpush1.msra.mxu0 0.0
  %3440 = vmatprep.subr.mxu0 0.0
  %3441 = vmatpush1.msra.mxu0 0.0
  %3442 = vmatprep.subr.mxu0 0.0
  %3443 = vmatpush1.msra.mxu0 0.0
  %3444 = vmatprep.subr.mxu0 0.0
  %3445 = vmatpush1.msra.mxu0 0.0
  %3446 = vmatprep.subr.mxu0 0.0
  %3447 = vmatpush1.msra.mxu0 0.0
  %3448 = vmatprep.subr.mxu0 0.0
  %3449 = vmatpush1.msra.mxu0 0.0
  %3450 = vmatprep.subr.mxu0 0.0
  %3451 = vmatpush1.msra.mxu0 0.0
  %3452 = vmatprep.subr.mxu0 0.0
  %3453 = vmatpush1.msra.mxu0 0.0
  %3454 = vmatprep.subr.mxu0 0.0
  %3455 = vmatpush1.msra.mxu0 0.0
  %3456 = vmatprep.subr.mxu0 0.0
  %3457 = vmatpush1.msra.mxu0 0.0
  %3458 = vmatprep.subr.mxu0 0.0
  %3459 = vmatpush1.msra.mxu0 0.0
  %3460 = vmatprep.subr.mxu0 0.0
  %3461 = vmatpush1.msra.mxu0 0.0
  %3462 = vmatprep.subr.mxu0 0.0
  %3463 = vmatpush1.msra.mxu0 0.0
  %3464 = vmatprep.subr.mxu0 0.0
  %3465 = vmatpush1.msra.mxu0 0.0
  %3466 = vmatprep.subr.mxu0 0.0
  %3467 = vmatpush1.msra.mxu0 0.0
  %3468 = vmatprep.subr.mxu0 0.0
  %3469 = vmatpush1.msra.mxu0 0.0
  %3470 = vmatprep.subr.mxu0 0.0
  %3471 = vmatpush1.msra.mxu0 0.0
  %3472 = vmatprep.subr.mxu0 0.0
  %3473 = vmatpush1.msra.mxu0 0.0
  %3474 = vmatprep.subr.mxu0 0.0
  %3475 = vmatpush1.msra.mxu0 0.0
  %3476 = vmatprep.subr.mxu0 0.0
  %3477 = vmatpush1.msra.mxu0 0.0
  %3478 = vmatprep.subr.mxu0 0.0
  %3479 = vmatpush1.msra.mxu0 0.0
  %3480 = vmatprep.subr.mxu0 0.0
  %3481 = vmatpush1.msra.mxu0 0.0
  %3482 = vmatprep.subr.mxu0 0.0
  %3483 = vmatpush1.msra.mxu0 0.0
  %3484 = vmatprep.subr.mxu0 0.0
  %3485 = vmatpush1.msra.mxu0 0.0
  %3486 = vmatprep.subr.mxu0 0.0
  %3487 = vmatpush1.msra.mxu0 0.0
  %3488 = vmatprep.subr.mxu0 0.0
  %3489 = vmatpush1.msra.mxu0 0.0
  %3490 = vmatprep.mubr.f32.mxu0 0.0
  %3491 = vmatmul.mubr.f32.gmra.mrb[0].mxu0 %v3415
  %v3492 = vpop.f32.mrb[0].mxu0
  %v3493 = vadd.f32 0.0, %v3492
  %v3494 = vpop.f32.mrb[0].mxu0
  %3495 = vmatprep.mubr.f32.mxu0 0.0
  %3496 = vmatmul.mubr.f32.gmra.mrb[0].mxu0 %v3418
  %v3497 = vpop.f32.mrb[0].mxu0
  %v3498 = vadd.f32 0.0, %v3497
  %v3499 = vpop.f32.mrb[0].mxu0
  %3500 = vmatprep.mubr.f32.mxu0 0.0
  %3501 = vmatmul.mubr.f32.gmra.mrb[0].mxu0 %v3421
  %v3502 = vpop.f32.mrb[0].mxu0
  %v3503 = vadd.f32 0.0, %v3502
  %v3504 = vpop.f32.mrb[0].mxu0
  %3505 = vmatprep.mubr.f32.mxu0 0.0
  %3506 = vmatmul.mubr.f32.gmra.mrb[0].mxu0 %v3424
  %v3507 = vpop.f32.mrb[0].mxu0
  %v3508 = vadd.f32 0.0, %v3507
  %v3509 = vpop.f32.mrb[0].mxu0
  %3510 = vdwg.mxu0
  %v3511 = vadd.f32 %v3396, %v3493
  %v3512 = vadd.f32 %v3401, %v3498
  %v3513 = vadd.f32 %v3406, %v3503
  %v3514 = vadd.f32 %v3411, %v3508
  %3516 = vset.pattern.permute.xlu0 0
  %3517 = vperm.xlu0 %3516, %v3216
  %v3518 = vpop.permute.xlu0 %3517
  %3521 = vset.pattern.permute.xlu0 0
  %3522 = vperm.xlu0 %3521, %v3217
  %v3523 = vpop.permute.xlu0 %3522
  %3526 = vset.pattern.permute.xlu0 0
  %3527 = vperm.xlu0 %3526, %v3218
  %v3528 = vpop.permute.xlu0 %3527
  %3531 = vset.pattern.permute.xlu0 0
  %3532 = vperm.xlu0 %3531, %v3219
  %v3533 = vpop.permute.xlu0 %3532
  %v3535 = vadd.f32 %v3511, %v3518
  %v3536 = vadd.f32 %v3512, %v3523
  %v3537 = vadd.f32 %v3513, %v3528
  %v3538 = vadd.f32 %v3514, %v3533
  %v3539 = vmax.f32 %v3535, 0.0
  %v3540 = vmax.f32 %v3536, 0.0
  %v3541 = vmax.f32 %v3537, 0.0
  %v3542 = vmax.f32 %v3538, 0.0
  %3543 = vmatprep.subr.mxu0 0.0
  %3544 = vmatpush1.msra.mxu0 %v68
  %3545 = vmatprep.subr.mxu0 0.0
  %3546 = vmatpush1.msra.mxu0 %v69
  %3547 = vmatprep.subr.mxu0 0.0
  %3548 = vmatpush1.msra.mxu0 %v70
  %3549 = vmatprep.subr.mxu0 0.0
  %3550 = vmatpush1.msra.mxu0 %v71
  %3551 = vmatprep.subr.mxu0 0.0
  %3552 = vmatpush1.msra.mxu0 %v72
  %3553 = vmatprep.subr.mxu0 0.0
  %3554 = vmatpush1.msra.mxu0 %v73
  %3555 = vmatprep.subr.mxu0 0.0
  %3556 = vmatpush1.msra.mxu0 %v74
  %3557 = vmatprep.subr.mxu0 0.0
  %3558 = vmatpush1.msra.mxu0 %v75
  %3559 = vmatprep.subr.mxu0 0.0
  %3560 = vmatpush1.msra.mxu0 %v76
  %3561 = vmatprep.subr.mxu0 0.0
  %3562 = vmatpush1.msra.mxu0 %v77
  %3563 = vmatprep.subr.mxu0 0.0
  %3564 = vmatpush1.msra.mxu0 %v78
  %3565 = vmatprep.subr.mxu0 0.0
  %3566 = vmatpush1.msra.mxu0 %v79
  %3567 = vmatprep.subr.mxu0 0.0
  %3568 = vmatpush1.msra.mxu0 %v80
  %3569 = vmatprep.subr.mxu0 0.0
  %3570 = vmatpush1.msra.mxu0 %v81
  %3571 = vmatprep.subr.mxu0 0.0
  %3572 = vmatpush1.msra.mxu0 %v82
  %3573 = vmatprep.subr.mxu0 0.0
  %3574 = vmatpush1.msra.mxu0 %v83
  %3575 = vmatprep.subr.mxu0 0.0
  %3576 = vmatpush1.msra.mxu0 0.0
  %3577 = vmatprep.subr.mxu0 0.0
  %3578 = vmatpush1.msra.mxu0 0.0
  %3579 = vmatprep.subr.mxu0 0.0
  %3580 = vmatpush1.msra.mxu0 0.0
  %3581 = vmatprep.subr.mxu0 0.0
  %3582 = vmatpush1.msra.mxu0 0.0
  %3583 = vmatprep.subr.mxu0 0.0
  %3584 = vmatpush1.msra.mxu0 0.0
  %3585 = vmatprep.subr.mxu0 0.0
  %3586 = vmatpush1.msra.mxu0 0.0
  %3587 = vmatprep.subr.mxu0 0.0
  %3588 = vmatpush1.msra.mxu0 0.0
  %3589 = vmatprep.subr.mxu0 0.0
  %3590 = vmatpush1.msra.mxu0 0.0
  %3591 = vmatprep.subr.mxu0 0.0
  %3592 = vmatpush1.msra.mxu0 0.0
  %3593 = vmatprep.subr.mxu0 0.0
  %3594 = vmatpush1.msra.mxu0 0.0
  %3595 = vmatprep.subr.mxu0 0.0
  %3596 = vmatpush1.msra.mxu0 0.0
  %3597 = vmatprep.subr.mxu0 0.0
  %3598 = vmatpush1.msra.mxu0 0.0
  %3599 = vmatprep.subr.mxu0 0.0
  %3600 = vmatpush1.msra.mxu0 0.0
  %3601 = vmatprep.subr.mxu0 0.0
  %3602 = vmatpush1.msra.mxu0 0.0
  %3603 = vmatprep.subr.mxu0 0.0
  %3604 = vmatpush1.msra.mxu0 0.0
  %3605 = vmatprep.subr.mxu0 0.0
  %3606 = vmatpush1.msra.mxu0 0.0
  %3607 = vmatprep.mubr.f32.mxu0 0.0
  %3608 = vmatmul.mubr.f32.gmra.mrb[0].mxu0 %v3541
  %v3609 = vpop.f32.mrb[0].mxu0
  %v3610 = vadd.f32 0.0, %v3609
  %v3611 = vpop.f32.mrb[0].mxu0
  %3612 = vmatprep.mubr.f32.mxu0 0.0
  %3613 = vmatmul.mubr.f32.gmra.mrb[0].mxu0 %v3542
  %v3614 = vpop.f32.mrb[0].mxu0
  %v3615 = vadd.f32 0.0, %v3614
  %v3616 = vpop.f32.mrb[0].mxu0
  %3617 = vdwg.mxu0
  %s3618 = scalar_lea.vmem %s8, 64
  %v3619 = vld [vmem:[%s3618] sm:$0xff]
  %v3620 = vld [vmem:[%s3618 + $0x8] sm:$0xff]
  %v3621 = vld [vmem:[%s3618 + $0x10] sm:$0xff]
  %v3622 = vld [vmem:[%s3618 + $0x18] sm:$0xff]
  %s3623 = scalar_lea.vmem %s9, 64
  %v3624 = vld [vmem:[%s3623] sm:$0xff]
  %v3625 = vld [vmem:[%s3623 + $0x8] sm:$0xff]
  %v3626 = vld [vmem:[%s3623 + $0x10] sm:$0xff]
  %v3627 = vld [vmem:[%s3623 + $0x18] sm:$0xff]
  %s3628 = scalar_lea.vmem %s10, 64
  %v3629 = vld [vmem:[%s3628] sm:$0xff]
  %v3630 = vld [vmem:[%s3628 + $0x8] sm:$0xff]
  %v3631 = vld [vmem:[%s3628 + $0x10] sm:$0xff]
  %v3632 = vld [vmem:[%s3628 + $0x18] sm:$0xff]
  %v3634 = vsel %vm321, %v3624, 0
  %v3637 = vsel %vm321, %v3625, 0
  %v3640 = vsel %vm321, %v3626, 0
  %v3643 = vsel %vm321, %v3627, 0
  %3645 = vmatprep.subr.mxu0 0.0
  %3646 = vmatpush1.msra.mxu0 %v3610
  %3647 = vmatprep.subr.mxu0 0.0
  %3648 = vmatpush1.msra.mxu0 %v3615
  %3649 = vmatprep.subr.mxu0 0.0
  %3650 = vmatpush1.msra.mxu0 0.0
  %3651 = vmatprep.subr.mxu0 0.0
  %3652 = vmatpush1.msra.mxu0 0.0
  %3653 = vmatprep.subr.mxu0 0.0
  %3654 = vmatpush1.msra.mxu0 0.0
  %3655 = vmatprep.subr.mxu0 0.0
  %3656 = vmatpush1.msra.mxu0 0.0
  %3657 = vmatprep.subr.mxu0 0.0
  %3658 = vmatpush1.msra.mxu0 0.0
  %3659 = vmatprep.subr.mxu0 0.0
  %3660 = vmatpush1.msra.mxu0 0.0
  %3661 = vmatprep.subr.mxu0 0.0
  %3662 = vmatpush1.msra.mxu0 0.0
  %3663 = vmatprep.subr.mxu0 0.0
  %3664 = vmatpush1.msra.mxu0 0.0
  %3665 = vmatprep.subr.mxu0 0.0
  %3666 = vmatpush1.msra.mxu0 0.0
  %3667 = vmatprep.subr.mxu0 0.0
  %3668 = vmatpush1.msra.mxu0 0.0
  %3669 = vmatprep.subr.mxu0 0.0
  %3670 = vmatpush1.msra.mxu0 0.0
  %3671 = vmatprep.subr.mxu0 0.0
  %3672 = vmatpush1.msra.mxu0 0.0
  %3673 = vmatprep.subr.mxu0 0.0
  %3674 = vmatpush1.msra.mxu0 0.0
  %3675 = vmatprep.subr.mxu0 0.0
  %3676 = vmatpush1.msra.mxu0 0.0
  %3677 = vmatprep.subr.mxu0 0.0
  %3678 = vmatpush1.msra.mxu0 0.0
  %3679 = vmatprep.subr.mxu0 0.0
  %3680 = vmatpush1.msra.mxu0 0.0
  %3681 = vmatprep.subr.mxu0 0.0
  %3682 = vmatpush1.msra.mxu0 0.0
  %3683 = vmatprep.subr.mxu0 0.0
  %3684 = vmatpush1.msra.mxu0 0.0
  %3685 = vmatprep.subr.mxu0 0.0
  %3686 = vmatpush1.msra.mxu0 0.0
  %3687 = vmatprep.subr.mxu0 0.0
  %3688 = vmatpush1.msra.mxu0 0.0
  %3689 = vmatprep.subr.mxu0 0.0
  %3690 = vmatpush1.msra.mxu0 0.0
  %3691 = vmatprep.subr.mxu0 0.0
  %3692 = vmatpush1.msra.mxu0 0.0
  %3693 = vmatprep.subr.mxu0 0.0
  %3694 = vmatpush1.msra.mxu0 0.0
  %3695 = vmatprep.subr.mxu0 0.0
  %3696 = vmatpush1.msra.mxu0 0.0
  %3697 = vmatprep.subr.mxu0 0.0
  %3698 = vmatpush1.msra.mxu0 0.0
  %3699 = vmatprep.subr.mxu0 0.0
  %3700 = vmatpush1.msra.mxu0 0.0
  %3701 = vmatprep.subr.mxu0 0.0
  %3702 = vmatpush1.msra.mxu0 0.0
  %3703 = vmatprep.subr.mxu0 0.0
  %3704 = vmatpush1.msra.mxu0 0.0
  %3705 = vmatprep.subr.mxu0 0.0
  %3706 = vmatpush1.msra.mxu0 0.0
  %3707 = vmatprep.subr.mxu0 0.0
  %3708 = vmatpush1.msra.mxu0 0.0
  %3709 = vmatprep.mubr.f32.mxu0 0.0
  %3710 = vmatmul.mubr.f32.gmra.mrb[0].mxu0 %v3634
  %v3711 = vpop.f32.mrb[0].mxu0
  %v3712 = vadd.f32 0.0, %v3711
  %v3713 = vpop.f32.mrb[0].mxu0
  %3714 = vmatprep.mubr.f32.mxu0 0.0
  %3715 = vmatmul.mubr.f32.gmra.mrb[0].mxu0 %v3637
  %v3716 = vpop.f32.mrb[0].mxu0
  %v3717 = vadd.f32 0.0, %v3716
  %v3718 = vpop.f32.mrb[0].mxu0
  %3719 = vmatprep.mubr.f32.mxu0 0.0
  %3720 = vmatmul.mubr.f32.gmra.mrb[0].mxu0 %v3640
  %v3721 = vpop.f32.mrb[0].mxu0
  %v3722 = vadd.f32 0.0, %v3721
  %v3723 = vpop.f32.mrb[0].mxu0
  %3724 = vmatprep.mubr.f32.mxu0 0.0
  %3725 = vmatmul.mubr.f32.gmra.mrb[0].mxu0 %v3643
  %v3726 = vpop.f32.mrb[0].mxu0
  %v3727 = vadd.f32 0.0, %v3726
  %v3728 = vpop.f32.mrb[0].mxu0
  %3729 = vdwg.mxu0
  %v3731 = vsel %vm321, %v3619, 0
  %v3734 = vsel %vm321, %v3620, 0
  %v3737 = vsel %vm321, %v3621, 0
  %v3740 = vsel %vm321, %v3622, 0
  %3742 = vmatprep.subr.mxu0 0.0
  %3743 = vmatpush1.msra.mxu0 %v3539
  %3744 = vmatprep.subr.mxu0 0.0
  %3745 = vmatpush1.msra.mxu0 %v3540
  %3746 = vmatprep.subr.mxu0 0.0
  %3747 = vmatpush1.msra.mxu0 0.0
  %3748 = vmatprep.subr.mxu0 0.0
  %3749 = vmatpush1.msra.mxu0 0.0
  %3750 = vmatprep.subr.mxu0 0.0
  %3751 = vmatpush1.msra.mxu0 0.0
  %3752 = vmatprep.subr.mxu0 0.0
  %3753 = vmatpush1.msra.mxu0 0.0
  %3754 = vmatprep.subr.mxu0 0.0
  %3755 = vmatpush1.msra.mxu0 0.0
  %3756 = vmatprep.subr.mxu0 0.0
  %3757 = vmatpush1.msra.mxu0 0.0
  %3758 = vmatprep.subr.mxu0 0.0
  %3759 = vmatpush1.msra.mxu0 0.0
  %3760 = vmatprep.subr.mxu0 0.0
  %3761 = vmatpush1.msra.mxu0 0.0
  %3762 = vmatprep.subr.mxu0 0.0
  %3763 = vmatpush1.msra.mxu0 0.0
  %3764 = vmatprep.subr.mxu0 0.0
  %3765 = vmatpush1.msra.mxu0 0.0
  %3766 = vmatprep.subr.mxu0 0.0
  %3767 = vmatpush1.msra.mxu0 0.0
  %3768 = vmatprep.subr.mxu0 0.0
  %3769 = vmatpush1.msra.mxu0 0.0
  %3770 = vmatprep.subr.mxu0 0.0
  %3771 = vmatpush1.msra.mxu0 0.0
  %3772 = vmatprep.subr.mxu0 0.0
  %3773 = vmatpush1.msra.mxu0 0.0
  %3774 = vmatprep.subr.mxu0 0.0
  %3775 = vmatpush1.msra.mxu0 0.0
  %3776 = vmatprep.subr.mxu0 0.0
  %3777 = vmatpush1.msra.mxu0 0.0
  %3778 = vmatprep.subr.mxu0 0.0
  %3779 = vmatpush1.msra.mxu0 0.0
  %3780 = vmatprep.subr.mxu0 0.0
  %3781 = vmatpush1.msra.mxu0 0.0
  %3782 = vmatprep.subr.mxu0 0.0
  %3783 = vmatpush1.msra.mxu0 0.0
  %3784 = vmatprep.subr.mxu0 0.0
  %3785 = vmatpush1.msra.mxu0 0.0
  %3786 = vmatprep.subr.mxu0 0.0
  %3787 = vmatpush1.msra.mxu0 0.0
  %3788 = vmatprep.subr.mxu0 0.0
  %3789 = vmatpush1.msra.mxu0 0.0
  %3790 = vmatprep.subr.mxu0 0.0
  %3791 = vmatpush1.msra.mxu0 0.0
  %3792 = vmatprep.subr.mxu0 0.0
  %3793 = vmatpush1.msra.mxu0 0.0
  %3794 = vmatprep.subr.mxu0 0.0
  %3795 = vmatpush1.msra.mxu0 0.0
  %3796 = vmatprep.subr.mxu0 0.0
  %3797 = vmatpush1.msra.mxu0 0.0
  %3798 = vmatprep.subr.mxu0 0.0
  %3799 = vmatpush1.msra.mxu0 0.0
  %3800 = vmatprep.subr.mxu0 0.0
  %3801 = vmatpush1.msra.mxu0 0.0
  %3802 = vmatprep.subr.mxu0 0.0
  %3803 = vmatpush1.msra.mxu0 0.0
  %3804 = vmatprep.subr.mxu0 0.0
  %3805 = vmatpush1.msra.mxu0 0.0
  %3806 = vmatprep.mubr.f32.mxu0 0.0
  %3807 = vmatmul.mubr.f32.gmra.mrb[0].mxu0 %v3731
  %v3808 = vpop.f32.mrb[0].mxu0
  %v3809 = vadd.f32 %v3712, %v3808
  %v3810 = vpop.f32.mrb[0].mxu0
  %3811 = vmatprep.mubr.f32.mxu0 0.0
  %3812 = vmatmul.mubr.f32.gmra.mrb[0].mxu0 %v3734
  %v3813 = vpop.f32.mrb[0].mxu0
  %v3814 = vadd.f32 %v3717, %v3813
  %v3815 = vpop.f32.mrb[0].mxu0
  %3816 = vmatprep.mubr.f32.mxu0 0.0
  %3817 = vmatmul.mubr.f32.gmra.mrb[0].mxu0 %v3737
  %v3818 = vpop.f32.mrb[0].mxu0
  %v3819 = vadd.f32 %v3722, %v3818
  %v3820 = vpop.f32.mrb[0].mxu0
  %3821 = vmatprep.mubr.f32.mxu0 0.0
  %3822 = vmatmul.mubr.f32.gmra.mrb[0].mxu0 %v3740
  %v3823 = vpop.f32.mrb[0].mxu0
  %v3824 = vadd.f32 %v3727, %v3823
  %v3825 = vpop.f32.mrb[0].mxu0
  %3826 = vdwg.mxu0
  %3828 = vset.pattern.permute.xlu0 0
  %3829 = vperm.xlu0 %3828, %v3629
  %v3830 = vpop.permute.xlu0 %3829
  %3833 = vset.pattern.permute.xlu0 0
  %3834 = vperm.xlu0 %3833, %v3630
  %v3835 = vpop.permute.xlu0 %3834
  %3838 = vset.pattern.permute.xlu0 0
  %3839 = vperm.xlu0 %3838, %v3631
  %v3840 = vpop.permute.xlu0 %3839
  %3843 = vset.pattern.permute.xlu0 0
  %3844 = vperm.xlu0 %3843, %v3632
  %v3845 = vpop.permute.xlu0 %3844
  %v3847 = vadd.f32 %v3809, %v3830
  %v3848 = vadd.f32 %v3814, %v3835
  %v3849 = vadd.f32 %v3819, %v3840
  %v3850 = vadd.f32 %v3824, %v3845
  %3851 = vmatprep.subr.mxu0 0.0
  %3852 = vmatpush1.msra.mxu0 %v68
  %3853 = vmatprep.subr.mxu0 0.0
  %3854 = vmatpush1.msra.mxu0 %v69
  %3855 = vmatprep.subr.mxu0 0.0
  %3856 = vmatpush1.msra.mxu0 %v70
  %3857 = vmatprep.subr.mxu0 0.0
  %3858 = vmatpush1.msra.mxu0 %v71
  %3859 = vmatprep.subr.mxu0 0.0
  %3860 = vmatpush1.msra.mxu0 %v72
  %3861 = vmatprep.subr.mxu0 0.0
  %3862 = vmatpush1.msra.mxu0 %v73
  %3863 = vmatprep.subr.mxu0 0.0
  %3864 = vmatpush1.msra.mxu0 %v74
  %3865 = vmatprep.subr.mxu0 0.0
  %3866 = vmatpush1.msra.mxu0 %v75
  %3867 = vmatprep.subr.mxu0 0.0
  %3868 = vmatpush1.msra.mxu0 %v76
  %3869 = vmatprep.subr.mxu0 0.0
  %3870 = vmatpush1.msra.mxu0 %v77
  %3871 = vmatprep.subr.mxu0 0.0
  %3872 = vmatpush1.msra.mxu0 %v78
  %3873 = vmatprep.subr.mxu0 0.0
  %3874 = vmatpush1.msra.mxu0 %v79
  %3875 = vmatprep.subr.mxu0 0.0
  %3876 = vmatpush1.msra.mxu0 %v80
  %3877 = vmatprep.subr.mxu0 0.0
  %3878 = vmatpush1.msra.mxu0 %v81
  %3879 = vmatprep.subr.mxu0 0.0
  %3880 = vmatpush1.msra.mxu0 %v82
  %3881 = vmatprep.subr.mxu0 0.0
  %3882 = vmatpush1.msra.mxu0 %v83
  %3883 = vmatprep.subr.mxu0 0.0
  %3884 = vmatpush1.msra.mxu0 0.0
  %3885 = vmatprep.subr.mxu0 0.0
  %3886 = vmatpush1.msra.mxu0 0.0
  %3887 = vmatprep.subr.mxu0 0.0
  %3888 = vmatpush1.msra.mxu0 0.0
  %3889 = vmatprep.subr.mxu0 0.0
  %3890 = vmatpush1.msra.mxu0 0.0
  %3891 = vmatprep.subr.mxu0 0.0
  %3892 = vmatpush1.msra.mxu0 0.0
  %3893 = vmatprep.subr.mxu0 0.0
  %3894 = vmatpush1.msra.mxu0 0.0
  %3895 = vmatprep.subr.mxu0 0.0
  %3896 = vmatpush1.msra.mxu0 0.0
  %3897 = vmatprep.subr.mxu0 0.0
  %3898 = vmatpush1.msra.mxu0 0.0
  %3899 = vmatprep.subr.mxu0 0.0
  %3900 = vmatpush1.msra.mxu0 0.0
  %3901 = vmatprep.subr.mxu0 0.0
  %3902 = vmatpush1.msra.mxu0 0.0
  %3903 = vmatprep.subr.mxu0 0.0
  %3904 = vmatpush1.msra.mxu0 0.0
  %3905 = vmatprep.subr.mxu0 0.0
  %3906 = vmatpush1.msra.mxu0 0.0
  %3907 = vmatprep.subr.mxu0 0.0
  %3908 = vmatpush1.msra.mxu0 0.0
  %3909 = vmatprep.subr.mxu0 0.0
  %3910 = vmatpush1.msra.mxu0 0.0
  %3911 = vmatprep.subr.mxu0 0.0
  %3912 = vmatpush1.msra.mxu0 0.0
  %3913 = vmatprep.subr.mxu0 0.0
  %3914 = vmatpush1.msra.mxu0 0.0
  %3915 = vmatprep.mubr.f32.mxu0 0.0
  %3916 = vmatmul.mubr.f32.gmra.mrb[0].mxu0 %v3849
  %v3917 = vpop.f32.mrb[0].mxu0
  %v3918 = vadd.f32 0.0, %v3917
  %v3919 = vpop.f32.mrb[0].mxu0
  %3920 = vmatprep.mubr.f32.mxu0 0.0
  %3921 = vmatmul.mubr.f32.gmra.mrb[0].mxu0 %v3850
  %v3922 = vpop.f32.mrb[0].mxu0
  %v3923 = vadd.f32 0.0, %v3922
  %v3924 = vpop.f32.mrb[0].mxu0
  %3925 = vdwg.mxu0
  %3926 = vmatprep.subr.mxu0 0.0
  %3927 = vmatpush1.msra.mxu0 %v84
  %3928 = vmatprep.subr.mxu0 0.0
  %3929 = vmatpush1.msra.mxu0 %v85
  %3930 = vmatprep.subr.mxu0 0.0
  %3931 = vmatpush1.msra.mxu0 %v86
  %3932 = vmatprep.subr.mxu0 0.0
  %3933 = vmatpush1.msra.mxu0 %v87
  %3934 = vmatprep.subr.mxu0 0.0
  %3935 = vmatpush1.msra.mxu0 %v88
  %3936 = vmatprep.subr.mxu0 0.0
  %3937 = vmatpush1.msra.mxu0 %v89
  %3938 = vmatprep.subr.mxu0 0.0
  %3939 = vmatpush1.msra.mxu0 %v90
  %3940 = vmatprep.subr.mxu0 0.0
  %3941 = vmatpush1.msra.mxu0 %v91
  %3942 = vmatprep.subr.mxu0 0.0
  %3943 = vmatpush1.msra.mxu0 %v92
  %3944 = vmatprep.subr.mxu0 0.0
  %3945 = vmatpush1.msra.mxu0 %v93
  %3946 = vmatprep.subr.mxu0 0.0
  %3947 = vmatpush1.msra.mxu0 %v94
  %3948 = vmatprep.subr.mxu0 0.0
  %3949 = vmatpush1.msra.mxu0 %v95
  %3950 = vmatprep.subr.mxu0 0.0
  %3951 = vmatpush1.msra.mxu0 %v96
  %3952 = vmatprep.subr.mxu0 0.0
  %3953 = vmatpush1.msra.mxu0 %v97
  %3954 = vmatprep.subr.mxu0 0.0
  %3955 = vmatpush1.msra.mxu0 %v98
  %3956 = vmatprep.subr.mxu0 0.0
  %3957 = vmatpush1.msra.mxu0 %v99
  %3958 = vmatprep.subr.mxu0 0.0
  %3959 = vmatpush1.msra.mxu0 0.0
  %3960 = vmatprep.subr.mxu0 0.0
  %3961 = vmatpush1.msra.mxu0 0.0
  %3962 = vmatprep.subr.mxu0 0.0
  %3963 = vmatpush1.msra.mxu0 0.0
  %3964 = vmatprep.subr.mxu0 0.0
  %3965 = vmatpush1.msra.mxu0 0.0
  %3966 = vmatprep.subr.mxu0 0.0
  %3967 = vmatpush1.msra.mxu0 0.0
  %3968 = vmatprep.subr.mxu0 0.0
  %3969 = vmatpush1.msra.mxu0 0.0
  %3970 = vmatprep.subr.mxu0 0.0
  %3971 = vmatpush1.msra.mxu0 0.0
  %3972 = vmatprep.subr.mxu0 0.0
  %3973 = vmatpush1.msra.mxu0 0.0
  %3974 = vmatprep.subr.mxu0 0.0
  %3975 = vmatpush1.msra.mxu0 0.0
  %3976 = vmatprep.subr.mxu0 0.0
  %3977 = vmatpush1.msra.mxu0 0.0
  %3978 = vmatprep.subr.mxu0 0.0
  %3979 = vmatpush1.msra.mxu0 0.0
  %3980 = vmatprep.subr.mxu0 0.0
  %3981 = vmatpush1.msra.mxu0 0.0
  %3982 = vmatprep.subr.mxu0 0.0
  %3983 = vmatpush1.msra.mxu0 0.0
  %3984 = vmatprep.subr.mxu0 0.0
  %3985 = vmatpush1.msra.mxu0 0.0
  %3986 = vmatprep.subr.mxu0 0.0
  %3987 = vmatpush1.msra.mxu0 0.0
  %3988 = vmatprep.subr.mxu0 0.0
  %3989 = vmatpush1.msra.mxu0 0.0
  %3990 = vmatprep.mubr.f32.mxu0 0.0
  %3991 = vmatmul.mubr.f32.gmra.mrb[0].mxu0 %v3847
  %v3992 = vpop.f32.mrb[0].mxu0
  %v3993 = vadd.f32 0.0, %v3992
  %v3994 = vpop.f32.mrb[0].mxu0
  %3995 = vmatprep.mubr.f32.mxu0 0.0
  %3996 = vmatmul.mubr.f32.gmra.mrb[0].mxu0 %v3848
  %v3997 = vpop.f32.mrb[0].mxu0
  %v3998 = vadd.f32 0.0, %v3997
  %v3999 = vpop.f32.mrb[0].mxu0
  %4000 = vdwg.mxu0
  %4001 = vmatprep.subr.mxu0 0.0
  %4002 = vmatpush1.msra.mxu0 %v84
  %4003 = vmatprep.subr.mxu0 0.0
  %4004 = vmatpush1.msra.mxu0 %v85
  %4005 = vmatprep.subr.mxu0 0.0
  %4006 = vmatpush1.msra.mxu0 %v86
  %4007 = vmatprep.subr.mxu0 0.0
  %4008 = vmatpush1.msra.mxu0 %v87
  %4009 = vmatprep.subr.mxu0 0.0
  %4010 = vmatpush1.msra.mxu0 %v88
  %4011 = vmatprep.subr.mxu0 0.0
  %4012 = vmatpush1.msra.mxu0 %v89
  %4013 = vmatprep.subr.mxu0 0.0
  %4014 = vmatpush1.msra.mxu0 %v90
  %4015 = vmatprep.subr.mxu0 0.0
  %4016 = vmatpush1.msra.mxu0 %v91
  %4017 = vmatprep.subr.mxu0 0.0
  %4018 = vmatpush1.msra.mxu0 %v92
  %4019 = vmatprep.subr.mxu0 0.0
  %4020 = vmatpush1.msra.mxu0 %v93
  %4021 = vmatprep.subr.mxu0 0.0
  %4022 = vmatpush1.msra.mxu0 %v94
  %4023 = vmatprep.subr.mxu0 0.0
  %4024 = vmatpush1.msra.mxu0 %v95
  %4025 = vmatprep.subr.mxu0 0.0
  %4026 = vmatpush1.msra.mxu0 %v96
  %4027 = vmatprep.subr.mxu0 0.0
  %4028 = vmatpush1.msra.mxu0 %v97
  %4029 = vmatprep.subr.mxu0 0.0
  %4030 = vmatpush1.msra.mxu0 %v98
  %4031 = vmatprep.subr.mxu0 0.0
  %4032 = vmatpush1.msra.mxu0 %v99
  %4033 = vmatprep.subr.mxu0 0.0
  %4034 = vmatpush1.msra.mxu0 0.0
  %4035 = vmatprep.subr.mxu0 0.0
  %4036 = vmatpush1.msra.mxu0 0.0
  %4037 = vmatprep.subr.mxu0 0.0
  %4038 = vmatpush1.msra.mxu0 0.0
  %4039 = vmatprep.subr.mxu0 0.0
  %4040 = vmatpush1.msra.mxu0 0.0
  %4041 = vmatprep.subr.mxu0 0.0
  %4042 = vmatpush1.msra.mxu0 0.0
  %4043 = vmatprep.subr.mxu0 0.0
  %4044 = vmatpush1.msra.mxu0 0.0
  %4045 = vmatprep.subr.mxu0 0.0
  %4046 = vmatpush1.msra.mxu0 0.0
  %4047 = vmatprep.subr.mxu0 0.0
  %4048 = vmatpush1.msra.mxu0 0.0
  %4049 = vmatprep.subr.mxu0 0.0
  %4050 = vmatpush1.msra.mxu0 0.0
  %4051 = vmatprep.subr.mxu0 0.0
  %4052 = vmatpush1.msra.mxu0 0.0
  %4053 = vmatprep.subr.mxu0 0.0
  %4054 = vmatpush1.msra.mxu0 0.0
  %4055 = vmatprep.subr.mxu0 0.0
  %4056 = vmatpush1.msra.mxu0 0.0
  %4057 = vmatprep.subr.mxu0 0.0
  %4058 = vmatpush1.msra.mxu0 0.0
  %4059 = vmatprep.subr.mxu0 0.0
  %4060 = vmatpush1.msra.mxu0 0.0
  %4061 = vmatprep.subr.mxu0 0.0
  %4062 = vmatpush1.msra.mxu0 0.0
  %4063 = vmatprep.subr.mxu0 0.0
  %4064 = vmatpush1.msra.mxu0 0.0
  %4065 = vmatprep.mubr.f32.mxu0 0.0
  %4066 = vmatmul.mubr.f32.gmra.mrb[0].mxu0 %v3918
  %v4067 = vpop.f32.mrb[0].mxu0
  %v4068 = vadd.f32 0.0, %v4067
  %v4069 = vpop.f32.mrb[0].mxu0
  %4070 = vmatprep.mubr.f32.mxu0 0.0
  %4071 = vmatmul.mubr.f32.gmra.mrb[0].mxu0 %v3923
  %v4072 = vpop.f32.mrb[0].mxu0
  %v4073 = vadd.f32 0.0, %v4072
  %v4074 = vpop.f32.mrb[0].mxu0
  %4075 = vdwg.mxu0
  %s4076 = scalar_lea.vmem %s12, 64
  %v4077 = vld [vmem:[%s4076] sm:$0xff]
  %v4078 = vld [vmem:[%s4076 + $0x8] sm:$0xff]
  %v4079 = vld [vmem:[%s4076 + $0x10] sm:$0xff]
  %v4080 = vld [vmem:[%s4076 + $0x18] sm:$0xff]
  %s4081 = scalar_lea.vmem %s13, 64
  %v4082 = vld [vmem:[%s4081] sm:$0xff]
  %v4083 = vld [vmem:[%s4081 + $0x8] sm:$0xff]
  %v4084 = vld [vmem:[%s4081 + $0x10] sm:$0xff]
  %v4085 = vld [vmem:[%s4081 + $0x18] sm:$0xff]
  %s4086 = scalar_lea.vmem %s14, 64
  %v4087 = vld [vmem:[%s4086] sm:$0xff]
  %v4088 = vld [vmem:[%s4086 + $0x8] sm:$0xff]
  %v4089 = vld [vmem:[%s4086 + $0x10] sm:$0xff]
  %v4090 = vld [vmem:[%s4086 + $0x18] sm:$0xff]
  %s4091 = scalar_lea.vmem %s15, 64
  %v4092 = vld [vmem:[%s4091] sm:$0xff]
  %v4093 = vld [vmem:[%s4091 + $0x8] sm:$0xff]
  %v4094 = vld [vmem:[%s4091 + $0x10] sm:$0xff]
  %v4095 = vld [vmem:[%s4091 + $0x18] sm:$0xff]
  %s4096 = scalar_lea.vmem %s16, 64
  %v4097 = vld [vmem:[%s4096] sm:$0xff]
  %v4098 = vld [vmem:[%s4096 + $0x8] sm:$0xff]
  %v4099 = vld [vmem:[%s4096 + $0x10] sm:$0xff]
  %v4100 = vld [vmem:[%s4096 + $0x18] sm:$0xff]
  %v4102 = vsel %vm321, %v4082, 0
  %v4105 = vsel %vm321, %v4083, 0
  %v4108 = vsel %vm321, %v4084, 0
  %v4111 = vsel %vm321, %v4085, 0
  %4113 = vmatprep.subr.mxu0 0.0
  %4114 = vmatpush1.msra.mxu0 %v3192
  %4115 = vmatprep.subr.mxu0 0.0
  %4116 = vmatpush1.msra.mxu0 %v3197
  %4117 = vmatprep.subr.mxu0 0.0
  %4118 = vmatpush1.msra.mxu0 0.0
  %4119 = vmatprep.subr.mxu0 0.0
  %4120 = vmatpush1.msra.mxu0 0.0
  %4121 = vmatprep.subr.mxu0 0.0
  %4122 = vmatpush1.msra.mxu0 0.0
  %4123 = vmatprep.subr.mxu0 0.0
  %4124 = vmatpush1.msra.mxu0 0.0
  %4125 = vmatprep.subr.mxu0 0.0
  %4126 = vmatpush1.msra.mxu0 0.0
  %4127 = vmatprep.subr.mxu0 0.0
  %4128 = vmatpush1.msra.mxu0 0.0
  %4129 = vmatprep.subr.mxu0 0.0
  %4130 = vmatpush1.msra.mxu0 0.0
  %4131 = vmatprep.subr.mxu0 0.0
  %4132 = vmatpush1.msra.mxu0 0.0
  %4133 = vmatprep.subr.mxu0 0.0
  %4134 = vmatpush1.msra.mxu0 0.0
  %4135 = vmatprep.subr.mxu0 0.0
  %4136 = vmatpush1.msra.mxu0 0.0
  %4137 = vmatprep.subr.mxu0 0.0
  %4138 = vmatpush1.msra.mxu0 0.0
  %4139 = vmatprep.subr.mxu0 0.0
  %4140 = vmatpush1.msra.mxu0 0.0
  %4141 = vmatprep.subr.mxu0 0.0
  %4142 = vmatpush1.msra.mxu0 0.0
  %4143 = vmatprep.subr.mxu0 0.0
  %4144 = vmatpush1.msra.mxu0 0.0
  %4145 = vmatprep.subr.mxu0 0.0
  %4146 = vmatpush1.msra.mxu0 0.0
  %4147 = vmatprep.subr.mxu0 0.0
  %4148 = vmatpush1.msra.mxu0 0.0
  %4149 = vmatprep.subr.mxu0 0.0
  %4150 = vmatpush1.msra.mxu0 0.0
  %4151 = vmatprep.subr.mxu0 0.0
  %4152 = vmatpush1.msra.mxu0 0.0
  %4153 = vmatprep.subr.mxu0 0.0
  %4154 = vmatpush1.msra.mxu0 0.0
  %4155 = vmatprep.subr.mxu0 0.0
  %4156 = vmatpush1.msra.mxu0 0.0
  %4157 = vmatprep.subr.mxu0 0.0
  %4158 = vmatpush1.msra.mxu0 0.0
  %4159 = vmatprep.subr.mxu0 0.0
  %4160 = vmatpush1.msra.mxu0 0.0
  %4161 = vmatprep.subr.mxu0 0.0
  %4162 = vmatpush1.msra.mxu0 0.0
  %4163 = vmatprep.subr.mxu0 0.0
  %4164 = vmatpush1.msra.mxu0 0.0
  %4165 = vmatprep.subr.mxu0 0.0
  %4166 = vmatpush1.msra.mxu0 0.0
  %4167 = vmatprep.subr.mxu0 0.0
  %4168 = vmatpush1.msra.mxu0 0.0
  %4169 = vmatprep.subr.mxu0 0.0
  %4170 = vmatpush1.msra.mxu0 0.0
  %4171 = vmatprep.subr.mxu0 0.0
  %4172 = vmatpush1.msra.mxu0 0.0
  %4173 = vmatprep.subr.mxu0 0.0
  %4174 = vmatpush1.msra.mxu0 0.0
  %4175 = vmatprep.subr.mxu0 0.0
  %4176 = vmatpush1.msra.mxu0 0.0
  %4177 = vmatprep.mubr.f32.mxu0 0.0
  %4178 = vmatmul.mubr.f32.gmra.mrb[0].mxu0 %v4102
  %v4179 = vpop.f32.mrb[0].mxu0
  %v4180 = vadd.f32 0.0, %v4179
  %v4181 = vpop.f32.mrb[0].mxu0
  %4182 = vmatprep.mubr.f32.mxu0 0.0
  %4183 = vmatmul.mubr.f32.gmra.mrb[0].mxu0 %v4105
  %v4184 = vpop.f32.mrb[0].mxu0
  %v4185 = vadd.f32 0.0, %v4184
  %v4186 = vpop.f32.mrb[0].mxu0
  %4187 = vmatprep.mubr.f32.mxu0 0.0
  %4188 = vmatmul.mubr.f32.gmra.mrb[0].mxu0 %v4108
  %v4189 = vpop.f32.mrb[0].mxu0
  %v4190 = vadd.f32 0.0, %v4189
  %v4191 = vpop.f32.mrb[0].mxu0
  %4192 = vmatprep.mubr.f32.mxu0 0.0
  %4193 = vmatmul.mubr.f32.gmra.mrb[0].mxu0 %v4111
  %v4194 = vpop.f32.mrb[0].mxu0
  %v4195 = vadd.f32 0.0, %v4194
  %v4196 = vpop.f32.mrb[0].mxu0
  %4197 = vdwg.mxu0
  %v4199 = vsel %vm321, %v4077, 0
  %v4202 = vsel %vm321, %v4078, 0
  %v4205 = vsel %vm321, %v4079, 0
  %v4208 = vsel %vm321, %v4080, 0
  %4210 = vmatprep.subr.mxu0 0.0
  %4211 = vmatpush1.msra.mxu0 %v3121
  %4212 = vmatprep.subr.mxu0 0.0
  %4213 = vmatpush1.msra.mxu0 %v3122
  %4214 = vmatprep.subr.mxu0 0.0
  %4215 = vmatpush1.msra.mxu0 0.0
  %4216 = vmatprep.subr.mxu0 0.0
  %4217 = vmatpush1.msra.mxu0 0.0
  %4218 = vmatprep.subr.mxu0 0.0
  %4219 = vmatpush1.msra.mxu0 0.0
  %4220 = vmatprep.subr.mxu0 0.0
  %4221 = vmatpush1.msra.mxu0 0.0
  %4222 = vmatprep.subr.mxu0 0.0
  %4223 = vmatpush1.msra.mxu0 0.0
  %4224 = vmatprep.subr.mxu0 0.0
  %4225 = vmatpush1.msra.mxu0 0.0
  %4226 = vmatprep.subr.mxu0 0.0
  %4227 = vmatpush1.msra.mxu0 0.0
  %4228 = vmatprep.subr.mxu0 0.0
  %4229 = vmatpush1.msra.mxu0 0.0
  %4230 = vmatprep.subr.mxu0 0.0
  %4231 = vmatpush1.msra.mxu0 0.0
  %4232 = vmatprep.subr.mxu0 0.0
  %4233 = vmatpush1.msra.mxu0 0.0
  %4234 = vmatprep.subr.mxu0 0.0
  %4235 = vmatpush1.msra.mxu0 0.0
  %4236 = vmatprep.subr.mxu0 0.0
  %4237 = vmatpush1.msra.mxu0 0.0
  %4238 = vmatprep.subr.mxu0 0.0
  %4239 = vmatpush1.msra.mxu0 0.0
  %4240 = vmatprep.subr.mxu0 0.0
  %4241 = vmatpush1.msra.mxu0 0.0
  %4242 = vmatprep.subr.mxu0 0.0
  %4243 = vmatpush1.msra.mxu0 0.0
  %4244 = vmatprep.subr.mxu0 0.0
  %4245 = vmatpush1.msra.mxu0 0.0
  %4246 = vmatprep.subr.mxu0 0.0
  %4247 = vmatpush1.msra.mxu0 0.0
  %4248 = vmatprep.subr.mxu0 0.0
  %4249 = vmatpush1.msra.mxu0 0.0
  %4250 = vmatprep.subr.mxu0 0.0
  %4251 = vmatpush1.msra.mxu0 0.0
  %4252 = vmatprep.subr.mxu0 0.0
  %4253 = vmatpush1.msra.mxu0 0.0
  %4254 = vmatprep.subr.mxu0 0.0
  %4255 = vmatpush1.msra.mxu0 0.0
  %4256 = vmatprep.subr.mxu0 0.0
  %4257 = vmatpush1.msra.mxu0 0.0
  %4258 = vmatprep.subr.mxu0 0.0
  %4259 = vmatpush1.msra.mxu0 0.0
  %4260 = vmatprep.subr.mxu0 0.0
  %4261 = vmatpush1.msra.mxu0 0.0
  %4262 = vmatprep.subr.mxu0 0.0
  %4263 = vmatpush1.msra.mxu0 0.0
  %4264 = vmatprep.subr.mxu0 0.0
  %4265 = vmatpush1.msra.mxu0 0.0
  %4266 = vmatprep.subr.mxu0 0.0
  %4267 = vmatpush1.msra.mxu0 0.0
  %4268 = vmatprep.subr.mxu0 0.0
  %4269 = vmatpush1.msra.mxu0 0.0
  %4270 = vmatprep.subr.mxu0 0.0
  %4271 = vmatpush1.msra.mxu0 0.0
  %4272 = vmatprep.subr.mxu0 0.0
  %4273 = vmatpush1.msra.mxu0 0.0
  %4274 = vmatprep.mubr.f32.mxu0 0.0
  %4275 = vmatmul.mubr.f32.gmra.mrb[0].mxu0 %v4199
  %v4276 = vpop.f32.mrb[0].mxu0
  %v4277 = vadd.f32 %v4180, %v4276
  %v4278 = vpop.f32.mrb[0].mxu0
  %4279 = vmatprep.mubr.f32.mxu0 0.0
  %4280 = vmatmul.mubr.f32.gmra.mrb[0].mxu0 %v4202
  %v4281 = vpop.f32.mrb[0].mxu0
  %v4282 = vadd.f32 %v4185, %v4281
  %v4283 = vpop.f32.mrb[0].mxu0
  %4284 = vmatprep.mubr.f32.mxu0 0.0
  %4285 = vmatmul.mubr.f32.gmra.mrb[0].mxu0 %v4205
  %v4286 = vpop.f32.mrb[0].mxu0
  %v4287 = vadd.f32 %v4190, %v4286
  %v4288 = vpop.f32.mrb[0].mxu0
  %4289 = vmatprep.mubr.f32.mxu0 0.0
  %4290 = vmatmul.mubr.f32.gmra.mrb[0].mxu0 %v4208
  %v4291 = vpop.f32.mrb[0].mxu0
  %v4292 = vadd.f32 %v4195, %v4291
  %v4293 = vpop.f32.mrb[0].mxu0
  %4294 = vdwg.mxu0
  %v4296 = vsel %vm321, %v4087, 0
  %v4299 = vsel %vm321, %v4088, 0
  %v4302 = vsel %vm321, %v4089, 0
  %v4305 = vsel %vm321, %v4090, 0
  %4307 = vmatprep.subr.mxu0 0.0
  %4308 = vmatpush1.msra.mxu0 %v3993
  %4309 = vmatprep.subr.mxu0 0.0
  %4310 = vmatpush1.msra.mxu0 %v3998
  %4311 = vmatprep.subr.mxu0 0.0
  %4312 = vmatpush1.msra.mxu0 0.0
  %4313 = vmatprep.subr.mxu0 0.0
  %4314 = vmatpush1.msra.mxu0 0.0
  %4315 = vmatprep.subr.mxu0 0.0
  %4316 = vmatpush1.msra.mxu0 0.0
  %4317 = vmatprep.subr.mxu0 0.0
  %4318 = vmatpush1.msra.mxu0 0.0
  %4319 = vmatprep.subr.mxu0 0.0
  %4320 = vmatpush1.msra.mxu0 0.0
  %4321 = vmatprep.subr.mxu0 0.0
  %4322 = vmatpush1.msra.mxu0 0.0
  %4323 = vmatprep.subr.mxu0 0.0
  %4324 = vmatpush1.msra.mxu0 0.0
  %4325 = vmatprep.subr.mxu0 0.0
  %4326 = vmatpush1.msra.mxu0 0.0
  %4327 = vmatprep.subr.mxu0 0.0
  %4328 = vmatpush1.msra.mxu0 0.0
  %4329 = vmatprep.subr.mxu0 0.0
  %4330 = vmatpush1.msra.mxu0 0.0
  %4331 = vmatprep.subr.mxu0 0.0
  %4332 = vmatpush1.msra.mxu0 0.0
  %4333 = vmatprep.subr.mxu0 0.0
  %4334 = vmatpush1.msra.mxu0 0.0
  %4335 = vmatprep.subr.mxu0 0.0
  %4336 = vmatpush1.msra.mxu0 0.0
  %4337 = vmatprep.subr.mxu0 0.0
  %4338 = vmatpush1.msra.mxu0 0.0
  %4339 = vmatprep.subr.mxu0 0.0
  %4340 = vmatpush1.msra.mxu0 0.0
  %4341 = vmatprep.subr.mxu0 0.0
  %4342 = vmatpush1.msra.mxu0 0.0
  %4343 = vmatprep.subr.mxu0 0.0
  %4344 = vmatpush1.msra.mxu0 0.0
  %4345 = vmatprep.subr.mxu0 0.0
  %4346 = vmatpush1.msra.mxu0 0.0
  %4347 = vmatprep.subr.mxu0 0.0
  %4348 = vmatpush1.msra.mxu0 0.0
  %4349 = vmatprep.subr.mxu0 0.0
  %4350 = vmatpush1.msra.mxu0 0.0
  %4351 = vmatprep.subr.mxu0 0.0
  %4352 = vmatpush1.msra.mxu0 0.0
  %4353 = vmatprep.subr.mxu0 0.0
  %4354 = vmatpush1.msra.mxu0 0.0
  %4355 = vmatprep.subr.mxu0 0.0
  %4356 = vmatpush1.msra.mxu0 0.0
  %4357 = vmatprep.subr.mxu0 0.0
  %4358 = vmatpush1.msra.mxu0 0.0
  %4359 = vmatprep.subr.mxu0 0.0
  %4360 = vmatpush1.msra.mxu0 0.0
  %4361 = vmatprep.subr.mxu0 0.0
  %4362 = vmatpush1.msra.mxu0 0.0
  %4363 = vmatprep.subr.mxu0 0.0
  %4364 = vmatpush1.msra.mxu0 0.0
  %4365 = vmatprep.subr.mxu0 0.0
  %4366 = vmatpush1.msra.mxu0 0.0
  %4367 = vmatprep.subr.mxu0 0.0
  %4368 = vmatpush1.msra.mxu0 0.0
  %4369 = vmatprep.subr.mxu0 0.0
  %4370 = vmatpush1.msra.mxu0 0.0
  %4371 = vmatprep.mubr.f32.mxu0 0.0
  %4372 = vmatmul.mubr.f32.gmra.mrb[0].mxu0 %v4296
  %v4373 = vpop.f32.mrb[0].mxu0
  %v4374 = vadd.f32 0.0, %v4373
  %v4375 = vpop.f32.mrb[0].mxu0
  %4376 = vmatprep.mubr.f32.mxu0 0.0
  %4377 = vmatmul.mubr.f32.gmra.mrb[0].mxu0 %v4299
  %v4378 = vpop.f32.mrb[0].mxu0
  %v4379 = vadd.f32 0.0, %v4378
  %v4380 = vpop.f32.mrb[0].mxu0
  %4381 = vmatprep.mubr.f32.mxu0 0.0
  %4382 = vmatmul.mubr.f32.gmra.mrb[0].mxu0 %v4302
  %v4383 = vpop.f32.mrb[0].mxu0
  %v4384 = vadd.f32 0.0, %v4383
  %v4385 = vpop.f32.mrb[0].mxu0
  %4386 = vmatprep.mubr.f32.mxu0 0.0
  %4387 = vmatmul.mubr.f32.gmra.mrb[0].mxu0 %v4305
  %v4388 = vpop.f32.mrb[0].mxu0
  %v4389 = vadd.f32 0.0, %v4388
  %v4390 = vpop.f32.mrb[0].mxu0
  %4391 = vdwg.mxu0
  %v4392 = vadd.f32 %v4277, %v4374
  %v4393 = vadd.f32 %v4282, %v4379
  %v4394 = vadd.f32 %v4287, %v4384
  %v4395 = vadd.f32 %v4292, %v4389
  %v4397 = vsel %vm321, %v4092, 0
  %v4400 = vsel %vm321, %v4093, 0
  %v4403 = vsel %vm321, %v4094, 0
  %v4406 = vsel %vm321, %v4095, 0
  %4408 = vmatprep.subr.mxu0 0.0
  %4409 = vmatpush1.msra.mxu0 %v4068
  %4410 = vmatprep.subr.mxu0 0.0
  %4411 = vmatpush1.msra.mxu0 %v4073
  %4412 = vmatprep.subr.mxu0 0.0
  %4413 = vmatpush1.msra.mxu0 0.0
  %4414 = vmatprep.subr.mxu0 0.0
  %4415 = vmatpush1.msra.mxu0 0.0
  %4416 = vmatprep.subr.mxu0 0.0
  %4417 = vmatpush1.msra.mxu0 0.0
  %4418 = vmatprep.subr.mxu0 0.0
  %4419 = vmatpush1.msra.mxu0 0.0
  %4420 = vmatprep.subr.mxu0 0.0
  %4421 = vmatpush1.msra.mxu0 0.0
  %4422 = vmatprep.subr.mxu0 0.0
  %4423 = vmatpush1.msra.mxu0 0.0
  %4424 = vmatprep.subr.mxu0 0.0
  %4425 = vmatpush1.msra.mxu0 0.0
  %4426 = vmatprep.subr.mxu0 0.0
  %4427 = vmatpush1.msra.mxu0 0.0
  %4428 = vmatprep.subr.mxu0 0.0
  %4429 = vmatpush1.msra.mxu0 0.0
  %4430 = vmatprep.subr.mxu0 0.0
  %4431 = vmatpush1.msra.mxu0 0.0
  %4432 = vmatprep.subr.mxu0 0.0
  %4433 = vmatpush1.msra.mxu0 0.0
  %4434 = vmatprep.subr.mxu0 0.0
  %4435 = vmatpush1.msra.mxu0 0.0
  %4436 = vmatprep.subr.mxu0 0.0
  %4437 = vmatpush1.msra.mxu0 0.0
  %4438 = vmatprep.subr.mxu0 0.0
  %4439 = vmatpush1.msra.mxu0 0.0
  %4440 = vmatprep.subr.mxu0 0.0
  %4441 = vmatpush1.msra.mxu0 0.0
  %4442 = vmatprep.subr.mxu0 0.0
  %4443 = vmatpush1.msra.mxu0 0.0
  %4444 = vmatprep.subr.mxu0 0.0
  %4445 = vmatpush1.msra.mxu0 0.0
  %4446 = vmatprep.subr.mxu0 0.0
  %4447 = vmatpush1.msra.mxu0 0.0
  %4448 = vmatprep.subr.mxu0 0.0
  %4449 = vmatpush1.msra.mxu0 0.0
  %4450 = vmatprep.subr.mxu0 0.0
  %4451 = vmatpush1.msra.mxu0 0.0
  %4452 = vmatprep.subr.mxu0 0.0
  %4453 = vmatpush1.msra.mxu0 0.0
  %4454 = vmatprep.subr.mxu0 0.0
  %4455 = vmatpush1.msra.mxu0 0.0
  %4456 = vmatprep.subr.mxu0 0.0
  %4457 = vmatpush1.msra.mxu0 0.0
  %4458 = vmatprep.subr.mxu0 0.0
  %4459 = vmatpush1.msra.mxu0 0.0
  %4460 = vmatprep.subr.mxu0 0.0
  %4461 = vmatpush1.msra.mxu0 0.0
  %4462 = vmatprep.subr.mxu0 0.0
  %4463 = vmatpush1.msra.mxu0 0.0
  %4464 = vmatprep.subr.mxu0 0.0
  %4465 = vmatpush1.msra.mxu0 0.0
  %4466 = vmatprep.subr.mxu0 0.0
  %4467 = vmatpush1.msra.mxu0 0.0
  %4468 = vmatprep.subr.mxu0 0.0
  %4469 = vmatpush1.msra.mxu0 0.0
  %4470 = vmatprep.subr.mxu0 0.0
  %4471 = vmatpush1.msra.mxu0 0.0
  %4472 = vmatprep.mubr.f32.mxu0 0.0
  %4473 = vmatmul.mubr.f32.gmra.mrb[0].mxu0 %v4397
  %v4474 = vpop.f32.mrb[0].mxu0
  %v4475 = vadd.f32 0.0, %v4474
  %v4476 = vpop.f32.mrb[0].mxu0
  %4477 = vmatprep.mubr.f32.mxu0 0.0
  %4478 = vmatmul.mubr.f32.gmra.mrb[0].mxu0 %v4400
  %v4479 = vpop.f32.mrb[0].mxu0
  %v4480 = vadd.f32 0.0, %v4479
  %v4481 = vpop.f32.mrb[0].mxu0
  %4482 = vmatprep.mubr.f32.mxu0 0.0
  %4483 = vmatmul.mubr.f32.gmra.mrb[0].mxu0 %v4403
  %v4484 = vpop.f32.mrb[0].mxu0
  %v4485 = vadd.f32 0.0, %v4484
  %v4486 = vpop.f32.mrb[0].mxu0
  %4487 = vmatprep.mubr.f32.mxu0 0.0
  %4488 = vmatmul.mubr.f32.gmra.mrb[0].mxu0 %v4406
  %v4489 = vpop.f32.mrb[0].mxu0
  %v4490 = vadd.f32 0.0, %v4489
  %v4491 = vpop.f32.mrb[0].mxu0
  %4492 = vdwg.mxu0
  %v4493 = vadd.f32 %v4392, %v4475
  %v4494 = vadd.f32 %v4393, %v4480
  %v4495 = vadd.f32 %v4394, %v4485
  %v4496 = vadd.f32 %v4395, %v4490
  %4498 = vset.pattern.permute.xlu0 0
  %4499 = vperm.xlu0 %4498, %v4097
  %v4500 = vpop.permute.xlu0 %4499
  %4503 = vset.pattern.permute.xlu0 0
  %4504 = vperm.xlu0 %4503, %v4098
  %v4505 = vpop.permute.xlu0 %4504
  %4508 = vset.pattern.permute.xlu0 0
  %4509 = vperm.xlu0 %4508, %v4099
  %v4510 = vpop.permute.xlu0 %4509
  %4513 = vset.pattern.permute.xlu0 0
  %4514 = vperm.xlu0 %4513, %v4100
  %v4515 = vpop.permute.xlu0 %4514
  %v4517 = vadd.f32 %v4493, %v4500
  %v4518 = vadd.f32 %v4494, %v4505
  %v4519 = vadd.f32 %v4495, %v4510
  %v4520 = vadd.f32 %v4496, %v4515
  %v4521 = vmax.f32 %v4517, 0.0
  %v4522 = vmax.f32 %v4518, 0.0
  %v4523 = vmax.f32 %v4519, 0.0
  %v4524 = vmax.f32 %v4520, 0.0
  %4525 = vmatprep.subr.mxu0 0.0
  %4526 = vmatpush1.msra.mxu0 %v68
  %4527 = vmatprep.subr.mxu0 0.0
  %4528 = vmatpush1.msra.mxu0 %v69
  %4529 = vmatprep.subr.mxu0 0.0
  %4530 = vmatpush1.msra.mxu0 %v70
  %4531 = vmatprep.subr.mxu0 0.0
  %4532 = vmatpush1.msra.mxu0 %v71
  %4533 = vmatprep.subr.mxu0 0.0
  %4534 = vmatpush1.msra.mxu0 %v72
  %4535 = vmatprep.subr.mxu0 0.0
  %4536 = vmatpush1.msra.mxu0 %v73
  %4537 = vmatprep.subr.mxu0 0.0
  %4538 = vmatpush1.msra.mxu0 %v74
  %4539 = vmatprep.subr.mxu0 0.0
  %4540 = vmatpush1.msra.mxu0 %v75
  %4541 = vmatprep.subr.mxu0 0.0
  %4542 = vmatpush1.msra.mxu0 %v76
  %4543 = vmatprep.subr.mxu0 0.0
  %4544 = vmatpush1.msra.mxu0 %v77
  %4545 = vmatprep.subr.mxu0 0.0
  %4546 = vmatpush1.msra.mxu0 %v78
  %4547 = vmatprep.subr.mxu0 0.0
  %4548 = vmatpush1.msra.mxu0 %v79
  %4549 = vmatprep.subr.mxu0 0.0
  %4550 = vmatpush1.msra.mxu0 %v80
  %4551 = vmatprep.subr.mxu0 0.0
  %4552 = vmatpush1.msra.mxu0 %v81
  %4553 = vmatprep.subr.mxu0 0.0
  %4554 = vmatpush1.msra.mxu0 %v82
  %4555 = vmatprep.subr.mxu0 0.0
  %4556 = vmatpush1.msra.mxu0 %v83
  %4557 = vmatprep.subr.mxu0 0.0
  %4558 = vmatpush1.msra.mxu0 0.0
  %4559 = vmatprep.subr.mxu0 0.0
  %4560 = vmatpush1.msra.mxu0 0.0
  %4561 = vmatprep.subr.mxu0 0.0
  %4562 = vmatpush1.msra.mxu0 0.0
  %4563 = vmatprep.subr.mxu0 0.0
  %4564 = vmatpush1.msra.mxu0 0.0
  %4565 = vmatprep.subr.mxu0 0.0
  %4566 = vmatpush1.msra.mxu0 0.0
  %4567 = vmatprep.subr.mxu0 0.0
  %4568 = vmatpush1.msra.mxu0 0.0
  %4569 = vmatprep.subr.mxu0 0.0
  %4570 = vmatpush1.msra.mxu0 0.0
  %4571 = vmatprep.subr.mxu0 0.0
  %4572 = vmatpush1.msra.mxu0 0.0
  %4573 = vmatprep.subr.mxu0 0.0
  %4574 = vmatpush1.msra.mxu0 0.0
  %4575 = vmatprep.subr.mxu0 0.0
  %4576 = vmatpush1.msra.mxu0 0.0
  %4577 = vmatprep.subr.mxu0 0.0
  %4578 = vmatpush1.msra.mxu0 0.0
  %4579 = vmatprep.subr.mxu0 0.0
  %4580 = vmatpush1.msra.mxu0 0.0
  %4581 = vmatprep.subr.mxu0 0.0
  %4582 = vmatpush1.msra.mxu0 0.0
  %4583 = vmatprep.subr.mxu0 0.0
  %4584 = vmatpush1.msra.mxu0 0.0
  %4585 = vmatprep.subr.mxu0 0.0
  %4586 = vmatpush1.msra.mxu0 0.0
  %4587 = vmatprep.subr.mxu0 0.0
  %4588 = vmatpush1.msra.mxu0 0.0
  %4589 = vmatprep.mubr.f32.mxu0 0.0
  %4590 = vmatmul.mubr.f32.gmra.mrb[0].mxu0 %v4523
  %v4591 = vpop.f32.mrb[0].mxu0
  %v4592 = vadd.f32 0.0, %v4591
  %v4593 = vpop.f32.mrb[0].mxu0
  %4594 = vmatprep.mubr.f32.mxu0 0.0
  %4595 = vmatmul.mubr.f32.gmra.mrb[0].mxu0 %v4524
  %v4596 = vpop.f32.mrb[0].mxu0
  %v4597 = vadd.f32 0.0, %v4596
  %v4598 = vpop.f32.mrb[0].mxu0
  %4599 = vdwg.mxu0
  %s4600 = scalar_lea.vmem %s17, 64
  %v4601 = vld [vmem:[%s4600] sm:$0xff]
  %v4602 = vld [vmem:[%s4600 + $0x8] sm:$0xff]
  %v4603 = vld [vmem:[%s4600 + $0x10] sm:$0xff]
  %v4604 = vld [vmem:[%s4600 + $0x18] sm:$0xff]
  %s4605 = scalar_lea.vmem %s18, 64
  %v4606 = vld [vmem:[%s4605] sm:$0xff]
  %v4607 = vld [vmem:[%s4605 + $0x8] sm:$0xff]
  %v4608 = vld [vmem:[%s4605 + $0x10] sm:$0xff]
  %v4609 = vld [vmem:[%s4605 + $0x18] sm:$0xff]
  %s4610 = scalar_lea.vmem %s19, 64
  %v4611 = vld [vmem:[%s4610] sm:$0xff]
  %v4612 = vld [vmem:[%s4610 + $0x8] sm:$0xff]
  %v4613 = vld [vmem:[%s4610 + $0x10] sm:$0xff]
  %v4614 = vld [vmem:[%s4610 + $0x18] sm:$0xff]
  %v4616 = vsel %vm321, %v4606, 0
  %v4619 = vsel %vm321, %v4607, 0
  %v4622 = vsel %vm321, %v4608, 0
  %v4625 = vsel %vm321, %v4609, 0
  %4627 = vmatprep.subr.mxu0 0.0
  %4628 = vmatpush1.msra.mxu0 %v4592
  %4629 = vmatprep.subr.mxu0 0.0
  %4630 = vmatpush1.msra.mxu0 %v4597
  %4631 = vmatprep.subr.mxu0 0.0
  %4632 = vmatpush1.msra.mxu0 0.0
  %4633 = vmatprep.subr.mxu0 0.0
  %4634 = vmatpush1.msra.mxu0 0.0
  %4635 = vmatprep.subr.mxu0 0.0
  %4636 = vmatpush1.msra.mxu0 0.0
  %4637 = vmatprep.subr.mxu0 0.0
  %4638 = vmatpush1.msra.mxu0 0.0
  %4639 = vmatprep.subr.mxu0 0.0
  %4640 = vmatpush1.msra.mxu0 0.0
  %4641 = vmatprep.subr.mxu0 0.0
  %4642 = vmatpush1.msra.mxu0 0.0
  %4643 = vmatprep.subr.mxu0 0.0
  %4644 = vmatpush1.msra.mxu0 0.0
  %4645 = vmatprep.subr.mxu0 0.0
  %4646 = vmatpush1.msra.mxu0 0.0
  %4647 = vmatprep.subr.mxu0 0.0
  %4648 = vmatpush1.msra.mxu0 0.0
  %4649 = vmatprep.subr.mxu0 0.0
  %4650 = vmatpush1.msra.mxu0 0.0
  %4651 = vmatprep.subr.mxu0 0.0
  %4652 = vmatpush1.msra.mxu0 0.0
  %4653 = vmatprep.subr.mxu0 0.0
  %4654 = vmatpush1.msra.mxu0 0.0
  %4655 = vmatprep.subr.mxu0 0.0
  %4656 = vmatpush1.msra.mxu0 0.0
  %4657 = vmatprep.subr.mxu0 0.0
  %4658 = vmatpush1.msra.mxu0 0.0
  %4659 = vmatprep.subr.mxu0 0.0
  %4660 = vmatpush1.msra.mxu0 0.0
  %4661 = vmatprep.subr.mxu0 0.0
  %4662 = vmatpush1.msra.mxu0 0.0
  %4663 = vmatprep.subr.mxu0 0.0
  %4664 = vmatpush1.msra.mxu0 0.0
  %4665 = vmatprep.subr.mxu0 0.0
  %4666 = vmatpush1.msra.mxu0 0.0
  %4667 = vmatprep.subr.mxu0 0.0
  %4668 = vmatpush1.msra.mxu0 0.0
  %4669 = vmatprep.subr.mxu0 0.0
  %4670 = vmatpush1.msra.mxu0 0.0
  %4671 = vmatprep.subr.mxu0 0.0
  %4672 = vmatpush1.msra.mxu0 0.0
  %4673 = vmatprep.subr.mxu0 0.0
  %4674 = vmatpush1.msra.mxu0 0.0
  %4675 = vmatprep.subr.mxu0 0.0
  %4676 = vmatpush1.msra.mxu0 0.0
  %4677 = vmatprep.subr.mxu0 0.0
  %4678 = vmatpush1.msra.mxu0 0.0
  %4679 = vmatprep.subr.mxu0 0.0
  %4680 = vmatpush1.msra.mxu0 0.0
  %4681 = vmatprep.subr.mxu0 0.0
  %4682 = vmatpush1.msra.mxu0 0.0
  %4683 = vmatprep.subr.mxu0 0.0
  %4684 = vmatpush1.msra.mxu0 0.0
  %4685 = vmatprep.subr.mxu0 0.0
  %4686 = vmatpush1.msra.mxu0 0.0
  %4687 = vmatprep.subr.mxu0 0.0
  %4688 = vmatpush1.msra.mxu0 0.0
  %4689 = vmatprep.subr.mxu0 0.0
  %4690 = vmatpush1.msra.mxu0 0.0
  %4691 = vmatprep.mubr.f32.mxu0 0.0
  %4692 = vmatmul.mubr.f32.gmra.mrb[0].mxu0 %v4616
  %v4693 = vpop.f32.mrb[0].mxu0
  %v4694 = vadd.f32 0.0, %v4693
  %v4695 = vpop.f32.mrb[0].mxu0
  %4696 = vmatprep.mubr.f32.mxu0 0.0
  %4697 = vmatmul.mubr.f32.gmra.mrb[0].mxu0 %v4619
  %v4698 = vpop.f32.mrb[0].mxu0
  %v4699 = vadd.f32 0.0, %v4698
  %v4700 = vpop.f32.mrb[0].mxu0
  %4701 = vmatprep.mubr.f32.mxu0 0.0
  %4702 = vmatmul.mubr.f32.gmra.mrb[0].mxu0 %v4622
  %v4703 = vpop.f32.mrb[0].mxu0
  %v4704 = vadd.f32 0.0, %v4703
  %v4705 = vpop.f32.mrb[0].mxu0
  %4706 = vmatprep.mubr.f32.mxu0 0.0
  %4707 = vmatmul.mubr.f32.gmra.mrb[0].mxu0 %v4625
  %v4708 = vpop.f32.mrb[0].mxu0
  %v4709 = vadd.f32 0.0, %v4708
  %v4710 = vpop.f32.mrb[0].mxu0
  %4711 = vdwg.mxu0
  %v4713 = vsel %vm321, %v4601, 0
  %v4716 = vsel %vm321, %v4602, 0
  %v4719 = vsel %vm321, %v4603, 0
  %v4722 = vsel %vm321, %v4604, 0
  %4724 = vmatprep.subr.mxu0 0.0
  %4725 = vmatpush1.msra.mxu0 %v4521
  %4726 = vmatprep.subr.mxu0 0.0
  %4727 = vmatpush1.msra.mxu0 %v4522
  %4728 = vmatprep.subr.mxu0 0.0
  %4729 = vmatpush1.msra.mxu0 0.0
  %4730 = vmatprep.subr.mxu0 0.0
  %4731 = vmatpush1.msra.mxu0 0.0
  %4732 = vmatprep.subr.mxu0 0.0
  %4733 = vmatpush1.msra.mxu0 0.0
  %4734 = vmatprep.subr.mxu0 0.0
  %4735 = vmatpush1.msra.mxu0 0.0
  %4736 = vmatprep.subr.mxu0 0.0
  %4737 = vmatpush1.msra.mxu0 0.0
  %4738 = vmatprep.subr.mxu0 0.0
  %4739 = vmatpush1.msra.mxu0 0.0
  %4740 = vmatprep.subr.mxu0 0.0
  %4741 = vmatpush1.msra.mxu0 0.0
  %4742 = vmatprep.subr.mxu0 0.0
  %4743 = vmatpush1.msra.mxu0 0.0
  %4744 = vmatprep.subr.mxu0 0.0
  %4745 = vmatpush1.msra.mxu0 0.0
  %4746 = vmatprep.subr.mxu0 0.0
  %4747 = vmatpush1.msra.mxu0 0.0
  %4748 = vmatprep.subr.mxu0 0.0
  %4749 = vmatpush1.msra.mxu0 0.0
  %4750 = vmatprep.subr.mxu0 0.0
  %4751 = vmatpush1.msra.mxu0 0.0
  %4752 = vmatprep.subr.mxu0 0.0
  %4753 = vmatpush1.msra.mxu0 0.0
  %4754 = vmatprep.subr.mxu0 0.0
  %4755 = vmatpush1.msra.mxu0 0.0
  %4756 = vmatprep.subr.mxu0 0.0
  %4757 = vmatpush1.msra.mxu0 0.0
  %4758 = vmatprep.subr.mxu0 0.0
  %4759 = vmatpush1.msra.mxu0 0.0
  %4760 = vmatprep.subr.mxu0 0.0
  %4761 = vmatpush1.msra.mxu0 0.0
  %4762 = vmatprep.subr.mxu0 0.0
  %4763 = vmatpush1.msra.mxu0 0.0
  %4764 = vmatprep.subr.mxu0 0.0
  %4765 = vmatpush1.msra.mxu0 0.0
  %4766 = vmatprep.subr.mxu0 0.0
  %4767 = vmatpush1.msra.mxu0 0.0
  %4768 = vmatprep.subr.mxu0 0.0
  %4769 = vmatpush1.msra.mxu0 0.0
  %4770 = vmatprep.subr.mxu0 0.0
  %4771 = vmatpush1.msra.mxu0 0.0
  %4772 = vmatprep.subr.mxu0 0.0
  %4773 = vmatpush1.msra.mxu0 0.0
  %4774 = vmatprep.subr.mxu0 0.0
  %4775 = vmatpush1.msra.mxu0 0.0
  %4776 = vmatprep.subr.mxu0 0.0
  %4777 = vmatpush1.msra.mxu0 0.0
  %4778 = vmatprep.subr.mxu0 0.0
  %4779 = vmatpush1.msra.mxu0 0.0
  %4780 = vmatprep.subr.mxu0 0.0
  %4781 = vmatpush1.msra.mxu0 0.0
  %4782 = vmatprep.subr.mxu0 0.0
  %4783 = vmatpush1.msra.mxu0 0.0
  %4784 = vmatprep.subr.mxu0 0.0
  %4785 = vmatpush1.msra.mxu0 0.0
  %4786 = vmatprep.subr.mxu0 0.0
  %4787 = vmatpush1.msra.mxu0 0.0
  %4788 = vmatprep.mubr.f32.mxu0 0.0
  %4789 = vmatmul.mubr.f32.gmra.mrb[0].mxu0 %v4713
  %v4790 = vpop.f32.mrb[0].mxu0
  %v4791 = vadd.f32 %v4694, %v4790
  %v4792 = vpop.f32.mrb[0].mxu0
  %4793 = vmatprep.mubr.f32.mxu0 0.0
  %4794 = vmatmul.mubr.f32.gmra.mrb[0].mxu0 %v4716
  %v4795 = vpop.f32.mrb[0].mxu0
  %v4796 = vadd.f32 %v4699, %v4795
  %v4797 = vpop.f32.mrb[0].mxu0
  %4798 = vmatprep.mubr.f32.mxu0 0.0
  %4799 = vmatmul.mubr.f32.gmra.mrb[0].mxu0 %v4719
  %v4800 = vpop.f32.mrb[0].mxu0
  %v4801 = vadd.f32 %v4704, %v4800
  %v4802 = vpop.f32.mrb[0].mxu0
  %4803 = vmatprep.mubr.f32.mxu0 0.0
  %4804 = vmatmul.mubr.f32.gmra.mrb[0].mxu0 %v4722
  %v4805 = vpop.f32.mrb[0].mxu0
  %v4806 = vadd.f32 %v4709, %v4805
  %v4807 = vpop.f32.mrb[0].mxu0
  %4808 = vdwg.mxu0
  %4810 = vset.pattern.permute.xlu0 0
  %4811 = vperm.xlu0 %4810, %v4611
  %v4812 = vpop.permute.xlu0 %4811
  %4815 = vset.pattern.permute.xlu0 0
  %4816 = vperm.xlu0 %4815, %v4612
  %v4817 = vpop.permute.xlu0 %4816
  %4820 = vset.pattern.permute.xlu0 0
  %4821 = vperm.xlu0 %4820, %v4613
  %v4822 = vpop.permute.xlu0 %4821
  %4825 = vset.pattern.permute.xlu0 0
  %4826 = vperm.xlu0 %4825, %v4614
  %v4827 = vpop.permute.xlu0 %4826
  %v4829 = vadd.f32 %v4791, %v4812
  %v4830 = vadd.f32 %v4796, %v4817
  %v4831 = vadd.f32 %v4801, %v4822
  %v4832 = vadd.f32 %v4806, %v4827
  %v4833 = vmax.f32 %v4829, 0.0
  %v4834 = vmax.f32 %v4830, 0.0
  %v4835 = vmax.f32 %v4831, 0.0
  %v4836 = vmax.f32 %v4832, 0.0
  %4837 = vmatprep.subr.mxu0 0.0
  %4838 = vmatpush1.msra.mxu0 %v68
  %4839 = vmatprep.subr.mxu0 0.0
  %4840 = vmatpush1.msra.mxu0 %v69
  %4841 = vmatprep.subr.mxu0 0.0
  %4842 = vmatpush1.msra.mxu0 %v70
  %4843 = vmatprep.subr.mxu0 0.0
  %4844 = vmatpush1.msra.mxu0 %v71
  %4845 = vmatprep.subr.mxu0 0.0
  %4846 = vmatpush1.msra.mxu0 %v72
  %4847 = vmatprep.subr.mxu0 0.0
  %4848 = vmatpush1.msra.mxu0 %v73
  %4849 = vmatprep.subr.mxu0 0.0
  %4850 = vmatpush1.msra.mxu0 %v74
  %4851 = vmatprep.subr.mxu0 0.0
  %4852 = vmatpush1.msra.mxu0 %v75
  %4853 = vmatprep.subr.mxu0 0.0
  %4854 = vmatpush1.msra.mxu0 %v76
  %4855 = vmatprep.subr.mxu0 0.0
  %4856 = vmatpush1.msra.mxu0 %v77
  %4857 = vmatprep.subr.mxu0 0.0
  %4858 = vmatpush1.msra.mxu0 %v78
  %4859 = vmatprep.subr.mxu0 0.0
  %4860 = vmatpush1.msra.mxu0 %v79
  %4861 = vmatprep.subr.mxu0 0.0
  %4862 = vmatpush1.msra.mxu0 %v80
  %4863 = vmatprep.subr.mxu0 0.0
  %4864 = vmatpush1.msra.mxu0 %v81
  %4865 = vmatprep.subr.mxu0 0.0
  %4866 = vmatpush1.msra.mxu0 %v82
  %4867 = vmatprep.subr.mxu0 0.0
  %4868 = vmatpush1.msra.mxu0 %v83
  %4869 = vmatprep.subr.mxu0 0.0
  %4870 = vmatpush1.msra.mxu0 0.0
  %4871 = vmatprep.subr.mxu0 0.0
  %4872 = vmatpush1.msra.mxu0 0.0
  %4873 = vmatprep.subr.mxu0 0.0
  %4874 = vmatpush1.msra.mxu0 0.0
  %4875 = vmatprep.subr.mxu0 0.0
  %4876 = vmatpush1.msra.mxu0 0.0
  %4877 = vmatprep.subr.mxu0 0.0
  %4878 = vmatpush1.msra.mxu0 0.0
  %4879 = vmatprep.subr.mxu0 0.0
  %4880 = vmatpush1.msra.mxu0 0.0
  %4881 = vmatprep.subr.mxu0 0.0
  %4882 = vmatpush1.msra.mxu0 0.0
  %4883 = vmatprep.subr.mxu0 0.0
  %4884 = vmatpush1.msra.mxu0 0.0
  %4885 = vmatprep.subr.mxu0 0.0
  %4886 = vmatpush1.msra.mxu0 0.0
  %4887 = vmatprep.subr.mxu0 0.0
  %4888 = vmatpush1.msra.mxu0 0.0
  %4889 = vmatprep.subr.mxu0 0.0
  %4890 = vmatpush1.msra.mxu0 0.0
  %4891 = vmatprep.subr.mxu0 0.0
  %4892 = vmatpush1.msra.mxu0 0.0
  %4893 = vmatprep.subr.mxu0 0.0
  %4894 = vmatpush1.msra.mxu0 0.0
  %4895 = vmatprep.subr.mxu0 0.0
  %4896 = vmatpush1.msra.mxu0 0.0
  %4897 = vmatprep.subr.mxu0 0.0
  %4898 = vmatpush1.msra.mxu0 0.0
  %4899 = vmatprep.subr.mxu0 0.0
  %4900 = vmatpush1.msra.mxu0 0.0
  %4901 = vmatprep.mubr.f32.mxu0 0.0
  %4902 = vmatmul.mubr.f32.gmra.mrb[0].mxu0 %v4835
  %v4903 = vpop.f32.mrb[0].mxu0
  %v4904 = vadd.f32 0.0, %v4903
  %v4905 = vpop.f32.mrb[0].mxu0
  %4906 = vmatprep.mubr.f32.mxu0 0.0
  %4907 = vmatmul.mubr.f32.gmra.mrb[0].mxu0 %v4836
  %v4908 = vpop.f32.mrb[0].mxu0
  %v4909 = vadd.f32 0.0, %v4908
  %v4910 = vpop.f32.mrb[0].mxu0
  %4911 = vdwg.mxu0
  %s4912 = scalar_lea.vmem %s4, 96
  %v4913 = vld [vmem:[%s4912] sm:$0xff]
  %v4914 = vld [vmem:[%s4912 + $0x8] sm:$0xff]
  %v4915 = vld [vmem:[%s4912 + $0x10] sm:$0xff]
  %v4916 = vld [vmem:[%s4912 + $0x18] sm:$0xff]
  %s4917 = scalar_lea.vmem %s5, 96
  %v4918 = vld [vmem:[%s4917] sm:$0xff]
  %v4919 = vld [vmem:[%s4917 + $0x8] sm:$0xff]
  %v4920 = vld [vmem:[%s4917 + $0x10] sm:$0xff]
  %v4921 = vld [vmem:[%s4917 + $0x18] sm:$0xff]
  %s4922 = scalar_lea.vmem %s6, 96
  %v4923 = vld [vmem:[%s4922] sm:$0xff]
  %v4924 = vld [vmem:[%s4922 + $0x8] sm:$0xff]
  %v4925 = vld [vmem:[%s4922 + $0x10] sm:$0xff]
  %v4926 = vld [vmem:[%s4922 + $0x18] sm:$0xff]
  %s4927 = scalar_lea.vmem %s7, 96
  %v4928 = vld [vmem:[%s4927] sm:$0xff]
  %v4929 = vld [vmem:[%s4927 + $0x8] sm:$0xff]
  %v4930 = vld [vmem:[%s4927 + $0x10] sm:$0xff]
  %v4931 = vld [vmem:[%s4927 + $0x18] sm:$0xff]
  %v4933 = vsel %vm321, %v4918, 0
  %v4936 = vsel %vm321, %v4919, 0
  %v4939 = vsel %vm321, %v4920, 0
  %v4942 = vsel %vm321, %v4921, 0
  %4944 = vmatprep.subr.mxu0 0.0
  %4945 = vmatpush1.msra.mxu0 %v4833
  %4946 = vmatprep.subr.mxu0 0.0
  %4947 = vmatpush1.msra.mxu0 %v4834
  %4948 = vmatprep.subr.mxu0 0.0
  %4949 = vmatpush1.msra.mxu0 0.0
  %4950 = vmatprep.subr.mxu0 0.0
  %4951 = vmatpush1.msra.mxu0 0.0
  %4952 = vmatprep.subr.mxu0 0.0
  %4953 = vmatpush1.msra.mxu0 0.0
  %4954 = vmatprep.subr.mxu0 0.0
  %4955 = vmatpush1.msra.mxu0 0.0
  %4956 = vmatprep.subr.mxu0 0.0
  %4957 = vmatpush1.msra.mxu0 0.0
  %4958 = vmatprep.subr.mxu0 0.0
  %4959 = vmatpush1.msra.mxu0 0.0
  %4960 = vmatprep.subr.mxu0 0.0
  %4961 = vmatpush1.msra.mxu0 0.0
  %4962 = vmatprep.subr.mxu0 0.0
  %4963 = vmatpush1.msra.mxu0 0.0
  %4964 = vmatprep.subr.mxu0 0.0
  %4965 = vmatpush1.msra.mxu0 0.0
  %4966 = vmatprep.subr.mxu0 0.0
  %4967 = vmatpush1.msra.mxu0 0.0
  %4968 = vmatprep.subr.mxu0 0.0
  %4969 = vmatpush1.msra.mxu0 0.0
  %4970 = vmatprep.subr.mxu0 0.0
  %4971 = vmatpush1.msra.mxu0 0.0
  %4972 = vmatprep.subr.mxu0 0.0
  %4973 = vmatpush1.msra.mxu0 0.0
  %4974 = vmatprep.subr.mxu0 0.0
  %4975 = vmatpush1.msra.mxu0 0.0
  %4976 = vmatprep.subr.mxu0 0.0
  %4977 = vmatpush1.msra.mxu0 0.0
  %4978 = vmatprep.subr.mxu0 0.0
  %4979 = vmatpush1.msra.mxu0 0.0
  %4980 = vmatprep.subr.mxu0 0.0
  %4981 = vmatpush1.msra.mxu0 0.0
  %4982 = vmatprep.subr.mxu0 0.0
  %4983 = vmatpush1.msra.mxu0 0.0
  %4984 = vmatprep.subr.mxu0 0.0
  %4985 = vmatpush1.msra.mxu0 0.0
  %4986 = vmatprep.subr.mxu0 0.0
  %4987 = vmatpush1.msra.mxu0 0.0
  %4988 = vmatprep.subr.mxu0 0.0
  %4989 = vmatpush1.msra.mxu0 0.0
  %4990 = vmatprep.subr.mxu0 0.0
  %4991 = vmatpush1.msra.mxu0 0.0
  %4992 = vmatprep.subr.mxu0 0.0
  %4993 = vmatpush1.msra.mxu0 0.0
  %4994 = vmatprep.subr.mxu0 0.0
  %4995 = vmatpush1.msra.mxu0 0.0
  %4996 = vmatprep.subr.mxu0 0.0
  %4997 = vmatpush1.msra.mxu0 0.0
  %4998 = vmatprep.subr.mxu0 0.0
  %4999 = vmatpush1.msra.mxu0 0.0
  %5000 = vmatprep.subr.mxu0 0.0
  %5001 = vmatpush1.msra.mxu0 0.0
  %5002 = vmatprep.subr.mxu0 0.0
  %5003 = vmatpush1.msra.mxu0 0.0
  %5004 = vmatprep.subr.mxu0 0.0
  %5005 = vmatpush1.msra.mxu0 0.0
  %5006 = vmatprep.subr.mxu0 0.0
  %5007 = vmatpush1.msra.mxu0 0.0
  %5008 = vmatprep.mubr.f32.mxu0 0.0
  %5009 = vmatmul.mubr.f32.gmra.mrb[0].mxu0 %v4933
  %v5010 = vpop.f32.mrb[0].mxu0
  %v5011 = vadd.f32 0.0, %v5010
  %v5012 = vpop.f32.mrb[0].mxu0
  %5013 = vmatprep.mubr.f32.mxu0 0.0
  %5014 = vmatmul.mubr.f32.gmra.mrb[0].mxu0 %v4936
  %v5015 = vpop.f32.mrb[0].mxu0
  %v5016 = vadd.f32 0.0, %v5015
  %v5017 = vpop.f32.mrb[0].mxu0
  %5018 = vmatprep.mubr.f32.mxu0 0.0
  %5019 = vmatmul.mubr.f32.gmra.mrb[0].mxu0 %v4939
  %v5020 = vpop.f32.mrb[0].mxu0
  %v5021 = vadd.f32 0.0, %v5020
  %v5022 = vpop.f32.mrb[0].mxu0
  %5023 = vmatprep.mubr.f32.mxu0 0.0
  %5024 = vmatmul.mubr.f32.gmra.mrb[0].mxu0 %v4942
  %v5025 = vpop.f32.mrb[0].mxu0
  %v5026 = vadd.f32 0.0, %v5025
  %v5027 = vpop.f32.mrb[0].mxu0
  %5028 = vdwg.mxu0
  %v5030 = vsel %vm128, %v4913, 0
  %v5033 = vsel %vm128, %v4914, 0
  %v5036 = vsel %vm128, %v4915, 0
  %v5039 = vsel %vm128, %v4916, 0
  %5041 = vmatprep.subr.mxu0 0.0
  %5042 = vmatpush1.msra.mxu0 %v143
  %5043 = vmatprep.subr.mxu0 0.0
  %5044 = vmatpush1.msra.mxu0 0.0
  %5045 = vmatprep.subr.mxu0 0.0
  %5046 = vmatpush1.msra.mxu0 0.0
  %5047 = vmatprep.subr.mxu0 0.0
  %5048 = vmatpush1.msra.mxu0 0.0
  %5049 = vmatprep.subr.mxu0 0.0
  %5050 = vmatpush1.msra.mxu0 0.0
  %5051 = vmatprep.subr.mxu0 0.0
  %5052 = vmatpush1.msra.mxu0 0.0
  %5053 = vmatprep.subr.mxu0 0.0
  %5054 = vmatpush1.msra.mxu0 0.0
  %5055 = vmatprep.subr.mxu0 0.0
  %5056 = vmatpush1.msra.mxu0 0.0
  %5057 = vmatprep.subr.mxu0 0.0
  %5058 = vmatpush1.msra.mxu0 0.0
  %5059 = vmatprep.subr.mxu0 0.0
  %5060 = vmatpush1.msra.mxu0 0.0
  %5061 = vmatprep.subr.mxu0 0.0
  %5062 = vmatpush1.msra.mxu0 0.0
  %5063 = vmatprep.subr.mxu0 0.0
  %5064 = vmatpush1.msra.mxu0 0.0
  %5065 = vmatprep.subr.mxu0 0.0
  %5066 = vmatpush1.msra.mxu0 0.0
  %5067 = vmatprep.subr.mxu0 0.0
  %5068 = vmatpush1.msra.mxu0 0.0
  %5069 = vmatprep.subr.mxu0 0.0
  %5070 = vmatpush1.msra.mxu0 0.0
  %5071 = vmatprep.subr.mxu0 0.0
  %5072 = vmatpush1.msra.mxu0 0.0
  %5073 = vmatprep.subr.mxu0 0.0
  %5074 = vmatpush1.msra.mxu0 0.0
  %5075 = vmatprep.subr.mxu0 0.0
  %5076 = vmatpush1.msra.mxu0 0.0
  %5077 = vmatprep.subr.mxu0 0.0
  %5078 = vmatpush1.msra.mxu0 0.0
  %5079 = vmatprep.subr.mxu0 0.0
  %5080 = vmatpush1.msra.mxu0 0.0
  %5081 = vmatprep.subr.mxu0 0.0
  %5082 = vmatpush1.msra.mxu0 0.0
  %5083 = vmatprep.subr.mxu0 0.0
  %5084 = vmatpush1.msra.mxu0 0.0
  %5085 = vmatprep.subr.mxu0 0.0
  %5086 = vmatpush1.msra.mxu0 0.0
  %5087 = vmatprep.subr.mxu0 0.0
  %5088 = vmatpush1.msra.mxu0 0.0
  %5089 = vmatprep.subr.mxu0 0.0
  %5090 = vmatpush1.msra.mxu0 0.0
  %5091 = vmatprep.subr.mxu0 0.0
  %5092 = vmatpush1.msra.mxu0 0.0
  %5093 = vmatprep.subr.mxu0 0.0
  %5094 = vmatpush1.msra.mxu0 0.0
  %5095 = vmatprep.subr.mxu0 0.0
  %5096 = vmatpush1.msra.mxu0 0.0
  %5097 = vmatprep.subr.mxu0 0.0
  %5098 = vmatpush1.msra.mxu0 0.0
  %5099 = vmatprep.subr.mxu0 0.0
  %5100 = vmatpush1.msra.mxu0 0.0
  %5101 = vmatprep.subr.mxu0 0.0
  %5102 = vmatpush1.msra.mxu0 0.0
  %5103 = vmatprep.subr.mxu0 0.0
  %5104 = vmatpush1.msra.mxu0 0.0
  %5105 = vmatprep.mubr.f32.mxu0 0.0
  %5106 = vmatmul.mubr.f32.gmra.mrb[0].mxu0 %v5030
  %v5107 = vpop.f32.mrb[0].mxu0
  %v5108 = vadd.f32 %v5011, %v5107
  %v5109 = vpop.f32.mrb[0].mxu0
  %5110 = vmatprep.mubr.f32.mxu0 0.0
  %5111 = vmatmul.mubr.f32.gmra.mrb[0].mxu0 %v5033
  %v5112 = vpop.f32.mrb[0].mxu0
  %v5113 = vadd.f32 %v5016, %v5112
  %v5114 = vpop.f32.mrb[0].mxu0
  %5115 = vmatprep.mubr.f32.mxu0 0.0
  %5116 = vmatmul.mubr.f32.gmra.mrb[0].mxu0 %v5036
  %v5117 = vpop.f32.mrb[0].mxu0
  %v5118 = vadd.f32 %v5021, %v5117
  %v5119 = vpop.f32.mrb[0].mxu0
  %5120 = vmatprep.mubr.f32.mxu0 0.0
  %5121 = vmatmul.mubr.f32.gmra.mrb[0].mxu0 %v5039
  %v5122 = vpop.f32.mrb[0].mxu0
  %v5123 = vadd.f32 %v5026, %v5122
  %v5124 = vpop.f32.mrb[0].mxu0
  %5125 = vdwg.mxu0
  %v5127 = vsel %vm321, %v4923, 0
  %v5130 = vsel %vm321, %v4924, 0
  %v5133 = vsel %vm321, %v4925, 0
  %v5136 = vsel %vm321, %v4926, 0
  %5138 = vmatprep.subr.mxu0 0.0
  %5139 = vmatpush1.msra.mxu0 %v4904
  %5140 = vmatprep.subr.mxu0 0.0
  %5141 = vmatpush1.msra.mxu0 %v4909
  %5142 = vmatprep.subr.mxu0 0.0
  %5143 = vmatpush1.msra.mxu0 0.0
  %5144 = vmatprep.subr.mxu0 0.0
  %5145 = vmatpush1.msra.mxu0 0.0
  %5146 = vmatprep.subr.mxu0 0.0
  %5147 = vmatpush1.msra.mxu0 0.0
  %5148 = vmatprep.subr.mxu0 0.0
  %5149 = vmatpush1.msra.mxu0 0.0
  %5150 = vmatprep.subr.mxu0 0.0
  %5151 = vmatpush1.msra.mxu0 0.0
  %5152 = vmatprep.subr.mxu0 0.0
  %5153 = vmatpush1.msra.mxu0 0.0
  %5154 = vmatprep.subr.mxu0 0.0
  %5155 = vmatpush1.msra.mxu0 0.0
  %5156 = vmatprep.subr.mxu0 0.0
  %5157 = vmatpush1.msra.mxu0 0.0
  %5158 = vmatprep.subr.mxu0 0.0
  %5159 = vmatpush1.msra.mxu0 0.0
  %5160 = vmatprep.subr.mxu0 0.0
  %5161 = vmatpush1.msra.mxu0 0.0
  %5162 = vmatprep.subr.mxu0 0.0
  %5163 = vmatpush1.msra.mxu0 0.0
  %5164 = vmatprep.subr.mxu0 0.0
  %5165 = vmatpush1.msra.mxu0 0.0
  %5166 = vmatprep.subr.mxu0 0.0
  %5167 = vmatpush1.msra.mxu0 0.0
  %5168 = vmatprep.subr.mxu0 0.0
  %5169 = vmatpush1.msra.mxu0 0.0
  %5170 = vmatprep.subr.mxu0 0.0
  %5171 = vmatpush1.msra.mxu0 0.0
  %5172 = vmatprep.subr.mxu0 0.0
  %5173 = vmatpush1.msra.mxu0 0.0
  %5174 = vmatprep.subr.mxu0 0.0
  %5175 = vmatpush1.msra.mxu0 0.0
  %5176 = vmatprep.subr.mxu0 0.0
  %5177 = vmatpush1.msra.mxu0 0.0
  %5178 = vmatprep.subr.mxu0 0.0
  %5179 = vmatpush1.msra.mxu0 0.0
  %5180 = vmatprep.subr.mxu0 0.0
  %5181 = vmatpush1.msra.mxu0 0.0
  %5182 = vmatprep.subr.mxu0 0.0
  %5183 = vmatpush1.msra.mxu0 0.0
  %5184 = vmatprep.subr.mxu0 0.0
  %5185 = vmatpush1.msra.mxu0 0.0
  %5186 = vmatprep.subr.mxu0 0.0
  %5187 = vmatpush1.msra.mxu0 0.0
  %5188 = vmatprep.subr.mxu0 0.0
  %5189 = vmatpush1.msra.mxu0 0.0
  %5190 = vmatprep.subr.mxu0 0.0
  %5191 = vmatpush1.msra.mxu0 0.0
  %5192 = vmatprep.subr.mxu0 0.0
  %5193 = vmatpush1.msra.mxu0 0.0
  %5194 = vmatprep.subr.mxu0 0.0
  %5195 = vmatpush1.msra.mxu0 0.0
  %5196 = vmatprep.subr.mxu0 0.0
  %5197 = vmatpush1.msra.mxu0 0.0
  %5198 = vmatprep.subr.mxu0 0.0
  %5199 = vmatpush1.msra.mxu0 0.0
  %5200 = vmatprep.subr.mxu0 0.0
  %5201 = vmatpush1.msra.mxu0 0.0
  %5202 = vmatprep.mubr.f32.mxu0 0.0
  %5203 = vmatmul.mubr.f32.gmra.mrb[0].mxu0 %v5127
  %v5204 = vpop.f32.mrb[0].mxu0
  %v5205 = vadd.f32 0.0, %v5204
  %v5206 = vpop.f32.mrb[0].mxu0
  %5207 = vmatprep.mubr.f32.mxu0 0.0
  %5208 = vmatmul.mubr.f32.gmra.mrb[0].mxu0 %v5130
  %v5209 = vpop.f32.mrb[0].mxu0
  %v5210 = vadd.f32 0.0, %v5209
  %v5211 = vpop.f32.mrb[0].mxu0
  %5212 = vmatprep.mubr.f32.mxu0 0.0
  %5213 = vmatmul.mubr.f32.gmra.mrb[0].mxu0 %v5133
  %v5214 = vpop.f32.mrb[0].mxu0
  %v5215 = vadd.f32 0.0, %v5214
  %v5216 = vpop.f32.mrb[0].mxu0
  %5217 = vmatprep.mubr.f32.mxu0 0.0
  %5218 = vmatmul.mubr.f32.gmra.mrb[0].mxu0 %v5136
  %v5219 = vpop.f32.mrb[0].mxu0
  %v5220 = vadd.f32 0.0, %v5219
  %v5221 = vpop.f32.mrb[0].mxu0
  %5222 = vdwg.mxu0
  %v5223 = vadd.f32 %v5108, %v5205
  %v5224 = vadd.f32 %v5113, %v5210
  %v5225 = vadd.f32 %v5118, %v5215
  %v5226 = vadd.f32 %v5123, %v5220
  %5228 = vset.pattern.permute.xlu0 0
  %5229 = vperm.xlu0 %5228, %v4928
  %v5230 = vpop.permute.xlu0 %5229
  %5233 = vset.pattern.permute.xlu0 0
  %5234 = vperm.xlu0 %5233, %v4929
  %v5235 = vpop.permute.xlu0 %5234
  %5238 = vset.pattern.permute.xlu0 0
  %5239 = vperm.xlu0 %5238, %v4930
  %v5240 = vpop.permute.xlu0 %5239
  %5243 = vset.pattern.permute.xlu0 0
  %5244 = vperm.xlu0 %5243, %v4931
  %v5245 = vpop.permute.xlu0 %5244
  %v5247 = vadd.f32 %v5223, %v5230
  %v5248 = vadd.f32 %v5224, %v5235
  %v5249 = vadd.f32 %v5225, %v5240
  %v5250 = vadd.f32 %v5226, %v5245
  %v5251 = vmax.f32 %v5247, 0.0
  %v5252 = vmax.f32 %v5248, 0.0
  %v5253 = vmax.f32 %v5249, 0.0
  %v5254 = vmax.f32 %v5250, 0.0
  %5255 = vmatprep.subr.mxu0 0.0
  %5256 = vmatpush1.msra.mxu0 %v68
  %5257 = vmatprep.subr.mxu0 0.0
  %5258 = vmatpush1.msra.mxu0 %v69
  %5259 = vmatprep.subr.mxu0 0.0
  %5260 = vmatpush1.msra.mxu0 %v70
  %5261 = vmatprep.subr.mxu0 0.0
  %5262 = vmatpush1.msra.mxu0 %v71
  %5263 = vmatprep.subr.mxu0 0.0
  %5264 = vmatpush1.msra.mxu0 %v72
  %5265 = vmatprep.subr.mxu0 0.0
  %5266 = vmatpush1.msra.mxu0 %v73
  %5267 = vmatprep.subr.mxu0 0.0
  %5268 = vmatpush1.msra.mxu0 %v74
  %5269 = vmatprep.subr.mxu0 0.0
  %5270 = vmatpush1.msra.mxu0 %v75
  %5271 = vmatprep.subr.mxu0 0.0
  %5272 = vmatpush1.msra.mxu0 %v76
  %5273 = vmatprep.subr.mxu0 0.0
  %5274 = vmatpush1.msra.mxu0 %v77
  %5275 = vmatprep.subr.mxu0 0.0
  %5276 = vmatpush1.msra.mxu0 %v78
  %5277 = vmatprep.subr.mxu0 0.0
  %5278 = vmatpush1.msra.mxu0 %v79
  %5279 = vmatprep.subr.mxu0 0.0
  %5280 = vmatpush1.msra.mxu0 %v80
  %5281 = vmatprep.subr.mxu0 0.0
  %5282 = vmatpush1.msra.mxu0 %v81
  %5283 = vmatprep.subr.mxu0 0.0
  %5284 = vmatpush1.msra.mxu0 %v82
  %5285 = vmatprep.subr.mxu0 0.0
  %5286 = vmatpush1.msra.mxu0 %v83
  %5287 = vmatprep.subr.mxu0 0.0
  %5288 = vmatpush1.msra.mxu0 0.0
  %5289 = vmatprep.subr.mxu0 0.0
  %5290 = vmatpush1.msra.mxu0 0.0
  %5291 = vmatprep.subr.mxu0 0.0
  %5292 = vmatpush1.msra.mxu0 0.0
  %5293 = vmatprep.subr.mxu0 0.0
  %5294 = vmatpush1.msra.mxu0 0.0
  %5295 = vmatprep.subr.mxu0 0.0
  %5296 = vmatpush1.msra.mxu0 0.0
  %5297 = vmatprep.subr.mxu0 0.0
  %5298 = vmatpush1.msra.mxu0 0.0
  %5299 = vmatprep.subr.mxu0 0.0
  %5300 = vmatpush1.msra.mxu0 0.0
  %5301 = vmatprep.subr.mxu0 0.0
  %5302 = vmatpush1.msra.mxu0 0.0
  %5303 = vmatprep.subr.mxu0 0.0
  %5304 = vmatpush1.msra.mxu0 0.0
  %5305 = vmatprep.subr.mxu0 0.0
  %5306 = vmatpush1.msra.mxu0 0.0
  %5307 = vmatprep.subr.mxu0 0.0
  %5308 = vmatpush1.msra.mxu0 0.0
  %5309 = vmatprep.subr.mxu0 0.0
  %5310 = vmatpush1.msra.mxu0 0.0
  %5311 = vmatprep.subr.mxu0 0.0
  %5312 = vmatpush1.msra.mxu0 0.0
  %5313 = vmatprep.subr.mxu0 0.0
  %5314 = vmatpush1.msra.mxu0 0.0
  %5315 = vmatprep.subr.mxu0 0.0
  %5316 = vmatpush1.msra.mxu0 0.0
  %5317 = vmatprep.subr.mxu0 0.0
  %5318 = vmatpush1.msra.mxu0 0.0
  %5319 = vmatprep.mubr.f32.mxu0 0.0
  %5320 = vmatmul.mubr.f32.gmra.mrb[0].mxu0 %v5253
  %v5321 = vpop.f32.mrb[0].mxu0
  %v5322 = vadd.f32 0.0, %v5321
  %v5323 = vpop.f32.mrb[0].mxu0
  %5324 = vmatprep.mubr.f32.mxu0 0.0
  %5325 = vmatmul.mubr.f32.gmra.mrb[0].mxu0 %v5254
  %v5326 = vpop.f32.mrb[0].mxu0
  %v5327 = vadd.f32 0.0, %v5326
  %v5328 = vpop.f32.mrb[0].mxu0
  %5329 = vdwg.mxu0
  %s5330 = scalar_lea.vmem %s8, 96
  %v5331 = vld [vmem:[%s5330] sm:$0xff]
  %v5332 = vld [vmem:[%s5330 + $0x8] sm:$0xff]
  %v5333 = vld [vmem:[%s5330 + $0x10] sm:$0xff]
  %v5334 = vld [vmem:[%s5330 + $0x18] sm:$0xff]
  %s5335 = scalar_lea.vmem %s9, 96
  %v5336 = vld [vmem:[%s5335] sm:$0xff]
  %v5337 = vld [vmem:[%s5335 + $0x8] sm:$0xff]
  %v5338 = vld [vmem:[%s5335 + $0x10] sm:$0xff]
  %v5339 = vld [vmem:[%s5335 + $0x18] sm:$0xff]
  %s5340 = scalar_lea.vmem %s10, 96
  %v5341 = vld [vmem:[%s5340] sm:$0xff]
  %v5342 = vld [vmem:[%s5340 + $0x8] sm:$0xff]
  %v5343 = vld [vmem:[%s5340 + $0x10] sm:$0xff]
  %v5344 = vld [vmem:[%s5340 + $0x18] sm:$0xff]
  %v5346 = vsel %vm321, %v5336, 0
  %v5349 = vsel %vm321, %v5337, 0
  %v5352 = vsel %vm321, %v5338, 0
  %v5355 = vsel %vm321, %v5339, 0
  %5357 = vmatprep.subr.mxu0 0.0
  %5358 = vmatpush1.msra.mxu0 %v5322
  %5359 = vmatprep.subr.mxu0 0.0
  %5360 = vmatpush1.msra.mxu0 %v5327
  %5361 = vmatprep.subr.mxu0 0.0
  %5362 = vmatpush1.msra.mxu0 0.0
  %5363 = vmatprep.subr.mxu0 0.0
  %5364 = vmatpush1.msra.mxu0 0.0
  %5365 = vmatprep.subr.mxu0 0.0
  %5366 = vmatpush1.msra.mxu0 0.0
  %5367 = vmatprep.subr.mxu0 0.0
  %5368 = vmatpush1.msra.mxu0 0.0
  %5369 = vmatprep.subr.mxu0 0.0
  %5370 = vmatpush1.msra.mxu0 0.0
  %5371 = vmatprep.subr.mxu0 0.0
  %5372 = vmatpush1.msra.mxu0 0.0
  %5373 = vmatprep.subr.mxu0 0.0
  %5374 = vmatpush1.msra.mxu0 0.0
  %5375 = vmatprep.subr.mxu0 0.0
  %5376 = vmatpush1.msra.mxu0 0.0
  %5377 = vmatprep.subr.mxu0 0.0
  %5378 = vmatpush1.msra.mxu0 0.0
  %5379 = vmatprep.subr.mxu0 0.0
  %5380 = vmatpush1.msra.mxu0 0.0
  %5381 = vmatprep.subr.mxu0 0.0
  %5382 = vmatpush1.msra.mxu0 0.0
  %5383 = vmatprep.subr.mxu0 0.0
  %5384 = vmatpush1.msra.mxu0 0.0
  %5385 = vmatprep.subr.mxu0 0.0
  %5386 = vmatpush1.msra.mxu0 0.0
  %5387 = vmatprep.subr.mxu0 0.0
  %5388 = vmatpush1.msra.mxu0 0.0
  %5389 = vmatprep.subr.mxu0 0.0
  %5390 = vmatpush1.msra.mxu0 0.0
  %5391 = vmatprep.subr.mxu0 0.0
  %5392 = vmatpush1.msra.mxu0 0.0
  %5393 = vmatprep.subr.mxu0 0.0
  %5394 = vmatpush1.msra.mxu0 0.0
  %5395 = vmatprep.subr.mxu0 0.0
  %5396 = vmatpush1.msra.mxu0 0.0
  %5397 = vmatprep.subr.mxu0 0.0
  %5398 = vmatpush1.msra.mxu0 0.0
  %5399 = vmatprep.subr.mxu0 0.0
  %5400 = vmatpush1.msra.mxu0 0.0
  %5401 = vmatprep.subr.mxu0 0.0
  %5402 = vmatpush1.msra.mxu0 0.0
  %5403 = vmatprep.subr.mxu0 0.0
  %5404 = vmatpush1.msra.mxu0 0.0
  %5405 = vmatprep.subr.mxu0 0.0
  %5406 = vmatpush1.msra.mxu0 0.0
  %5407 = vmatprep.subr.mxu0 0.0
  %5408 = vmatpush1.msra.mxu0 0.0
  %5409 = vmatprep.subr.mxu0 0.0
  %5410 = vmatpush1.msra.mxu0 0.0
  %5411 = vmatprep.subr.mxu0 0.0
  %5412 = vmatpush1.msra.mxu0 0.0
  %5413 = vmatprep.subr.mxu0 0.0
  %5414 = vmatpush1.msra.mxu0 0.0
  %5415 = vmatprep.subr.mxu0 0.0
  %5416 = vmatpush1.msra.mxu0 0.0
  %5417 = vmatprep.subr.mxu0 0.0
  %5418 = vmatpush1.msra.mxu0 0.0
  %5419 = vmatprep.subr.mxu0 0.0
  %5420 = vmatpush1.msra.mxu0 0.0
  %5421 = vmatprep.mubr.f32.mxu0 0.0
  %5422 = vmatmul.mubr.f32.gmra.mrb[0].mxu0 %v5346
  %v5423 = vpop.f32.mrb[0].mxu0
  %v5424 = vadd.f32 0.0, %v5423
  %v5425 = vpop.f32.mrb[0].mxu0
  %5426 = vmatprep.mubr.f32.mxu0 0.0
  %5427 = vmatmul.mubr.f32.gmra.mrb[0].mxu0 %v5349
  %v5428 = vpop.f32.mrb[0].mxu0
  %v5429 = vadd.f32 0.0, %v5428
  %v5430 = vpop.f32.mrb[0].mxu0
  %5431 = vmatprep.mubr.f32.mxu0 0.0
  %5432 = vmatmul.mubr.f32.gmra.mrb[0].mxu0 %v5352
  %v5433 = vpop.f32.mrb[0].mxu0
  %v5434 = vadd.f32 0.0, %v5433
  %v5435 = vpop.f32.mrb[0].mxu0
  %5436 = vmatprep.mubr.f32.mxu0 0.0
  %5437 = vmatmul.mubr.f32.gmra.mrb[0].mxu0 %v5355
  %v5438 = vpop.f32.mrb[0].mxu0
  %v5439 = vadd.f32 0.0, %v5438
  %v5440 = vpop.f32.mrb[0].mxu0
  %5441 = vdwg.mxu0
  %v5443 = vsel %vm321, %v5331, 0
  %v5446 = vsel %vm321, %v5332, 0
  %v5449 = vsel %vm321, %v5333, 0
  %v5452 = vsel %vm321, %v5334, 0
  %5454 = vmatprep.subr.mxu0 0.0
  %5455 = vmatpush1.msra.mxu0 %v5251
  %5456 = vmatprep.subr.mxu0 0.0
  %5457 = vmatpush1.msra.mxu0 %v5252
  %5458 = vmatprep.subr.mxu0 0.0
  %5459 = vmatpush1.msra.mxu0 0.0
  %5460 = vmatprep.subr.mxu0 0.0
  %5461 = vmatpush1.msra.mxu0 0.0
  %5462 = vmatprep.subr.mxu0 0.0
  %5463 = vmatpush1.msra.mxu0 0.0
  %5464 = vmatprep.subr.mxu0 0.0
  %5465 = vmatpush1.msra.mxu0 0.0
  %5466 = vmatprep.subr.mxu0 0.0
  %5467 = vmatpush1.msra.mxu0 0.0
  %5468 = vmatprep.subr.mxu0 0.0
  %5469 = vmatpush1.msra.mxu0 0.0
  %5470 = vmatprep.subr.mxu0 0.0
  %5471 = vmatpush1.msra.mxu0 0.0
  %5472 = vmatprep.subr.mxu0 0.0
  %5473 = vmatpush1.msra.mxu0 0.0
  %5474 = vmatprep.subr.mxu0 0.0
  %5475 = vmatpush1.msra.mxu0 0.0
  %5476 = vmatprep.subr.mxu0 0.0
  %5477 = vmatpush1.msra.mxu0 0.0
  %5478 = vmatprep.subr.mxu0 0.0
  %5479 = vmatpush1.msra.mxu0 0.0
  %5480 = vmatprep.subr.mxu0 0.0
  %5481 = vmatpush1.msra.mxu0 0.0
  %5482 = vmatprep.subr.mxu0 0.0
  %5483 = vmatpush1.msra.mxu0 0.0
  %5484 = vmatprep.subr.mxu0 0.0
  %5485 = vmatpush1.msra.mxu0 0.0
  %5486 = vmatprep.subr.mxu0 0.0
  %5487 = vmatpush1.msra.mxu0 0.0
  %5488 = vmatprep.subr.mxu0 0.0
  %5489 = vmatpush1.msra.mxu0 0.0
  %5490 = vmatprep.subr.mxu0 0.0
  %5491 = vmatpush1.msra.mxu0 0.0
  %5492 = vmatprep.subr.mxu0 0.0
  %5493 = vmatpush1.msra.mxu0 0.0
  %5494 = vmatprep.subr.mxu0 0.0
  %5495 = vmatpush1.msra.mxu0 0.0
  %5496 = vmatprep.subr.mxu0 0.0
  %5497 = vmatpush1.msra.mxu0 0.0
  %5498 = vmatprep.subr.mxu0 0.0
  %5499 = vmatpush1.msra.mxu0 0.0
  %5500 = vmatprep.subr.mxu0 0.0
  %5501 = vmatpush1.msra.mxu0 0.0
  %5502 = vmatprep.subr.mxu0 0.0
  %5503 = vmatpush1.msra.mxu0 0.0
  %5504 = vmatprep.subr.mxu0 0.0
  %5505 = vmatpush1.msra.mxu0 0.0
  %5506 = vmatprep.subr.mxu0 0.0
  %5507 = vmatpush1.msra.mxu0 0.0
  %5508 = vmatprep.subr.mxu0 0.0
  %5509 = vmatpush1.msra.mxu0 0.0
  %5510 = vmatprep.subr.mxu0 0.0
  %5511 = vmatpush1.msra.mxu0 0.0
  %5512 = vmatprep.subr.mxu0 0.0
  %5513 = vmatpush1.msra.mxu0 0.0
  %5514 = vmatprep.subr.mxu0 0.0
  %5515 = vmatpush1.msra.mxu0 0.0
  %5516 = vmatprep.subr.mxu0 0.0
  %5517 = vmatpush1.msra.mxu0 0.0
  %5518 = vmatprep.mubr.f32.mxu0 0.0
  %5519 = vmatmul.mubr.f32.gmra.mrb[0].mxu0 %v5443
  %v5520 = vpop.f32.mrb[0].mxu0
  %v5521 = vadd.f32 %v5424, %v5520
  %v5522 = vpop.f32.mrb[0].mxu0
  %5523 = vmatprep.mubr.f32.mxu0 0.0
  %5524 = vmatmul.mubr.f32.gmra.mrb[0].mxu0 %v5446
  %v5525 = vpop.f32.mrb[0].mxu0
  %v5526 = vadd.f32 %v5429, %v5525
  %v5527 = vpop.f32.mrb[0].mxu0
  %5528 = vmatprep.mubr.f32.mxu0 0.0
  %5529 = vmatmul.mubr.f32.gmra.mrb[0].mxu0 %v5449
  %v5530 = vpop.f32.mrb[0].mxu0
  %v5531 = vadd.f32 %v5434, %v5530
  %v5532 = vpop.f32.mrb[0].mxu0
  %5533 = vmatprep.mubr.f32.mxu0 0.0
  %5534 = vmatmul.mubr.f32.gmra.mrb[0].mxu0 %v5452
  %v5535 = vpop.f32.mrb[0].mxu0
  %v5536 = vadd.f32 %v5439, %v5535
  %v5537 = vpop.f32.mrb[0].mxu0
  %5538 = vdwg.mxu0
  %5540 = vset.pattern.permute.xlu0 0
  %5541 = vperm.xlu0 %5540, %v5341
  %v5542 = vpop.permute.xlu0 %5541
  %5545 = vset.pattern.permute.xlu0 0
  %5546 = vperm.xlu0 %5545, %v5342
  %v5547 = vpop.permute.xlu0 %5546
  %5550 = vset.pattern.permute.xlu0 0
  %5551 = vperm.xlu0 %5550, %v5343
  %v5552 = vpop.permute.xlu0 %5551
  %5555 = vset.pattern.permute.xlu0 0
  %5556 = vperm.xlu0 %5555, %v5344
  %v5557 = vpop.permute.xlu0 %5556
  %v5559 = vadd.f32 %v5521, %v5542
  %v5560 = vadd.f32 %v5526, %v5547
  %v5561 = vadd.f32 %v5531, %v5552
  %v5562 = vadd.f32 %v5536, %v5557
  %5563 = vmatprep.subr.mxu0 0.0
  %5564 = vmatpush1.msra.mxu0 %v68
  %5565 = vmatprep.subr.mxu0 0.0
  %5566 = vmatpush1.msra.mxu0 %v69
  %5567 = vmatprep.subr.mxu0 0.0
  %5568 = vmatpush1.msra.mxu0 %v70
  %5569 = vmatprep.subr.mxu0 0.0
  %5570 = vmatpush1.msra.mxu0 %v71
  %5571 = vmatprep.subr.mxu0 0.0
  %5572 = vmatpush1.msra.mxu0 %v72
  %5573 = vmatprep.subr.mxu0 0.0
  %5574 = vmatpush1.msra.mxu0 %v73
  %5575 = vmatprep.subr.mxu0 0.0
  %5576 = vmatpush1.msra.mxu0 %v74
  %5577 = vmatprep.subr.mxu0 0.0
  %5578 = vmatpush1.msra.mxu0 %v75
  %5579 = vmatprep.subr.mxu0 0.0
  %5580 = vmatpush1.msra.mxu0 %v76
  %5581 = vmatprep.subr.mxu0 0.0
  %5582 = vmatpush1.msra.mxu0 %v77
  %5583 = vmatprep.subr.mxu0 0.0
  %5584 = vmatpush1.msra.mxu0 %v78
  %5585 = vmatprep.subr.mxu0 0.0
  %5586 = vmatpush1.msra.mxu0 %v79
  %5587 = vmatprep.subr.mxu0 0.0
  %5588 = vmatpush1.msra.mxu0 %v80
  %5589 = vmatprep.subr.mxu0 0.0
  %5590 = vmatpush1.msra.mxu0 %v81
  %5591 = vmatprep.subr.mxu0 0.0
  %5592 = vmatpush1.msra.mxu0 %v82
  %5593 = vmatprep.subr.mxu0 0.0
  %5594 = vmatpush1.msra.mxu0 %v83
  %5595 = vmatprep.subr.mxu0 0.0
  %5596 = vmatpush1.msra.mxu0 0.0
  %5597 = vmatprep.subr.mxu0 0.0
  %5598 = vmatpush1.msra.mxu0 0.0
  %5599 = vmatprep.subr.mxu0 0.0
  %5600 = vmatpush1.msra.mxu0 0.0
  %5601 = vmatprep.subr.mxu0 0.0
  %5602 = vmatpush1.msra.mxu0 0.0
  %5603 = vmatprep.subr.mxu0 0.0
  %5604 = vmatpush1.msra.mxu0 0.0
  %5605 = vmatprep.subr.mxu0 0.0
  %5606 = vmatpush1.msra.mxu0 0.0
  %5607 = vmatprep.subr.mxu0 0.0
  %5608 = vmatpush1.msra.mxu0 0.0
  %5609 = vmatprep.subr.mxu0 0.0
  %5610 = vmatpush1.msra.mxu0 0.0
  %5611 = vmatprep.subr.mxu0 0.0
  %5612 = vmatpush1.msra.mxu0 0.0
  %5613 = vmatprep.subr.mxu0 0.0
  %5614 = vmatpush1.msra.mxu0 0.0
  %5615 = vmatprep.subr.mxu0 0.0
  %5616 = vmatpush1.msra.mxu0 0.0
  %5617 = vmatprep.subr.mxu0 0.0
  %5618 = vmatpush1.msra.mxu0 0.0
  %5619 = vmatprep.subr.mxu0 0.0
  %5620 = vmatpush1.msra.mxu0 0.0
  %5621 = vmatprep.subr.mxu0 0.0
  %5622 = vmatpush1.msra.mxu0 0.0
  %5623 = vmatprep.subr.mxu0 0.0
  %5624 = vmatpush1.msra.mxu0 0.0
  %5625 = vmatprep.subr.mxu0 0.0
  %5626 = vmatpush1.msra.mxu0 0.0
  %5627 = vmatprep.mubr.f32.mxu0 0.0
  %5628 = vmatmul.mubr.f32.gmra.mrb[0].mxu0 %v5561
  %v5629 = vpop.f32.mrb[0].mxu0
  %v5630 = vadd.f32 0.0, %v5629
  %v5631 = vpop.f32.mrb[0].mxu0
  %5632 = vmatprep.mubr.f32.mxu0 0.0
  %5633 = vmatmul.mubr.f32.gmra.mrb[0].mxu0 %v5562
  %v5634 = vpop.f32.mrb[0].mxu0
  %v5635 = vadd.f32 0.0, %v5634
  %v5636 = vpop.f32.mrb[0].mxu0
  %5637 = vdwg.mxu0
  %5638 = vmatprep.subr.mxu0 0.0
  %5639 = vmatpush1.msra.mxu0 %v84
  %5640 = vmatprep.subr.mxu0 0.0
  %5641 = vmatpush1.msra.mxu0 %v85
  %5642 = vmatprep.subr.mxu0 0.0
  %5643 = vmatpush1.msra.mxu0 %v86
  %5644 = vmatprep.subr.mxu0 0.0
  %5645 = vmatpush1.msra.mxu0 %v87
  %5646 = vmatprep.subr.mxu0 0.0
  %5647 = vmatpush1.msra.mxu0 %v88
  %5648 = vmatprep.subr.mxu0 0.0
  %5649 = vmatpush1.msra.mxu0 %v89
  %5650 = vmatprep.subr.mxu0 0.0
  %5651 = vmatpush1.msra.mxu0 %v90
  %5652 = vmatprep.subr.mxu0 0.0
  %5653 = vmatpush1.msra.mxu0 %v91
  %5654 = vmatprep.subr.mxu0 0.0
  %5655 = vmatpush1.msra.mxu0 %v92
  %5656 = vmatprep.subr.mxu0 0.0
  %5657 = vmatpush1.msra.mxu0 %v93
  %5658 = vmatprep.subr.mxu0 0.0
  %5659 = vmatpush1.msra.mxu0 %v94
  %5660 = vmatprep.subr.mxu0 0.0
  %5661 = vmatpush1.msra.mxu0 %v95
  %5662 = vmatprep.subr.mxu0 0.0
  %5663 = vmatpush1.msra.mxu0 %v96
  %5664 = vmatprep.subr.mxu0 0.0
  %5665 = vmatpush1.msra.mxu0 %v97
  %5666 = vmatprep.subr.mxu0 0.0
  %5667 = vmatpush1.msra.mxu0 %v98
  %5668 = vmatprep.subr.mxu0 0.0
  %5669 = vmatpush1.msra.mxu0 %v99
  %5670 = vmatprep.subr.mxu0 0.0
  %5671 = vmatpush1.msra.mxu0 0.0
  %5672 = vmatprep.subr.mxu0 0.0
  %5673 = vmatpush1.msra.mxu0 0.0
  %5674 = vmatprep.subr.mxu0 0.0
  %5675 = vmatpush1.msra.mxu0 0.0
  %5676 = vmatprep.subr.mxu0 0.0
  %5677 = vmatpush1.msra.mxu0 0.0
  %5678 = vmatprep.subr.mxu0 0.0
  %5679 = vmatpush1.msra.mxu0 0.0
  %5680 = vmatprep.subr.mxu0 0.0
  %5681 = vmatpush1.msra.mxu0 0.0
  %5682 = vmatprep.subr.mxu0 0.0
  %5683 = vmatpush1.msra.mxu0 0.0
  %5684 = vmatprep.subr.mxu0 0.0
  %5685 = vmatpush1.msra.mxu0 0.0
  %5686 = vmatprep.subr.mxu0 0.0
  %5687 = vmatpush1.msra.mxu0 0.0
  %5688 = vmatprep.subr.mxu0 0.0
  %5689 = vmatpush1.msra.mxu0 0.0
  %5690 = vmatprep.subr.mxu0 0.0
  %5691 = vmatpush1.msra.mxu0 0.0
  %5692 = vmatprep.subr.mxu0 0.0
  %5693 = vmatpush1.msra.mxu0 0.0
  %5694 = vmatprep.subr.mxu0 0.0
  %5695 = vmatpush1.msra.mxu0 0.0
  %5696 = vmatprep.subr.mxu0 0.0
  %5697 = vmatpush1.msra.mxu0 0.0
  %5698 = vmatprep.subr.mxu0 0.0
  %5699 = vmatpush1.msra.mxu0 0.0
  %5700 = vmatprep.subr.mxu0 0.0
  %5701 = vmatpush1.msra.mxu0 0.0
  %5702 = vmatprep.mubr.f32.mxu0 0.0
  %5703 = vmatmul.mubr.f32.gmra.mrb[0].mxu0 %v5559
  %v5704 = vpop.f32.mrb[0].mxu0
  %v5705 = vadd.f32 0.0, %v5704
  %v5706 = vpop.f32.mrb[0].mxu0
  %5707 = vmatprep.mubr.f32.mxu0 0.0
  %5708 = vmatmul.mubr.f32.gmra.mrb[0].mxu0 %v5560
  %v5709 = vpop.f32.mrb[0].mxu0
  %v5710 = vadd.f32 0.0, %v5709
  %v5711 = vpop.f32.mrb[0].mxu0
  %5712 = vdwg.mxu0
  %5713 = vmatprep.subr.mxu0 0.0
  %5714 = vmatpush1.msra.mxu0 %v84
  %5715 = vmatprep.subr.mxu0 0.0
  %5716 = vmatpush1.msra.mxu0 %v85
  %5717 = vmatprep.subr.mxu0 0.0
  %5718 = vmatpush1.msra.mxu0 %v86
  %5719 = vmatprep.subr.mxu0 0.0
  %5720 = vmatpush1.msra.mxu0 %v87
  %5721 = vmatprep.subr.mxu0 0.0
  %5722 = vmatpush1.msra.mxu0 %v88
  %5723 = vmatprep.subr.mxu0 0.0
  %5724 = vmatpush1.msra.mxu0 %v89
  %5725 = vmatprep.subr.mxu0 0.0
  %5726 = vmatpush1.msra.mxu0 %v90
  %5727 = vmatprep.subr.mxu0 0.0
  %5728 = vmatpush1.msra.mxu0 %v91
  %5729 = vmatprep.subr.mxu0 0.0
  %5730 = vmatpush1.msra.mxu0 %v92
  %5731 = vmatprep.subr.mxu0 0.0
  %5732 = vmatpush1.msra.mxu0 %v93
  %5733 = vmatprep.subr.mxu0 0.0
  %5734 = vmatpush1.msra.mxu0 %v94
  %5735 = vmatprep.subr.mxu0 0.0
  %5736 = vmatpush1.msra.mxu0 %v95
  %5737 = vmatprep.subr.mxu0 0.0
  %5738 = vmatpush1.msra.mxu0 %v96
  %5739 = vmatprep.subr.mxu0 0.0
  %5740 = vmatpush1.msra.mxu0 %v97
  %5741 = vmatprep.subr.mxu0 0.0
  %5742 = vmatpush1.msra.mxu0 %v98
  %5743 = vmatprep.subr.mxu0 0.0
  %5744 = vmatpush1.msra.mxu0 %v99
  %5745 = vmatprep.subr.mxu0 0.0
  %5746 = vmatpush1.msra.mxu0 0.0
  %5747 = vmatprep.subr.mxu0 0.0
  %5748 = vmatpush1.msra.mxu0 0.0
  %5749 = vmatprep.subr.mxu0 0.0
  %5750 = vmatpush1.msra.mxu0 0.0
  %5751 = vmatprep.subr.mxu0 0.0
  %5752 = vmatpush1.msra.mxu0 0.0
  %5753 = vmatprep.subr.mxu0 0.0
  %5754 = vmatpush1.msra.mxu0 0.0
  %5755 = vmatprep.subr.mxu0 0.0
  %5756 = vmatpush1.msra.mxu0 0.0
  %5757 = vmatprep.subr.mxu0 0.0
  %5758 = vmatpush1.msra.mxu0 0.0
  %5759 = vmatprep.subr.mxu0 0.0
  %5760 = vmatpush1.msra.mxu0 0.0
  %5761 = vmatprep.subr.mxu0 0.0
  %5762 = vmatpush1.msra.mxu0 0.0
  %5763 = vmatprep.subr.mxu0 0.0
  %5764 = vmatpush1.msra.mxu0 0.0
  %5765 = vmatprep.subr.mxu0 0.0
  %5766 = vmatpush1.msra.mxu0 0.0
  %5767 = vmatprep.subr.mxu0 0.0
  %5768 = vmatpush1.msra.mxu0 0.0
  %5769 = vmatprep.subr.mxu0 0.0
  %5770 = vmatpush1.msra.mxu0 0.0
  %5771 = vmatprep.subr.mxu0 0.0
  %5772 = vmatpush1.msra.mxu0 0.0
  %5773 = vmatprep.subr.mxu0 0.0
  %5774 = vmatpush1.msra.mxu0 0.0
  %5775 = vmatprep.subr.mxu0 0.0
  %5776 = vmatpush1.msra.mxu0 0.0
  %5777 = vmatprep.mubr.f32.mxu0 0.0
  %5778 = vmatmul.mubr.f32.gmra.mrb[0].mxu0 %v5630
  %v5779 = vpop.f32.mrb[0].mxu0
  %v5780 = vadd.f32 0.0, %v5779
  %v5781 = vpop.f32.mrb[0].mxu0
  %5782 = vmatprep.mubr.f32.mxu0 0.0
  %5783 = vmatmul.mubr.f32.gmra.mrb[0].mxu0 %v5635
  %v5784 = vpop.f32.mrb[0].mxu0
  %v5785 = vadd.f32 0.0, %v5784
  %v5786 = vpop.f32.mrb[0].mxu0
  %5787 = vdwg.mxu0
  %s5788 = scalar_lea.vmem %s12, 96
  %v5789 = vld [vmem:[%s5788] sm:$0xff]
  %v5790 = vld [vmem:[%s5788 + $0x8] sm:$0xff]
  %v5791 = vld [vmem:[%s5788 + $0x10] sm:$0xff]
  %v5792 = vld [vmem:[%s5788 + $0x18] sm:$0xff]
  %s5793 = scalar_lea.vmem %s13, 96
  %v5794 = vld [vmem:[%s5793] sm:$0xff]
  %v5795 = vld [vmem:[%s5793 + $0x8] sm:$0xff]
  %v5796 = vld [vmem:[%s5793 + $0x10] sm:$0xff]
  %v5797 = vld [vmem:[%s5793 + $0x18] sm:$0xff]
  %s5798 = scalar_lea.vmem %s14, 96
  %v5799 = vld [vmem:[%s5798] sm:$0xff]
  %v5800 = vld [vmem:[%s5798 + $0x8] sm:$0xff]
  %v5801 = vld [vmem:[%s5798 + $0x10] sm:$0xff]
  %v5802 = vld [vmem:[%s5798 + $0x18] sm:$0xff]
  %s5803 = scalar_lea.vmem %s15, 96
  %v5804 = vld [vmem:[%s5803] sm:$0xff]
  %v5805 = vld [vmem:[%s5803 + $0x8] sm:$0xff]
  %v5806 = vld [vmem:[%s5803 + $0x10] sm:$0xff]
  %v5807 = vld [vmem:[%s5803 + $0x18] sm:$0xff]
  %s5808 = scalar_lea.vmem %s16, 96
  %v5809 = vld [vmem:[%s5808] sm:$0xff]
  %v5810 = vld [vmem:[%s5808 + $0x8] sm:$0xff]
  %v5811 = vld [vmem:[%s5808 + $0x10] sm:$0xff]
  %v5812 = vld [vmem:[%s5808 + $0x18] sm:$0xff]
  %v5814 = vsel %vm321, %v5794, 0
  %v5817 = vsel %vm321, %v5795, 0
  %v5820 = vsel %vm321, %v5796, 0
  %v5823 = vsel %vm321, %v5797, 0
  %5825 = vmatprep.subr.mxu0 0.0
  %5826 = vmatpush1.msra.mxu0 %v4904
  %5827 = vmatprep.subr.mxu0 0.0
  %5828 = vmatpush1.msra.mxu0 %v4909
  %5829 = vmatprep.subr.mxu0 0.0
  %5830 = vmatpush1.msra.mxu0 0.0
  %5831 = vmatprep.subr.mxu0 0.0
  %5832 = vmatpush1.msra.mxu0 0.0
  %5833 = vmatprep.subr.mxu0 0.0
  %5834 = vmatpush1.msra.mxu0 0.0
  %5835 = vmatprep.subr.mxu0 0.0
  %5836 = vmatpush1.msra.mxu0 0.0
  %5837 = vmatprep.subr.mxu0 0.0
  %5838 = vmatpush1.msra.mxu0 0.0
  %5839 = vmatprep.subr.mxu0 0.0
  %5840 = vmatpush1.msra.mxu0 0.0
  %5841 = vmatprep.subr.mxu0 0.0
  %5842 = vmatpush1.msra.mxu0 0.0
  %5843 = vmatprep.subr.mxu0 0.0
  %5844 = vmatpush1.msra.mxu0 0.0
  %5845 = vmatprep.subr.mxu0 0.0
  %5846 = vmatpush1.msra.mxu0 0.0
  %5847 = vmatprep.subr.mxu0 0.0
  %5848 = vmatpush1.msra.mxu0 0.0
  %5849 = vmatprep.subr.mxu0 0.0
  %5850 = vmatpush1.msra.mxu0 0.0
  %5851 = vmatprep.subr.mxu0 0.0
  %5852 = vmatpush1.msra.mxu0 0.0
  %5853 = vmatprep.subr.mxu0 0.0
  %5854 = vmatpush1.msra.mxu0 0.0
  %5855 = vmatprep.subr.mxu0 0.0
  %5856 = vmatpush1.msra.mxu0 0.0
  %5857 = vmatprep.subr.mxu0 0.0
  %5858 = vmatpush1.msra.mxu0 0.0
  %5859 = vmatprep.subr.mxu0 0.0
  %5860 = vmatpush1.msra.mxu0 0.0
  %5861 = vmatprep.subr.mxu0 0.0
  %5862 = vmatpush1.msra.mxu0 0.0
  %5863 = vmatprep.subr.mxu0 0.0
  %5864 = vmatpush1.msra.mxu0 0.0
  %5865 = vmatprep.subr.mxu0 0.0
  %5866 = vmatpush1.msra.mxu0 0.0
  %5867 = vmatprep.subr.mxu0 0.0
  %5868 = vmatpush1.msra.mxu0 0.0
  %5869 = vmatprep.subr.mxu0 0.0
  %5870 = vmatpush1.msra.mxu0 0.0
  %5871 = vmatprep.subr.mxu0 0.0
  %5872 = vmatpush1.msra.mxu0 0.0
  %5873 = vmatprep.subr.mxu0 0.0
  %5874 = vmatpush1.msra.mxu0 0.0
  %5875 = vmatprep.subr.mxu0 0.0
  %5876 = vmatpush1.msra.mxu0 0.0
  %5877 = vmatprep.subr.mxu0 0.0
  %5878 = vmatpush1.msra.mxu0 0.0
  %5879 = vmatprep.subr.mxu0 0.0
  %5880 = vmatpush1.msra.mxu0 0.0
  %5881 = vmatprep.subr.mxu0 0.0
  %5882 = vmatpush1.msra.mxu0 0.0
  %5883 = vmatprep.subr.mxu0 0.0
  %5884 = vmatpush1.msra.mxu0 0.0
  %5885 = vmatprep.subr.mxu0 0.0
  %5886 = vmatpush1.msra.mxu0 0.0
  %5887 = vmatprep.subr.mxu0 0.0
  %5888 = vmatpush1.msra.mxu0 0.0
  %5889 = vmatprep.mubr.f32.mxu0 0.0
  %5890 = vmatmul.mubr.f32.gmra.mrb[0].mxu0 %v5814
  %v5891 = vpop.f32.mrb[0].mxu0
  %v5892 = vadd.f32 0.0, %v5891
  %v5893 = vpop.f32.mrb[0].mxu0
  %5894 = vmatprep.mubr.f32.mxu0 0.0
  %5895 = vmatmul.mubr.f32.gmra.mrb[0].mxu0 %v5817
  %v5896 = vpop.f32.mrb[0].mxu0
  %v5897 = vadd.f32 0.0, %v5896
  %v5898 = vpop.f32.mrb[0].mxu0
  %5899 = vmatprep.mubr.f32.mxu0 0.0
  %5900 = vmatmul.mubr.f32.gmra.mrb[0].mxu0 %v5820
  %v5901 = vpop.f32.mrb[0].mxu0
  %v5902 = vadd.f32 0.0, %v5901
  %v5903 = vpop.f32.mrb[0].mxu0
  %5904 = vmatprep.mubr.f32.mxu0 0.0
  %5905 = vmatmul.mubr.f32.gmra.mrb[0].mxu0 %v5823
  %v5906 = vpop.f32.mrb[0].mxu0
  %v5907 = vadd.f32 0.0, %v5906
  %v5908 = vpop.f32.mrb[0].mxu0
  %5909 = vdwg.mxu0
  %v5911 = vsel %vm321, %v5789, 0
  %v5914 = vsel %vm321, %v5790, 0
  %v5917 = vsel %vm321, %v5791, 0
  %v5920 = vsel %vm321, %v5792, 0
  %5922 = vmatprep.subr.mxu0 0.0
  %5923 = vmatpush1.msra.mxu0 %v4833
  %5924 = vmatprep.subr.mxu0 0.0
  %5925 = vmatpush1.msra.mxu0 %v4834
  %5926 = vmatprep.subr.mxu0 0.0
  %5927 = vmatpush1.msra.mxu0 0.0
  %5928 = vmatprep.subr.mxu0 0.0
  %5929 = vmatpush1.msra.mxu0 0.0
  %5930 = vmatprep.subr.mxu0 0.0
  %5931 = vmatpush1.msra.mxu0 0.0
  %5932 = vmatprep.subr.mxu0 0.0
  %5933 = vmatpush1.msra.mxu0 0.0
  %5934 = vmatprep.subr.mxu0 0.0
  %5935 = vmatpush1.msra.mxu0 0.0
  %5936 = vmatprep.subr.mxu0 0.0
  %5937 = vmatpush1.msra.mxu0 0.0
  %5938 = vmatprep.subr.mxu0 0.0
  %5939 = vmatpush1.msra.mxu0 0.0
  %5940 = vmatprep.subr.mxu0 0.0
  %5941 = vmatpush1.msra.mxu0 0.0
  %5942 = vmatprep.subr.mxu0 0.0
  %5943 = vmatpush1.msra.mxu0 0.0
  %5944 = vmatprep.subr.mxu0 0.0
  %5945 = vmatpush1.msra.mxu0 0.0
  %5946 = vmatprep.subr.mxu0 0.0
  %5947 = vmatpush1.msra.mxu0 0.0
  %5948 = vmatprep.subr.mxu0 0.0
  %5949 = vmatpush1.msra.mxu0 0.0
  %5950 = vmatprep.subr.mxu0 0.0
  %5951 = vmatpush1.msra.mxu0 0.0
  %5952 = vmatprep.subr.mxu0 0.0
  %5953 = vmatpush1.msra.mxu0 0.0
  %5954 = vmatprep.subr.mxu0 0.0
  %5955 = vmatpush1.msra.mxu0 0.0
  %5956 = vmatprep.subr.mxu0 0.0
  %5957 = vmatpush1.msra.mxu0 0.0
  %5958 = vmatprep.subr.mxu0 0.0
  %5959 = vmatpush1.msra.mxu0 0.0
  %5960 = vmatprep.subr.mxu0 0.0
  %5961 = vmatpush1.msra.mxu0 0.0
  %5962 = vmatprep.subr.mxu0 0.0
  %5963 = vmatpush1.msra.mxu0 0.0
  %5964 = vmatprep.subr.mxu0 0.0
  %5965 = vmatpush1.msra.mxu0 0.0
  %5966 = vmatprep.subr.mxu0 0.0
  %5967 = vmatpush1.msra.mxu0 0.0
  %5968 = vmatprep.subr.mxu0 0.0
  %5969 = vmatpush1.msra.mxu0 0.0
  %5970 = vmatprep.subr.mxu0 0.0
  %5971 = vmatpush1.msra.mxu0 0.0
  %5972 = vmatprep.subr.mxu0 0.0
  %5973 = vmatpush1.msra.mxu0 0.0
  %5974 = vmatprep.subr.mxu0 0.0
  %5975 = vmatpush1.msra.mxu0 0.0
  %5976 = vmatprep.subr.mxu0 0.0
  %5977 = vmatpush1.msra.mxu0 0.0
  %5978 = vmatprep.subr.mxu0 0.0
  %5979 = vmatpush1.msra.mxu0 0.0
  %5980 = vmatprep.subr.mxu0 0.0
  %5981 = vmatpush1.msra.mxu0 0.0
  %5982 = vmatprep.subr.mxu0 0.0
  %5983 = vmatpush1.msra.mxu0 0.0
  %5984 = vmatprep.subr.mxu0 0.0
  %5985 = vmatpush1.msra.mxu0 0.0
  %5986 = vmatprep.mubr.f32.mxu0 0.0
  %5987 = vmatmul.mubr.f32.gmra.mrb[0].mxu0 %v5911
  %v5988 = vpop.f32.mrb[0].mxu0
  %v5989 = vadd.f32 %v5892, %v5988
  %v5990 = vpop.f32.mrb[0].mxu0
  %5991 = vmatprep.mubr.f32.mxu0 0.0
  %5992 = vmatmul.mubr.f32.gmra.mrb[0].mxu0 %v5914
  %v5993 = vpop.f32.mrb[0].mxu0
  %v5994 = vadd.f32 %v5897, %v5993
  %v5995 = vpop.f32.mrb[0].mxu0
  %5996 = vmatprep.mubr.f32.mxu0 0.0
  %5997 = vmatmul.mubr.f32.gmra.mrb[0].mxu0 %v5917
  %v5998 = vpop.f32.mrb[0].mxu0
  %v5999 = vadd.f32 %v5902, %v5998
  %v6000 = vpop.f32.mrb[0].mxu0
  %6001 = vmatprep.mubr.f32.mxu0 0.0
  %6002 = vmatmul.mubr.f32.gmra.mrb[0].mxu0 %v5920
  %v6003 = vpop.f32.mrb[0].mxu0
  %v6004 = vadd.f32 %v5907, %v6003
  %v6005 = vpop.f32.mrb[0].mxu0
  %6006 = vdwg.mxu0
  %v6008 = vsel %vm321, %v5799, 0
  %v6011 = vsel %vm321, %v5800, 0
  %v6014 = vsel %vm321, %v5801, 0
  %v6017 = vsel %vm321, %v5802, 0
  %6019 = vmatprep.subr.mxu0 0.0
  %6020 = vmatpush1.msra.mxu0 %v5705
  %6021 = vmatprep.subr.mxu0 0.0
  %6022 = vmatpush1.msra.mxu0 %v5710
  %6023 = vmatprep.subr.mxu0 0.0
  %6024 = vmatpush1.msra.mxu0 0.0
  %6025 = vmatprep.subr.mxu0 0.0
  %6026 = vmatpush1.msra.mxu0 0.0
  %6027 = vmatprep.subr.mxu0 0.0
  %6028 = vmatpush1.msra.mxu0 0.0
  %6029 = vmatprep.subr.mxu0 0.0
  %6030 = vmatpush1.msra.mxu0 0.0
  %6031 = vmatprep.subr.mxu0 0.0
  %6032 = vmatpush1.msra.mxu0 0.0
  %6033 = vmatprep.subr.mxu0 0.0
  %6034 = vmatpush1.msra.mxu0 0.0
  %6035 = vmatprep.subr.mxu0 0.0
  %6036 = vmatpush1.msra.mxu0 0.0
  %6037 = vmatprep.subr.mxu0 0.0
  %6038 = vmatpush1.msra.mxu0 0.0
  %6039 = vmatprep.subr.mxu0 0.0
  %6040 = vmatpush1.msra.mxu0 0.0
  %6041 = vmatprep.subr.mxu0 0.0
  %6042 = vmatpush1.msra.mxu0 0.0
  %6043 = vmatprep.subr.mxu0 0.0
  %6044 = vmatpush1.msra.mxu0 0.0
  %6045 = vmatprep.subr.mxu0 0.0
  %6046 = vmatpush1.msra.mxu0 0.0
  %6047 = vmatprep.subr.mxu0 0.0
  %6048 = vmatpush1.msra.mxu0 0.0
  %6049 = vmatprep.subr.mxu0 0.0
  %6050 = vmatpush1.msra.mxu0 0.0
  %6051 = vmatprep.subr.mxu0 0.0
  %6052 = vmatpush1.msra.mxu0 0.0
  %6053 = vmatprep.subr.mxu0 0.0
  %6054 = vmatpush1.msra.mxu0 0.0
  %6055 = vmatprep.subr.mxu0 0.0
  %6056 = vmatpush1.msra.mxu0 0.0
  %6057 = vmatprep.subr.mxu0 0.0
  %6058 = vmatpush1.msra.mxu0 0.0
  %6059 = vmatprep.subr.mxu0 0.0
  %6060 = vmatpush1.msra.mxu0 0.0
  %6061 = vmatprep.subr.mxu0 0.0
  %6062 = vmatpush1.msra.mxu0 0.0
  %6063 = vmatprep.subr.mxu0 0.0
  %6064 = vmatpush1.msra.mxu0 0.0
  %6065 = vmatprep.subr.mxu0 0.0
  %6066 = vmatpush1.msra.mxu0 0.0
  %6067 = vmatprep.subr.mxu0 0.0
  %6068 = vmatpush1.msra.mxu0 0.0
  %6069 = vmatprep.subr.mxu0 0.0
  %6070 = vmatpush1.msra.mxu0 0.0
  %6071 = vmatprep.subr.mxu0 0.0
  %6072 = vmatpush1.msra.mxu0 0.0
  %6073 = vmatprep.subr.mxu0 0.0
  %6074 = vmatpush1.msra.mxu0 0.0
  %6075 = vmatprep.subr.mxu0 0.0
  %6076 = vmatpush1.msra.mxu0 0.0
  %6077 = vmatprep.subr.mxu0 0.0
  %6078 = vmatpush1.msra.mxu0 0.0
  %6079 = vmatprep.subr.mxu0 0.0
  %6080 = vmatpush1.msra.mxu0 0.0
  %6081 = vmatprep.subr.mxu0 0.0
  %6082 = vmatpush1.msra.mxu0 0.0
  %6083 = vmatprep.mubr.f32.mxu0 0.0
  %6084 = vmatmul.mubr.f32.gmra.mrb[0].mxu0 %v6008
  %v6085 = vpop.f32.mrb[0].mxu0
  %v6086 = vadd.f32 0.0, %v6085
  %v6087 = vpop.f32.mrb[0].mxu0
  %6088 = vmatprep.mubr.f32.mxu0 0.0
  %6089 = vmatmul.mubr.f32.gmra.mrb[0].mxu0 %v6011
  %v6090 = vpop.f32.mrb[0].mxu0
  %v6091 = vadd.f32 0.0, %v6090
  %v6092 = vpop.f32.mrb[0].mxu0
  %6093 = vmatprep.mubr.f32.mxu0 0.0
  %6094 = vmatmul.mubr.f32.gmra.mrb[0].mxu0 %v6014
  %v6095 = vpop.f32.mrb[0].mxu0
  %v6096 = vadd.f32 0.0, %v6095
  %v6097 = vpop.f32.mrb[0].mxu0
  %6098 = vmatprep.mubr.f32.mxu0 0.0
  %6099 = vmatmul.mubr.f32.gmra.mrb[0].mxu0 %v6017
  %v6100 = vpop.f32.mrb[0].mxu0
  %v6101 = vadd.f32 0.0, %v6100
  %v6102 = vpop.f32.mrb[0].mxu0
  %6103 = vdwg.mxu0
  %v6104 = vadd.f32 %v5989, %v6086
  %v6105 = vadd.f32 %v5994, %v6091
  %v6106 = vadd.f32 %v5999, %v6096
  %v6107 = vadd.f32 %v6004, %v6101
  %v6109 = vsel %vm321, %v5804, 0
  %v6112 = vsel %vm321, %v5805, 0
  %v6115 = vsel %vm321, %v5806, 0
  %v6118 = vsel %vm321, %v5807, 0
  %6120 = vmatprep.subr.mxu0 0.0
  %6121 = vmatpush1.msra.mxu0 %v5780
  %6122 = vmatprep.subr.mxu0 0.0
  %6123 = vmatpush1.msra.mxu0 %v5785
  %6124 = vmatprep.subr.mxu0 0.0
  %6125 = vmatpush1.msra.mxu0 0.0
  %6126 = vmatprep.subr.mxu0 0.0
  %6127 = vmatpush1.msra.mxu0 0.0
  %6128 = vmatprep.subr.mxu0 0.0
  %6129 = vmatpush1.msra.mxu0 0.0
  %6130 = vmatprep.subr.mxu0 0.0
  %6131 = vmatpush1.msra.mxu0 0.0
  %6132 = vmatprep.subr.mxu0 0.0
  %6133 = vmatpush1.msra.mxu0 0.0
  %6134 = vmatprep.subr.mxu0 0.0
  %6135 = vmatpush1.msra.mxu0 0.0
  %6136 = vmatprep.subr.mxu0 0.0
  %6137 = vmatpush1.msra.mxu0 0.0
  %6138 = vmatprep.subr.mxu0 0.0
  %6139 = vmatpush1.msra.mxu0 0.0
  %6140 = vmatprep.subr.mxu0 0.0
  %6141 = vmatpush1.msra.mxu0 0.0
  %6142 = vmatprep.subr.mxu0 0.0
  %6143 = vmatpush1.msra.mxu0 0.0
  %6144 = vmatprep.subr.mxu0 0.0
  %6145 = vmatpush1.msra.mxu0 0.0
  %6146 = vmatprep.subr.mxu0 0.0
  %6147 = vmatpush1.msra.mxu0 0.0
  %6148 = vmatprep.subr.mxu0 0.0
  %6149 = vmatpush1.msra.mxu0 0.0
  %6150 = vmatprep.subr.mxu0 0.0
  %6151 = vmatpush1.msra.mxu0 0.0
  %6152 = vmatprep.subr.mxu0 0.0
  %6153 = vmatpush1.msra.mxu0 0.0
  %6154 = vmatprep.subr.mxu0 0.0
  %6155 = vmatpush1.msra.mxu0 0.0
  %6156 = vmatprep.subr.mxu0 0.0
  %6157 = vmatpush1.msra.mxu0 0.0
  %6158 = vmatprep.subr.mxu0 0.0
  %6159 = vmatpush1.msra.mxu0 0.0
  %6160 = vmatprep.subr.mxu0 0.0
  %6161 = vmatpush1.msra.mxu0 0.0
  %6162 = vmatprep.subr.mxu0 0.0
  %6163 = vmatpush1.msra.mxu0 0.0
  %6164 = vmatprep.subr.mxu0 0.0
  %6165 = vmatpush1.msra.mxu0 0.0
  %6166 = vmatprep.subr.mxu0 0.0
  %6167 = vmatpush1.msra.mxu0 0.0
  %6168 = vmatprep.subr.mxu0 0.0
  %6169 = vmatpush1.msra.mxu0 0.0
  %6170 = vmatprep.subr.mxu0 0.0
  %6171 = vmatpush1.msra.mxu0 0.0
  %6172 = vmatprep.subr.mxu0 0.0
  %6173 = vmatpush1.msra.mxu0 0.0
  %6174 = vmatprep.subr.mxu0 0.0
  %6175 = vmatpush1.msra.mxu0 0.0
  %6176 = vmatprep.subr.mxu0 0.0
  %6177 = vmatpush1.msra.mxu0 0.0
  %6178 = vmatprep.subr.mxu0 0.0
  %6179 = vmatpush1.msra.mxu0 0.0
  %6180 = vmatprep.subr.mxu0 0.0
  %6181 = vmatpush1.msra.mxu0 0.0
  %6182 = vmatprep.subr.mxu0 0.0
  %6183 = vmatpush1.msra.mxu0 0.0
  %6184 = vmatprep.mubr.f32.mxu0 0.0
  %6185 = vmatmul.mubr.f32.gmra.mrb[0].mxu0 %v6109
  %v6186 = vpop.f32.mrb[0].mxu0
  %v6187 = vadd.f32 0.0, %v6186
  %v6188 = vpop.f32.mrb[0].mxu0
  %6189 = vmatprep.mubr.f32.mxu0 0.0
  %6190 = vmatmul.mubr.f32.gmra.mrb[0].mxu0 %v6112
  %v6191 = vpop.f32.mrb[0].mxu0
  %v6192 = vadd.f32 0.0, %v6191
  %v6193 = vpop.f32.mrb[0].mxu0
  %6194 = vmatprep.mubr.f32.mxu0 0.0
  %6195 = vmatmul.mubr.f32.gmra.mrb[0].mxu0 %v6115
  %v6196 = vpop.f32.mrb[0].mxu0
  %v6197 = vadd.f32 0.0, %v6196
  %v6198 = vpop.f32.mrb[0].mxu0
  %6199 = vmatprep.mubr.f32.mxu0 0.0
  %6200 = vmatmul.mubr.f32.gmra.mrb[0].mxu0 %v6118
  %v6201 = vpop.f32.mrb[0].mxu0
  %v6202 = vadd.f32 0.0, %v6201
  %v6203 = vpop.f32.mrb[0].mxu0
  %6204 = vdwg.mxu0
  %v6205 = vadd.f32 %v6104, %v6187
  %v6206 = vadd.f32 %v6105, %v6192
  %v6207 = vadd.f32 %v6106, %v6197
  %v6208 = vadd.f32 %v6107, %v6202
  %6210 = vset.pattern.permute.xlu0 0
  %6211 = vperm.xlu0 %6210, %v5809
  %v6212 = vpop.permute.xlu0 %6211
  %6215 = vset.pattern.permute.xlu0 0
  %6216 = vperm.xlu0 %6215, %v5810
  %v6217 = vpop.permute.xlu0 %6216
  %6220 = vset.pattern.permute.xlu0 0
  %6221 = vperm.xlu0 %6220, %v5811
  %v6222 = vpop.permute.xlu0 %6221
  %6225 = vset.pattern.permute.xlu0 0
  %6226 = vperm.xlu0 %6225, %v5812
  %v6227 = vpop.permute.xlu0 %6226
  %v6229 = vadd.f32 %v6205, %v6212
  %v6230 = vadd.f32 %v6206, %v6217
  %v6231 = vadd.f32 %v6207, %v6222
  %v6232 = vadd.f32 %v6208, %v6227
  %v6233 = vmax.f32 %v6229, 0.0
  %v6234 = vmax.f32 %v6230, 0.0
  %v6235 = vmax.f32 %v6231, 0.0
  %v6236 = vmax.f32 %v6232, 0.0
  %6237 = vmatprep.subr.mxu0 0.0
  %6238 = vmatpush1.msra.mxu0 %v68
  %6239 = vmatprep.subr.mxu0 0.0
  %6240 = vmatpush1.msra.mxu0 %v69
  %6241 = vmatprep.subr.mxu0 0.0
  %6242 = vmatpush1.msra.mxu0 %v70
  %6243 = vmatprep.subr.mxu0 0.0
  %6244 = vmatpush1.msra.mxu0 %v71
  %6245 = vmatprep.subr.mxu0 0.0
  %6246 = vmatpush1.msra.mxu0 %v72
  %6247 = vmatprep.subr.mxu0 0.0
  %6248 = vmatpush1.msra.mxu0 %v73
  %6249 = vmatprep.subr.mxu0 0.0
  %6250 = vmatpush1.msra.mxu0 %v74
  %6251 = vmatprep.subr.mxu0 0.0
  %6252 = vmatpush1.msra.mxu0 %v75
  %6253 = vmatprep.subr.mxu0 0.0
  %6254 = vmatpush1.msra.mxu0 %v76
  %6255 = vmatprep.subr.mxu0 0.0
  %6256 = vmatpush1.msra.mxu0 %v77
  %6257 = vmatprep.subr.mxu0 0.0
  %6258 = vmatpush1.msra.mxu0 %v78
  %6259 = vmatprep.subr.mxu0 0.0
  %6260 = vmatpush1.msra.mxu0 %v79
  %6261 = vmatprep.subr.mxu0 0.0
  %6262 = vmatpush1.msra.mxu0 %v80
  %6263 = vmatprep.subr.mxu0 0.0
  %6264 = vmatpush1.msra.mxu0 %v81
  %6265 = vmatprep.subr.mxu0 0.0
  %6266 = vmatpush1.msra.mxu0 %v82
  %6267 = vmatprep.subr.mxu0 0.0
  %6268 = vmatpush1.msra.mxu0 %v83
  %6269 = vmatprep.subr.mxu0 0.0
  %6270 = vmatpush1.msra.mxu0 0.0
  %6271 = vmatprep.subr.mxu0 0.0
  %6272 = vmatpush1.msra.mxu0 0.0
  %6273 = vmatprep.subr.mxu0 0.0
  %6274 = vmatpush1.msra.mxu0 0.0
  %6275 = vmatprep.subr.mxu0 0.0
  %6276 = vmatpush1.msra.mxu0 0.0
  %6277 = vmatprep.subr.mxu0 0.0
  %6278 = vmatpush1.msra.mxu0 0.0
  %6279 = vmatprep.subr.mxu0 0.0
  %6280 = vmatpush1.msra.mxu0 0.0
  %6281 = vmatprep.subr.mxu0 0.0
  %6282 = vmatpush1.msra.mxu0 0.0
  %6283 = vmatprep.subr.mxu0 0.0
  %6284 = vmatpush1.msra.mxu0 0.0
  %6285 = vmatprep.subr.mxu0 0.0
  %6286 = vmatpush1.msra.mxu0 0.0
  %6287 = vmatprep.subr.mxu0 0.0
  %6288 = vmatpush1.msra.mxu0 0.0
  %6289 = vmatprep.subr.mxu0 0.0
  %6290 = vmatpush1.msra.mxu0 0.0
  %6291 = vmatprep.subr.mxu0 0.0
  %6292 = vmatpush1.msra.mxu0 0.0
  %6293 = vmatprep.subr.mxu0 0.0
  %6294 = vmatpush1.msra.mxu0 0.0
  %6295 = vmatprep.subr.mxu0 0.0
  %6296 = vmatpush1.msra.mxu0 0.0
  %6297 = vmatprep.subr.mxu0 0.0
  %6298 = vmatpush1.msra.mxu0 0.0
  %6299 = vmatprep.subr.mxu0 0.0
  %6300 = vmatpush1.msra.mxu0 0.0
  %6301 = vmatprep.mubr.f32.mxu0 0.0
  %6302 = vmatmul.mubr.f32.gmra.mrb[0].mxu0 %v6235
  %v6303 = vpop.f32.mrb[0].mxu0
  %v6304 = vadd.f32 0.0, %v6303
  %v6305 = vpop.f32.mrb[0].mxu0
  %6306 = vmatprep.mubr.f32.mxu0 0.0
  %6307 = vmatmul.mubr.f32.gmra.mrb[0].mxu0 %v6236
  %v6308 = vpop.f32.mrb[0].mxu0
  %v6309 = vadd.f32 0.0, %v6308
  %v6310 = vpop.f32.mrb[0].mxu0
  %6311 = vdwg.mxu0
  %s6312 = scalar_lea.vmem %s17, 96
  %v6313 = vld [vmem:[%s6312] sm:$0xff]
  %v6314 = vld [vmem:[%s6312 + $0x8] sm:$0xff]
  %v6315 = vld [vmem:[%s6312 + $0x10] sm:$0xff]
  %v6316 = vld [vmem:[%s6312 + $0x18] sm:$0xff]
  %s6317 = scalar_lea.vmem %s18, 96
  %v6318 = vld [vmem:[%s6317] sm:$0xff]
  %v6319 = vld [vmem:[%s6317 + $0x8] sm:$0xff]
  %v6320 = vld [vmem:[%s6317 + $0x10] sm:$0xff]
  %v6321 = vld [vmem:[%s6317 + $0x18] sm:$0xff]
  %s6322 = scalar_lea.vmem %s19, 96
  %v6323 = vld [vmem:[%s6322] sm:$0xff]
  %v6324 = vld [vmem:[%s6322 + $0x8] sm:$0xff]
  %v6325 = vld [vmem:[%s6322 + $0x10] sm:$0xff]
  %v6326 = vld [vmem:[%s6322 + $0x18] sm:$0xff]
  %v6328 = vsel %vm321, %v6318, 0
  %v6331 = vsel %vm321, %v6319, 0
  %v6334 = vsel %vm321, %v6320, 0
  %v6337 = vsel %vm321, %v6321, 0
  %6339 = vmatprep.subr.mxu0 0.0
  %6340 = vmatpush1.msra.mxu0 %v6304
  %6341 = vmatprep.subr.mxu0 0.0
  %6342 = vmatpush1.msra.mxu0 %v6309
  %6343 = vmatprep.subr.mxu0 0.0
  %6344 = vmatpush1.msra.mxu0 0.0
  %6345 = vmatprep.subr.mxu0 0.0
  %6346 = vmatpush1.msra.mxu0 0.0
  %6347 = vmatprep.subr.mxu0 0.0
  %6348 = vmatpush1.msra.mxu0 0.0
  %6349 = vmatprep.subr.mxu0 0.0
  %6350 = vmatpush1.msra.mxu0 0.0
  %6351 = vmatprep.subr.mxu0 0.0
  %6352 = vmatpush1.msra.mxu0 0.0
  %6353 = vmatprep.subr.mxu0 0.0
  %6354 = vmatpush1.msra.mxu0 0.0
  %6355 = vmatprep.subr.mxu0 0.0
  %6356 = vmatpush1.msra.mxu0 0.0
  %6357 = vmatprep.subr.mxu0 0.0
  %6358 = vmatpush1.msra.mxu0 0.0
  %6359 = vmatprep.subr.mxu0 0.0
  %6360 = vmatpush1.msra.mxu0 0.0
  %6361 = vmatprep.subr.mxu0 0.0
  %6362 = vmatpush1.msra.mxu0 0.0
  %6363 = vmatprep.subr.mxu0 0.0
  %6364 = vmatpush1.msra.mxu0 0.0
  %6365 = vmatprep.subr.mxu0 0.0
  %6366 = vmatpush1.msra.mxu0 0.0
  %6367 = vmatprep.subr.mxu0 0.0
  %6368 = vmatpush1.msra.mxu0 0.0
  %6369 = vmatprep.subr.mxu0 0.0
  %6370 = vmatpush1.msra.mxu0 0.0
  %6371 = vmatprep.subr.mxu0 0.0
  %6372 = vmatpush1.msra.mxu0 0.0
  %6373 = vmatprep.subr.mxu0 0.0
  %6374 = vmatpush1.msra.mxu0 0.0
  %6375 = vmatprep.subr.mxu0 0.0
  %6376 = vmatpush1.msra.mxu0 0.0
  %6377 = vmatprep.subr.mxu0 0.0
  %6378 = vmatpush1.msra.mxu0 0.0
  %6379 = vmatprep.subr.mxu0 0.0
  %6380 = vmatpush1.msra.mxu0 0.0
  %6381 = vmatprep.subr.mxu0 0.0
  %6382 = vmatpush1.msra.mxu0 0.0
  %6383 = vmatprep.subr.mxu0 0.0
  %6384 = vmatpush1.msra.mxu0 0.0
  %6385 = vmatprep.subr.mxu0 0.0
  %6386 = vmatpush1.msra.mxu0 0.0
  %6387 = vmatprep.subr.mxu0 0.0
  %6388 = vmatpush1.msra.mxu0 0.0
  %6389 = vmatprep.subr.mxu0 0.0
  %6390 = vmatpush1.msra.mxu0 0.0
  %6391 = vmatprep.subr.mxu0 0.0
  %6392 = vmatpush1.msra.mxu0 0.0
  %6393 = vmatprep.subr.mxu0 0.0
  %6394 = vmatpush1.msra.mxu0 0.0
  %6395 = vmatprep.subr.mxu0 0.0
  %6396 = vmatpush1.msra.mxu0 0.0
  %6397 = vmatprep.subr.mxu0 0.0
  %6398 = vmatpush1.msra.mxu0 0.0
  %6399 = vmatprep.subr.mxu0 0.0
  %6400 = vmatpush1.msra.mxu0 0.0
  %6401 = vmatprep.subr.mxu0 0.0
  %6402 = vmatpush1.msra.mxu0 0.0
  %6403 = vmatprep.mubr.f32.mxu0 0.0
  %6404 = vmatmul.mubr.f32.gmra.mrb[0].mxu0 %v6328
  %v6405 = vpop.f32.mrb[0].mxu0
  %v6406 = vadd.f32 0.0, %v6405
  %v6407 = vpop.f32.mrb[0].mxu0
  %6408 = vmatprep.mubr.f32.mxu0 0.0
  %6409 = vmatmul.mubr.f32.gmra.mrb[0].mxu0 %v6331
  %v6410 = vpop.f32.mrb[0].mxu0
  %v6411 = vadd.f32 0.0, %v6410
  %v6412 = vpop.f32.mrb[0].mxu0
  %6413 = vmatprep.mubr.f32.mxu0 0.0
  %6414 = vmatmul.mubr.f32.gmra.mrb[0].mxu0 %v6334
  %v6415 = vpop.f32.mrb[0].mxu0
  %v6416 = vadd.f32 0.0, %v6415
  %v6417 = vpop.f32.mrb[0].mxu0
  %6418 = vmatprep.mubr.f32.mxu0 0.0
  %6419 = vmatmul.mubr.f32.gmra.mrb[0].mxu0 %v6337
  %v6420 = vpop.f32.mrb[0].mxu0
  %v6421 = vadd.f32 0.0, %v6420
  %v6422 = vpop.f32.mrb[0].mxu0
  %6423 = vdwg.mxu0
  %v6425 = vsel %vm321, %v6313, 0
  %v6428 = vsel %vm321, %v6314, 0
  %v6431 = vsel %vm321, %v6315, 0
  %v6434 = vsel %vm321, %v6316, 0
  %6436 = vmatprep.subr.mxu0 0.0
  %6437 = vmatpush1.msra.mxu0 %v6233
  %6438 = vmatprep.subr.mxu0 0.0
  %6439 = vmatpush1.msra.mxu0 %v6234
  %6440 = vmatprep.subr.mxu0 0.0
  %6441 = vmatpush1.msra.mxu0 0.0
  %6442 = vmatprep.subr.mxu0 0.0
  %6443 = vmatpush1.msra.mxu0 0.0
  %6444 = vmatprep.subr.mxu0 0.0
  %6445 = vmatpush1.msra.mxu0 0.0
  %6446 = vmatprep.subr.mxu0 0.0
  %6447 = vmatpush1.msra.mxu0 0.0
  %6448 = vmatprep.subr.mxu0 0.0
  %6449 = vmatpush1.msra.mxu0 0.0
  %6450 = vmatprep.subr.mxu0 0.0
  %6451 = vmatpush1.msra.mxu0 0.0
  %6452 = vmatprep.subr.mxu0 0.0
  %6453 = vmatpush1.msra.mxu0 0.0
  %6454 = vmatprep.subr.mxu0 0.0
  %6455 = vmatpush1.msra.mxu0 0.0
  %6456 = vmatprep.subr.mxu0 0.0
  %6457 = vmatpush1.msra.mxu0 0.0
  %6458 = vmatprep.subr.mxu0 0.0
  %6459 = vmatpush1.msra.mxu0 0.0
  %6460 = vmatprep.subr.mxu0 0.0
  %6461 = vmatpush1.msra.mxu0 0.0
  %6462 = vmatprep.subr.mxu0 0.0
  %6463 = vmatpush1.msra.mxu0 0.0
  %6464 = vmatprep.subr.mxu0 0.0
  %6465 = vmatpush1.msra.mxu0 0.0
  %6466 = vmatprep.subr.mxu0 0.0
  %6467 = vmatpush1.msra.mxu0 0.0
  %6468 = vmatprep.subr.mxu0 0.0
  %6469 = vmatpush1.msra.mxu0 0.0
  %6470 = vmatprep.subr.mxu0 0.0
  %6471 = vmatpush1.msra.mxu0 0.0
  %6472 = vmatprep.subr.mxu0 0.0
  %6473 = vmatpush1.msra.mxu0 0.0
  %6474 = vmatprep.subr.mxu0 0.0
  %6475 = vmatpush1.msra.mxu0 0.0
  %6476 = vmatprep.subr.mxu0 0.0
  %6477 = vmatpush1.msra.mxu0 0.0
  %6478 = vmatprep.subr.mxu0 0.0
  %6479 = vmatpush1.msra.mxu0 0.0
  %6480 = vmatprep.subr.mxu0 0.0
  %6481 = vmatpush1.msra.mxu0 0.0
  %6482 = vmatprep.subr.mxu0 0.0
  %6483 = vmatpush1.msra.mxu0 0.0
  %6484 = vmatprep.subr.mxu0 0.0
  %6485 = vmatpush1.msra.mxu0 0.0
  %6486 = vmatprep.subr.mxu0 0.0
  %6487 = vmatpush1.msra.mxu0 0.0
  %6488 = vmatprep.subr.mxu0 0.0
  %6489 = vmatpush1.msra.mxu0 0.0
  %6490 = vmatprep.subr.mxu0 0.0
  %6491 = vmatpush1.msra.mxu0 0.0
  %6492 = vmatprep.subr.mxu0 0.0
  %6493 = vmatpush1.msra.mxu0 0.0
  %6494 = vmatprep.subr.mxu0 0.0
  %6495 = vmatpush1.msra.mxu0 0.0
  %6496 = vmatprep.subr.mxu0 0.0
  %6497 = vmatpush1.msra.mxu0 0.0
  %6498 = vmatprep.subr.mxu0 0.0
  %6499 = vmatpush1.msra.mxu0 0.0
  %6500 = vmatprep.mubr.f32.mxu0 0.0
  %6501 = vmatmul.mubr.f32.gmra.mrb[0].mxu0 %v6425
  %v6502 = vpop.f32.mrb[0].mxu0
  %v6503 = vadd.f32 %v6406, %v6502
  %v6504 = vpop.f32.mrb[0].mxu0
  %6505 = vmatprep.mubr.f32.mxu0 0.0
  %6506 = vmatmul.mubr.f32.gmra.mrb[0].mxu0 %v6428
  %v6507 = vpop.f32.mrb[0].mxu0
  %v6508 = vadd.f32 %v6411, %v6507
  %v6509 = vpop.f32.mrb[0].mxu0
  %6510 = vmatprep.mubr.f32.mxu0 0.0
  %6511 = vmatmul.mubr.f32.gmra.mrb[0].mxu0 %v6431
  %v6512 = vpop.f32.mrb[0].mxu0
  %v6513 = vadd.f32 %v6416, %v6512
  %v6514 = vpop.f32.mrb[0].mxu0
  %6515 = vmatprep.mubr.f32.mxu0 0.0
  %6516 = vmatmul.mubr.f32.gmra.mrb[0].mxu0 %v6434
  %v6517 = vpop.f32.mrb[0].mxu0
  %v6518 = vadd.f32 %v6421, %v6517
  %v6519 = vpop.f32.mrb[0].mxu0
  %6520 = vdwg.mxu0
  %6522 = vset.pattern.permute.xlu0 0
  %6523 = vperm.xlu0 %6522, %v6323
  %v6524 = vpop.permute.xlu0 %6523
  %6527 = vset.pattern.permute.xlu0 0
  %6528 = vperm.xlu0 %6527, %v6324
  %v6529 = vpop.permute.xlu0 %6528
  %6532 = vset.pattern.permute.xlu0 0
  %6533 = vperm.xlu0 %6532, %v6325
  %v6534 = vpop.permute.xlu0 %6533
  %6537 = vset.pattern.permute.xlu0 0
  %6538 = vperm.xlu0 %6537, %v6326
  %v6539 = vpop.permute.xlu0 %6538
  %v6541 = vadd.f32 %v6503, %v6524
  %v6542 = vadd.f32 %v6508, %v6529
  %v6543 = vadd.f32 %v6513, %v6534
  %v6544 = vadd.f32 %v6518, %v6539
  %v6545 = vmax.f32 %v6541, 0.0
  %v6546 = vmax.f32 %v6542, 0.0
  %v6547 = vmax.f32 %v6543, 0.0
  %v6548 = vmax.f32 %v6544, 0.0
  %6549 = vmatprep.subr.mxu0 0.0
  %6550 = vmatpush1.msra.mxu0 %v68
  %6551 = vmatprep.subr.mxu0 0.0
  %6552 = vmatpush1.msra.mxu0 %v69
  %6553 = vmatprep.subr.mxu0 0.0
  %6554 = vmatpush1.msra.mxu0 %v70
  %6555 = vmatprep.subr.mxu0 0.0
  %6556 = vmatpush1.msra.mxu0 %v71
  %6557 = vmatprep.subr.mxu0 0.0
  %6558 = vmatpush1.msra.mxu0 %v72
  %6559 = vmatprep.subr.mxu0 0.0
  %6560 = vmatpush1.msra.mxu0 %v73
  %6561 = vmatprep.subr.mxu0 0.0
  %6562 = vmatpush1.msra.mxu0 %v74
  %6563 = vmatprep.subr.mxu0 0.0
  %6564 = vmatpush1.msra.mxu0 %v75
  %6565 = vmatprep.subr.mxu0 0.0
  %6566 = vmatpush1.msra.mxu0 %v76
  %6567 = vmatprep.subr.mxu0 0.0
  %6568 = vmatpush1.msra.mxu0 %v77
  %6569 = vmatprep.subr.mxu0 0.0
  %6570 = vmatpush1.msra.mxu0 %v78
  %6571 = vmatprep.subr.mxu0 0.0
  %6572 = vmatpush1.msra.mxu0 %v79
  %6573 = vmatprep.subr.mxu0 0.0
  %6574 = vmatpush1.msra.mxu0 %v80
  %6575 = vmatprep.subr.mxu0 0.0
  %6576 = vmatpush1.msra.mxu0 %v81
  %6577 = vmatprep.subr.mxu0 0.0
  %6578 = vmatpush1.msra.mxu0 %v82
  %6579 = vmatprep.subr.mxu0 0.0
  %6580 = vmatpush1.msra.mxu0 %v83
  %6581 = vmatprep.subr.mxu0 0.0
  %6582 = vmatpush1.msra.mxu0 0.0
  %6583 = vmatprep.subr.mxu0 0.0
  %6584 = vmatpush1.msra.mxu0 0.0
  %6585 = vmatprep.subr.mxu0 0.0
  %6586 = vmatpush1.msra.mxu0 0.0
  %6587 = vmatprep.subr.mxu0 0.0
  %6588 = vmatpush1.msra.mxu0 0.0
  %6589 = vmatprep.subr.mxu0 0.0
  %6590 = vmatpush1.msra.mxu0 0.0
  %6591 = vmatprep.subr.mxu0 0.0
  %6592 = vmatpush1.msra.mxu0 0.0
  %6593 = vmatprep.subr.mxu0 0.0
  %6594 = vmatpush1.msra.mxu0 0.0
  %6595 = vmatprep.subr.mxu0 0.0
  %6596 = vmatpush1.msra.mxu0 0.0
  %6597 = vmatprep.subr.mxu0 0.0
  %6598 = vmatpush1.msra.mxu0 0.0
  %6599 = vmatprep.subr.mxu0 0.0
  %6600 = vmatpush1.msra.mxu0 0.0
  %6601 = vmatprep.subr.mxu0 0.0
  %6602 = vmatpush1.msra.mxu0 0.0
  %6603 = vmatprep.subr.mxu0 0.0
  %6604 = vmatpush1.msra.mxu0 0.0
  %6605 = vmatprep.subr.mxu0 0.0
  %6606 = vmatpush1.msra.mxu0 0.0
  %6607 = vmatprep.subr.mxu0 0.0
  %6608 = vmatpush1.msra.mxu0 0.0
  %6609 = vmatprep.subr.mxu0 0.0
  %6610 = vmatpush1.msra.mxu0 0.0
  %6611 = vmatprep.subr.mxu0 0.0
  %6612 = vmatpush1.msra.mxu0 0.0
  %6613 = vmatprep.mubr.f32.mxu0 0.0
  %6614 = vmatmul.mubr.f32.gmra.mrb[0].mxu0 %v6547
  %v6615 = vpop.f32.mrb[0].mxu0
  %v6616 = vadd.f32 0.0, %v6615
  %v6617 = vpop.f32.mrb[0].mxu0
  %6618 = vmatprep.mubr.f32.mxu0 0.0
  %6619 = vmatmul.mubr.f32.gmra.mrb[0].mxu0 %v6548
  %v6620 = vpop.f32.mrb[0].mxu0
  %v6621 = vadd.f32 0.0, %v6620
  %v6622 = vpop.f32.mrb[0].mxu0
  %6623 = vdwg.mxu0
  %s6624 = scalar_lea.vmem %s4, 128
  %v6625 = vld [vmem:[%s6624] sm:$0xff]
  %v6626 = vld [vmem:[%s6624 + $0x8] sm:$0xff]
  %v6627 = vld [vmem:[%s6624 + $0x10] sm:$0xff]
  %v6628 = vld [vmem:[%s6624 + $0x18] sm:$0xff]
  %s6629 = scalar_lea.vmem %s5, 128
  %v6630 = vld [vmem:[%s6629] sm:$0xff]
  %v6631 = vld [vmem:[%s6629 + $0x8] sm:$0xff]
  %v6632 = vld [vmem:[%s6629 + $0x10] sm:$0xff]
  %v6633 = vld [vmem:[%s6629 + $0x18] sm:$0xff]
  %s6634 = scalar_lea.vmem %s6, 128
  %v6635 = vld [vmem:[%s6634] sm:$0xff]
  %v6636 = vld [vmem:[%s6634 + $0x8] sm:$0xff]
  %v6637 = vld [vmem:[%s6634 + $0x10] sm:$0xff]
  %v6638 = vld [vmem:[%s6634 + $0x18] sm:$0xff]
  %s6639 = scalar_lea.vmem %s7, 128
  %v6640 = vld [vmem:[%s6639] sm:$0xff]
  %v6641 = vld [vmem:[%s6639 + $0x8] sm:$0xff]
  %v6642 = vld [vmem:[%s6639 + $0x10] sm:$0xff]
  %v6643 = vld [vmem:[%s6639 + $0x18] sm:$0xff]
  %v6645 = vsel %vm321, %v6630, 0
  %v6648 = vsel %vm321, %v6631, 0
  %v6651 = vsel %vm321, %v6632, 0
  %v6654 = vsel %vm321, %v6633, 0
  %6656 = vmatprep.subr.mxu0 0.0
  %6657 = vmatpush1.msra.mxu0 %v6545
  %6658 = vmatprep.subr.mxu0 0.0
  %6659 = vmatpush1.msra.mxu0 %v6546
  %6660 = vmatprep.subr.mxu0 0.0
  %6661 = vmatpush1.msra.mxu0 0.0
  %6662 = vmatprep.subr.mxu0 0.0
  %6663 = vmatpush1.msra.mxu0 0.0
  %6664 = vmatprep.subr.mxu0 0.0
  %6665 = vmatpush1.msra.mxu0 0.0
  %6666 = vmatprep.subr.mxu0 0.0
  %6667 = vmatpush1.msra.mxu0 0.0
  %6668 = vmatprep.subr.mxu0 0.0
  %6669 = vmatpush1.msra.mxu0 0.0
  %6670 = vmatprep.subr.mxu0 0.0
  %6671 = vmatpush1.msra.mxu0 0.0
  %6672 = vmatprep.subr.mxu0 0.0
  %6673 = vmatpush1.msra.mxu0 0.0
  %6674 = vmatprep.subr.mxu0 0.0
  %6675 = vmatpush1.msra.mxu0 0.0
  %6676 = vmatprep.subr.mxu0 0.0
  %6677 = vmatpush1.msra.mxu0 0.0
  %6678 = vmatprep.subr.mxu0 0.0
  %6679 = vmatpush1.msra.mxu0 0.0
  %6680 = vmatprep.subr.mxu0 0.0
  %6681 = vmatpush1.msra.mxu0 0.0
  %6682 = vmatprep.subr.mxu0 0.0
  %6683 = vmatpush1.msra.mxu0 0.0
  %6684 = vmatprep.subr.mxu0 0.0
  %6685 = vmatpush1.msra.mxu0 0.0
  %6686 = vmatprep.subr.mxu0 0.0
  %6687 = vmatpush1.msra.mxu0 0.0
  %6688 = vmatprep.subr.mxu0 0.0
  %6689 = vmatpush1.msra.mxu0 0.0
  %6690 = vmatprep.subr.mxu0 0.0
  %6691 = vmatpush1.msra.mxu0 0.0
  %6692 = vmatprep.subr.mxu0 0.0
  %6693 = vmatpush1.msra.mxu0 0.0
  %6694 = vmatprep.subr.mxu0 0.0
  %6695 = vmatpush1.msra.mxu0 0.0
  %6696 = vmatprep.subr.mxu0 0.0
  %6697 = vmatpush1.msra.mxu0 0.0
  %6698 = vmatprep.subr.mxu0 0.0
  %6699 = vmatpush1.msra.mxu0 0.0
  %6700 = vmatprep.subr.mxu0 0.0
  %6701 = vmatpush1.msra.mxu0 0.0
  %6702 = vmatprep.subr.mxu0 0.0
  %6703 = vmatpush1.msra.mxu0 0.0
  %6704 = vmatprep.subr.mxu0 0.0
  %6705 = vmatpush1.msra.mxu0 0.0
  %6706 = vmatprep.subr.mxu0 0.0
  %6707 = vmatpush1.msra.mxu0 0.0
  %6708 = vmatprep.subr.mxu0 0.0
  %6709 = vmatpush1.msra.mxu0 0.0
  %6710 = vmatprep.subr.mxu0 0.0
  %6711 = vmatpush1.msra.mxu0 0.0
  %6712 = vmatprep.subr.mxu0 0.0
  %6713 = vmatpush1.msra.mxu0 0.0
  %6714 = vmatprep.subr.mxu0 0.0
  %6715 = vmatpush1.msra.mxu0 0.0
  %6716 = vmatprep.subr.mxu0 0.0
  %6717 = vmatpush1.msra.mxu0 0.0
  %6718 = vmatprep.subr.mxu0 0.0
  %6719 = vmatpush1.msra.mxu0 0.0
  %6720 = vmatprep.mubr.f32.mxu0 0.0
  %6721 = vmatmul.mubr.f32.gmra.mrb[0].mxu0 %v6645
  %v6722 = vpop.f32.mrb[0].mxu0
  %v6723 = vadd.f32 0.0, %v6722
  %v6724 = vpop.f32.mrb[0].mxu0
  %6725 = vmatprep.mubr.f32.mxu0 0.0
  %6726 = vmatmul.mubr.f32.gmra.mrb[0].mxu0 %v6648
  %v6727 = vpop.f32.mrb[0].mxu0
  %v6728 = vadd.f32 0.0, %v6727
  %v6729 = vpop.f32.mrb[0].mxu0
  %6730 = vmatprep.mubr.f32.mxu0 0.0
  %6731 = vmatmul.mubr.f32.gmra.mrb[0].mxu0 %v6651
  %v6732 = vpop.f32.mrb[0].mxu0
  %v6733 = vadd.f32 0.0, %v6732
  %v6734 = vpop.f32.mrb[0].mxu0
  %6735 = vmatprep.mubr.f32.mxu0 0.0
  %6736 = vmatmul.mubr.f32.gmra.mrb[0].mxu0 %v6654
  %v6737 = vpop.f32.mrb[0].mxu0
  %v6738 = vadd.f32 0.0, %v6737
  %v6739 = vpop.f32.mrb[0].mxu0
  %6740 = vdwg.mxu0
  %v6742 = vsel %vm128, %v6625, 0
  %v6745 = vsel %vm128, %v6626, 0
  %v6748 = vsel %vm128, %v6627, 0
  %v6751 = vsel %vm128, %v6628, 0
  %6753 = vmatprep.subr.mxu0 0.0
  %6754 = vmatpush1.msra.mxu0 %v143
  %6755 = vmatprep.subr.mxu0 0.0
  %6756 = vmatpush1.msra.mxu0 0.0
  %6757 = vmatprep.subr.mxu0 0.0
  %6758 = vmatpush1.msra.mxu0 0.0
  %6759 = vmatprep.subr.mxu0 0.0
  %6760 = vmatpush1.msra.mxu0 0.0
  %6761 = vmatprep.subr.mxu0 0.0
  %6762 = vmatpush1.msra.mxu0 0.0
  %6763 = vmatprep.subr.mxu0 0.0
  %6764 = vmatpush1.msra.mxu0 0.0
  %6765 = vmatprep.subr.mxu0 0.0
  %6766 = vmatpush1.msra.mxu0 0.0
  %6767 = vmatprep.subr.mxu0 0.0
  %6768 = vmatpush1.msra.mxu0 0.0
  %6769 = vmatprep.subr.mxu0 0.0
  %6770 = vmatpush1.msra.mxu0 0.0
  %6771 = vmatprep.subr.mxu0 0.0
  %6772 = vmatpush1.msra.mxu0 0.0
  %6773 = vmatprep.subr.mxu0 0.0
  %6774 = vmatpush1.msra.mxu0 0.0
  %6775 = vmatprep.subr.mxu0 0.0
  %6776 = vmatpush1.msra.mxu0 0.0
  %6777 = vmatprep.subr.mxu0 0.0
  %6778 = vmatpush1.msra.mxu0 0.0
  %6779 = vmatprep.subr.mxu0 0.0
  %6780 = vmatpush1.msra.mxu0 0.0
  %6781 = vmatprep.subr.mxu0 0.0
  %6782 = vmatpush1.msra.mxu0 0.0
  %6783 = vmatprep.subr.mxu0 0.0
  %6784 = vmatpush1.msra.mxu0 0.0
  %6785 = vmatprep.subr.mxu0 0.0
  %6786 = vmatpush1.msra.mxu0 0.0
  %6787 = vmatprep.subr.mxu0 0.0
  %6788 = vmatpush1.msra.mxu0 0.0
  %6789 = vmatprep.subr.mxu0 0.0
  %6790 = vmatpush1.msra.mxu0 0.0
  %6791 = vmatprep.subr.mxu0 0.0
  %6792 = vmatpush1.msra.mxu0 0.0
  %6793 = vmatprep.subr.mxu0 0.0
  %6794 = vmatpush1.msra.mxu0 0.0
  %6795 = vmatprep.subr.mxu0 0.0
  %6796 = vmatpush1.msra.mxu0 0.0
  %6797 = vmatprep.subr.mxu0 0.0
  %6798 = vmatpush1.msra.mxu0 0.0
  %6799 = vmatprep.subr.mxu0 0.0
  %6800 = vmatpush1.msra.mxu0 0.0
  %6801 = vmatprep.subr.mxu0 0.0
  %6802 = vmatpush1.msra.mxu0 0.0
  %6803 = vmatprep.subr.mxu0 0.0
  %6804 = vmatpush1.msra.mxu0 0.0
  %6805 = vmatprep.subr.mxu0 0.0
  %6806 = vmatpush1.msra.mxu0 0.0
  %6807 = vmatprep.subr.mxu0 0.0
  %6808 = vmatpush1.msra.mxu0 0.0
  %6809 = vmatprep.subr.mxu0 0.0
  %6810 = vmatpush1.msra.mxu0 0.0
  %6811 = vmatprep.subr.mxu0 0.0
  %6812 = vmatpush1.msra.mxu0 0.0
  %6813 = vmatprep.subr.mxu0 0.0
  %6814 = vmatpush1.msra.mxu0 0.0
  %6815 = vmatprep.subr.mxu0 0.0
  %6816 = vmatpush1.msra.mxu0 0.0
  %6817 = vmatprep.mubr.f32.mxu0 0.0
  %6818 = vmatmul.mubr.f32.gmra.mrb[0].mxu0 %v6742
  %v6819 = vpop.f32.mrb[0].mxu0
  %v6820 = vadd.f32 %v6723, %v6819
  %v6821 = vpop.f32.mrb[0].mxu0
  %6822 = vmatprep.mubr.f32.mxu0 0.0
  %6823 = vmatmul.mubr.f32.gmra.mrb[0].mxu0 %v6745
  %v6824 = vpop.f32.mrb[0].mxu0
  %v6825 = vadd.f32 %v6728, %v6824
  %v6826 = vpop.f32.mrb[0].mxu0
  %6827 = vmatprep.mubr.f32.mxu0 0.0
  %6828 = vmatmul.mubr.f32.gmra.mrb[0].mxu0 %v6748
  %v6829 = vpop.f32.mrb[0].mxu0
  %v6830 = vadd.f32 %v6733, %v6829
  %v6831 = vpop.f32.mrb[0].mxu0
  %6832 = vmatprep.mubr.f32.mxu0 0.0
  %6833 = vmatmul.mubr.f32.gmra.mrb[0].mxu0 %v6751
  %v6834 = vpop.f32.mrb[0].mxu0
  %v6835 = vadd.f32 %v6738, %v6834
  %v6836 = vpop.f32.mrb[0].mxu0
  %6837 = vdwg.mxu0
  %v6839 = vsel %vm321, %v6635, 0
  %v6842 = vsel %vm321, %v6636, 0
  %v6845 = vsel %vm321, %v6637, 0
  %v6848 = vsel %vm321, %v6638, 0
  %6850 = vmatprep.subr.mxu0 0.0
  %6851 = vmatpush1.msra.mxu0 %v6616
  %6852 = vmatprep.subr.mxu0 0.0
  %6853 = vmatpush1.msra.mxu0 %v6621
  %6854 = vmatprep.subr.mxu0 0.0
  %6855 = vmatpush1.msra.mxu0 0.0
  %6856 = vmatprep.subr.mxu0 0.0
  %6857 = vmatpush1.msra.mxu0 0.0
  %6858 = vmatprep.subr.mxu0 0.0
  %6859 = vmatpush1.msra.mxu0 0.0
  %6860 = vmatprep.subr.mxu0 0.0
  %6861 = vmatpush1.msra.mxu0 0.0
  %6862 = vmatprep.subr.mxu0 0.0
  %6863 = vmatpush1.msra.mxu0 0.0
  %6864 = vmatprep.subr.mxu0 0.0
  %6865 = vmatpush1.msra.mxu0 0.0
  %6866 = vmatprep.subr.mxu0 0.0
  %6867 = vmatpush1.msra.mxu0 0.0
  %6868 = vmatprep.subr.mxu0 0.0
  %6869 = vmatpush1.msra.mxu0 0.0
  %6870 = vmatprep.subr.mxu0 0.0
  %6871 = vmatpush1.msra.mxu0 0.0
  %6872 = vmatprep.subr.mxu0 0.0
  %6873 = vmatpush1.msra.mxu0 0.0
  %6874 = vmatprep.subr.mxu0 0.0
  %6875 = vmatpush1.msra.mxu0 0.0
  %6876 = vmatprep.subr.mxu0 0.0
  %6877 = vmatpush1.msra.mxu0 0.0
  %6878 = vmatprep.subr.mxu0 0.0
  %6879 = vmatpush1.msra.mxu0 0.0
  %6880 = vmatprep.subr.mxu0 0.0
  %6881 = vmatpush1.msra.mxu0 0.0
  %6882 = vmatprep.subr.mxu0 0.0
  %6883 = vmatpush1.msra.mxu0 0.0
  %6884 = vmatprep.subr.mxu0 0.0
  %6885 = vmatpush1.msra.mxu0 0.0
  %6886 = vmatprep.subr.mxu0 0.0
  %6887 = vmatpush1.msra.mxu0 0.0
  %6888 = vmatprep.subr.mxu0 0.0
  %6889 = vmatpush1.msra.mxu0 0.0
  %6890 = vmatprep.subr.mxu0 0.0
  %6891 = vmatpush1.msra.mxu0 0.0
  %6892 = vmatprep.subr.mxu0 0.0
  %6893 = vmatpush1.msra.mxu0 0.0
  %6894 = vmatprep.subr.mxu0 0.0
  %6895 = vmatpush1.msra.mxu0 0.0
  %6896 = vmatprep.subr.mxu0 0.0
  %6897 = vmatpush1.msra.mxu0 0.0
  %6898 = vmatprep.subr.mxu0 0.0
  %6899 = vmatpush1.msra.mxu0 0.0
  %6900 = vmatprep.subr.mxu0 0.0
  %6901 = vmatpush1.msra.mxu0 0.0
  %6902 = vmatprep.subr.mxu0 0.0
  %6903 = vmatpush1.msra.mxu0 0.0
  %6904 = vmatprep.subr.mxu0 0.0
  %6905 = vmatpush1.msra.mxu0 0.0
  %6906 = vmatprep.subr.mxu0 0.0
  %6907 = vmatpush1.msra.mxu0 0.0
  %6908 = vmatprep.subr.mxu0 0.0
  %6909 = vmatpush1.msra.mxu0 0.0
  %6910 = vmatprep.subr.mxu0 0.0
  %6911 = vmatpush1.msra.mxu0 0.0
  %6912 = vmatprep.subr.mxu0 0.0
  %6913 = vmatpush1.msra.mxu0 0.0
  %6914 = vmatprep.mubr.f32.mxu0 0.0
  %6915 = vmatmul.mubr.f32.gmra.mrb[0].mxu0 %v6839
  %v6916 = vpop.f32.mrb[0].mxu0
  %v6917 = vadd.f32 0.0, %v6916
  %v6918 = vpop.f32.mrb[0].mxu0
  %6919 = vmatprep.mubr.f32.mxu0 0.0
  %6920 = vmatmul.mubr.f32.gmra.mrb[0].mxu0 %v6842
  %v6921 = vpop.f32.mrb[0].mxu0
  %v6922 = vadd.f32 0.0, %v6921
  %v6923 = vpop.f32.mrb[0].mxu0
  %6924 = vmatprep.mubr.f32.mxu0 0.0
  %6925 = vmatmul.mubr.f32.gmra.mrb[0].mxu0 %v6845
  %v6926 = vpop.f32.mrb[0].mxu0
  %v6927 = vadd.f32 0.0, %v6926
  %v6928 = vpop.f32.mrb[0].mxu0
  %6929 = vmatprep.mubr.f32.mxu0 0.0
  %6930 = vmatmul.mubr.f32.gmra.mrb[0].mxu0 %v6848
  %v6931 = vpop.f32.mrb[0].mxu0
  %v6932 = vadd.f32 0.0, %v6931
  %v6933 = vpop.f32.mrb[0].mxu0
  %6934 = vdwg.mxu0
  %v6935 = vadd.f32 %v6820, %v6917
  %v6936 = vadd.f32 %v6825, %v6922
  %v6937 = vadd.f32 %v6830, %v6927
  %v6938 = vadd.f32 %v6835, %v6932
  %6940 = vset.pattern.permute.xlu0 0
  %6941 = vperm.xlu0 %6940, %v6640
  %v6942 = vpop.permute.xlu0 %6941
  %6945 = vset.pattern.permute.xlu0 0
  %6946 = vperm.xlu0 %6945, %v6641
  %v6947 = vpop.permute.xlu0 %6946
  %6950 = vset.pattern.permute.xlu0 0
  %6951 = vperm.xlu0 %6950, %v6642
  %v6952 = vpop.permute.xlu0 %6951
  %6955 = vset.pattern.permute.xlu0 0
  %6956 = vperm.xlu0 %6955, %v6643
  %v6957 = vpop.permute.xlu0 %6956
  %v6959 = vadd.f32 %v6935, %v6942
  %v6960 = vadd.f32 %v6936, %v6947
  %v6961 = vadd.f32 %v6937, %v6952
  %v6962 = vadd.f32 %v6938, %v6957
  %v6963 = vmax.f32 %v6959, 0.0
  %v6964 = vmax.f32 %v6960, 0.0
  %v6965 = vmax.f32 %v6961, 0.0
  %v6966 = vmax.f32 %v6962, 0.0
  %6967 = vmatprep.subr.mxu0 0.0
  %6968 = vmatpush1.msra.mxu0 %v68
  %6969 = vmatprep.subr.mxu0 0.0
  %6970 = vmatpush1.msra.mxu0 %v69
  %6971 = vmatprep.subr.mxu0 0.0
  %6972 = vmatpush1.msra.mxu0 %v70
  %6973 = vmatprep.subr.mxu0 0.0
  %6974 = vmatpush1.msra.mxu0 %v71
  %6975 = vmatprep.subr.mxu0 0.0
  %6976 = vmatpush1.msra.mxu0 %v72
  %6977 = vmatprep.subr.mxu0 0.0
  %6978 = vmatpush1.msra.mxu0 %v73
  %6979 = vmatprep.subr.mxu0 0.0
  %6980 = vmatpush1.msra.mxu0 %v74
  %6981 = vmatprep.subr.mxu0 0.0
  %6982 = vmatpush1.msra.mxu0 %v75
  %6983 = vmatprep.subr.mxu0 0.0
  %6984 = vmatpush1.msra.mxu0 %v76
  %6985 = vmatprep.subr.mxu0 0.0
  %6986 = vmatpush1.msra.mxu0 %v77
  %6987 = vmatprep.subr.mxu0 0.0
  %6988 = vmatpush1.msra.mxu0 %v78
  %6989 = vmatprep.subr.mxu0 0.0
  %6990 = vmatpush1.msra.mxu0 %v79
  %6991 = vmatprep.subr.mxu0 0.0
  %6992 = vmatpush1.msra.mxu0 %v80
  %6993 = vmatprep.subr.mxu0 0.0
  %6994 = vmatpush1.msra.mxu0 %v81
  %6995 = vmatprep.subr.mxu0 0.0
  %6996 = vmatpush1.msra.mxu0 %v82
  %6997 = vmatprep.subr.mxu0 0.0
  %6998 = vmatpush1.msra.mxu0 %v83
  %6999 = vmatprep.subr.mxu0 0.0
  %7000 = vmatpush1.msra.mxu0 0.0
  %7001 = vmatprep.subr.mxu0 0.0
  %7002 = vmatpush1.msra.mxu0 0.0
  %7003 = vmatprep.subr.mxu0 0.0
  %7004 = vmatpush1.msra.mxu0 0.0
  %7005 = vmatprep.subr.mxu0 0.0
  %7006 = vmatpush1.msra.mxu0 0.0
  %7007 = vmatprep.subr.mxu0 0.0
  %7008 = vmatpush1.msra.mxu0 0.0
  %7009 = vmatprep.subr.mxu0 0.0
  %7010 = vmatpush1.msra.mxu0 0.0
  %7011 = vmatprep.subr.mxu0 0.0
  %7012 = vmatpush1.msra.mxu0 0.0
  %7013 = vmatprep.subr.mxu0 0.0
  %7014 = vmatpush1.msra.mxu0 0.0
  %7015 = vmatprep.subr.mxu0 0.0
  %7016 = vmatpush1.msra.mxu0 0.0
  %7017 = vmatprep.subr.mxu0 0.0
  %7018 = vmatpush1.msra.mxu0 0.0
  %7019 = vmatprep.subr.mxu0 0.0
  %7020 = vmatpush1.msra.mxu0 0.0
  %7021 = vmatprep.subr.mxu0 0.0
  %7022 = vmatpush1.msra.mxu0 0.0
  %7023 = vmatprep.subr.mxu0 0.0
  %7024 = vmatpush1.msra.mxu0 0.0
  %7025 = vmatprep.subr.mxu0 0.0
  %7026 = vmatpush1.msra.mxu0 0.0
  %7027 = vmatprep.subr.mxu0 0.0
  %7028 = vmatpush1.msra.mxu0 0.0
  %7029 = vmatprep.subr.mxu0 0.0
  %7030 = vmatpush1.msra.mxu0 0.0
  %7031 = vmatprep.mubr.f32.mxu0 0.0
  %7032 = vmatmul.mubr.f32.gmra.mrb[0].mxu0 %v6965
  %v7033 = vpop.f32.mrb[0].mxu0
  %v7034 = vadd.f32 0.0, %v7033
  %v7035 = vpop.f32.mrb[0].mxu0
  %7036 = vmatprep.mubr.f32.mxu0 0.0
  %7037 = vmatmul.mubr.f32.gmra.mrb[0].mxu0 %v6966
  %v7038 = vpop.f32.mrb[0].mxu0
  %v7039 = vadd.f32 0.0, %v7038
  %v7040 = vpop.f32.mrb[0].mxu0
  %7041 = vdwg.mxu0
  %s7042 = scalar_lea.vmem %s8, 128
  %v7043 = vld [vmem:[%s7042] sm:$0xff]
  %v7044 = vld [vmem:[%s7042 + $0x8] sm:$0xff]
  %v7045 = vld [vmem:[%s7042 + $0x10] sm:$0xff]
  %v7046 = vld [vmem:[%s7042 + $0x18] sm:$0xff]
  %s7047 = scalar_lea.vmem %s9, 128
  %v7048 = vld [vmem:[%s7047] sm:$0xff]
  %v7049 = vld [vmem:[%s7047 + $0x8] sm:$0xff]
  %v7050 = vld [vmem:[%s7047 + $0x10] sm:$0xff]
  %v7051 = vld [vmem:[%s7047 + $0x18] sm:$0xff]
  %s7052 = scalar_lea.vmem %s10, 128
  %v7053 = vld [vmem:[%s7052] sm:$0xff]
  %v7054 = vld [vmem:[%s7052 + $0x8] sm:$0xff]
  %v7055 = vld [vmem:[%s7052 + $0x10] sm:$0xff]
  %v7056 = vld [vmem:[%s7052 + $0x18] sm:$0xff]
  %v7058 = vsel %vm321, %v7048, 0
  %v7061 = vsel %vm321, %v7049, 0
  %v7064 = vsel %vm321, %v7050, 0
  %v7067 = vsel %vm321, %v7051, 0
  %7069 = vmatprep.subr.mxu0 0.0
  %7070 = vmatpush1.msra.mxu0 %v7034
  %7071 = vmatprep.subr.mxu0 0.0
  %7072 = vmatpush1.msra.mxu0 %v7039
  %7073 = vmatprep.subr.mxu0 0.0
  %7074 = vmatpush1.msra.mxu0 0.0
  %7075 = vmatprep.subr.mxu0 0.0
  %7076 = vmatpush1.msra.mxu0 0.0
  %7077 = vmatprep.subr.mxu0 0.0
  %7078 = vmatpush1.msra.mxu0 0.0
  %7079 = vmatprep.subr.mxu0 0.0
  %7080 = vmatpush1.msra.mxu0 0.0
  %7081 = vmatprep.subr.mxu0 0.0
  %7082 = vmatpush1.msra.mxu0 0.0
  %7083 = vmatprep.subr.mxu0 0.0
  %7084 = vmatpush1.msra.mxu0 0.0
  %7085 = vmatprep.subr.mxu0 0.0
  %7086 = vmatpush1.msra.mxu0 0.0
  %7087 = vmatprep.subr.mxu0 0.0
  %7088 = vmatpush1.msra.mxu0 0.0
  %7089 = vmatprep.subr.mxu0 0.0
  %7090 = vmatpush1.msra.mxu0 0.0
  %7091 = vmatprep.subr.mxu0 0.0
  %7092 = vmatpush1.msra.mxu0 0.0
  %7093 = vmatprep.subr.mxu0 0.0
  %7094 = vmatpush1.msra.mxu0 0.0
  %7095 = vmatprep.subr.mxu0 0.0
  %7096 = vmatpush1.msra.mxu0 0.0
  %7097 = vmatprep.subr.mxu0 0.0
  %7098 = vmatpush1.msra.mxu0 0.0
  %7099 = vmatprep.subr.mxu0 0.0
  %7100 = vmatpush1.msra.mxu0 0.0
  %7101 = vmatprep.subr.mxu0 0.0
  %7102 = vmatpush1.msra.mxu0 0.0
  %7103 = vmatprep.subr.mxu0 0.0
  %7104 = vmatpush1.msra.mxu0 0.0
  %7105 = vmatprep.subr.mxu0 0.0
  %7106 = vmatpush1.msra.mxu0 0.0
  %7107 = vmatprep.subr.mxu0 0.0
  %7108 = vmatpush1.msra.mxu0 0.0
  %7109 = vmatprep.subr.mxu0 0.0
  %7110 = vmatpush1.msra.mxu0 0.0
  %7111 = vmatprep.subr.mxu0 0.0
  %7112 = vmatpush1.msra.mxu0 0.0
  %7113 = vmatprep.subr.mxu0 0.0
  %7114 = vmatpush1.msra.mxu0 0.0
  %7115 = vmatprep.subr.mxu0 0.0
  %7116 = vmatpush1.msra.mxu0 0.0
  %7117 = vmatprep.subr.mxu0 0.0
  %7118 = vmatpush1.msra.mxu0 0.0
  %7119 = vmatprep.subr.mxu0 0.0
  %7120 = vmatpush1.msra.mxu0 0.0
  %7121 = vmatprep.subr.mxu0 0.0
  %7122 = vmatpush1.msra.mxu0 0.0
  %7123 = vmatprep.subr.mxu0 0.0
  %7124 = vmatpush1.msra.mxu0 0.0
  %7125 = vmatprep.subr.mxu0 0.0
  %7126 = vmatpush1.msra.mxu0 0.0
  %7127 = vmatprep.subr.mxu0 0.0
  %7128 = vmatpush1.msra.mxu0 0.0
  %7129 = vmatprep.subr.mxu0 0.0
  %7130 = vmatpush1.msra.mxu0 0.0
  %7131 = vmatprep.subr.mxu0 0.0
  %7132 = vmatpush1.msra.mxu0 0.0
  %7133 = vmatprep.mubr.f32.mxu0 0.0
  %7134 = vmatmul.mubr.f32.gmra.mrb[0].mxu0 %v7058
  %v7135 = vpop.f32.mrb[0].mxu0
  %v7136 = vadd.f32 0.0, %v7135
  %v7137 = vpop.f32.mrb[0].mxu0
  %7138 = vmatprep.mubr.f32.mxu0 0.0
  %7139 = vmatmul.mubr.f32.gmra.mrb[0].mxu0 %v7061
  %v7140 = vpop.f32.mrb[0].mxu0
  %v7141 = vadd.f32 0.0, %v7140
  %v7142 = vpop.f32.mrb[0].mxu0
  %7143 = vmatprep.mubr.f32.mxu0 0.0
  %7144 = vmatmul.mubr.f32.gmra.mrb[0].mxu0 %v7064
  %v7145 = vpop.f32.mrb[0].mxu0
  %v7146 = vadd.f32 0.0, %v7145
  %v7147 = vpop.f32.mrb[0].mxu0
  %7148 = vmatprep.mubr.f32.mxu0 0.0
  %7149 = vmatmul.mubr.f32.gmra.mrb[0].mxu0 %v7067
  %v7150 = vpop.f32.mrb[0].mxu0
  %v7151 = vadd.f32 0.0, %v7150
  %v7152 = vpop.f32.mrb[0].mxu0
  %7153 = vdwg.mxu0
  %v7155 = vsel %vm321, %v7043, 0
  %v7158 = vsel %vm321, %v7044, 0
  %v7161 = vsel %vm321, %v7045, 0
  %v7164 = vsel %vm321, %v7046, 0
  %7166 = vmatprep.subr.mxu0 0.0
  %7167 = vmatpush1.msra.mxu0 %v6963
  %7168 = vmatprep.subr.mxu0 0.0
  %7169 = vmatpush1.msra.mxu0 %v6964
  %7170 = vmatprep.subr.mxu0 0.0
  %7171 = vmatpush1.msra.mxu0 0.0
  %7172 = vmatprep.subr.mxu0 0.0
  %7173 = vmatpush1.msra.mxu0 0.0
  %7174 = vmatprep.subr.mxu0 0.0
  %7175 = vmatpush1.msra.mxu0 0.0
  %7176 = vmatprep.subr.mxu0 0.0
  %7177 = vmatpush1.msra.mxu0 0.0
  %7178 = vmatprep.subr.mxu0 0.0
  %7179 = vmatpush1.msra.mxu0 0.0
  %7180 = vmatprep.subr.mxu0 0.0
  %7181 = vmatpush1.msra.mxu0 0.0
  %7182 = vmatprep.subr.mxu0 0.0
  %7183 = vmatpush1.msra.mxu0 0.0
  %7184 = vmatprep.subr.mxu0 0.0
  %7185 = vmatpush1.msra.mxu0 0.0
  %7186 = vmatprep.subr.mxu0 0.0
  %7187 = vmatpush1.msra.mxu0 0.0
  %7188 = vmatprep.subr.mxu0 0.0
  %7189 = vmatpush1.msra.mxu0 0.0
  %7190 = vmatprep.subr.mxu0 0.0
  %7191 = vmatpush1.msra.mxu0 0.0
  %7192 = vmatprep.subr.mxu0 0.0
  %7193 = vmatpush1.msra.mxu0 0.0
  %7194 = vmatprep.subr.mxu0 0.0
  %7195 = vmatpush1.msra.mxu0 0.0
  %7196 = vmatprep.subr.mxu0 0.0
  %7197 = vmatpush1.msra.mxu0 0.0
  %7198 = vmatprep.subr.mxu0 0.0
  %7199 = vmatpush1.msra.mxu0 0.0
  %7200 = vmatprep.subr.mxu0 0.0
  %7201 = vmatpush1.msra.mxu0 0.0
  %7202 = vmatprep.subr.mxu0 0.0
  %7203 = vmatpush1.msra.mxu0 0.0
  %7204 = vmatprep.subr.mxu0 0.0
  %7205 = vmatpush1.msra.mxu0 0.0
  %7206 = vmatprep.subr.mxu0 0.0
  %7207 = vmatpush1.msra.mxu0 0.0
  %7208 = vmatprep.subr.mxu0 0.0
  %7209 = vmatpush1.msra.mxu0 0.0
  %7210 = vmatprep.subr.mxu0 0.0
  %7211 = vmatpush1.msra.mxu0 0.0
  %7212 = vmatprep.subr.mxu0 0.0
  %7213 = vmatpush1.msra.mxu0 0.0
  %7214 = vmatprep.subr.mxu0 0.0
  %7215 = vmatpush1.msra.mxu0 0.0
  %7216 = vmatprep.subr.mxu0 0.0
  %7217 = vmatpush1.msra.mxu0 0.0
  %7218 = vmatprep.subr.mxu0 0.0
  %7219 = vmatpush1.msra.mxu0 0.0
  %7220 = vmatprep.subr.mxu0 0.0
  %7221 = vmatpush1.msra.mxu0 0.0
  %7222 = vmatprep.subr.mxu0 0.0
  %7223 = vmatpush1.msra.mxu0 0.0
  %7224 = vmatprep.subr.mxu0 0.0
  %7225 = vmatpush1.msra.mxu0 0.0
  %7226 = vmatprep.subr.mxu0 0.0
  %7227 = vmatpush1.msra.mxu0 0.0
  %7228 = vmatprep.subr.mxu0 0.0
  %7229 = vmatpush1.msra.mxu0 0.0
  %7230 = vmatprep.mubr.f32.mxu0 0.0
  %7231 = vmatmul.mubr.f32.gmra.mrb[0].mxu0 %v7155
  %v7232 = vpop.f32.mrb[0].mxu0
  %v7233 = vadd.f32 %v7136, %v7232
  %v7234 = vpop.f32.mrb[0].mxu0
  %7235 = vmatprep.mubr.f32.mxu0 0.0
  %7236 = vmatmul.mubr.f32.gmra.mrb[0].mxu0 %v7158
  %v7237 = vpop.f32.mrb[0].mxu0
  %v7238 = vadd.f32 %v7141, %v7237
  %v7239 = vpop.f32.mrb[0].mxu0
  %7240 = vmatprep.mubr.f32.mxu0 0.0
  %7241 = vmatmul.mubr.f32.gmra.mrb[0].mxu0 %v7161
  %v7242 = vpop.f32.mrb[0].mxu0
  %v7243 = vadd.f32 %v7146, %v7242
  %v7244 = vpop.f32.mrb[0].mxu0
  %7245 = vmatprep.mubr.f32.mxu0 0.0
  %7246 = vmatmul.mubr.f32.gmra.mrb[0].mxu0 %v7164
  %v7247 = vpop.f32.mrb[0].mxu0
  %v7248 = vadd.f32 %v7151, %v7247
  %v7249 = vpop.f32.mrb[0].mxu0
  %7250 = vdwg.mxu0
  %7252 = vset.pattern.permute.xlu0 0
  %7253 = vperm.xlu0 %7252, %v7053
  %v7254 = vpop.permute.xlu0 %7253
  %7257 = vset.pattern.permute.xlu0 0
  %7258 = vperm.xlu0 %7257, %v7054
  %v7259 = vpop.permute.xlu0 %7258
  %7262 = vset.pattern.permute.xlu0 0
  %7263 = vperm.xlu0 %7262, %v7055
  %v7264 = vpop.permute.xlu0 %7263
  %7267 = vset.pattern.permute.xlu0 0
  %7268 = vperm.xlu0 %7267, %v7056
  %v7269 = vpop.permute.xlu0 %7268
  %v7271 = vadd.f32 %v7233, %v7254
  %v7272 = vadd.f32 %v7238, %v7259
  %v7273 = vadd.f32 %v7243, %v7264
  %v7274 = vadd.f32 %v7248, %v7269
  %7275 = vmatprep.subr.mxu0 0.0
  %7276 = vmatpush1.msra.mxu0 %v68
  %7277 = vmatprep.subr.mxu0 0.0
  %7278 = vmatpush1.msra.mxu0 %v69
  %7279 = vmatprep.subr.mxu0 0.0
  %7280 = vmatpush1.msra.mxu0 %v70
  %7281 = vmatprep.subr.mxu0 0.0
  %7282 = vmatpush1.msra.mxu0 %v71
  %7283 = vmatprep.subr.mxu0 0.0
  %7284 = vmatpush1.msra.mxu0 %v72
  %7285 = vmatprep.subr.mxu0 0.0
  %7286 = vmatpush1.msra.mxu0 %v73
  %7287 = vmatprep.subr.mxu0 0.0
  %7288 = vmatpush1.msra.mxu0 %v74
  %7289 = vmatprep.subr.mxu0 0.0
  %7290 = vmatpush1.msra.mxu0 %v75
  %7291 = vmatprep.subr.mxu0 0.0
  %7292 = vmatpush1.msra.mxu0 %v76
  %7293 = vmatprep.subr.mxu0 0.0
  %7294 = vmatpush1.msra.mxu0 %v77
  %7295 = vmatprep.subr.mxu0 0.0
  %7296 = vmatpush1.msra.mxu0 %v78
  %7297 = vmatprep.subr.mxu0 0.0
  %7298 = vmatpush1.msra.mxu0 %v79
  %7299 = vmatprep.subr.mxu0 0.0
  %7300 = vmatpush1.msra.mxu0 %v80
  %7301 = vmatprep.subr.mxu0 0.0
  %7302 = vmatpush1.msra.mxu0 %v81
  %7303 = vmatprep.subr.mxu0 0.0
  %7304 = vmatpush1.msra.mxu0 %v82
  %7305 = vmatprep.subr.mxu0 0.0
  %7306 = vmatpush1.msra.mxu0 %v83
  %7307 = vmatprep.subr.mxu0 0.0
  %7308 = vmatpush1.msra.mxu0 0.0
  %7309 = vmatprep.subr.mxu0 0.0
  %7310 = vmatpush1.msra.mxu0 0.0
  %7311 = vmatprep.subr.mxu0 0.0
  %7312 = vmatpush1.msra.mxu0 0.0
  %7313 = vmatprep.subr.mxu0 0.0
  %7314 = vmatpush1.msra.mxu0 0.0
  %7315 = vmatprep.subr.mxu0 0.0
  %7316 = vmatpush1.msra.mxu0 0.0
  %7317 = vmatprep.subr.mxu0 0.0
  %7318 = vmatpush1.msra.mxu0 0.0
  %7319 = vmatprep.subr.mxu0 0.0
  %7320 = vmatpush1.msra.mxu0 0.0
  %7321 = vmatprep.subr.mxu0 0.0
  %7322 = vmatpush1.msra.mxu0 0.0
  %7323 = vmatprep.subr.mxu0 0.0
  %7324 = vmatpush1.msra.mxu0 0.0
  %7325 = vmatprep.subr.mxu0 0.0
  %7326 = vmatpush1.msra.mxu0 0.0
  %7327 = vmatprep.subr.mxu0 0.0
  %7328 = vmatpush1.msra.mxu0 0.0
  %7329 = vmatprep.subr.mxu0 0.0
  %7330 = vmatpush1.msra.mxu0 0.0
  %7331 = vmatprep.subr.mxu0 0.0
  %7332 = vmatpush1.msra.mxu0 0.0
  %7333 = vmatprep.subr.mxu0 0.0
  %7334 = vmatpush1.msra.mxu0 0.0
  %7335 = vmatprep.subr.mxu0 0.0
  %7336 = vmatpush1.msra.mxu0 0.0
  %7337 = vmatprep.subr.mxu0 0.0
  %7338 = vmatpush1.msra.mxu0 0.0
  %7339 = vmatprep.mubr.f32.mxu0 0.0
  %7340 = vmatmul.mubr.f32.gmra.mrb[0].mxu0 %v7273
  %v7341 = vpop.f32.mrb[0].mxu0
  %v7342 = vadd.f32 0.0, %v7341
  %v7343 = vpop.f32.mrb[0].mxu0
  %7344 = vmatprep.mubr.f32.mxu0 0.0
  %7345 = vmatmul.mubr.f32.gmra.mrb[0].mxu0 %v7274
  %v7346 = vpop.f32.mrb[0].mxu0
  %v7347 = vadd.f32 0.0, %v7346
  %v7348 = vpop.f32.mrb[0].mxu0
  %7349 = vdwg.mxu0
  %7350 = vmatprep.subr.mxu0 0.0
  %7351 = vmatpush1.msra.mxu0 %v84
  %7352 = vmatprep.subr.mxu0 0.0
  %7353 = vmatpush1.msra.mxu0 %v85
  %7354 = vmatprep.subr.mxu0 0.0
  %7355 = vmatpush1.msra.mxu0 %v86
  %7356 = vmatprep.subr.mxu0 0.0
  %7357 = vmatpush1.msra.mxu0 %v87
  %7358 = vmatprep.subr.mxu0 0.0
  %7359 = vmatpush1.msra.mxu0 %v88
  %7360 = vmatprep.subr.mxu0 0.0
  %7361 = vmatpush1.msra.mxu0 %v89
  %7362 = vmatprep.subr.mxu0 0.0
  %7363 = vmatpush1.msra.mxu0 %v90
  %7364 = vmatprep.subr.mxu0 0.0
  %7365 = vmatpush1.msra.mxu0 %v91
  %7366 = vmatprep.subr.mxu0 0.0
  %7367 = vmatpush1.msra.mxu0 %v92
  %7368 = vmatprep.subr.mxu0 0.0
  %7369 = vmatpush1.msra.mxu0 %v93
  %7370 = vmatprep.subr.mxu0 0.0
  %7371 = vmatpush1.msra.mxu0 %v94
  %7372 = vmatprep.subr.mxu0 0.0
  %7373 = vmatpush1.msra.mxu0 %v95
  %7374 = vmatprep.subr.mxu0 0.0
  %7375 = vmatpush1.msra.mxu0 %v96
  %7376 = vmatprep.subr.mxu0 0.0
  %7377 = vmatpush1.msra.mxu0 %v97
  %7378 = vmatprep.subr.mxu0 0.0
  %7379 = vmatpush1.msra.mxu0 %v98
  %7380 = vmatprep.subr.mxu0 0.0
  %7381 = vmatpush1.msra.mxu0 %v99
  %7382 = vmatprep.subr.mxu0 0.0
  %7383 = vmatpush1.msra.mxu0 0.0
  %7384 = vmatprep.subr.mxu0 0.0
  %7385 = vmatpush1.msra.mxu0 0.0
  %7386 = vmatprep.subr.mxu0 0.0
  %7387 = vmatpush1.msra.mxu0 0.0
  %7388 = vmatprep.subr.mxu0 0.0
  %7389 = vmatpush1.msra.mxu0 0.0
  %7390 = vmatprep.subr.mxu0 0.0
  %7391 = vmatpush1.msra.mxu0 0.0
  %7392 = vmatprep.subr.mxu0 0.0
  %7393 = vmatpush1.msra.mxu0 0.0
  %7394 = vmatprep.subr.mxu0 0.0
  %7395 = vmatpush1.msra.mxu0 0.0
  %7396 = vmatprep.subr.mxu0 0.0
  %7397 = vmatpush1.msra.mxu0 0.0
  %7398 = vmatprep.subr.mxu0 0.0
  %7399 = vmatpush1.msra.mxu0 0.0
  %7400 = vmatprep.subr.mxu0 0.0
  %7401 = vmatpush1.msra.mxu0 0.0
  %7402 = vmatprep.subr.mxu0 0.0
  %7403 = vmatpush1.msra.mxu0 0.0
  %7404 = vmatprep.subr.mxu0 0.0
  %7405 = vmatpush1.msra.mxu0 0.0
  %7406 = vmatprep.subr.mxu0 0.0
  %7407 = vmatpush1.msra.mxu0 0.0
  %7408 = vmatprep.subr.mxu0 0.0
  %7409 = vmatpush1.msra.mxu0 0.0
  %7410 = vmatprep.subr.mxu0 0.0
  %7411 = vmatpush1.msra.mxu0 0.0
  %7412 = vmatprep.subr.mxu0 0.0
  %7413 = vmatpush1.msra.mxu0 0.0
  %7414 = vmatprep.mubr.f32.mxu0 0.0
  %7415 = vmatmul.mubr.f32.gmra.mrb[0].mxu0 %v7271
  %v7416 = vpop.f32.mrb[0].mxu0
  %v7417 = vadd.f32 0.0, %v7416
  %v7418 = vpop.f32.mrb[0].mxu0
  %7419 = vmatprep.mubr.f32.mxu0 0.0
  %7420 = vmatmul.mubr.f32.gmra.mrb[0].mxu0 %v7272
  %v7421 = vpop.f32.mrb[0].mxu0
  %v7422 = vadd.f32 0.0, %v7421
  %v7423 = vpop.f32.mrb[0].mxu0
  %7424 = vdwg.mxu0
  %7425 = vmatprep.subr.mxu0 0.0
  %7426 = vmatpush1.msra.mxu0 %v84
  %7427 = vmatprep.subr.mxu0 0.0
  %7428 = vmatpush1.msra.mxu0 %v85
  %7429 = vmatprep.subr.mxu0 0.0
  %7430 = vmatpush1.msra.mxu0 %v86
  %7431 = vmatprep.subr.mxu0 0.0
  %7432 = vmatpush1.msra.mxu0 %v87
  %7433 = vmatprep.subr.mxu0 0.0
  %7434 = vmatpush1.msra.mxu0 %v88
  %7435 = vmatprep.subr.mxu0 0.0
  %7436 = vmatpush1.msra.mxu0 %v89
  %7437 = vmatprep.subr.mxu0 0.0
  %7438 = vmatpush1.msra.mxu0 %v90
  %7439 = vmatprep.subr.mxu0 0.0
  %7440 = vmatpush1.msra.mxu0 %v91
  %7441 = vmatprep.subr.mxu0 0.0
  %7442 = vmatpush1.msra.mxu0 %v92
  %7443 = vmatprep.subr.mxu0 0.0
  %7444 = vmatpush1.msra.mxu0 %v93
  %7445 = vmatprep.subr.mxu0 0.0
  %7446 = vmatpush1.msra.mxu0 %v94
  %7447 = vmatprep.subr.mxu0 0.0
  %7448 = vmatpush1.msra.mxu0 %v95
  %7449 = vmatprep.subr.mxu0 0.0
  %7450 = vmatpush1.msra.mxu0 %v96
  %7451 = vmatprep.subr.mxu0 0.0
  %7452 = vmatpush1.msra.mxu0 %v97
  %7453 = vmatprep.subr.mxu0 0.0
  %7454 = vmatpush1.msra.mxu0 %v98
  %7455 = vmatprep.subr.mxu0 0.0
  %7456 = vmatpush1.msra.mxu0 %v99
  %7457 = vmatprep.subr.mxu0 0.0
  %7458 = vmatpush1.msra.mxu0 0.0
  %7459 = vmatprep.subr.mxu0 0.0
  %7460 = vmatpush1.msra.mxu0 0.0
  %7461 = vmatprep.subr.mxu0 0.0
  %7462 = vmatpush1.msra.mxu0 0.0
  %7463 = vmatprep.subr.mxu0 0.0
  %7464 = vmatpush1.msra.mxu0 0.0
  %7465 = vmatprep.subr.mxu0 0.0
  %7466 = vmatpush1.msra.mxu0 0.0
  %7467 = vmatprep.subr.mxu0 0.0
  %7468 = vmatpush1.msra.mxu0 0.0
  %7469 = vmatprep.subr.mxu0 0.0
  %7470 = vmatpush1.msra.mxu0 0.0
  %7471 = vmatprep.subr.mxu0 0.0
  %7472 = vmatpush1.msra.mxu0 0.0
  %7473 = vmatprep.subr.mxu0 0.0
  %7474 = vmatpush1.msra.mxu0 0.0
  %7475 = vmatprep.subr.mxu0 0.0
  %7476 = vmatpush1.msra.mxu0 0.0
  %7477 = vmatprep.subr.mxu0 0.0
  %7478 = vmatpush1.msra.mxu0 0.0
  %7479 = vmatprep.subr.mxu0 0.0
  %7480 = vmatpush1.msra.mxu0 0.0
  %7481 = vmatprep.subr.mxu0 0.0
  %7482 = vmatpush1.msra.mxu0 0.0
  %7483 = vmatprep.subr.mxu0 0.0
  %7484 = vmatpush1.msra.mxu0 0.0
  %7485 = vmatprep.subr.mxu0 0.0
  %7486 = vmatpush1.msra.mxu0 0.0
  %7487 = vmatprep.subr.mxu0 0.0
  %7488 = vmatpush1.msra.mxu0 0.0
  %7489 = vmatprep.mubr.f32.mxu0 0.0
  %7490 = vmatmul.mubr.f32.gmra.mrb[0].mxu0 %v7342
  %v7491 = vpop.f32.mrb[0].mxu0
  %v7492 = vadd.f32 0.0, %v7491
  %v7493 = vpop.f32.mrb[0].mxu0
  %7494 = vmatprep.mubr.f32.mxu0 0.0
  %7495 = vmatmul.mubr.f32.gmra.mrb[0].mxu0 %v7347
  %v7496 = vpop.f32.mrb[0].mxu0
  %v7497 = vadd.f32 0.0, %v7496
  %v7498 = vpop.f32.mrb[0].mxu0
  %7499 = vdwg.mxu0
  %s7500 = scalar_lea.vmem %s12, 128
  %v7501 = vld [vmem:[%s7500] sm:$0xff]
  %v7502 = vld [vmem:[%s7500 + $0x8] sm:$0xff]
  %v7503 = vld [vmem:[%s7500 + $0x10] sm:$0xff]
  %v7504 = vld [vmem:[%s7500 + $0x18] sm:$0xff]
  %s7505 = scalar_lea.vmem %s13, 128
  %v7506 = vld [vmem:[%s7505] sm:$0xff]
  %v7507 = vld [vmem:[%s7505 + $0x8] sm:$0xff]
  %v7508 = vld [vmem:[%s7505 + $0x10] sm:$0xff]
  %v7509 = vld [vmem:[%s7505 + $0x18] sm:$0xff]
  %s7510 = scalar_lea.vmem %s14, 128
  %v7511 = vld [vmem:[%s7510] sm:$0xff]
  %v7512 = vld [vmem:[%s7510 + $0x8] sm:$0xff]
  %v7513 = vld [vmem:[%s7510 + $0x10] sm:$0xff]
  %v7514 = vld [vmem:[%s7510 + $0x18] sm:$0xff]
  %s7515 = scalar_lea.vmem %s15, 128
  %v7516 = vld [vmem:[%s7515] sm:$0xff]
  %v7517 = vld [vmem:[%s7515 + $0x8] sm:$0xff]
  %v7518 = vld [vmem:[%s7515 + $0x10] sm:$0xff]
  %v7519 = vld [vmem:[%s7515 + $0x18] sm:$0xff]
  %s7520 = scalar_lea.vmem %s16, 128
  %v7521 = vld [vmem:[%s7520] sm:$0xff]
  %v7522 = vld [vmem:[%s7520 + $0x8] sm:$0xff]
  %v7523 = vld [vmem:[%s7520 + $0x10] sm:$0xff]
  %v7524 = vld [vmem:[%s7520 + $0x18] sm:$0xff]
  %v7526 = vsel %vm321, %v7506, 0
  %v7529 = vsel %vm321, %v7507, 0
  %v7532 = vsel %vm321, %v7508, 0
  %v7535 = vsel %vm321, %v7509, 0
  %7537 = vmatprep.subr.mxu0 0.0
  %7538 = vmatpush1.msra.mxu0 %v6616
  %7539 = vmatprep.subr.mxu0 0.0
  %7540 = vmatpush1.msra.mxu0 %v6621
  %7541 = vmatprep.subr.mxu0 0.0
  %7542 = vmatpush1.msra.mxu0 0.0
  %7543 = vmatprep.subr.mxu0 0.0
  %7544 = vmatpush1.msra.mxu0 0.0
  %7545 = vmatprep.subr.mxu0 0.0
  %7546 = vmatpush1.msra.mxu0 0.0
  %7547 = vmatprep.subr.mxu0 0.0
  %7548 = vmatpush1.msra.mxu0 0.0
  %7549 = vmatprep.subr.mxu0 0.0
  %7550 = vmatpush1.msra.mxu0 0.0
  %7551 = vmatprep.subr.mxu0 0.0
  %7552 = vmatpush1.msra.mxu0 0.0
  %7553 = vmatprep.subr.mxu0 0.0
  %7554 = vmatpush1.msra.mxu0 0.0
  %7555 = vmatprep.subr.mxu0 0.0
  %7556 = vmatpush1.msra.mxu0 0.0
  %7557 = vmatprep.subr.mxu0 0.0
  %7558 = vmatpush1.msra.mxu0 0.0
  %7559 = vmatprep.subr.mxu0 0.0
  %7560 = vmatpush1.msra.mxu0 0.0
  %7561 = vmatprep.subr.mxu0 0.0
  %7562 = vmatpush1.msra.mxu0 0.0
  %7563 = vmatprep.subr.mxu0 0.0
  %7564 = vmatpush1.msra.mxu0 0.0
  %7565 = vmatprep.subr.mxu0 0.0
  %7566 = vmatpush1.msra.mxu0 0.0
  %7567 = vmatprep.subr.mxu0 0.0
  %7568 = vmatpush1.msra.mxu0 0.0
  %7569 = vmatprep.subr.mxu0 0.0
  %7570 = vmatpush1.msra.mxu0 0.0
  %7571 = vmatprep.subr.mxu0 0.0
  %7572 = vmatpush1.msra.mxu0 0.0
  %7573 = vmatprep.subr.mxu0 0.0
  %7574 = vmatpush1.msra.mxu0 0.0
  %7575 = vmatprep.subr.mxu0 0.0
  %7576 = vmatpush1.msra.mxu0 0.0
  %7577 = vmatprep.subr.mxu0 0.0
  %7578 = vmatpush1.msra.mxu0 0.0
  %7579 = vmatprep.subr.mxu0 0.0
  %7580 = vmatpush1.msra.mxu0 0.0
  %7581 = vmatprep.subr.mxu0 0.0
  %7582 = vmatpush1.msra.mxu0 0.0
  %7583 = vmatprep.subr.mxu0 0.0
  %7584 = vmatpush1.msra.mxu0 0.0
  %7585 = vmatprep.subr.mxu0 0.0
  %7586 = vmatpush1.msra.mxu0 0.0
  %7587 = vmatprep.subr.mxu0 0.0
  %7588 = vmatpush1.msra.mxu0 0.0
  %7589 = vmatprep.subr.mxu0 0.0
  %7590 = vmatpush1.msra.mxu0 0.0
  %7591 = vmatprep.subr.mxu0 0.0
  %7592 = vmatpush1.msra.mxu0 0.0
  %7593 = vmatprep.subr.mxu0 0.0
  %7594 = vmatpush1.msra.mxu0 0.0
  %7595 = vmatprep.subr.mxu0 0.0
  %7596 = vmatpush1.msra.mxu0 0.0
  %7597 = vmatprep.subr.mxu0 0.0
  %7598 = vmatpush1.msra.mxu0 0.0
  %7599 = vmatprep.subr.mxu0 0.0
  %7600 = vmatpush1.msra.mxu0 0.0
  %7601 = vmatprep.mubr.f32.mxu0 0.0
  %7602 = vmatmul.mubr.f32.gmra.mrb[0].mxu0 %v7526
  %v7603 = vpop.f32.mrb[0].mxu0
  %v7604 = vadd.f32 0.0, %v7603
  %v7605 = vpop.f32.mrb[0].mxu0
  %7606 = vmatprep.mubr.f32.mxu0 0.0
  %7607 = vmatmul.mubr.f32.gmra.mrb[0].mxu0 %v7529
  %v7608 = vpop.f32.mrb[0].mxu0
  %v7609 = vadd.f32 0.0, %v7608
  %v7610 = vpop.f32.mrb[0].mxu0
  %7611 = vmatprep.mubr.f32.mxu0 0.0
  %7612 = vmatmul.mubr.f32.gmra.mrb[0].mxu0 %v7532
  %v7613 = vpop.f32.mrb[0].mxu0
  %v7614 = vadd.f32 0.0, %v7613
  %v7615 = vpop.f32.mrb[0].mxu0
  %7616 = vmatprep.mubr.f32.mxu0 0.0
  %7617 = vmatmul.mubr.f32.gmra.mrb[0].mxu0 %v7535
  %v7618 = vpop.f32.mrb[0].mxu0
  %v7619 = vadd.f32 0.0, %v7618
  %v7620 = vpop.f32.mrb[0].mxu0
  %7621 = vdwg.mxu0
  %v7623 = vsel %vm321, %v7501, 0
  %v7626 = vsel %vm321, %v7502, 0
  %v7629 = vsel %vm321, %v7503, 0
  %v7632 = vsel %vm321, %v7504, 0
  %7634 = vmatprep.subr.mxu0 0.0
  %7635 = vmatpush1.msra.mxu0 %v6545
  %7636 = vmatprep.subr.mxu0 0.0
  %7637 = vmatpush1.msra.mxu0 %v6546
  %7638 = vmatprep.subr.mxu0 0.0
  %7639 = vmatpush1.msra.mxu0 0.0
  %7640 = vmatprep.subr.mxu0 0.0
  %7641 = vmatpush1.msra.mxu0 0.0
  %7642 = vmatprep.subr.mxu0 0.0
  %7643 = vmatpush1.msra.mxu0 0.0
  %7644 = vmatprep.subr.mxu0 0.0
  %7645 = vmatpush1.msra.mxu0 0.0
  %7646 = vmatprep.subr.mxu0 0.0
  %7647 = vmatpush1.msra.mxu0 0.0
  %7648 = vmatprep.subr.mxu0 0.0
  %7649 = vmatpush1.msra.mxu0 0.0
  %7650 = vmatprep.subr.mxu0 0.0
  %7651 = vmatpush1.msra.mxu0 0.0
  %7652 = vmatprep.subr.mxu0 0.0
  %7653 = vmatpush1.msra.mxu0 0.0
  %7654 = vmatprep.subr.mxu0 0.0
  %7655 = vmatpush1.msra.mxu0 0.0
  %7656 = vmatprep.subr.mxu0 0.0
  %7657 = vmatpush1.msra.mxu0 0.0
  %7658 = vmatprep.subr.mxu0 0.0
  %7659 = vmatpush1.msra.mxu0 0.0
  %7660 = vmatprep.subr.mxu0 0.0
  %7661 = vmatpush1.msra.mxu0 0.0
  %7662 = vmatprep.subr.mxu0 0.0
  %7663 = vmatpush1.msra.mxu0 0.0
  %7664 = vmatprep.subr.mxu0 0.0
  %7665 = vmatpush1.msra.mxu0 0.0
  %7666 = vmatprep.subr.mxu0 0.0
  %7667 = vmatpush1.msra.mxu0 0.0
  %7668 = vmatprep.subr.mxu0 0.0
  %7669 = vmatpush1.msra.mxu0 0.0
  %7670 = vmatprep.subr.mxu0 0.0
  %7671 = vmatpush1.msra.mxu0 0.0
  %7672 = vmatprep.subr.mxu0 0.0
  %7673 = vmatpush1.msra.mxu0 0.0
  %7674 = vmatprep.subr.mxu0 0.0
  %7675 = vmatpush1.msra.mxu0 0.0
  %7676 = vmatprep.subr.mxu0 0.0
  %7677 = vmatpush1.msra.mxu0 0.0
  %7678 = vmatprep.subr.mxu0 0.0
  %7679 = vmatpush1.msra.mxu0 0.0
  %7680 = vmatprep.subr.mxu0 0.0
  %7681 = vmatpush1.msra.mxu0 0.0
  %7682 = vmatprep.subr.mxu0 0.0
  %7683 = vmatpush1.msra.mxu0 0.0
  %7684 = vmatprep.subr.mxu0 0.0
  %7685 = vmatpush1.msra.mxu0 0.0
  %7686 = vmatprep.subr.mxu0 0.0
  %7687 = vmatpush1.msra.mxu0 0.0
  %7688 = vmatprep.subr.mxu0 0.0
  %7689 = vmatpush1.msra.mxu0 0.0
  %7690 = vmatprep.subr.mxu0 0.0
  %7691 = vmatpush1.msra.mxu0 0.0
  %7692 = vmatprep.subr.mxu0 0.0
  %7693 = vmatpush1.msra.mxu0 0.0
  %7694 = vmatprep.subr.mxu0 0.0
  %7695 = vmatpush1.msra.mxu0 0.0
  %7696 = vmatprep.subr.mxu0 0.0
  %7697 = vmatpush1.msra.mxu0 0.0
  %7698 = vmatprep.mubr.f32.mxu0 0.0
  %7699 = vmatmul.mubr.f32.gmra.mrb[0].mxu0 %v7623
  %v7700 = vpop.f32.mrb[0].mxu0
  %v7701 = vadd.f32 %v7604, %v7700
  %v7702 = vpop.f32.mrb[0].mxu0
  %7703 = vmatprep.mubr.f32.mxu0 0.0
  %7704 = vmatmul.mubr.f32.gmra.mrb[0].mxu0 %v7626
  %v7705 = vpop.f32.mrb[0].mxu0
  %v7706 = vadd.f32 %v7609, %v7705
  %v7707 = vpop.f32.mrb[0].mxu0
  %7708 = vmatprep.mubr.f32.mxu0 0.0
  %7709 = vmatmul.mubr.f32.gmra.mrb[0].mxu0 %v7629
  %v7710 = vpop.f32.mrb[0].mxu0
  %v7711 = vadd.f32 %v7614, %v7710
  %v7712 = vpop.f32.mrb[0].mxu0
  %7713 = vmatprep.mubr.f32.mxu0 0.0
  %7714 = vmatmul.mubr.f32.gmra.mrb[0].mxu0 %v7632
  %v7715 = vpop.f32.mrb[0].mxu0
  %v7716 = vadd.f32 %v7619, %v7715
  %v7717 = vpop.f32.mrb[0].mxu0
  %7718 = vdwg.mxu0
  %v7720 = vsel %vm321, %v7511, 0
  %v7723 = vsel %vm321, %v7512, 0
  %v7726 = vsel %vm321, %v7513, 0
  %v7729 = vsel %vm321, %v7514, 0
  %7731 = vmatprep.subr.mxu0 0.0
  %7732 = vmatpush1.msra.mxu0 %v7417
  %7733 = vmatprep.subr.mxu0 0.0
  %7734 = vmatpush1.msra.mxu0 %v7422
  %7735 = vmatprep.subr.mxu0 0.0
  %7736 = vmatpush1.msra.mxu0 0.0
  %7737 = vmatprep.subr.mxu0 0.0
  %7738 = vmatpush1.msra.mxu0 0.0
  %7739 = vmatprep.subr.mxu0 0.0
  %7740 = vmatpush1.msra.mxu0 0.0
  %7741 = vmatprep.subr.mxu0 0.0
  %7742 = vmatpush1.msra.mxu0 0.0
  %7743 = vmatprep.subr.mxu0 0.0
  %7744 = vmatpush1.msra.mxu0 0.0
  %7745 = vmatprep.subr.mxu0 0.0
  %7746 = vmatpush1.msra.mxu0 0.0
  %7747 = vmatprep.subr.mxu0 0.0
  %7748 = vmatpush1.msra.mxu0 0.0
  %7749 = vmatprep.subr.mxu0 0.0
  %7750 = vmatpush1.msra.mxu0 0.0
  %7751 = vmatprep.subr.mxu0 0.0
  %7752 = vmatpush1.msra.mxu0 0.0
  %7753 = vmatprep.subr.mxu0 0.0
  %7754 = vmatpush1.msra.mxu0 0.0
  %7755 = vmatprep.subr.mxu0 0.0
  %7756 = vmatpush1.msra.mxu0 0.0
  %7757 = vmatprep.subr.mxu0 0.0
  %7758 = vmatpush1.msra.mxu0 0.0
  %7759 = vmatprep.subr.mxu0 0.0
  %7760 = vmatpush1.msra.mxu0 0.0
  %7761 = vmatprep.subr.mxu0 0.0
  %7762 = vmatpush1.msra.mxu0 0.0
  %7763 = vmatprep.subr.mxu0 0.0
  %7764 = vmatpush1.msra.mxu0 0.0
  %7765 = vmatprep.subr.mxu0 0.0
  %7766 = vmatpush1.msra.mxu0 0.0
  %7767 = vmatprep.subr.mxu0 0.0
  %7768 = vmatpush1.msra.mxu0 0.0
  %7769 = vmatprep.subr.mxu0 0.0
  %7770 = vmatpush1.msra.mxu0 0.0
  %7771 = vmatprep.subr.mxu0 0.0
  %7772 = vmatpush1.msra.mxu0 0.0
  %7773 = vmatprep.subr.mxu0 0.0
  %7774 = vmatpush1.msra.mxu0 0.0
  %7775 = vmatprep.subr.mxu0 0.0
  %7776 = vmatpush1.msra.mxu0 0.0
  %7777 = vmatprep.subr.mxu0 0.0
  %7778 = vmatpush1.msra.mxu0 0.0
  %7779 = vmatprep.subr.mxu0 0.0
  %7780 = vmatpush1.msra.mxu0 0.0
  %7781 = vmatprep.subr.mxu0 0.0
  %7782 = vmatpush1.msra.mxu0 0.0
  %7783 = vmatprep.subr.mxu0 0.0
  %7784 = vmatpush1.msra.mxu0 0.0
  %7785 = vmatprep.subr.mxu0 0.0
  %7786 = vmatpush1.msra.mxu0 0.0
  %7787 = vmatprep.subr.mxu0 0.0
  %7788 = vmatpush1.msra.mxu0 0.0
  %7789 = vmatprep.subr.mxu0 0.0
  %7790 = vmatpush1.msra.mxu0 0.0
  %7791 = vmatprep.subr.mxu0 0.0
  %7792 = vmatpush1.msra.mxu0 0.0
  %7793 = vmatprep.subr.mxu0 0.0
  %7794 = vmatpush1.msra.mxu0 0.0
  %7795 = vmatprep.mubr.f32.mxu0 0.0
  %7796 = vmatmul.mubr.f32.gmra.mrb[0].mxu0 %v7720
  %v7797 = vpop.f32.mrb[0].mxu0
  %v7798 = vadd.f32 0.0, %v7797
  %v7799 = vpop.f32.mrb[0].mxu0
  %7800 = vmatprep.mubr.f32.mxu0 0.0
  %7801 = vmatmul.mubr.f32.gmra.mrb[0].mxu0 %v7723
  %v7802 = vpop.f32.mrb[0].mxu0
  %v7803 = vadd.f32 0.0, %v7802
  %v7804 = vpop.f32.mrb[0].mxu0
  %7805 = vmatprep.mubr.f32.mxu0 0.0
  %7806 = vmatmul.mubr.f32.gmra.mrb[0].mxu0 %v7726
  %v7807 = vpop.f32.mrb[0].mxu0
  %v7808 = vadd.f32 0.0, %v7807
  %v7809 = vpop.f32.mrb[0].mxu0
  %7810 = vmatprep.mubr.f32.mxu0 0.0
  %7811 = vmatmul.mubr.f32.gmra.mrb[0].mxu0 %v7729
  %v7812 = vpop.f32.mrb[0].mxu0
  %v7813 = vadd.f32 0.0, %v7812
  %v7814 = vpop.f32.mrb[0].mxu0
  %7815 = vdwg.mxu0
  %v7816 = vadd.f32 %v7701, %v7798
  %v7817 = vadd.f32 %v7706, %v7803
  %v7818 = vadd.f32 %v7711, %v7808
  %v7819 = vadd.f32 %v7716, %v7813
  %v7821 = vsel %vm321, %v7516, 0
  %v7824 = vsel %vm321, %v7517, 0
  %v7827 = vsel %vm321, %v7518, 0
  %v7830 = vsel %vm321, %v7519, 0
  %7832 = vmatprep.subr.mxu0 0.0
  %7833 = vmatpush1.msra.mxu0 %v7492
  %7834 = vmatprep.subr.mxu0 0.0
  %7835 = vmatpush1.msra.mxu0 %v7497
  %7836 = vmatprep.subr.mxu0 0.0
  %7837 = vmatpush1.msra.mxu0 0.0
  %7838 = vmatprep.subr.mxu0 0.0
  %7839 = vmatpush1.msra.mxu0 0.0
  %7840 = vmatprep.subr.mxu0 0.0
  %7841 = vmatpush1.msra.mxu0 0.0
  %7842 = vmatprep.subr.mxu0 0.0
  %7843 = vmatpush1.msra.mxu0 0.0
  %7844 = vmatprep.subr.mxu0 0.0
  %7845 = vmatpush1.msra.mxu0 0.0
  %7846 = vmatprep.subr.mxu0 0.0
  %7847 = vmatpush1.msra.mxu0 0.0
  %7848 = vmatprep.subr.mxu0 0.0
  %7849 = vmatpush1.msra.mxu0 0.0
  %7850 = vmatprep.subr.mxu0 0.0
  %7851 = vmatpush1.msra.mxu0 0.0
  %7852 = vmatprep.subr.mxu0 0.0
  %7853 = vmatpush1.msra.mxu0 0.0
  %7854 = vmatprep.subr.mxu0 0.0
  %7855 = vmatpush1.msra.mxu0 0.0
  %7856 = vmatprep.subr.mxu0 0.0
  %7857 = vmatpush1.msra.mxu0 0.0
  %7858 = vmatprep.subr.mxu0 0.0
  %7859 = vmatpush1.msra.mxu0 0.0
  %7860 = vmatprep.subr.mxu0 0.0
  %7861 = vmatpush1.msra.mxu0 0.0
  %7862 = vmatprep.subr.mxu0 0.0
  %7863 = vmatpush1.msra.mxu0 0.0
  %7864 = vmatprep.subr.mxu0 0.0
  %7865 = vmatpush1.msra.mxu0 0.0
  %7866 = vmatprep.subr.mxu0 0.0
  %7867 = vmatpush1.msra.mxu0 0.0
  %7868 = vmatprep.subr.mxu0 0.0
  %7869 = vmatpush1.msra.mxu0 0.0
  %7870 = vmatprep.subr.mxu0 0.0
  %7871 = vmatpush1.msra.mxu0 0.0
  %7872 = vmatprep.subr.mxu0 0.0
  %7873 = vmatpush1.msra.mxu0 0.0
  %7874 = vmatprep.subr.mxu0 0.0
  %7875 = vmatpush1.msra.mxu0 0.0
  %7876 = vmatprep.subr.mxu0 0.0
  %7877 = vmatpush1.msra.mxu0 0.0
  %7878 = vmatprep.subr.mxu0 0.0
  %7879 = vmatpush1.msra.mxu0 0.0
  %7880 = vmatprep.subr.mxu0 0.0
  %7881 = vmatpush1.msra.mxu0 0.0
  %7882 = vmatprep.subr.mxu0 0.0
  %7883 = vmatpush1.msra.mxu0 0.0
  %7884 = vmatprep.subr.mxu0 0.0
  %7885 = vmatpush1.msra.mxu0 0.0
  %7886 = vmatprep.subr.mxu0 0.0
  %7887 = vmatpush1.msra.mxu0 0.0
  %7888 = vmatprep.subr.mxu0 0.0
  %7889 = vmatpush1.msra.mxu0 0.0
  %7890 = vmatprep.subr.mxu0 0.0
  %7891 = vmatpush1.msra.mxu0 0.0
  %7892 = vmatprep.subr.mxu0 0.0
  %7893 = vmatpush1.msra.mxu0 0.0
  %7894 = vmatprep.subr.mxu0 0.0
  %7895 = vmatpush1.msra.mxu0 0.0
  %7896 = vmatprep.mubr.f32.mxu0 0.0
  %7897 = vmatmul.mubr.f32.gmra.mrb[0].mxu0 %v7821
  %v7898 = vpop.f32.mrb[0].mxu0
  %v7899 = vadd.f32 0.0, %v7898
  %v7900 = vpop.f32.mrb[0].mxu0
  %7901 = vmatprep.mubr.f32.mxu0 0.0
  %7902 = vmatmul.mubr.f32.gmra.mrb[0].mxu0 %v7824
  %v7903 = vpop.f32.mrb[0].mxu0
  %v7904 = vadd.f32 0.0, %v7903
  %v7905 = vpop.f32.mrb[0].mxu0
  %7906 = vmatprep.mubr.f32.mxu0 0.0
  %7907 = vmatmul.mubr.f32.gmra.mrb[0].mxu0 %v7827
  %v7908 = vpop.f32.mrb[0].mxu0
  %v7909 = vadd.f32 0.0, %v7908
  %v7910 = vpop.f32.mrb[0].mxu0
  %7911 = vmatprep.mubr.f32.mxu0 0.0
  %7912 = vmatmul.mubr.f32.gmra.mrb[0].mxu0 %v7830
  %v7913 = vpop.f32.mrb[0].mxu0
  %v7914 = vadd.f32 0.0, %v7913
  %v7915 = vpop.f32.mrb[0].mxu0
  %7916 = vdwg.mxu0
  %v7917 = vadd.f32 %v7816, %v7899
  %v7918 = vadd.f32 %v7817, %v7904
  %v7919 = vadd.f32 %v7818, %v7909
  %v7920 = vadd.f32 %v7819, %v7914
  %7922 = vset.pattern.permute.xlu0 0
  %7923 = vperm.xlu0 %7922, %v7521
  %v7924 = vpop.permute.xlu0 %7923
  %7927 = vset.pattern.permute.xlu0 0
  %7928 = vperm.xlu0 %7927, %v7522
  %v7929 = vpop.permute.xlu0 %7928
  %7932 = vset.pattern.permute.xlu0 0
  %7933 = vperm.xlu0 %7932, %v7523
  %v7934 = vpop.permute.xlu0 %7933
  %7937 = vset.pattern.permute.xlu0 0
  %7938 = vperm.xlu0 %7937, %v7524
  %v7939 = vpop.permute.xlu0 %7938
  %v7941 = vadd.f32 %v7917, %v7924
  %v7942 = vadd.f32 %v7918, %v7929
  %v7943 = vadd.f32 %v7919, %v7934
  %v7944 = vadd.f32 %v7920, %v7939
  %v7945 = vmax.f32 %v7941, 0.0
  %v7946 = vmax.f32 %v7942, 0.0
  %v7947 = vmax.f32 %v7943, 0.0
  %v7948 = vmax.f32 %v7944, 0.0
  %7949 = vmatprep.subr.mxu0 0.0
  %7950 = vmatpush1.msra.mxu0 %v68
  %7951 = vmatprep.subr.mxu0 0.0
  %7952 = vmatpush1.msra.mxu0 %v69
  %7953 = vmatprep.subr.mxu0 0.0
  %7954 = vmatpush1.msra.mxu0 %v70
  %7955 = vmatprep.subr.mxu0 0.0
  %7956 = vmatpush1.msra.mxu0 %v71
  %7957 = vmatprep.subr.mxu0 0.0
  %7958 = vmatpush1.msra.mxu0 %v72
  %7959 = vmatprep.subr.mxu0 0.0
  %7960 = vmatpush1.msra.mxu0 %v73
  %7961 = vmatprep.subr.mxu0 0.0
  %7962 = vmatpush1.msra.mxu0 %v74
  %7963 = vmatprep.subr.mxu0 0.0
  %7964 = vmatpush1.msra.mxu0 %v75
  %7965 = vmatprep.subr.mxu0 0.0
  %7966 = vmatpush1.msra.mxu0 %v76
  %7967 = vmatprep.subr.mxu0 0.0
  %7968 = vmatpush1.msra.mxu0 %v77
  %7969 = vmatprep.subr.mxu0 0.0
  %7970 = vmatpush1.msra.mxu0 %v78
  %7971 = vmatprep.subr.mxu0 0.0
  %7972 = vmatpush1.msra.mxu0 %v79
  %7973 = vmatprep.subr.mxu0 0.0
  %7974 = vmatpush1.msra.mxu0 %v80
  %7975 = vmatprep.subr.mxu0 0.0
  %7976 = vmatpush1.msra.mxu0 %v81
  %7977 = vmatprep.subr.mxu0 0.0
  %7978 = vmatpush1.msra.mxu0 %v82
  %7979 = vmatprep.subr.mxu0 0.0
  %7980 = vmatpush1.msra.mxu0 %v83
  %7981 = vmatprep.subr.mxu0 0.0
  %7982 = vmatpush1.msra.mxu0 0.0
  %7983 = vmatprep.subr.mxu0 0.0
  %7984 = vmatpush1.msra.mxu0 0.0
  %7985 = vmatprep.subr.mxu0 0.0
  %7986 = vmatpush1.msra.mxu0 0.0
  %7987 = vmatprep.subr.mxu0 0.0
  %7988 = vmatpush1.msra.mxu0 0.0
  %7989 = vmatprep.subr.mxu0 0.0
  %7990 = vmatpush1.msra.mxu0 0.0
  %7991 = vmatprep.subr.mxu0 0.0
  %7992 = vmatpush1.msra.mxu0 0.0
  %7993 = vmatprep.subr.mxu0 0.0
  %7994 = vmatpush1.msra.mxu0 0.0
  %7995 = vmatprep.subr.mxu0 0.0
  %7996 = vmatpush1.msra.mxu0 0.0
  %7997 = vmatprep.subr.mxu0 0.0
  %7998 = vmatpush1.msra.mxu0 0.0
  %7999 = vmatprep.subr.mxu0 0.0
  %8000 = vmatpush1.msra.mxu0 0.0
  %8001 = vmatprep.subr.mxu0 0.0
  %8002 = vmatpush1.msra.mxu0 0.0
  %8003 = vmatprep.subr.mxu0 0.0
  %8004 = vmatpush1.msra.mxu0 0.0
  %8005 = vmatprep.subr.mxu0 0.0
  %8006 = vmatpush1.msra.mxu0 0.0
  %8007 = vmatprep.subr.mxu0 0.0
  %8008 = vmatpush1.msra.mxu0 0.0
  %8009 = vmatprep.subr.mxu0 0.0
  %8010 = vmatpush1.msra.mxu0 0.0
  %8011 = vmatprep.subr.mxu0 0.0
  %8012 = vmatpush1.msra.mxu0 0.0
  %8013 = vmatprep.mubr.f32.mxu0 0.0
  %8014 = vmatmul.mubr.f32.gmra.mrb[0].mxu0 %v7947
  %v8015 = vpop.f32.mrb[0].mxu0
  %v8016 = vadd.f32 0.0, %v8015
  %v8017 = vpop.f32.mrb[0].mxu0
  %8018 = vmatprep.mubr.f32.mxu0 0.0
  %8019 = vmatmul.mubr.f32.gmra.mrb[0].mxu0 %v7948
  %v8020 = vpop.f32.mrb[0].mxu0
  %v8021 = vadd.f32 0.0, %v8020
  %v8022 = vpop.f32.mrb[0].mxu0
  %8023 = vdwg.mxu0
  %s8024 = scalar_lea.vmem %s17, 128
  %v8025 = vld [vmem:[%s8024] sm:$0xff]
  %v8026 = vld [vmem:[%s8024 + $0x8] sm:$0xff]
  %v8027 = vld [vmem:[%s8024 + $0x10] sm:$0xff]
  %v8028 = vld [vmem:[%s8024 + $0x18] sm:$0xff]
  %s8029 = scalar_lea.vmem %s18, 128
  %v8030 = vld [vmem:[%s8029] sm:$0xff]
  %v8031 = vld [vmem:[%s8029 + $0x8] sm:$0xff]
  %v8032 = vld [vmem:[%s8029 + $0x10] sm:$0xff]
  %v8033 = vld [vmem:[%s8029 + $0x18] sm:$0xff]
  %s8034 = scalar_lea.vmem %s19, 128
  %v8035 = vld [vmem:[%s8034] sm:$0xff]
  %v8037 = vsel %vm321, %v8030, 0
  %v8040 = vsel %vm321, %v8031, 0
  %v8043 = vsel %vm321, %v8032, 0
  %v8046 = vsel %vm321, %v8033, 0
  %8048 = vmatprep.subr.mxu0 0.0
  %8049 = vmatpush1.msra.mxu0 %v8016
  %8050 = vmatprep.subr.mxu0 0.0
  %8051 = vmatpush1.msra.mxu0 %v8021
  %8052 = vmatprep.subr.mxu0 0.0
  %8053 = vmatpush1.msra.mxu0 0.0
  %8054 = vmatprep.subr.mxu0 0.0
  %8055 = vmatpush1.msra.mxu0 0.0
  %8056 = vmatprep.subr.mxu0 0.0
  %8057 = vmatpush1.msra.mxu0 0.0
  %8058 = vmatprep.subr.mxu0 0.0
  %8059 = vmatpush1.msra.mxu0 0.0
  %8060 = vmatprep.subr.mxu0 0.0
  %8061 = vmatpush1.msra.mxu0 0.0
  %8062 = vmatprep.subr.mxu0 0.0
  %8063 = vmatpush1.msra.mxu0 0.0
  %8064 = vmatprep.subr.mxu0 0.0
  %8065 = vmatpush1.msra.mxu0 0.0
  %8066 = vmatprep.subr.mxu0 0.0
  %8067 = vmatpush1.msra.mxu0 0.0
  %8068 = vmatprep.subr.mxu0 0.0
  %8069 = vmatpush1.msra.mxu0 0.0
  %8070 = vmatprep.subr.mxu0 0.0
  %8071 = vmatpush1.msra.mxu0 0.0
  %8072 = vmatprep.subr.mxu0 0.0
  %8073 = vmatpush1.msra.mxu0 0.0
  %8074 = vmatprep.subr.mxu0 0.0
  %8075 = vmatpush1.msra.mxu0 0.0
  %8076 = vmatprep.subr.mxu0 0.0
  %8077 = vmatpush1.msra.mxu0 0.0
  %8078 = vmatprep.subr.mxu0 0.0
  %8079 = vmatpush1.msra.mxu0 0.0
  %8080 = vmatprep.subr.mxu0 0.0
  %8081 = vmatpush1.msra.mxu0 0.0
  %8082 = vmatprep.subr.mxu0 0.0
  %8083 = vmatpush1.msra.mxu0 0.0
  %8084 = vmatprep.subr.mxu0 0.0
  %8085 = vmatpush1.msra.mxu0 0.0
  %8086 = vmatprep.subr.mxu0 0.0
  %8087 = vmatpush1.msra.mxu0 0.0
  %8088 = vmatprep.subr.mxu0 0.0
  %8089 = vmatpush1.msra.mxu0 0.0
  %8090 = vmatprep.subr.mxu0 0.0
  %8091 = vmatpush1.msra.mxu0 0.0
  %8092 = vmatprep.subr.mxu0 0.0
  %8093 = vmatpush1.msra.mxu0 0.0
  %8094 = vmatprep.subr.mxu0 0.0
  %8095 = vmatpush1.msra.mxu0 0.0
  %8096 = vmatprep.subr.mxu0 0.0
  %8097 = vmatpush1.msra.mxu0 0.0
  %8098 = vmatprep.subr.mxu0 0.0
  %8099 = vmatpush1.msra.mxu0 0.0
  %8100 = vmatprep.subr.mxu0 0.0
  %8101 = vmatpush1.msra.mxu0 0.0
  %8102 = vmatprep.subr.mxu0 0.0
  %8103 = vmatpush1.msra.mxu0 0.0
  %8104 = vmatprep.subr.mxu0 0.0
  %8105 = vmatpush1.msra.mxu0 0.0
  %8106 = vmatprep.subr.mxu0 0.0
  %8107 = vmatpush1.msra.mxu0 0.0
  %8108 = vmatprep.subr.mxu0 0.0
  %8109 = vmatpush1.msra.mxu0 0.0
  %8110 = vmatprep.subr.mxu0 0.0
  %8111 = vmatpush1.msra.mxu0 0.0
  %8112 = vmatprep.mubr.f32.mxu0 0.0
  %8113 = vmatmul.mubr.f32.gmra.mrb[0].mxu0 %v8037
  %v8114 = vpop.f32.mrb[0].mxu0
  %v8115 = vadd.f32 0.0, %v8114
  %v8116 = vpop.f32.mrb[0].mxu0
  %8117 = vmatprep.mubr.f32.mxu0 0.0
  %8118 = vmatmul.mubr.f32.gmra.mrb[0].mxu0 %v8040
  %v8119 = vpop.f32.mrb[0].mxu0
  %v8120 = vpop.f32.mrb[0].mxu0
  %8121 = vmatprep.mubr.f32.mxu0 0.0
  %8122 = vmatmul.mubr.f32.gmra.mrb[0].mxu0 %v8043
  %v8123 = vpop.f32.mrb[0].mxu0
  %v8124 = vpop.f32.mrb[0].mxu0
  %8125 = vmatprep.mubr.f32.mxu0 0.0
  %8126 = vmatmul.mubr.f32.gmra.mrb[0].mxu0 %v8046
  %v8127 = vpop.f32.mrb[0].mxu0
  %v8128 = vpop.f32.mrb[0].mxu0
  %8129 = vdwg.mxu0
  %v8131 = vsel %vm321, %v8025, 0
  %v8134 = vsel %vm321, %v8026, 0
  %v8137 = vsel %vm321, %v8027, 0
  %v8140 = vsel %vm321, %v8028, 0
  %8142 = vmatprep.subr.mxu0 0.0
  %8143 = vmatpush1.msra.mxu0 %v7945
  %8144 = vmatprep.subr.mxu0 0.0
  %8145 = vmatpush1.msra.mxu0 %v7946
  %8146 = vmatprep.subr.mxu0 0.0
  %8147 = vmatpush1.msra.mxu0 0.0
  %8148 = vmatprep.subr.mxu0 0.0
  %8149 = vmatpush1.msra.mxu0 0.0
  %8150 = vmatprep.subr.mxu0 0.0
  %8151 = vmatpush1.msra.mxu0 0.0
  %8152 = vmatprep.subr.mxu0 0.0
  %8153 = vmatpush1.msra.mxu0 0.0
  %8154 = vmatprep.subr.mxu0 0.0
  %8155 = vmatpush1.msra.mxu0 0.0
  %8156 = vmatprep.subr.mxu0 0.0
  %8157 = vmatpush1.msra.mxu0 0.0
  %8158 = vmatprep.subr.mxu0 0.0
  %8159 = vmatpush1.msra.mxu0 0.0
  %8160 = vmatprep.subr.mxu0 0.0
  %8161 = vmatpush1.msra.mxu0 0.0
  %8162 = vmatprep.subr.mxu0 0.0
  %8163 = vmatpush1.msra.mxu0 0.0
  %8164 = vmatprep.subr.mxu0 0.0
  %8165 = vmatpush1.msra.mxu0 0.0
  %8166 = vmatprep.subr.mxu0 0.0
  %8167 = vmatpush1.msra.mxu0 0.0
  %8168 = vmatprep.subr.mxu0 0.0
  %8169 = vmatpush1.msra.mxu0 0.0
  %8170 = vmatprep.subr.mxu0 0.0
  %8171 = vmatpush1.msra.mxu0 0.0
  %8172 = vmatprep.subr.mxu0 0.0
  %8173 = vmatpush1.msra.mxu0 0.0
  %8174 = vmatprep.subr.mxu0 0.0
  %8175 = vmatpush1.msra.mxu0 0.0
  %8176 = vmatprep.subr.mxu0 0.0
  %8177 = vmatpush1.msra.mxu0 0.0
  %8178 = vmatprep.subr.mxu0 0.0
  %8179 = vmatpush1.msra.mxu0 0.0
  %8180 = vmatprep.subr.mxu0 0.0
  %8181 = vmatpush1.msra.mxu0 0.0
  %8182 = vmatprep.subr.mxu0 0.0
  %8183 = vmatpush1.msra.mxu0 0.0
  %8184 = vmatprep.subr.mxu0 0.0
  %8185 = vmatpush1.msra.mxu0 0.0
  %8186 = vmatprep.subr.mxu0 0.0
  %8187 = vmatpush1.msra.mxu0 0.0
  %8188 = vmatprep.subr.mxu0 0.0
  %8189 = vmatpush1.msra.mxu0 0.0
  %8190 = vmatprep.subr.mxu0 0.0
  %8191 = vmatpush1.msra.mxu0 0.0
  %8192 = vmatprep.subr.mxu0 0.0
  %8193 = vmatpush1.msra.mxu0 0.0
  %8194 = vmatprep.subr.mxu0 0.0
  %8195 = vmatpush1.msra.mxu0 0.0
  %8196 = vmatprep.subr.mxu0 0.0
  %8197 = vmatpush1.msra.mxu0 0.0
  %8198 = vmatprep.subr.mxu0 0.0
  %8199 = vmatpush1.msra.mxu0 0.0
  %8200 = vmatprep.subr.mxu0 0.0
  %8201 = vmatpush1.msra.mxu0 0.0
  %8202 = vmatprep.subr.mxu0 0.0
  %8203 = vmatpush1.msra.mxu0 0.0
  %8204 = vmatprep.subr.mxu0 0.0
  %8205 = vmatpush1.msra.mxu0 0.0
  %8206 = vmatprep.mubr.f32.mxu0 0.0
  %8207 = vmatmul.mubr.f32.gmra.mrb[0].mxu0 %v8131
  %v8208 = vpop.f32.mrb[0].mxu0
  %v8209 = vadd.f32 %v8115, %v8208
  %v8210 = vpop.f32.mrb[0].mxu0
  %8211 = vmatprep.mubr.f32.mxu0 0.0
  %8212 = vmatmul.mubr.f32.gmra.mrb[0].mxu0 %v8134
  %v8213 = vpop.f32.mrb[0].mxu0
  %v8214 = vpop.f32.mrb[0].mxu0
  %8215 = vmatprep.mubr.f32.mxu0 0.0
  %8216 = vmatmul.mubr.f32.gmra.mrb[0].mxu0 %v8137
  %v8217 = vpop.f32.mrb[0].mxu0
  %v8218 = vpop.f32.mrb[0].mxu0
  %8219 = vmatprep.mubr.f32.mxu0 0.0
  %8220 = vmatmul.mubr.f32.gmra.mrb[0].mxu0 %v8140
  %v8221 = vpop.f32.mrb[0].mxu0
  %v8222 = vpop.f32.mrb[0].mxu0
  %8223 = vdwg.mxu0
  %8225 = vset.pattern.permute.xlu0 0
  %8226 = vperm.xlu0 %8225, %v8035
  %v8227 = vpop.permute.xlu0 %8226
  %v8229 = vadd.f32 %v8209, %v8227
  %v8230 = vadd.f32 %v8229, 4.0
  %v8231 = vmax.f32 %v8230, 0.0
  %v8232 = vand.u32 2147483647, %v8230
  %v8233 = vsub.f32 0.0, %v8232
  %v8234 = vmul.f32 %v8233, 1.442695
  %v8235 = vpow.pop %v8234
  %v8236 = vadd.f32 %v8235, 1.0
  %v8237 = vlog2.pop %v8236
  %v8238 = vmul.f32 %v8237, 0.6931472
  %v8239 = vadd.f32 %v8231, %v8238
  %v8240 = vadd.f32 %v8239, 0.0001
  %v8241 = vld [vmem:[%s3] sm:$0xf]
  %v8243 = vrot.slane %v8240, 4
  %v8245 = vmul.f32 %v8241, %v8243
  %v8246 = vadd.f32 %v8229, %v8245
  %8247 = vst [vmem:[%s20] sm:$0xf] %v8246
  %v8248 = vsel %vm141, %v8243, 0.0
  %v8249 = vrot.slane %v8248, 4
  %v8250 = vadd.f32 %v8248, %v8249
  %v8251 = vrot.slane %v8250, 2
  %v8252 = vadd.f32 %v8250, %v8251
  %v8253 = vrot.slane %v8252, 1
  %v8254 = vadd.f32 %v8252, %v8253
  %8255 = vst [vmem:[%s21] sm:$0x1] %v8254
  // Predicated region
  $region82: #{_lambda_.1} parent=0 // pred_check
    _
  $region83: #{_lambda_.1} parent=0 // pred_check_branch
    %8257 = sbr.rel (0) target = $region85
  $region84: #{_lambda_.1} parent=0 // pred_region
    _
  $region85: #{_lambda_.1} parent=0 // pred_fallthru
    _
  // Predicated region
  $region86: #{_lambda_.1} parent=0 // pred_check
    _
  $region87: #{_lambda_.1} parent=0 // pred_check_branch
    %8259 = sbr.rel (0) target = $region89
  $region88: #{_lambda_.1} parent=0 // pred_region
    _
  $region89: #{_lambda_.1} parent=0 // pred_fallthru
    _
  // Predicated region
  $region90: #{_lambda_.1} parent=0 // pred_check
    _
  $region91: #{_lambda_.1} parent=0 // pred_check_branch
    %8261 = sbr.rel (0) target = $region93
  $region92: #{_lambda_.1} parent=0 // pred_region
    _
  $region93: #{_lambda_.1} parent=0 // pred_fallthru
    _
  // Predicated region
  $region94: #{_lambda_.1} parent=0 // pred_check
    _
  $region95: #{_lambda_.1} parent=0 // pred_check_branch
    %8263 = sbr.rel (0) target = $region97
  $region96: #{_lambda_.1} parent=0 // pred_region
    _
  $region97: #{_lambda_.1} parent=0 // pred_fallthru
    _

</llo_original>
